<compile_context>
chip_gen: v7x
topology: tpu7x:2x2x1
jax: 0.10.0
libtpu: 0.0.40
codegen_flags: <defaults>
</compile_context>

<pallas_src>
import functools
import math

import jax
import jax.numpy as jnp
from jax import lax
from jax.experimental import pallas as pl
from jax.experimental.pallas import tpu as pltpu


def _textdet_kernel(xp_ref, w1_ref, b1_ref, wh_ref, bh_ref, out_ref, *, H, W, C):
    """Fused conv3x3 + folded BN + ReLU + fused 1x1 heads + sigmoid/angle.

    xp_ref:  (1, (H+4)*W, C)  channel-last feature map, flattened pixel grid,
                              zero-padded with 2 extra rows top & bottom
                              (1 conv-pad row + 1 guard row each side).
    w1_ref:  (9, C, C)        conv1 weights (BN scale folded), tap-major (dy,dx).
    b1_ref:  (1, C)           conv1 bias with BN shift folded.
    wh_ref:  (C, 6)           fused 1x1 heads: [score | loc(4) | angle-logit].
    bh_ref:  (1, 6)           fused head bias.
    out_ref: (1, H*W, 6)      [score, loc0..loc3, angle] per pixel.
    """
    HW = H * W

    # Output-pixel column index; used to zero the taps whose +-1 column shift
    # would otherwise wrap across a row boundary (virtual left/right zero pad).
    colx = lax.broadcasted_iota(jnp.int32, (HW, 1), 0) % W
    left_edge = colx == 0
    right_edge = colx == W - 1

    # 3x3 conv as 9 shifted, lane-dense (HW, C) @ (C, C) MXU matmuls.  Both the
    # dy shift and the +-1 dx shift are plain row offsets into the flattened,
    # H-padded pixel grid; the guard rows keep every slice in bounds.
    acc = jnp.zeros((HW, C), jnp.float32)
    for dy in range(3):
        for dx in range(3):
            start = (dy + 1) * W + (dx - 1)
            tap = xp_ref[0, pl.ds(start, HW), :]               # (HW, C)
            if dx == 0:
                tap = jnp.where(left_edge, 0.0, tap)
            elif dx == 2:
                tap = jnp.where(right_edge, 0.0, tap)
            acc = acc + jnp.dot(tap, w1_ref[dy * 3 + dx],
                                preferred_element_type=jnp.float32)

    # Fused conv bias + folded BatchNorm + ReLU (stays in VMEM).
    y = jnp.maximum(acc + b1_ref[...], 0.0)                    # (HW, C)

    # Fused 1x1 heads.
    z = jnp.dot(y, wh_ref[...], preferred_element_type=jnp.float32) + bh_ref[...]
    s = 1.0 / (1.0 + jnp.exp(-z))                              # sigmoid (EUP)

    # Channel 5 is the angle logit: angle = (sigmoid - 0.5) * pi.
    ch = lax.broadcasted_iota(jnp.int32, z.shape, 1)
    out_ref[0] = jnp.where(ch == 5, (s - 0.5) * math.pi, s)


def fots_text_det(x, params, *, eps=1e-5):
    """TextDet forward. x: (N, 256, H, W) f32. Returns (score, geo) in NCHW."""
    N, C, H, W = x.shape
    assert C % 128 == 0, "channel axis must be lane-dense (multiple of 128)"
    assert W % 8 == 0, "feature-map width must be sublane-friendly"

    # ---- fold inference-mode BatchNorm into conv1 (weights are HWIO) ----
    scale = params["gamma"] / jnp.sqrt(params["running_var"] + eps)
    w1f = (params["w1"] * scale[None, None, None, :]).reshape(9, C, C)
    b1f = ((params["b1"] - params["running_mean"]) * scale + params["beta"]).reshape(1, C)

    # ---- fuse the three 1x1 heads into one (C, 6) matmul ----
    wh = jnp.concatenate([params["w2"], params["w3"], params["w4"]], axis=1)   # (C, 6)
    bh = jnp.concatenate([params["b2"], params["b3"], params["b4"]]).reshape(1, 6)

    # ---- channel-last, pad H by 2 rows each side (1 conv pad + 1 guard so
    #      every +-1-shifted in-kernel slice stays in bounds), flatten pixels.
    #      NOTE: a single copy of the map — no 3x replication. ----
    xh = jnp.transpose(x, (0, 2, 3, 1))                        # (N, H, W, C)
    xp = jnp.pad(xh, ((0, 0), (2, 2), (0, 0), (0, 0)))         # (N, H+4, W, C)
    xf = xp.reshape(N, (H + 4) * W, C)                         # (N, (H+4)*W, C)

    kernel = functools.partial(_textdet_kernel, H=H, W=W, C=C)

    flops = N * (2 * H * W * 9 * C * C + 2 * H * W * C * 6)
    bytes_accessed = 4 * (N * (H + 4) * W * C + 9 * C * C + C
                          + C * 6 + 6 + N * H * W * 6)

    out = pl.pallas_call(
        kernel,
        out_shape=jax.ShapeDtypeStruct((N, H * W, 6), jnp.float32),
        grid_spec=pltpu.PrefetchScalarGridSpec(
            num_scalar_prefetch=0,
            grid=(N,),
            in_specs=[
                pl.BlockSpec((1, (H + 4) * W, C), lambda i: (i, 0, 0)),
                pl.BlockSpec((9, C, C), lambda i: (0, 0, 0)),   # constant block
                pl.BlockSpec((1, C), lambda i: (0, 0)),
                pl.BlockSpec((C, 6), lambda i: (0, 0)),
                pl.BlockSpec((1, 6), lambda i: (0, 0)),
            ],
            out_specs=pl.BlockSpec((1, H * W, 6), lambda i: (i, 0, 0)),
        ),
        compiler_params=pltpu.CompilerParams(
            dimension_semantics=("parallel",),   # shard batch across v7x's 2 TCs
        ),
        cost_estimate=pl.CostEstimate(
            flops=flops,
            transcendentals=N * H * W * 6,
            bytes_accessed=bytes_accessed,
        ),
    )(xf, w1f, b1f, wh, bh)

    # (N, H*W, 6) -> NCHW, then split into score / geo exactly like the module.
    out = out.reshape(N, H, W, 6).transpose(0, 3, 1, 2)
    score = out[:, 0:1]
    geo = out[:, 1:6]
    return score, geo


def _textdet_reference(x, params, *, eps=1e-5):
    """Pure-JAX reference of TextDet.forward (inference-mode BatchNorm)."""
    hp = lax.Precision.HIGHEST
    y = lax.conv_general_dilated(
        x, params["w1"], window_strides=(1, 1), padding=((1, 1), (1, 1)),
        dimension_numbers=("NCHW", "HWIO", "NCHW"), precision=hp)
    y = y + params["b1"][None, :, None, None]
    scale = params["gamma"] / jnp.sqrt(params["running_var"] + eps)
    y = (y - params["running_mean"][None, :, None, None]) * scale[None, :, None, None] \
        + params["beta"][None, :, None, None]
    y = jnp.maximum(y, 0.0)

    def head(w, b):
        return jnp.einsum("nchw,co->nohw", y, w, precision=hp) + b[None, :, None, None]

    score = jax.nn.sigmoid(head(params["w2"], params["b2"]))
    loc = jax.nn.sigmoid(head(params["w3"], params["b3"]))
    angle = (jax.nn.sigmoid(head(params["w4"], params["b4"])) - 0.5) * math.pi
    geo = jnp.concatenate([loc, angle], axis=1)
    return score, geo


if __name__ == "__main__":
    # Small shared-feature-map shape; channel count (256) is fixed by TextDet.
    N, C, H, W = 2, 256, 16, 16

    keys = jax.random.split(jax.random.PRNGKey(0), 13)
    x = jax.random.normal(keys[0], (N, C, H, W), jnp.float32)
    params = dict(
        w1=0.02 * jax.random.normal(keys[1], (3, 3, C, C), jnp.float32),   # HWIO
        b1=0.05 * jax.random.normal(keys[2], (C,), jnp.float32),
        gamma=1.0 + 0.1 * jax.random.normal(keys[3], (C,), jnp.float32),
        beta=0.1 * jax.random.normal(keys[4], (C,), jnp.float32),
        running_mean=0.1 * jax.random.normal(keys[5], (C,), jnp.float32),
        running_var=jax.random.uniform(keys[6], (C,), jnp.float32, 0.5, 1.5),
        w2=0.05 * jax.random.normal(keys[7], (C, 1), jnp.float32),
        b2=0.02 * jax.random.normal(keys[8], (1,), jnp.float32),
        w3=0.05 * jax.random.normal(keys[9], (C, 4), jnp.float32),
        b3=0.02 * jax.random.normal(keys[10], (4,), jnp.float32),
        w4=0.05 * jax.random.normal(keys[11], (C, 1), jnp.float32),
        b4=0.02 * jax.random.normal(keys[12], (1,), jnp.float32),
    )

    score, geo = fots_text_det(x, params)
    score, geo = jax.block_until_ready((score, geo))

    score_ref, geo_ref = _textdet_reference(x, params)

    assert score.shape == (N, 1, H, W) and geo.shape == (N, 5, H, W)
    # Loose tolerance covers MXU multi-pass f32 matmul vs XLA HIGHEST-precision
    # conv differences; genuine bugs produce O(0.1+) errors.
    assert jnp.allclose(score, score_ref, rtol=1e-2, atol=1e-2)
    assert jnp.allclose(geo, geo_ref, rtol=1e-2, atol=1e-2)

    print("KERNEL_OK")
</pallas_src>

<mosaic_0001>
module attributes {stable_mosaic.version = 11 : i64} {
  func.func @_textdet_kernel(%arg0: i32, %arg1: memref<1x320x256xf32, #tpu.memory_space<vmem>>, %arg2: memref<9x256x256xf32, #tpu.memory_space<vmem>>, %arg3: memref<1x256xf32, #tpu.memory_space<vmem>>, %arg4: memref<256x6xf32, #tpu.memory_space<vmem>>, %arg5: memref<1x6xf32, #tpu.memory_space<vmem>>, %arg6: memref<1x256x6xf32, #tpu.memory_space<vmem>>) attributes {dimension_semantics = [#tpu.dimension_semantics<parallel>], iteration_bounds = array<i64: 2>, scalar_prefetch = 0 : i64, scratch_operands = 0 : i64, tpu.core_type = #tpu.core_type<tc>, window_params = [{transform_indices = @transform_0, window_bounds = array<i64: 1, 320, 256>}, {pipeline_mode = #tpu.pipeline_mode<synchronous>, transform_indices = @transform_1, window_bounds = array<i64: 9, 256, 256>}, {pipeline_mode = #tpu.pipeline_mode<synchronous>, transform_indices = @transform_2, window_bounds = array<i64: 1, 256>}, {pipeline_mode = #tpu.pipeline_mode<synchronous>, transform_indices = @transform_3, window_bounds = array<i64: 256, 6>}, {pipeline_mode = #tpu.pipeline_mode<synchronous>, transform_indices = @transform_4, window_bounds = array<i64: 1, 6>}, {transform_indices = @transform_5, window_bounds = array<i64: 1, 256, 6>}]} {
    %0 = tpu.iota {dimensions = array<i32: 0>} : vector<256x1xi32>
    %c16_i32 = arith.constant 16 : i32
    %c0_i32 = arith.constant 0 : i32
    %1 = arith.cmpi eq, %c16_i32, %c0_i32 : i32
    %c1_i32 = arith.constant 1 : i32
    %2 = arith.select %1, %c1_i32, %c16_i32 : i32
    %3 = vector.broadcast %2 : i32 to vector<256x1xi32>
    %4 = arith.remsi %0, %3 : vector<256x1xi32>
    %c0_i32_0 = arith.constant 0 : i32
    %5 = vector.broadcast %c0_i32_0 : i32 to vector<256x1xi32>
    %6 = arith.cmpi ne, %4, %5 : vector<256x1xi32>
    %c0_i32_1 = arith.constant 0 : i32
    %7 = vector.broadcast %c0_i32_1 : i32 to vector<256x1xi32>
    %8 = arith.cmpi slt, %4, %7 : vector<256x1xi32>
    %c0_i32_2 = arith.constant 0 : i32
    %9 = arith.cmpi slt, %2, %c0_i32_2 : i32
    %10 = vector.broadcast %9 : i1 to vector<256x1xi1>
    %11 = vector.broadcast %10 : vector<256x1xi1> to vector<256x1xi1>
    %12 = arith.xori %8, %11 : vector<256x1xi1>
    %13 = arith.andi %12, %6 : vector<256x1xi1>
    %14 = vector.broadcast %2 : i32 to vector<256x1xi32>
    %15 = arith.addi %4, %14 : vector<256x1xi32>
    %16 = arith.select %13, %15, %4 : vector<256x1xi1>, vector<256x1xi32>
    %c0_i32_3 = arith.constant 0 : i32
    %17 = vector.broadcast %c0_i32_3 : i32 to vector<256x1xi32>
    %18 = arith.cmpi eq, %16, %17 : vector<256x1xi32>
    %c15_i32 = arith.constant 15 : i32
    %19 = vector.broadcast %c15_i32 : i32 to vector<256x1xi32>
    %20 = arith.cmpi eq, %16, %19 : vector<256x1xi32>
    %cst = arith.constant 0.000000e+00 : f32
    %21 = vector.broadcast %cst : f32 to vector<256x256xf32>
    %c0 = arith.constant 0 : index
    %c15 = arith.constant 15 : index
    %c0_4 = arith.constant 0 : index
    %22 = vector.load %arg1[%c0, %c15, %c0_4] : memref<1x320x256xf32, #tpu.memory_space<vmem>>, vector<1x256x256xf32>
    %23 = vector.shape_cast %22 : vector<1x256x256xf32> to vector<256x256xf32>
    %cst_5 = arith.constant 0.000000e+00 : f32
    %24 = vector.shape_cast %18 : vector<256x1xi1> to vector<256x1xi1>
    %25 = vector.broadcast %24 : vector<256x1xi1> to vector<256x256xi1>
    %26 = vector.broadcast %cst_5 : f32 to vector<256x256xf32>
    %27 = arith.select %25, %26, %23 : vector<256x256xi1>, vector<256x256xf32>
    %c0_6 = arith.constant 0 : index
    %c0_7 = arith.constant 0 : index
    %c0_8 = arith.constant 0 : index
    %28 = vector.load %arg2[%c0_6, %c0_7, %c0_8] : memref<9x256x256xf32, #tpu.memory_space<vmem>>, vector<1x256x256xf32>
    %29 = vector.shape_cast %28 : vector<1x256x256xf32> to vector<256x256xf32>
    %cst_9 = arith.constant dense<0.000000e+00> : vector<256x256xf32>
    %30 = tpu.matmul %27, %29, %cst_9 {dimension_numbers = #tpu.dot_dimension_numbers<[1], [0], [0], [1], [0, 0, 1, 1], [], []>} : vector<256x256xf32>, vector<256x256xf32>, vector<256x256xf32> -> vector<256x256xf32>
    %31 = arith.addf %21, %30 : vector<256x256xf32>
    %c0_10 = arith.constant 0 : index
    %c16 = arith.constant 16 : index
    %c0_11 = arith.constant 0 : index
    %32 = vector.load %arg1[%c0_10, %c16, %c0_11] : memref<1x320x256xf32, #tpu.memory_space<vmem>>, vector<1x256x256xf32>
    %33 = vector.shape_cast %32 : vector<1x256x256xf32> to vector<256x256xf32>
    %c1 = arith.constant 1 : index
    %c0_12 = arith.constant 0 : index
    %c0_13 = arith.constant 0 : index
    %34 = vector.load %arg2[%c1, %c0_12, %c0_13] : memref<9x256x256xf32, #tpu.memory_space<vmem>>, vector<1x256x256xf32>
    %35 = vector.shape_cast %34 : vector<1x256x256xf32> to vector<256x256xf32>
    %cst_14 = arith.constant dense<0.000000e+00> : vector<256x256xf32>
    %36 = tpu.matmul %33, %35, %cst_14 {dimension_numbers = #tpu.dot_dimension_numbers<[1], [0], [0], [1], [0, 0, 1, 1], [], []>} : vector<256x256xf32>, vector<256x256xf32>, vector<256x256xf32> -> vector<256x256xf32>
    %37 = arith.addf %31, %36 : vector<256x256xf32>
    %c0_15 = arith.constant 0 : index
    %c17 = arith.constant 17 : index
    %c0_16 = arith.constant 0 : index
    %38 = vector.load %arg1[%c0_15, %c17, %c0_16] : memref<1x320x256xf32, #tpu.memory_space<vmem>>, vector<1x256x256xf32>
    %39 = vector.shape_cast %38 : vector<1x256x256xf32> to vector<256x256xf32>
    %cst_17 = arith.constant 0.000000e+00 : f32
    %40 = vector.shape_cast %20 : vector<256x1xi1> to vector<256x1xi1>
    %41 = vector.broadcast %40 : vector<256x1xi1> to vector<256x256xi1>
    %42 = vector.broadcast %cst_17 : f32 to vector<256x256xf32>
    %43 = arith.select %41, %42, %39 : vector<256x256xi1>, vector<256x256xf32>
    %c2 = arith.constant 2 : index
    %c0_18 = arith.constant 0 : index
    %c0_19 = arith.constant 0 : index
    %44 = vector.load %arg2[%c2, %c0_18, %c0_19] : memref<9x256x256xf32, #tpu.memory_space<vmem>>, vector<1x256x256xf32>
    %45 = vector.shape_cast %44 : vector<1x256x256xf32> to vector<256x256xf32>
    %cst_20 = arith.constant dense<0.000000e+00> : vector<256x256xf32>
    %46 = tpu.matmul %43, %45, %cst_20 {dimension_numbers = #tpu.dot_dimension_numbers<[1], [0], [0], [1], [0, 0, 1, 1], [], []>} : vector<256x256xf32>, vector<256x256xf32>, vector<256x256xf32> -> vector<256x256xf32>
    %47 = arith.addf %37, %46 : vector<256x256xf32>
    %c0_21 = arith.constant 0 : index
    %c31 = arith.constant 31 : index
    %c0_22 = arith.constant 0 : index
    %48 = vector.load %arg1[%c0_21, %c31, %c0_22] : memref<1x320x256xf32, #tpu.memory_space<vmem>>, vector<1x256x256xf32>
    %49 = vector.shape_cast %48 : vector<1x256x256xf32> to vector<256x256xf32>
    %cst_23 = arith.constant 0.000000e+00 : f32
    %50 = vector.shape_cast %18 : vector<256x1xi1> to vector<256x1xi1>
    %51 = vector.broadcast %50 : vector<256x1xi1> to vector<256x256xi1>
    %52 = vector.broadcast %cst_23 : f32 to vector<256x256xf32>
    %53 = arith.select %51, %52, %49 : vector<256x256xi1>, vector<256x256xf32>
    %c3 = arith.constant 3 : index
    %c0_24 = arith.constant 0 : index
    %c0_25 = arith.constant 0 : index
    %54 = vector.load %arg2[%c3, %c0_24, %c0_25] : memref<9x256x256xf32, #tpu.memory_space<vmem>>, vector<1x256x256xf32>
    %55 = vector.shape_cast %54 : vector<1x256x256xf32> to vector<256x256xf32>
    %cst_26 = arith.constant dense<0.000000e+00> : vector<256x256xf32>
    %56 = tpu.matmul %53, %55, %cst_26 {dimension_numbers = #tpu.dot_dimension_numbers<[1], [0], [0], [1], [0, 0, 1, 1], [], []>} : vector<256x256xf32>, vector<256x256xf32>, vector<256x256xf32> -> vector<256x256xf32>
    %57 = arith.addf %47, %56 : vector<256x256xf32>
    %c0_27 = arith.constant 0 : index
    %c32 = arith.constant 32 : index
    %c0_28 = arith.constant 0 : index
    %58 = vector.load %arg1[%c0_27, %c32, %c0_28] : memref<1x320x256xf32, #tpu.memory_space<vmem>>, vector<1x256x256xf32>
    %59 = vector.shape_cast %58 : vector<1x256x256xf32> to vector<256x256xf32>
    %c4 = arith.constant 4 : index
    %c0_29 = arith.constant 0 : index
    %c0_30 = arith.constant 0 : index
    %60 = vector.load %arg2[%c4, %c0_29, %c0_30] : memref<9x256x256xf32, #tpu.memory_space<vmem>>, vector<1x256x256xf32>
    %61 = vector.shape_cast %60 : vector<1x256x256xf32> to vector<256x256xf32>
    %cst_31 = arith.constant dense<0.000000e+00> : vector<256x256xf32>
    %62 = tpu.matmul %59, %61, %cst_31 {dimension_numbers = #tpu.dot_dimension_numbers<[1], [0], [0], [1], [0, 0, 1, 1], [], []>} : vector<256x256xf32>, vector<256x256xf32>, vector<256x256xf32> -> vector<256x256xf32>
    %63 = arith.addf %57, %62 : vector<256x256xf32>
    %c0_32 = arith.constant 0 : index
    %c33 = arith.constant 33 : index
    %c0_33 = arith.constant 0 : index
    %64 = vector.load %arg1[%c0_32, %c33, %c0_33] : memref<1x320x256xf32, #tpu.memory_space<vmem>>, vector<1x256x256xf32>
    %65 = vector.shape_cast %64 : vector<1x256x256xf32> to vector<256x256xf32>
    %cst_34 = arith.constant 0.000000e+00 : f32
    %66 = vector.shape_cast %20 : vector<256x1xi1> to vector<256x1xi1>
    %67 = vector.broadcast %66 : vector<256x1xi1> to vector<256x256xi1>
    %68 = vector.broadcast %cst_34 : f32 to vector<256x256xf32>
    %69 = arith.select %67, %68, %65 : vector<256x256xi1>, vector<256x256xf32>
    %c5 = arith.constant 5 : index
    %c0_35 = arith.constant 0 : index
    %c0_36 = arith.constant 0 : index
    %70 = vector.load %arg2[%c5, %c0_35, %c0_36] : memref<9x256x256xf32, #tpu.memory_space<vmem>>, vector<1x256x256xf32>
    %71 = vector.shape_cast %70 : vector<1x256x256xf32> to vector<256x256xf32>
    %cst_37 = arith.constant dense<0.000000e+00> : vector<256x256xf32>
    %72 = tpu.matmul %69, %71, %cst_37 {dimension_numbers = #tpu.dot_dimension_numbers<[1], [0], [0], [1], [0, 0, 1, 1], [], []>} : vector<256x256xf32>, vector<256x256xf32>, vector<256x256xf32> -> vector<256x256xf32>
    %73 = arith.addf %63, %72 : vector<256x256xf32>
    %c0_38 = arith.constant 0 : index
    %c47 = arith.constant 47 : index
    %c0_39 = arith.constant 0 : index
    %74 = vector.load %arg1[%c0_38, %c47, %c0_39] : memref<1x320x256xf32, #tpu.memory_space<vmem>>, vector<1x256x256xf32>
    %75 = vector.shape_cast %74 : vector<1x256x256xf32> to vector<256x256xf32>
    %cst_40 = arith.constant 0.000000e+00 : f32
    %76 = vector.shape_cast %18 : vector<256x1xi1> to vector<256x1xi1>
    %77 = vector.broadcast %76 : vector<256x1xi1> to vector<256x256xi1>
    %78 = vector.broadcast %cst_40 : f32 to vector<256x256xf32>
    %79 = arith.select %77, %78, %75 : vector<256x256xi1>, vector<256x256xf32>
    %c6 = arith.constant 6 : index
    %c0_41 = arith.constant 0 : index
    %c0_42 = arith.constant 0 : index
    %80 = vector.load %arg2[%c6, %c0_41, %c0_42] : memref<9x256x256xf32, #tpu.memory_space<vmem>>, vector<1x256x256xf32>
    %81 = vector.shape_cast %80 : vector<1x256x256xf32> to vector<256x256xf32>
    %cst_43 = arith.constant dense<0.000000e+00> : vector<256x256xf32>
    %82 = tpu.matmul %79, %81, %cst_43 {dimension_numbers = #tpu.dot_dimension_numbers<[1], [0], [0], [1], [0, 0, 1, 1], [], []>} : vector<256x256xf32>, vector<256x256xf32>, vector<256x256xf32> -> vector<256x256xf32>
    %83 = arith.addf %73, %82 : vector<256x256xf32>
    %c0_44 = arith.constant 0 : index
    %c48 = arith.constant 48 : index
    %c0_45 = arith.constant 0 : index
    %84 = vector.load %arg1[%c0_44, %c48, %c0_45] : memref<1x320x256xf32, #tpu.memory_space<vmem>>, vector<1x256x256xf32>
    %85 = vector.shape_cast %84 : vector<1x256x256xf32> to vector<256x256xf32>
    %c7 = arith.constant 7 : index
    %c0_46 = arith.constant 0 : index
    %c0_47 = arith.constant 0 : index
    %86 = vector.load %arg2[%c7, %c0_46, %c0_47] : memref<9x256x256xf32, #tpu.memory_space<vmem>>, vector<1x256x256xf32>
    %87 = vector.shape_cast %86 : vector<1x256x256xf32> to vector<256x256xf32>
    %cst_48 = arith.constant dense<0.000000e+00> : vector<256x256xf32>
    %88 = tpu.matmul %85, %87, %cst_48 {dimension_numbers = #tpu.dot_dimension_numbers<[1], [0], [0], [1], [0, 0, 1, 1], [], []>} : vector<256x256xf32>, vector<256x256xf32>, vector<256x256xf32> -> vector<256x256xf32>
    %89 = arith.addf %83, %88 : vector<256x256xf32>
    %c0_49 = arith.constant 0 : index
    %c49 = arith.constant 49 : index
    %c0_50 = arith.constant 0 : index
    %90 = vector.load %arg1[%c0_49, %c49, %c0_50] : memref<1x320x256xf32, #tpu.memory_space<vmem>>, vector<1x256x256xf32>
    %91 = vector.shape_cast %90 : vector<1x256x256xf32> to vector<256x256xf32>
    %cst_51 = arith.constant 0.000000e+00 : f32
    %92 = vector.shape_cast %20 : vector<256x1xi1> to vector<256x1xi1>
    %93 = vector.broadcast %92 : vector<256x1xi1> to vector<256x256xi1>
    %94 = vector.broadcast %cst_51 : f32 to vector<256x256xf32>
    %95 = arith.select %93, %94, %91 : vector<256x256xi1>, vector<256x256xf32>
    %c8 = arith.constant 8 : index
    %c0_52 = arith.constant 0 : index
    %c0_53 = arith.constant 0 : index
    %96 = vector.load %arg2[%c8, %c0_52, %c0_53] : memref<9x256x256xf32, #tpu.memory_space<vmem>>, vector<1x256x256xf32>
    %97 = vector.shape_cast %96 : vector<1x256x256xf32> to vector<256x256xf32>
    %cst_54 = arith.constant dense<0.000000e+00> : vector<256x256xf32>
    %98 = tpu.matmul %95, %97, %cst_54 {dimension_numbers = #tpu.dot_dimension_numbers<[1], [0], [0], [1], [0, 0, 1, 1], [], []>} : vector<256x256xf32>, vector<256x256xf32>, vector<256x256xf32> -> vector<256x256xf32>
    %99 = arith.addf %89, %98 : vector<256x256xf32>
    %c0_55 = arith.constant 0 : index
    %c0_56 = arith.constant 0 : index
    %100 = vector.load %arg3[%c0_55, %c0_56] : memref<1x256xf32, #tpu.memory_space<vmem>>, vector<1x256xf32>
    %101 = vector.broadcast %100 : vector<1x256xf32> to vector<256x256xf32>
    %102 = arith.addf %99, %101 : vector<256x256xf32>
    %cst_57 = arith.constant 0.000000e+00 : f32
    %103 = vector.broadcast %cst_57 : f32 to vector<256x256xf32>
    %104 = arith.maximumf %102, %103 : vector<256x256xf32>
    %c0_58 = arith.constant 0 : index
    %c0_59 = arith.constant 0 : index
    %105 = vector.load %arg4[%c0_58, %c0_59] : memref<256x6xf32, #tpu.memory_space<vmem>>, vector<256x6xf32>
    %cst_60 = arith.constant dense<0.000000e+00> : vector<256x6xf32>
    %106 = tpu.matmul %104, %105, %cst_60 {dimension_numbers = #tpu.dot_dimension_numbers<[1], [0], [0], [1], [0, 0, 1, 1], [], []>} : vector<256x256xf32>, vector<256x6xf32>, vector<256x6xf32> -> vector<256x6xf32>
    %c0_61 = arith.constant 0 : index
    %c0_62 = arith.constant 0 : index
    %107 = vector.load %arg5[%c0_61, %c0_62] : memref<1x6xf32, #tpu.memory_space<vmem>>, vector<1x6xf32>
    %108 = vector.broadcast %107 : vector<1x6xf32> to vector<256x6xf32>
    %109 = arith.addf %106, %108 : vector<256x6xf32>
    %cst_63 = arith.constant 0.000000e+00 : f32
    %110 = vector.broadcast %cst_63 : f32 to vector<256x6xf32>
    %111 = arith.subf %110, %109 : vector<256x6xf32>
    %112 = math.exp %111 : vector<256x6xf32>
    %cst_64 = arith.constant 1.000000e+00 : f32
    %113 = vector.broadcast %cst_64 : f32 to vector<256x6xf32>
    %114 = arith.addf %113, %112 : vector<256x6xf32>
    %cst_65 = arith.constant 1.000000e+00 : f32
    %115 = vector.broadcast %cst_65 : f32 to vector<256x6xf32>
    %116 = arith.divf %115, %114 : vector<256x6xf32>
    %117 = tpu.iota {dimensions = array<i32: 1>} : vector<256x6xi32>
    %c5_i32 = arith.constant 5 : i32
    %118 = vector.broadcast %c5_i32 : i32 to vector<256x6xi32>
    %119 = arith.cmpi eq, %117, %118 : vector<256x6xi32>
    %cst_66 = arith.constant 5.000000e-01 : f32
    %120 = vector.broadcast %cst_66 : f32 to vector<256x6xf32>
    %121 = arith.subf %116, %120 : vector<256x6xf32>
    %cst_67 = arith.constant 3.14159274 : f32
    %122 = vector.broadcast %cst_67 : f32 to vector<256x6xf32>
    %123 = arith.mulf %121, %122 : vector<256x6xf32>
    %124 = arith.select %119, %123, %116 : vector<256x6xi1>, vector<256x6xf32>
    %c0_68 = arith.constant 0 : index
    %c0_69 = arith.constant 0 : index
    %c0_70 = arith.constant 0 : index
    %125 = vector.load %arg6[%c0_68, %c0_69, %c0_70] : memref<1x256x6xf32, #tpu.memory_space<vmem>>, vector<1x256x6xf32>
    %126 = vector.shape_cast %125 : vector<1x256x6xf32> to vector<256x6xf32>
    %127 = vector.shape_cast %124 : vector<256x6xf32> to vector<1x256x6xf32>
    tpu.vector_store %arg6[%c0_68, %c0_69, %c0_70], %127 {strides = array<i32>} : memref<1x256x6xf32, #tpu.memory_space<vmem>>, vector<1x256x6xf32>,
    return
  }
  func.func @transform_0(%arg0: i32) -> (i32, i32, i32) {
    %c0_i32 = arith.constant 0 : i32
    %c0_i32_0 = arith.constant 0 : i32
    %c0_i32_1 = arith.constant 0 : i32
    return %arg0, %c0_i32, %c0_i32_0 : i32, i32, i32
  }
  func.func @transform_1(%arg0: i32) -> (i32, i32, i32) {
    %c0_i32 = arith.constant 0 : i32
    %c0_i32_0 = arith.constant 0 : i32
    %c0_i32_1 = arith.constant 0 : i32
    %c0_i32_2 = arith.constant 0 : i32
    return %c0_i32, %c0_i32_0, %c0_i32_1 : i32, i32, i32
  }
  func.func @transform_2(%arg0: i32) -> (i32, i32) {
    %c0_i32 = arith.constant 0 : i32
    %c0_i32_0 = arith.constant 0 : i32
    %c0_i32_1 = arith.constant 0 : i32
    return %c0_i32, %c0_i32_0 : i32, i32
  }
  func.func @transform_3(%arg0: i32) -> (i32, i32) {
    %c0_i32 = arith.constant 0 : i32
    %c0_i32_0 = arith.constant 0 : i32
    %c0_i32_1 = arith.constant 0 : i32
    return %c0_i32, %c0_i32_0 : i32, i32
  }
  func.func @transform_4(%arg0: i32) -> (i32, i32) {
    %c0_i32 = arith.constant 0 : i32
    %c0_i32_0 = arith.constant 0 : i32
    %c0_i32_1 = arith.constant 0 : i32
    return %c0_i32, %c0_i32_0 : i32, i32
  }
  func.func @transform_5(%arg0: i32) -> (i32, i32, i32) {
    %c0_i32 = arith.constant 0 : i32
    %c0_i32_0 = arith.constant 0 : i32
    %c0_i32_1 = arith.constant 0 : i32
    return %arg0, %c0_i32, %c0_i32_0 : i32, i32, i32
  }
}

</mosaic_0001>

<llo_original>
// kernel: tpu_custom_call.1
$region0: #{tpu_custom_call.1}
  #allocation0 [shape = 'u32[]', space=smem, size = 0x4, offset = 0x4, fixed_abs, tag = 'smem constant byte address 0x4 - core index']
  #allocation1 [shape = 'u32[144,128]{1,0:T(1,128)}', space=vmem, size = 0x12000, scoped, tag = 'internal scratch']
  %s0 = inlined_call_operand.hbm [shape: f32[2,320,256], index: 0, kind: input, shape index: {}]
  %s1 = inlined_call_operand.hbm [shape: f32[9,256,256], index: 1, kind: input, shape index: {}]
  %s2 = inlined_call_operand.hbm [shape: f32[1,256], index: 2, kind: input, shape index: {}]
  %s3 = inlined_call_operand.vmem [shape: f32[256,6], index: 3, kind: input, shape index: {}]
  %s4 = inlined_call_operand.hbm [shape: f32[1,6], index: 4, kind: input, shape index: {}]
  %s5 = inlined_call_operand.vmem [shape: f32[2,256,6], index: 5, kind: output, shape index: {}]
  %s6 = sld [smem:[#allocation0]]
  $region69: #{tpu_custom_call.1} parent=0
    _
  %s8 = ssub.s32 1, %s6
  %s9 = scalar_select 0, %s8, %s6
  $region1: #{tpu_custom_call.1} parent=0
    #allocation2 [shape = 'u8[655360]{0}', space=vmem, size = 0xa0000, scoped, tag = 'input window, operand 0']
    #allocation3 [shape = 's32[2]{0}', space=sflag, size = 0x8, scoped, tag = 'scoped memory for tpu_custom_call.1']
    #allocation4 [shape = 'u8[2359296]{0}', space=vmem, size = 0x240000, scoped, tag = 'input window, operand 1, single buffered']
    #allocation5 [shape = 's32[1]{0}', space=sflag, size = 0x4, scoped, tag = 'scoped memory for tpu_custom_call.1']
    #allocation6 [shape = 'u8[1024]{0}', space=vmem, size = 0x400, scoped, tag = 'input window, operand 2, single buffered']
    #allocation7 [shape = 'u8[512]{0}', space=vmem, size = 0x400, scoped, tag = 'input window, operand 4, single buffered']
    #allocation8 [shape = 's32[1]{0}', space=sflag, size = 0x4, scoped, tag = 'scoped memory for tpu_custom_call.1']
    %10 = vsyncpa [#allocation3], 0
    %s11 = scalar_lea.sflag [#allocation3], 1
    %12 = vsyncpa %s11, 0
    %13 = vsyncpa [#allocation5], 0
    %14 = vsyncpa [#allocation8], 0
    loop: start=0, step=1, limit=4
    $region2: #{tpu_custom_call.1} parent=1 // loop_pre_header
      _
    $region3: #{tpu_custom_call.1} parent=1 // loop_header
      %s16 = sphi 0, %s20
      %p17 = scmp.ge.s32.totalorder %s16, 4
      %s26 = sphi 0, %s28
      %s29 = sphi 0, %s26
      %s30 = sphi 0, %s29
      %s46 = sphi 0, %s30
      %s50 = sphi 0, %s50
      %s52 = sphi 0, %s50
      %s53 = sphi 0, %s52
      %s67 = sphi 0, %s53
      %s71 = sphi 0, %s71
      %s73 = sphi 0, %s71
      %s74 = sphi 0, %s73
      %s88 = sphi 0, %s74
      %s92 = sphi 0, %s92
      %s94 = sphi 0, %s92
      %s95 = sphi 0, %s94
      %s109 = sphi 0, %s95
      %s113 = sphi 0, %s113
      %s115 = sphi 0, %s113
      %s116 = sphi 0, %s115
      %s130 = sphi 0, %s116
      %s136 = sphi 0, %s138
      %s139 = sphi 0, %s136
      %s140 = sphi 0, %s139
      %s156 = sphi 0, %s140
    $region4: #{tpu_custom_call.1} parent=1 // loop_header_branch
      %19 = sbr.rel (%p17) target = $region8
    $region5: #{tpu_custom_call.1} parent=1 // loop_body
      %s21 = ssub.s32 %s16, 1
      %s22 = ssub.s32 %s16, 2
      %s23 = sadd.s32 %s16, 1
      %s24 = ssub.s32 %s16, %s23
      %p25 = scmp.eq.s32.totalorder %s24, 0
      %s27 = sadd.s32 %s26, 1
      %s28 = scalar_select %p25, %s26, %s27
      %p31 = pneg %p25
      %p32 = scmp.eq.s32.totalorder %s16, 1
      %p33 = por %p31, %p32
      %p34 = scmp.ne.s32.totalorder %s26, %s29
      %p35 = scmp.eq.s32.totalorder %s16, 0
      %p36 = por %p34, %p35
      %p37 = scmp.ne.s32.totalorder %s26, %s29
      %p38 = scmp.eq.s32.totalorder %s21, 1
      %p39 = por %p37, %p38
      %p40 = scmp.ne.s32.totalorder %s29, %s30
      %p41 = scmp.eq.s32.totalorder %s21, 0
      %p42 = por %p40, %p41
      %p43 = scmp.ne.s32.totalorder %s29, %s30
      %p44 = scmp.eq.s32.totalorder %s22, 1
      %p45 = por %p43, %p44
      %p47 = scmp.ne.s32.totalorder %s30, %s46
      %p48 = scmp.eq.s32.totalorder %s22, 0
      %p49 = por %p47, %p48
      %s51 = sadd.s32 %s50, 1
      %p54 = scmp.eq.s32.totalorder %s16, 1
      %p55 = scmp.ne.s32.totalorder %s50, %s52
      %p56 = scmp.eq.s32.totalorder %s16, 0
      %p57 = por %p55, %p56
      %p58 = scmp.ne.s32.totalorder %s50, %s52
      %p59 = scmp.eq.s32.totalorder %s21, 1
      %p60 = por %p58, %p59
      %p61 = scmp.ne.s32.totalorder %s52, %s53
      %p62 = scmp.eq.s32.totalorder %s21, 0
      %p63 = por %p61, %p62
      %p64 = scmp.ne.s32.totalorder %s52, %s53
      %p65 = scmp.eq.s32.totalorder %s22, 1
      %p66 = por %p64, %p65
      %p68 = scmp.ne.s32.totalorder %s53, %s67
      %p69 = scmp.eq.s32.totalorder %s22, 0
      %p70 = por %p68, %p69
      %s72 = sadd.s32 %s71, 1
      %p75 = scmp.eq.s32.totalorder %s16, 1
      %p76 = scmp.ne.s32.totalorder %s71, %s73
      %p77 = scmp.eq.s32.totalorder %s16, 0
      %p78 = por %p76, %p77
      %p79 = scmp.ne.s32.totalorder %s71, %s73
      %p80 = scmp.eq.s32.totalorder %s21, 1
      %p81 = por %p79, %p80
      %p82 = scmp.ne.s32.totalorder %s73, %s74
      %p83 = scmp.eq.s32.totalorder %s21, 0
      %p84 = por %p82, %p83
      %p85 = scmp.ne.s32.totalorder %s73, %s74
      %p86 = scmp.eq.s32.totalorder %s22, 1
      %p87 = por %p85, %p86
      %p89 = scmp.ne.s32.totalorder %s74, %s88
      %p90 = scmp.eq.s32.totalorder %s22, 0
      %p91 = por %p89, %p90
      %s93 = sadd.s32 %s92, 1
      %p96 = scmp.eq.s32.totalorder %s16, 1
      %p97 = scmp.ne.s32.totalorder %s92, %s94
      %p98 = scmp.eq.s32.totalorder %s16, 0
      %p99 = por %p97, %p98
      %p100 = scmp.ne.s32.totalorder %s92, %s94
      %p101 = scmp.eq.s32.totalorder %s21, 1
      %p102 = por %p100, %p101
      %p103 = scmp.ne.s32.totalorder %s94, %s95
      %p104 = scmp.eq.s32.totalorder %s21, 0
      %p105 = por %p103, %p104
      %p106 = scmp.ne.s32.totalorder %s94, %s95
      %p107 = scmp.eq.s32.totalorder %s22, 1
      %p108 = por %p106, %p107
      %p110 = scmp.ne.s32.totalorder %s95, %s109
      %p111 = scmp.eq.s32.totalorder %s22, 0
      %p112 = por %p110, %p111
      %s114 = sadd.s32 %s113, 1
      %p117 = scmp.eq.s32.totalorder %s16, 1
      %p118 = scmp.ne.s32.totalorder %s113, %s115
      %p119 = scmp.eq.s32.totalorder %s16, 0
      %p120 = por %p118, %p119
      %p121 = scmp.ne.s32.totalorder %s113, %s115
      %p122 = scmp.eq.s32.totalorder %s21, 1
      %p123 = por %p121, %p122
      %p124 = scmp.ne.s32.totalorder %s115, %s116
      %p125 = scmp.eq.s32.totalorder %s21, 0
      %p126 = por %p124, %p125
      %p127 = scmp.ne.s32.totalorder %s115, %s116
      %p128 = scmp.eq.s32.totalorder %s22, 1
      %p129 = por %p127, %p128
      %p131 = scmp.ne.s32.totalorder %s116, %s130
      %p132 = scmp.eq.s32.totalorder %s22, 0
      %p133 = por %p131, %p132
      %s134 = ssub.s32 %s16, %s23
      %p135 = scmp.eq.s32.totalorder %s134, 0
      %s137 = sadd.s32 %s136, 1
      %s138 = scalar_select %p135, %s136, %s137
      %p141 = pneg %p135
      %p142 = scmp.eq.s32.totalorder %s16, 1
      %p143 = por %p141, %p142
      %p144 = scmp.ne.s32.totalorder %s136, %s139
      %p145 = scmp.eq.s32.totalorder %s16, 0
      %p146 = por %p144, %p145
      %p147 = scmp.ne.s32.totalorder %s136, %s139
      %p148 = scmp.eq.s32.totalorder %s21, 1
      %p149 = por %p147, %p148
      %p150 = scmp.ne.s32.totalorder %s139, %s140
      %p151 = scmp.eq.s32.totalorder %s21, 0
      %p152 = por %p150, %p151
      %p153 = scmp.ne.s32.totalorder %s139, %s140
      %p154 = scmp.eq.s32.totalorder %s22, 1
      %p155 = por %p153, %p154
      %p157 = scmp.ne.s32.totalorder %s140, %s156
      %p158 = scmp.eq.s32.totalorder %s22, 0
      %p159 = por %p157, %p158
      %p160 = scmp.le.s32.totalorder 1, %s16
      %p161 = scmp.lt.s32.totalorder %s16, 3
      %p162 = pnand %p160, %p161
      %p163 = pneg %p162
      // Predicated region
      $region9: #{tpu_custom_call.1} parent=5 // pred_check
        _
      $region10: #{tpu_custom_call.1} parent=5 // pred_check_branch
        %165 = sbr.rel (%p162) target = $region12
      $region11: #{tpu_custom_call.1} parent=5 // pred_region
        %s166 = ssub.s32 %s16, 1
        // Predicated region
        $region13: #{tpu_custom_call.1} parent=11 // pred_check
          %p167 = pneg %p63
        $region14: #{tpu_custom_call.1} parent=11 // pred_check_branch
          %169 = sbr.rel (%p167) target = $region16
        $region15: #{tpu_custom_call.1} parent=11 // pred_region
          %s171 = ssub.s32 73728, 73728
          %172 = vsyncadd [#allocation5], %s171
          %s173 = sshll.u32 [#allocation4], 4
          %s174 = int_to_ptr.vmem [resolvable:$true] %s173
          %179 = dma.hbm_to_vmem [thread:$0]  %s1, 73728, %s174, [#allocation5], 256, 256, 16
        $region16: #{tpu_custom_call.1} parent=11 // pred_fallthru
          _
        // Predicated region
        $region17: #{tpu_custom_call.1} parent=11 // pred_check
          %p180 = pneg %p84
        $region18: #{tpu_custom_call.1} parent=11 // pred_check_branch
          %182 = sbr.rel (%p180) target = $region20
        $region19: #{tpu_custom_call.1} parent=11 // pred_region
          %s184 = ssub.s32 32, 32
          %185 = vsyncadd [#allocation5], %s184
          %s187 = sshll.u32 [#allocation6], 4
          %s188 = int_to_ptr.vmem [resolvable:$true] %s187
          %190 = dma.hbm_to_vmem [thread:$0]  %s2, 32, %s188, [#allocation5]
        $region20: #{tpu_custom_call.1} parent=11 // pred_fallthru
          _
        // Predicated region
        $region21: #{tpu_custom_call.1} parent=11 // pred_check
          %p191 = pneg %p105
        $region22: #{tpu_custom_call.1} parent=11 // pred_check_branch
          %193 = sbr.rel (%p191) target = $region24
        $region23: #{tpu_custom_call.1} parent=11 // pred_region
          _
        $region24: #{tpu_custom_call.1} parent=11 // pred_fallthru
          _
        // Predicated region
        $region25: #{tpu_custom_call.1} parent=11 // pred_check
          %p194 = pneg %p126
        $region26: #{tpu_custom_call.1} parent=11 // pred_check_branch
          %196 = sbr.rel (%p194) target = $region28
        $region27: #{tpu_custom_call.1} parent=11 // pred_region
          %s198 = ssub.s32 16, 16
          %199 = vsyncadd [#allocation8], %s198
          %s201 = sshll.u32 [#allocation7], 4
          %s202 = int_to_ptr.vmem [resolvable:$true] %s201
          %204 = dma.hbm_to_vmem [thread:$0]  %s4, 16, %s202, [#allocation8]
        $region28: #{tpu_custom_call.1} parent=11 // pred_fallthru
          _
      $region12: #{tpu_custom_call.1} parent=5 // pred_fallthru
        _
      %p205 = scmp.lt.s32.totalorder %s16, 2
      // Predicated region
      $region29: #{tpu_custom_call.1} parent=5 // pred_check
        %p206 = pneg %p205
      $region30: #{tpu_custom_call.1} parent=5 // pred_check_branch
        %208 = sbr.rel (%p206) target = $region32
      $region31: #{tpu_custom_call.1} parent=5 // pred_region
        // Predicated region
        $region33: #{tpu_custom_call.1} parent=31 // pred_check
          %p209 = pneg %p36
        $region34: #{tpu_custom_call.1} parent=31 // pred_check_branch
          %211 = sbr.rel (%p209) target = $region36
        $region35: #{tpu_custom_call.1} parent=31 // pred_region
          %s212 = sand.u32 %s26, 1
          %s213 = scalar_lea.sflag [#allocation3], %s212
          %s214 = sand.u32 %s26, 1
          %s215 = smul.addr %s214, 640
          %s216 = scalar_lea.vmem [#allocation2], %s215
          %s218 = ssub.s32 10240, 10240
          %219 = vsyncadd %s213, %s218
          %s220 = smul.addr %s16, 80
          %s221 = smul.addr %s220, 128
          %s222 = scalar_lea.hbm %s0, %s221
          %s223 = sshll.u32 %s216, 4
          %s224 = int_to_ptr.vmem [resolvable:$true] %s223
          %229 = dma.hbm_to_vmem [thread:$0]  %s222, 10240, %s224, %s213, 256, 256, 16
        $region36: #{tpu_custom_call.1} parent=31 // pred_fallthru
          _
      $region32: #{tpu_custom_call.1} parent=5 // pred_fallthru
        _
      %p230 = scmp.le.s32.totalorder 1, %s16
      %p231 = scmp.lt.s32.totalorder %s16, 3
      %p232 = pnand %p230, %p231
      %p233 = pneg %p232
      // Predicated region
      $region37: #{tpu_custom_call.1} parent=5 // pred_check
        _
      $region38: #{tpu_custom_call.1} parent=5 // pred_check_branch
        %235 = sbr.rel (%p232) target = $region40
      $region39: #{tpu_custom_call.1} parent=5 // pred_region
        %s236 = ssub.s32 %s16, 1
        %s237 = sand.u32 %s29, 1
        %s238 = scalar_lea.sflag [#allocation3], %s237
        %s239 = sand.u32 %s29, 1
        %s240 = smul.addr %s239, 640
        %s241 = scalar_lea.vmem [#allocation2], %s240
        // Predicated region
        $region41: #{tpu_custom_call.1} parent=39 // pred_check
          %p242 = pneg %p42
        $region42: #{tpu_custom_call.1} parent=39 // pred_check_branch
          %244 = sbr.rel (%p242) target = $region44
        $region43: #{tpu_custom_call.1} parent=39 // pred_region
          %245 = dma.done %s238, 10240
        $region44: #{tpu_custom_call.1} parent=39 // pred_fallthru
          _
        // Predicated region
        $region45: #{tpu_custom_call.1} parent=39 // pred_check
          %p246 = pneg %p63
        $region46: #{tpu_custom_call.1} parent=39 // pred_check_branch
          %248 = sbr.rel (%p246) target = $region48
        $region47: #{tpu_custom_call.1} parent=39 // pred_region
          %249 = dma.done [#allocation5], 73728
        $region48: #{tpu_custom_call.1} parent=39 // pred_fallthru
          _
        // Predicated region
        $region49: #{tpu_custom_call.1} parent=39 // pred_check
          %p250 = pneg %p84
        $region50: #{tpu_custom_call.1} parent=39 // pred_check_branch
          %252 = sbr.rel (%p250) target = $region52
        $region51: #{tpu_custom_call.1} parent=39 // pred_region
          %253 = dma.done [#allocation5], 32
        $region52: #{tpu_custom_call.1} parent=39 // pred_fallthru
          _
        // Predicated region
        $region53: #{tpu_custom_call.1} parent=39 // pred_check
          %p254 = pneg %p126
        $region54: #{tpu_custom_call.1} parent=39 // pred_check_branch
          %256 = sbr.rel (%p254) target = $region56
        $region55: #{tpu_custom_call.1} parent=39 // pred_region
          %257 = dma.done [#allocation8], 16
        $region56: #{tpu_custom_call.1} parent=39 // pred_fallthru
          _
        %s258 = sand.u32 %s29, 1
        %s259 = scalar_lea.sflag [#allocation3], %s258
        %s260 = sand.u32 %s29, 1
        %s261 = smul.addr %s260, 640
        %s262 = scalar_lea.vmem [#allocation2], %s261
        %p263 = pneg %p42
        %p264 = pneg %p39
        %p265 = pneg %p63
        %p266 = pneg %p60
        %p267 = pneg %p84
        %p268 = pneg %p81
        %p269 = pneg %p105
        %p270 = pneg %p102
        %p271 = pneg %p126
        %p272 = pneg %p123
        %p273 = pneg %p152
        %p274 = pneg %p149
        %p275 = scmp.lt.s32.totalorder %s21, 1
        %s276 = scalar_select %p275, %s21, 1
        %s277 = smul.addr %s276, 32
        %s278 = smul.addr %s277, 8
        %s279 = scalar_lea.vmem %s5, %s278
        %p280 = scmp.lt.s32.totalorder %s21, 1
        %s281 = scalar_select %p280, %s21, 1
        %s282 = smul.addr %s281, 32
        %s283 = smul.addr %s282, 8
        %s284 = scalar_lea.vmem %s5, %s283
        %v285 = vlaneseq
        %v286 = vshrl.u32 %v285, 7
        %v287 = vadd.s32 %v286, 8
        %v288 = vadd.s32 %v286, 16
        %v289 = vadd.s32 %v286, 24
        %v290 = vadd.s32 %v286, 32
        %v291 = vadd.s32 %v286, 40
        %v292 = vadd.s32 %v286, 48
        %v293 = vadd.s32 %v286, 56
        %v294 = vadd.s32 %v286, 64
        %v295 = vadd.s32 %v286, 72
        %v296 = vadd.s32 %v286, 80
        %v297 = vadd.s32 %v286, 88
        %v298 = vadd.s32 %v286, 96
        %v299 = vadd.s32 %v286, 104
        %v300 = vadd.s32 %v286, 112
        %v301 = vadd.s32 %v286, 120
        %v302 = vadd.s32 %v286, 128
        %v303 = vadd.s32 %v286, 136
        %v304 = vadd.s32 %v286, 144
        %v305 = vadd.s32 %v286, 152
        %v306 = vadd.s32 %v286, 160
        %v307 = vadd.s32 %v286, 168
        %v308 = vadd.s32 %v286, 176
        %v309 = vadd.s32 %v286, 184
        %v310 = vadd.s32 %v286, 192
        %v311 = vadd.s32 %v286, 200
        %v312 = vadd.s32 %v286, 208
        %v313 = vadd.s32 %v286, 216
        %v314 = vadd.s32 %v286, 224
        %v315 = vadd.s32 %v286, 232
        %v316 = vadd.s32 %v286, 240
        %v317 = vadd.s32 %v286, 248
        %vm318 = vcmp.lt.s32.totalorder %v286, 0
        %v319 = vsub.s32 0, %v286
        %v320 = vsel %vm318, %v319, %v286
        %v321 = vshrl.u32 %v320, 4
        %v322 = vand.u32 %v320, 15
        %v323 = vsub.s32 0, %v322
        %v324 = vsel %vm318, %v323, %v322
        %vm325 = vcmp.lt.s32.totalorder %v287, 0
        %v326 = vsub.s32 0, %v287
        %v327 = vsel %vm325, %v326, %v287
        %v328 = vshrl.u32 %v327, 4
        %v329 = vand.u32 %v327, 15
        %v330 = vsub.s32 0, %v329
        %v331 = vsel %vm325, %v330, %v329
        %vm332 = vcmp.lt.s32.totalorder %v288, 0
        %v333 = vsub.s32 0, %v288
        %v334 = vsel %vm332, %v333, %v288
        %v335 = vshrl.u32 %v334, 4
        %v336 = vand.u32 %v334, 15
        %v337 = vsub.s32 0, %v336
        %v338 = vsel %vm332, %v337, %v336
        %vm339 = vcmp.lt.s32.totalorder %v289, 0
        %v340 = vsub.s32 0, %v289
        %v341 = vsel %vm339, %v340, %v289
        %v342 = vshrl.u32 %v341, 4
        %v343 = vand.u32 %v341, 15
        %v344 = vsub.s32 0, %v343
        %v345 = vsel %vm339, %v344, %v343
        %vm346 = vcmp.lt.s32.totalorder %v290, 0
        %v347 = vsub.s32 0, %v290
        %v348 = vsel %vm346, %v347, %v290
        %v349 = vshrl.u32 %v348, 4
        %v350 = vand.u32 %v348, 15
        %v351 = vsub.s32 0, %v350
        %v352 = vsel %vm346, %v351, %v350
        %vm353 = vcmp.lt.s32.totalorder %v291, 0
        %v354 = vsub.s32 0, %v291
        %v355 = vsel %vm353, %v354, %v291
        %v356 = vshrl.u32 %v355, 4
        %v357 = vand.u32 %v355, 15
        %v358 = vsub.s32 0, %v357
        %v359 = vsel %vm353, %v358, %v357
        %vm360 = vcmp.lt.s32.totalorder %v292, 0
        %v361 = vsub.s32 0, %v292
        %v362 = vsel %vm360, %v361, %v292
        %v363 = vshrl.u32 %v362, 4
        %v364 = vand.u32 %v362, 15
        %v365 = vsub.s32 0, %v364
        %v366 = vsel %vm360, %v365, %v364
        %vm367 = vcmp.lt.s32.totalorder %v293, 0
        %v368 = vsub.s32 0, %v293
        %v369 = vsel %vm367, %v368, %v293
        %v370 = vshrl.u32 %v369, 4
        %v371 = vand.u32 %v369, 15
        %v372 = vsub.s32 0, %v371
        %v373 = vsel %vm367, %v372, %v371
        %vm374 = vcmp.lt.s32.totalorder %v294, 0
        %v375 = vsub.s32 0, %v294
        %v376 = vsel %vm374, %v375, %v294
        %v377 = vshrl.u32 %v376, 4
        %v378 = vand.u32 %v376, 15
        %v379 = vsub.s32 0, %v378
        %v380 = vsel %vm374, %v379, %v378
        %vm381 = vcmp.lt.s32.totalorder %v295, 0
        %v382 = vsub.s32 0, %v295
        %v383 = vsel %vm381, %v382, %v295
        %v384 = vshrl.u32 %v383, 4
        %v385 = vand.u32 %v383, 15
        %v386 = vsub.s32 0, %v385
        %v387 = vsel %vm381, %v386, %v385
        %vm388 = vcmp.lt.s32.totalorder %v296, 0
        %v389 = vsub.s32 0, %v296
        %v390 = vsel %vm388, %v389, %v296
        %v391 = vshrl.u32 %v390, 4
        %v392 = vand.u32 %v390, 15
        %v393 = vsub.s32 0, %v392
        %v394 = vsel %vm388, %v393, %v392
        %vm395 = vcmp.lt.s32.totalorder %v297, 0
        %v396 = vsub.s32 0, %v297
        %v397 = vsel %vm395, %v396, %v297
        %v398 = vshrl.u32 %v397, 4
        %v399 = vand.u32 %v397, 15
        %v400 = vsub.s32 0, %v399
        %v401 = vsel %vm395, %v400, %v399
        %vm402 = vcmp.lt.s32.totalorder %v298, 0
        %v403 = vsub.s32 0, %v298
        %v404 = vsel %vm402, %v403, %v298
        %v405 = vshrl.u32 %v404, 4
        %v406 = vand.u32 %v404, 15
        %v407 = vsub.s32 0, %v406
        %v408 = vsel %vm402, %v407, %v406
        %vm409 = vcmp.lt.s32.totalorder %v299, 0
        %v410 = vsub.s32 0, %v299
        %v411 = vsel %vm409, %v410, %v299
        %v412 = vshrl.u32 %v411, 4
        %v413 = vand.u32 %v411, 15
        %v414 = vsub.s32 0, %v413
        %v415 = vsel %vm409, %v414, %v413
        %vm416 = vcmp.lt.s32.totalorder %v300, 0
        %v417 = vsub.s32 0, %v300
        %v418 = vsel %vm416, %v417, %v300
        %v419 = vshrl.u32 %v418, 4
        %v420 = vand.u32 %v418, 15
        %v421 = vsub.s32 0, %v420
        %v422 = vsel %vm416, %v421, %v420
        %vm423 = vcmp.lt.s32.totalorder %v301, 0
        %v424 = vsub.s32 0, %v301
        %v425 = vsel %vm423, %v424, %v301
        %v426 = vshrl.u32 %v425, 4
        %v427 = vand.u32 %v425, 15
        %v428 = vsub.s32 0, %v427
        %v429 = vsel %vm423, %v428, %v427
        %vm430 = vcmp.lt.s32.totalorder %v302, 0
        %v431 = vsub.s32 0, %v302
        %v432 = vsel %vm430, %v431, %v302
        %v433 = vshrl.u32 %v432, 4
        %v434 = vand.u32 %v432, 15
        %v435 = vsub.s32 0, %v434
        %v436 = vsel %vm430, %v435, %v434
        %vm437 = vcmp.lt.s32.totalorder %v303, 0
        %v438 = vsub.s32 0, %v303
        %v439 = vsel %vm437, %v438, %v303
        %v440 = vshrl.u32 %v439, 4
        %v441 = vand.u32 %v439, 15
        %v442 = vsub.s32 0, %v441
        %v443 = vsel %vm437, %v442, %v441
        %vm444 = vcmp.lt.s32.totalorder %v304, 0
        %v445 = vsub.s32 0, %v304
        %v446 = vsel %vm444, %v445, %v304
        %v447 = vshrl.u32 %v446, 4
        %v448 = vand.u32 %v446, 15
        %v449 = vsub.s32 0, %v448
        %v450 = vsel %vm444, %v449, %v448
        %vm451 = vcmp.lt.s32.totalorder %v305, 0
        %v452 = vsub.s32 0, %v305
        %v453 = vsel %vm451, %v452, %v305
        %v454 = vshrl.u32 %v453, 4
        %v455 = vand.u32 %v453, 15
        %v456 = vsub.s32 0, %v455
        %v457 = vsel %vm451, %v456, %v455
        %vm458 = vcmp.lt.s32.totalorder %v306, 0
        %v459 = vsub.s32 0, %v306
        %v460 = vsel %vm458, %v459, %v306
        %v461 = vshrl.u32 %v460, 4
        %v462 = vand.u32 %v460, 15
        %v463 = vsub.s32 0, %v462
        %v464 = vsel %vm458, %v463, %v462
        %vm465 = vcmp.lt.s32.totalorder %v307, 0
        %v466 = vsub.s32 0, %v307
        %v467 = vsel %vm465, %v466, %v307
        %v468 = vshrl.u32 %v467, 4
        %v469 = vand.u32 %v467, 15
        %v470 = vsub.s32 0, %v469
        %v471 = vsel %vm465, %v470, %v469
        %vm472 = vcmp.lt.s32.totalorder %v308, 0
        %v473 = vsub.s32 0, %v308
        %v474 = vsel %vm472, %v473, %v308
        %v475 = vshrl.u32 %v474, 4
        %v476 = vand.u32 %v474, 15
        %v477 = vsub.s32 0, %v476
        %v478 = vsel %vm472, %v477, %v476
        %vm479 = vcmp.lt.s32.totalorder %v309, 0
        %v480 = vsub.s32 0, %v309
        %v481 = vsel %vm479, %v480, %v309
        %v482 = vshrl.u32 %v481, 4
        %v483 = vand.u32 %v481, 15
        %v484 = vsub.s32 0, %v483
        %v485 = vsel %vm479, %v484, %v483
        %vm486 = vcmp.lt.s32.totalorder %v310, 0
        %v487 = vsub.s32 0, %v310
        %v488 = vsel %vm486, %v487, %v310
        %v489 = vshrl.u32 %v488, 4
        %v490 = vand.u32 %v488, 15
        %v491 = vsub.s32 0, %v490
        %v492 = vsel %vm486, %v491, %v490
        %vm493 = vcmp.lt.s32.totalorder %v311, 0
        %v494 = vsub.s32 0, %v311
        %v495 = vsel %vm493, %v494, %v311
        %v496 = vshrl.u32 %v495, 4
        %v497 = vand.u32 %v495, 15
        %v498 = vsub.s32 0, %v497
        %v499 = vsel %vm493, %v498, %v497
        %vm500 = vcmp.lt.s32.totalorder %v312, 0
        %v501 = vsub.s32 0, %v312
        %v502 = vsel %vm500, %v501, %v312
        %v503 = vshrl.u32 %v502, 4
        %v504 = vand.u32 %v502, 15
        %v505 = vsub.s32 0, %v504
        %v506 = vsel %vm500, %v505, %v504
        %vm507 = vcmp.lt.s32.totalorder %v313, 0
        %v508 = vsub.s32 0, %v313
        %v509 = vsel %vm507, %v508, %v313
        %v510 = vshrl.u32 %v509, 4
        %v511 = vand.u32 %v509, 15
        %v512 = vsub.s32 0, %v511
        %v513 = vsel %vm507, %v512, %v511
        %vm514 = vcmp.lt.s32.totalorder %v314, 0
        %v515 = vsub.s32 0, %v314
        %v516 = vsel %vm514, %v515, %v314
        %v517 = vshrl.u32 %v516, 4
        %v518 = vand.u32 %v516, 15
        %v519 = vsub.s32 0, %v518
        %v520 = vsel %vm514, %v519, %v518
        %vm521 = vcmp.lt.s32.totalorder %v315, 0
        %v522 = vsub.s32 0, %v315
        %v523 = vsel %vm521, %v522, %v315
        %v524 = vshrl.u32 %v523, 4
        %v525 = vand.u32 %v523, 15
        %v526 = vsub.s32 0, %v525
        %v527 = vsel %vm521, %v526, %v525
        %vm528 = vcmp.lt.s32.totalorder %v316, 0
        %v529 = vsub.s32 0, %v316
        %v530 = vsel %vm528, %v529, %v316
        %v531 = vshrl.u32 %v530, 4
        %v532 = vand.u32 %v530, 15
        %v533 = vsub.s32 0, %v532
        %v534 = vsel %vm528, %v533, %v532
        %vm535 = vcmp.lt.s32.totalorder %v317, 0
        %v536 = vsub.s32 0, %v317
        %v537 = vsel %vm535, %v536, %v317
        %v538 = vshrl.u32 %v537, 4
        %v539 = vand.u32 %v537, 15
        %v540 = vsub.s32 0, %v539
        %v541 = vsel %vm535, %v540, %v539
        %vm542 = vcmp.ne.s32.totalorder %v324, 0
        %vm543 = vcmp.ne.s32.totalorder %v331, 0
        %vm544 = vcmp.ne.s32.totalorder %v338, 0
        %vm545 = vcmp.ne.s32.totalorder %v345, 0
        %vm546 = vcmp.ne.s32.totalorder %v352, 0
        %vm547 = vcmp.ne.s32.totalorder %v359, 0
        %vm548 = vcmp.ne.s32.totalorder %v366, 0
        %vm549 = vcmp.ne.s32.totalorder %v373, 0
        %vm550 = vcmp.ne.s32.totalorder %v380, 0
        %vm551 = vcmp.ne.s32.totalorder %v387, 0
        %vm552 = vcmp.ne.s32.totalorder %v394, 0
        %vm553 = vcmp.ne.s32.totalorder %v401, 0
        %vm554 = vcmp.ne.s32.totalorder %v408, 0
        %vm555 = vcmp.ne.s32.totalorder %v415, 0
        %vm556 = vcmp.ne.s32.totalorder %v422, 0
        %vm557 = vcmp.ne.s32.totalorder %v429, 0
        %vm558 = vcmp.ne.s32.totalorder %v436, 0
        %vm559 = vcmp.ne.s32.totalorder %v443, 0
        %vm560 = vcmp.ne.s32.totalorder %v450, 0
        %vm561 = vcmp.ne.s32.totalorder %v457, 0
        %vm562 = vcmp.ne.s32.totalorder %v464, 0
        %vm563 = vcmp.ne.s32.totalorder %v471, 0
        %vm564 = vcmp.ne.s32.totalorder %v478, 0
        %vm565 = vcmp.ne.s32.totalorder %v485, 0
        %vm566 = vcmp.ne.s32.totalorder %v492, 0
        %vm567 = vcmp.ne.s32.totalorder %v499, 0
        %vm568 = vcmp.ne.s32.totalorder %v506, 0
        %vm569 = vcmp.ne.s32.totalorder %v513, 0
        %vm570 = vcmp.ne.s32.totalorder %v520, 0
        %vm571 = vcmp.ne.s32.totalorder %v527, 0
        %vm572 = vcmp.ne.s32.totalorder %v534, 0
        %vm573 = vcmp.ne.s32.totalorder %v541, 0
        %vm574 = vcmp.lt.s32.totalorder %v324, 0
        %vm575 = vcmp.lt.s32.totalorder %v331, 0
        %vm576 = vcmp.lt.s32.totalorder %v338, 0
        %vm577 = vcmp.lt.s32.totalorder %v345, 0
        %vm578 = vcmp.lt.s32.totalorder %v352, 0
        %vm579 = vcmp.lt.s32.totalorder %v359, 0
        %vm580 = vcmp.lt.s32.totalorder %v366, 0
        %vm581 = vcmp.lt.s32.totalorder %v373, 0
        %vm582 = vcmp.lt.s32.totalorder %v380, 0
        %vm583 = vcmp.lt.s32.totalorder %v387, 0
        %vm584 = vcmp.lt.s32.totalorder %v394, 0
        %vm585 = vcmp.lt.s32.totalorder %v401, 0
        %vm586 = vcmp.lt.s32.totalorder %v408, 0
        %vm587 = vcmp.lt.s32.totalorder %v415, 0
        %vm588 = vcmp.lt.s32.totalorder %v422, 0
        %vm589 = vcmp.lt.s32.totalorder %v429, 0
        %vm590 = vcmp.lt.s32.totalorder %v436, 0
        %vm591 = vcmp.lt.s32.totalorder %v443, 0
        %vm592 = vcmp.lt.s32.totalorder %v450, 0
        %vm593 = vcmp.lt.s32.totalorder %v457, 0
        %vm594 = vcmp.lt.s32.totalorder %v464, 0
        %vm595 = vcmp.lt.s32.totalorder %v471, 0
        %vm596 = vcmp.lt.s32.totalorder %v478, 0
        %vm597 = vcmp.lt.s32.totalorder %v485, 0
        %vm598 = vcmp.lt.s32.totalorder %v492, 0
        %vm599 = vcmp.lt.s32.totalorder %v499, 0
        %vm600 = vcmp.lt.s32.totalorder %v506, 0
        %vm601 = vcmp.lt.s32.totalorder %v513, 0
        %vm602 = vcmp.lt.s32.totalorder %v520, 0
        %vm603 = vcmp.lt.s32.totalorder %v527, 0
        %vm604 = vcmp.lt.s32.totalorder %v534, 0
        %vm605 = vcmp.lt.s32.totalorder %v541, 0
        %vm606 = vmand %vm574, %vm542
        %vm607 = vmand %vm575, %vm543
        %vm608 = vmand %vm576, %vm544
        %vm609 = vmand %vm577, %vm545
        %vm610 = vmand %vm578, %vm546
        %vm611 = vmand %vm579, %vm547
        %vm612 = vmand %vm580, %vm548
        %vm613 = vmand %vm581, %vm549
        %vm614 = vmand %vm582, %vm550
        %vm615 = vmand %vm583, %vm551
        %vm616 = vmand %vm584, %vm552
        %vm617 = vmand %vm585, %vm553
        %vm618 = vmand %vm586, %vm554
        %vm619 = vmand %vm587, %vm555
        %vm620 = vmand %vm588, %vm556
        %vm621 = vmand %vm589, %vm557
        %vm622 = vmand %vm590, %vm558
        %vm623 = vmand %vm591, %vm559
        %vm624 = vmand %vm592, %vm560
        %vm625 = vmand %vm593, %vm561
        %vm626 = vmand %vm594, %vm562
        %vm627 = vmand %vm595, %vm563
        %vm628 = vmand %vm596, %vm564
        %vm629 = vmand %vm597, %vm565
        %vm630 = vmand %vm598, %vm566
        %vm631 = vmand %vm599, %vm567
        %vm632 = vmand %vm600, %vm568
        %vm633 = vmand %vm601, %vm569
        %vm634 = vmand %vm602, %vm570
        %vm635 = vmand %vm603, %vm571
        %vm636 = vmand %vm604, %vm572
        %vm637 = vmand %vm605, %vm573
        %v638 = vadd.s32 %v324, 16
        %v639 = vadd.s32 %v331, 16
        %v640 = vadd.s32 %v338, 16
        %v641 = vadd.s32 %v345, 16
        %v642 = vadd.s32 %v352, 16
        %v643 = vadd.s32 %v359, 16
        %v644 = vadd.s32 %v366, 16
        %v645 = vadd.s32 %v373, 16
        %v646 = vadd.s32 %v380, 16
        %v647 = vadd.s32 %v387, 16
        %v648 = vadd.s32 %v394, 16
        %v649 = vadd.s32 %v401, 16
        %v650 = vadd.s32 %v408, 16
        %v651 = vadd.s32 %v415, 16
        %v652 = vadd.s32 %v422, 16
        %v653 = vadd.s32 %v429, 16
        %v654 = vadd.s32 %v436, 16
        %v655 = vadd.s32 %v443, 16
        %v656 = vadd.s32 %v450, 16
        %v657 = vadd.s32 %v457, 16
        %v658 = vadd.s32 %v464, 16
        %v659 = vadd.s32 %v471, 16
        %v660 = vadd.s32 %v478, 16
        %v661 = vadd.s32 %v485, 16
        %v662 = vadd.s32 %v492, 16
        %v663 = vadd.s32 %v499, 16
        %v664 = vadd.s32 %v506, 16
        %v665 = vadd.s32 %v513, 16
        %v666 = vadd.s32 %v520, 16
        %v667 = vadd.s32 %v527, 16
        %v668 = vadd.s32 %v534, 16
        %v669 = vadd.s32 %v541, 16
        %v670 = vsel %vm606, %v638, %v324
        %v671 = vsel %vm607, %v639, %v331
        %v672 = vsel %vm608, %v640, %v338
        %v673 = vsel %vm609, %v641, %v345
        %v674 = vsel %vm610, %v642, %v352
        %v675 = vsel %vm611, %v643, %v359
        %v676 = vsel %vm612, %v644, %v366
        %v677 = vsel %vm613, %v645, %v373
        %v678 = vsel %vm614, %v646, %v380
        %v679 = vsel %vm615, %v647, %v387
        %v680 = vsel %vm616, %v648, %v394
        %v681 = vsel %vm617, %v649, %v401
        %v682 = vsel %vm618, %v650, %v408
        %v683 = vsel %vm619, %v651, %v415
        %v684 = vsel %vm620, %v652, %v422
        %v685 = vsel %vm621, %v653, %v429
        %v686 = vsel %vm622, %v654, %v436
        %v687 = vsel %vm623, %v655, %v443
        %v688 = vsel %vm624, %v656, %v450
        %v689 = vsel %vm625, %v657, %v457
        %v690 = vsel %vm626, %v658, %v464
        %v691 = vsel %vm627, %v659, %v471
        %v692 = vsel %vm628, %v660, %v478
        %v693 = vsel %vm629, %v661, %v485
        %v694 = vsel %vm630, %v662, %v492
        %v695 = vsel %vm631, %v663, %v499
        %v696 = vsel %vm632, %v664, %v506
        %v697 = vsel %vm633, %v665, %v513
        %v698 = vsel %vm634, %v666, %v520
        %v699 = vsel %vm635, %v667, %v527
        %v700 = vsel %vm636, %v668, %v534
        %v701 = vsel %vm637, %v669, %v541
        %vm702 = vcmp.eq.s32.totalorder %v670, 0
        %vm703 = vcmp.eq.s32.totalorder %v671, 0
        %vm704 = vcmp.eq.s32.totalorder %v672, 0
        %vm705 = vcmp.eq.s32.totalorder %v673, 0
        %vm706 = vcmp.eq.s32.totalorder %v674, 0
        %vm707 = vcmp.eq.s32.totalorder %v675, 0
        %vm708 = vcmp.eq.s32.totalorder %v676, 0
        %vm709 = vcmp.eq.s32.totalorder %v677, 0
        %vm710 = vcmp.eq.s32.totalorder %v678, 0
        %vm711 = vcmp.eq.s32.totalorder %v679, 0
        %vm712 = vcmp.eq.s32.totalorder %v680, 0
        %vm713 = vcmp.eq.s32.totalorder %v681, 0
        %vm714 = vcmp.eq.s32.totalorder %v682, 0
        %vm715 = vcmp.eq.s32.totalorder %v683, 0
        %vm716 = vcmp.eq.s32.totalorder %v684, 0
        %vm717 = vcmp.eq.s32.totalorder %v685, 0
        %vm718 = vcmp.eq.s32.totalorder %v686, 0
        %vm719 = vcmp.eq.s32.totalorder %v687, 0
        %vm720 = vcmp.eq.s32.totalorder %v688, 0
        %vm721 = vcmp.eq.s32.totalorder %v689, 0
        %vm722 = vcmp.eq.s32.totalorder %v690, 0
        %vm723 = vcmp.eq.s32.totalorder %v691, 0
        %vm724 = vcmp.eq.s32.totalorder %v692, 0
        %vm725 = vcmp.eq.s32.totalorder %v693, 0
        %vm726 = vcmp.eq.s32.totalorder %v694, 0
        %vm727 = vcmp.eq.s32.totalorder %v695, 0
        %vm728 = vcmp.eq.s32.totalorder %v696, 0
        %vm729 = vcmp.eq.s32.totalorder %v697, 0
        %vm730 = vcmp.eq.s32.totalorder %v698, 0
        %vm731 = vcmp.eq.s32.totalorder %v699, 0
        %vm732 = vcmp.eq.s32.totalorder %v700, 0
        %vm733 = vcmp.eq.s32.totalorder %v701, 0
        %vm734 = vcmp.eq.s32.totalorder %v670, 15
        %vm735 = vcmp.eq.s32.totalorder %v671, 15
        %vm736 = vcmp.eq.s32.totalorder %v672, 15
        %vm737 = vcmp.eq.s32.totalorder %v673, 15
        %vm738 = vcmp.eq.s32.totalorder %v674, 15
        %vm739 = vcmp.eq.s32.totalorder %v675, 15
        %vm740 = vcmp.eq.s32.totalorder %v676, 15
        %vm741 = vcmp.eq.s32.totalorder %v677, 15
        %vm742 = vcmp.eq.s32.totalorder %v678, 15
        %vm743 = vcmp.eq.s32.totalorder %v679, 15
        %vm744 = vcmp.eq.s32.totalorder %v680, 15
        %vm745 = vcmp.eq.s32.totalorder %v681, 15
        %vm746 = vcmp.eq.s32.totalorder %v682, 15
        %vm747 = vcmp.eq.s32.totalorder %v683, 15
        %vm748 = vcmp.eq.s32.totalorder %v684, 15
        %vm749 = vcmp.eq.s32.totalorder %v685, 15
        %vm750 = vcmp.eq.s32.totalorder %v686, 15
        %vm751 = vcmp.eq.s32.totalorder %v687, 15
        %vm752 = vcmp.eq.s32.totalorder %v688, 15
        %vm753 = vcmp.eq.s32.totalorder %v689, 15
        %vm754 = vcmp.eq.s32.totalorder %v690, 15
        %vm755 = vcmp.eq.s32.totalorder %v691, 15
        %vm756 = vcmp.eq.s32.totalorder %v692, 15
        %vm757 = vcmp.eq.s32.totalorder %v693, 15
        %vm758 = vcmp.eq.s32.totalorder %v694, 15
        %vm759 = vcmp.eq.s32.totalorder %v695, 15
        %vm760 = vcmp.eq.s32.totalorder %v696, 15
        %vm761 = vcmp.eq.s32.totalorder %v697, 15
        %vm762 = vcmp.eq.s32.totalorder %v698, 15
        %vm763 = vcmp.eq.s32.totalorder %v699, 15
        %vm764 = vcmp.eq.s32.totalorder %v700, 15
        %vm765 = vcmp.eq.s32.totalorder %v701, 15
        %v766 = vld [vmem:[%s241 + $0x10] sm:$0x80]
        %v767 = vld [vmem:[%s241 + $0x18] sm:$0x80]
        %v768 = vld [vmem:[%s241 + $0x20] sm:$0xff]
        %v769 = vld [vmem:[%s241 + $0x28] sm:$0xff]
        %v770 = vld [vmem:[%s241 + $0x30] sm:$0xff]
        %v771 = vld [vmem:[%s241 + $0x38] sm:$0xff]
        %v772 = vld [vmem:[%s241 + $0x40] sm:$0xff]
        %v773 = vld [vmem:[%s241 + $0x48] sm:$0xff]
        %v774 = vld [vmem:[%s241 + $0x50] sm:$0xff]
        %v775 = vld [vmem:[%s241 + $0x58] sm:$0xff]
        %v776 = vld [vmem:[%s241 + $0x60] sm:$0xff]
        %v777 = vld [vmem:[%s241 + $0x68] sm:$0xff]
        %v778 = vld [vmem:[%s241 + $0x70] sm:$0xff]
        %v779 = vld [vmem:[%s241 + $0x78] sm:$0xff]
        %v780 = vld [vmem:[%s241 + $0x80] sm:$0xff]
        %v781 = vld [vmem:[%s241 + $0x88] sm:$0xff]
        %v782 = vld [vmem:[%s241 + $0x90] sm:$0xff]
        %v783 = vld [vmem:[%s241 + $0x98] sm:$0xff]
        %v784 = vld [vmem:[%s241 + $0xa0] sm:$0xff]
        %v785 = vld [vmem:[%s241 + $0xa8] sm:$0xff]
        %v786 = vld [vmem:[%s241 + $0xb0] sm:$0xff]
        %v787 = vld [vmem:[%s241 + $0xb8] sm:$0xff]
        %v788 = vld [vmem:[%s241 + $0xc0] sm:$0xff]
        %v789 = vld [vmem:[%s241 + $0xc8] sm:$0xff]
        %v790 = vld [vmem:[%s241 + $0xd0] sm:$0xff]
        %v791 = vld [vmem:[%s241 + $0xd8] sm:$0xff]
        %v792 = vld [vmem:[%s241 + $0xe0] sm:$0xff]
        %v793 = vld [vmem:[%s241 + $0xe8] sm:$0xff]
        %v794 = vld [vmem:[%s241 + $0xf0] sm:$0xff]
        %v795 = vld [vmem:[%s241 + $0xf8] sm:$0xff]
        %v796 = vld [vmem:[%s241 + $0x100] sm:$0xff]
        %v797 = vld [vmem:[%s241 + $0x108] sm:$0xff]
        %v798 = vld [vmem:[%s241 + $0x110] sm:$0xff]
        %v799 = vld [vmem:[%s241 + $0x118] sm:$0xff]
        %v800 = vld [vmem:[%s241 + $0x120] sm:$0xff]
        %v801 = vld [vmem:[%s241 + $0x128] sm:$0xff]
        %v802 = vld [vmem:[%s241 + $0x130] sm:$0xff]
        %v803 = vld [vmem:[%s241 + $0x138] sm:$0xff]
        %v804 = vld [vmem:[%s241 + $0x140] sm:$0xff]
        %v805 = vld [vmem:[%s241 + $0x148] sm:$0xff]
        %v806 = vld [vmem:[%s241 + $0x150] sm:$0xff]
        %v807 = vld [vmem:[%s241 + $0x158] sm:$0xff]
        %v808 = vld [vmem:[%s241 + $0x160] sm:$0xff]
        %v809 = vld [vmem:[%s241 + $0x168] sm:$0xff]
        %v810 = vld [vmem:[%s241 + $0x170] sm:$0xff]
        %v811 = vld [vmem:[%s241 + $0x178] sm:$0xff]
        %v812 = vld [vmem:[%s241 + $0x180] sm:$0xff]
        %v813 = vld [vmem:[%s241 + $0x188] sm:$0xff]
        %v814 = vld [vmem:[%s241 + $0x190] sm:$0xff]
        %v815 = vld [vmem:[%s241 + $0x198] sm:$0xff]
        %v816 = vld [vmem:[%s241 + $0x1a0] sm:$0xff]
        %v817 = vld [vmem:[%s241 + $0x1a8] sm:$0xff]
        %v818 = vld [vmem:[%s241 + $0x1b0] sm:$0xff]
        %v819 = vld [vmem:[%s241 + $0x1b8] sm:$0xff]
        %v820 = vld [vmem:[%s241 + $0x1c0] sm:$0xff]
        %v821 = vld [vmem:[%s241 + $0x1c8] sm:$0xff]
        %v822 = vld [vmem:[%s241 + $0x1d0] sm:$0xff]
        %v823 = vld [vmem:[%s241 + $0x1d8] sm:$0xff]
        %v824 = vld [vmem:[%s241 + $0x1e0] sm:$0xff]
        %v825 = vld [vmem:[%s241 + $0x1e8] sm:$0xff]
        %v826 = vld [vmem:[%s241 + $0x1f0] sm:$0xff]
        %v827 = vld [vmem:[%s241 + $0x1f8] sm:$0xff]
        %v828 = vld [vmem:[%s241 + $0x200] sm:$0xff]
        %v829 = vld [vmem:[%s241 + $0x208] sm:$0xff]
        %v830 = vld [vmem:[%s241 + $0x210] sm:$0x7f]
        %v831 = vld [vmem:[%s241 + $0x218] sm:$0x7f]
        %v832 = vsel %vm702, 1, 0
        %v833 = vsel %vm703, 1, 0
        %v834 = vsel %vm704, 1, 0
        %v835 = vsel %vm705, 1, 0
        %v836 = vsel %vm706, 1, 0
        %v837 = vsel %vm707, 1, 0
        %v838 = vsel %vm708, 1, 0
        %v839 = vsel %vm709, 1, 0
        %v840 = vsel %vm710, 1, 0
        %v841 = vsel %vm711, 1, 0
        %v842 = vsel %vm712, 1, 0
        %v843 = vsel %vm713, 1, 0
        %v844 = vsel %vm714, 1, 0
        %v845 = vsel %vm715, 1, 0
        %v846 = vsel %vm716, 1, 0
        %v847 = vsel %vm717, 1, 0
        %v848 = vsel %vm718, 1, 0
        %v849 = vsel %vm719, 1, 0
        %v850 = vsel %vm720, 1, 0
        %v851 = vsel %vm721, 1, 0
        %v852 = vsel %vm722, 1, 0
        %v853 = vsel %vm723, 1, 0
        %v854 = vsel %vm724, 1, 0
        %v855 = vsel %vm725, 1, 0
        %v856 = vsel %vm726, 1, 0
        %v857 = vsel %vm727, 1, 0
        %v858 = vsel %vm728, 1, 0
        %v859 = vsel %vm729, 1, 0
        %v860 = vsel %vm730, 1, 0
        %v861 = vsel %vm731, 1, 0
        %v862 = vsel %vm732, 1, 0
        %v863 = vsel %vm733, 1, 0
        %vm864 = vcmp.eq.s32.totalorder %v832, 1
        %vm865 = vcmp.eq.s32.totalorder %v833, 1
        %vm866 = vcmp.eq.s32.totalorder %v834, 1
        %vm867 = vcmp.eq.s32.totalorder %v835, 1
        %vm868 = vcmp.eq.s32.totalorder %v836, 1
        %vm869 = vcmp.eq.s32.totalorder %v837, 1
        %vm870 = vcmp.eq.s32.totalorder %v838, 1
        %vm871 = vcmp.eq.s32.totalorder %v839, 1
        %vm872 = vcmp.eq.s32.totalorder %v840, 1
        %vm873 = vcmp.eq.s32.totalorder %v841, 1
        %vm874 = vcmp.eq.s32.totalorder %v842, 1
        %vm875 = vcmp.eq.s32.totalorder %v843, 1
        %vm876 = vcmp.eq.s32.totalorder %v844, 1
        %vm877 = vcmp.eq.s32.totalorder %v845, 1
        %vm878 = vcmp.eq.s32.totalorder %v846, 1
        %vm879 = vcmp.eq.s32.totalorder %v847, 1
        %vm880 = vcmp.eq.s32.totalorder %v848, 1
        %vm881 = vcmp.eq.s32.totalorder %v849, 1
        %vm882 = vcmp.eq.s32.totalorder %v850, 1
        %vm883 = vcmp.eq.s32.totalorder %v851, 1
        %vm884 = vcmp.eq.s32.totalorder %v852, 1
        %vm885 = vcmp.eq.s32.totalorder %v853, 1
        %vm886 = vcmp.eq.s32.totalorder %v854, 1
        %vm887 = vcmp.eq.s32.totalorder %v855, 1
        %vm888 = vcmp.eq.s32.totalorder %v856, 1
        %vm889 = vcmp.eq.s32.totalorder %v857, 1
        %vm890 = vcmp.eq.s32.totalorder %v858, 1
        %vm891 = vcmp.eq.s32.totalorder %v859, 1
        %vm892 = vcmp.eq.s32.totalorder %v860, 1
        %vm893 = vcmp.eq.s32.totalorder %v861, 1
        %vm894 = vcmp.eq.s32.totalorder %v862, 1
        %vm895 = vcmp.eq.s32.totalorder %v863, 1
        %vm962 = vcmask 1040384
        %v963 = vrot.slane %v766, 7
        %v964 = vrot.slane %v768, 7
        %v965 = vsel %vm962, %v963, %v964
        %v966 = vrot.slane %v767, 7
        %v967 = vrot.slane %v769, 7
        %v968 = vsel %vm962, %v966, %v967
        %v969 = vrot.slane %v770, 7
        %v970 = vsel %vm962, %v964, %v969
        %v971 = vrot.slane %v771, 7
        %v972 = vsel %vm962, %v967, %v971
        %v973 = vrot.slane %v772, 7
        %v974 = vsel %vm962, %v969, %v973
        %v975 = vrot.slane %v773, 7
        %v976 = vsel %vm962, %v971, %v975
        %v977 = vrot.slane %v774, 7
        %v978 = vsel %vm962, %v973, %v977
        %v979 = vrot.slane %v775, 7
        %v980 = vsel %vm962, %v975, %v979
        %v981 = vrot.slane %v776, 7
        %v982 = vsel %vm962, %v977, %v981
        %v983 = vrot.slane %v777, 7
        %v984 = vsel %vm962, %v979, %v983
        %v985 = vrot.slane %v778, 7
        %v986 = vsel %vm962, %v981, %v985
        %v987 = vrot.slane %v779, 7
        %v988 = vsel %vm962, %v983, %v987
        %v989 = vrot.slane %v780, 7
        %v990 = vsel %vm962, %v985, %v989
        %v991 = vrot.slane %v781, 7
        %v992 = vsel %vm962, %v987, %v991
        %v993 = vrot.slane %v782, 7
        %v994 = vsel %vm962, %v989, %v993
        %v995 = vrot.slane %v783, 7
        %v996 = vsel %vm962, %v991, %v995
        %v997 = vrot.slane %v784, 7
        %v998 = vsel %vm962, %v993, %v997
        %v999 = vrot.slane %v785, 7
        %v1000 = vsel %vm962, %v995, %v999
        %v1001 = vrot.slane %v786, 7
        %v1002 = vsel %vm962, %v997, %v1001
        %v1003 = vrot.slane %v787, 7
        %v1004 = vsel %vm962, %v999, %v1003
        %v1005 = vrot.slane %v788, 7
        %v1006 = vsel %vm962, %v1001, %v1005
        %v1007 = vrot.slane %v789, 7
        %v1008 = vsel %vm962, %v1003, %v1007
        %v1009 = vrot.slane %v790, 7
        %v1010 = vsel %vm962, %v1005, %v1009
        %v1011 = vrot.slane %v791, 7
        %v1012 = vsel %vm962, %v1007, %v1011
        %v1013 = vrot.slane %v792, 7
        %v1014 = vsel %vm962, %v1009, %v1013
        %v1015 = vrot.slane %v793, 7
        %v1016 = vsel %vm962, %v1011, %v1015
        %v1017 = vrot.slane %v794, 7
        %v1018 = vsel %vm962, %v1013, %v1017
        %v1019 = vrot.slane %v795, 7
        %v1020 = vsel %vm962, %v1015, %v1019
        %v1021 = vrot.slane %v796, 7
        %v1022 = vsel %vm962, %v1017, %v1021
        %v1023 = vrot.slane %v797, 7
        %v1024 = vsel %vm962, %v1019, %v1023
        %v1025 = vrot.slane %v798, 7
        %v1026 = vsel %vm962, %v1021, %v1025
        %v1027 = vrot.slane %v799, 7
        %v1028 = vsel %vm962, %v1023, %v1027
        %v1029 = vrot.slane %v800, 7
        %v1030 = vsel %vm962, %v1025, %v1029
        %v1031 = vrot.slane %v801, 7
        %v1032 = vsel %vm962, %v1027, %v1031
        %v1033 = vrot.slane %v802, 7
        %v1034 = vsel %vm962, %v1029, %v1033
        %v1035 = vrot.slane %v803, 7
        %v1036 = vsel %vm962, %v1031, %v1035
        %v1037 = vrot.slane %v804, 7
        %v1038 = vsel %vm962, %v1033, %v1037
        %v1039 = vrot.slane %v805, 7
        %v1040 = vsel %vm962, %v1035, %v1039
        %v1041 = vrot.slane %v806, 7
        %v1042 = vsel %vm962, %v1037, %v1041
        %v1043 = vrot.slane %v807, 7
        %v1044 = vsel %vm962, %v1039, %v1043
        %v1045 = vrot.slane %v808, 7
        %v1046 = vsel %vm962, %v1041, %v1045
        %v1047 = vrot.slane %v809, 7
        %v1048 = vsel %vm962, %v1043, %v1047
        %v1049 = vrot.slane %v810, 7
        %v1050 = vsel %vm962, %v1045, %v1049
        %v1051 = vrot.slane %v811, 7
        %v1052 = vsel %vm962, %v1047, %v1051
        %v1053 = vrot.slane %v812, 7
        %v1054 = vsel %vm962, %v1049, %v1053
        %v1055 = vrot.slane %v813, 7
        %v1056 = vsel %vm962, %v1051, %v1055
        %v1057 = vrot.slane %v814, 7
        %v1058 = vsel %vm962, %v1053, %v1057
        %v1059 = vrot.slane %v815, 7
        %v1060 = vsel %vm962, %v1055, %v1059
        %v1061 = vrot.slane %v816, 7
        %v1062 = vsel %vm962, %v1057, %v1061
        %v1063 = vrot.slane %v817, 7
        %v1064 = vsel %vm962, %v1059, %v1063
        %v1065 = vrot.slane %v818, 7
        %v1066 = vsel %vm962, %v1061, %v1065
        %v1067 = vrot.slane %v819, 7
        %v1068 = vsel %vm962, %v1063, %v1067
        %v1069 = vrot.slane %v820, 7
        %v1070 = vsel %vm962, %v1065, %v1069
        %v1071 = vrot.slane %v821, 7
        %v1072 = vsel %vm962, %v1067, %v1071
        %v1073 = vrot.slane %v822, 7
        %v1074 = vsel %vm962, %v1069, %v1073
        %v1075 = vrot.slane %v823, 7
        %v1076 = vsel %vm962, %v1071, %v1075
        %v1077 = vrot.slane %v824, 7
        %v1078 = vsel %vm962, %v1073, %v1077
        %v1079 = vrot.slane %v825, 7
        %v1080 = vsel %vm962, %v1075, %v1079
        %v1081 = vrot.slane %v826, 7
        %v1082 = vsel %vm962, %v1077, %v1081
        %v1083 = vrot.slane %v827, 7
        %v1084 = vsel %vm962, %v1079, %v1083
        %v1085 = vrot.slane %v828, 7
        %v1086 = vsel %vm962, %v1081, %v1085
        %v1087 = vrot.slane %v829, 7
        %v1088 = vsel %vm962, %v1083, %v1087
        %v1089 = vrot.slane %v830, 7
        %v1090 = vsel %vm962, %v1085, %v1089
        %v1091 = vrot.slane %v831, 7
        %v1092 = vsel %vm962, %v1087, %v1091
        %v1157 = vsel %vm864, 0.0, %v965
        %v1158 = vsel %vm864, 0.0, %v968
        %v1159 = vsel %vm865, 0.0, %v970
        %v1160 = vsel %vm865, 0.0, %v972
        %v1161 = vsel %vm866, 0.0, %v974
        %v1162 = vsel %vm866, 0.0, %v976
        %v1163 = vsel %vm867, 0.0, %v978
        %v1164 = vsel %vm867, 0.0, %v980
        %v1165 = vsel %vm868, 0.0, %v982
        %v1166 = vsel %vm868, 0.0, %v984
        %v1167 = vsel %vm869, 0.0, %v986
        %v1168 = vsel %vm869, 0.0, %v988
        %v1169 = vsel %vm870, 0.0, %v990
        %v1170 = vsel %vm870, 0.0, %v992
        %v1171 = vsel %vm871, 0.0, %v994
        %v1172 = vsel %vm871, 0.0, %v996
        %v1173 = vsel %vm872, 0.0, %v998
        %v1174 = vsel %vm872, 0.0, %v1000
        %v1175 = vsel %vm873, 0.0, %v1002
        %v1176 = vsel %vm873, 0.0, %v1004
        %v1177 = vsel %vm874, 0.0, %v1006
        %v1178 = vsel %vm874, 0.0, %v1008
        %v1179 = vsel %vm875, 0.0, %v1010
        %v1180 = vsel %vm875, 0.0, %v1012
        %v1181 = vsel %vm876, 0.0, %v1014
        %v1182 = vsel %vm876, 0.0, %v1016
        %v1183 = vsel %vm877, 0.0, %v1018
        %v1184 = vsel %vm877, 0.0, %v1020
        %v1185 = vsel %vm878, 0.0, %v1022
        %v1186 = vsel %vm878, 0.0, %v1024
        %v1187 = vsel %vm879, 0.0, %v1026
        %v1188 = vsel %vm879, 0.0, %v1028
        %v1189 = vsel %vm880, 0.0, %v1030
        %v1190 = vsel %vm880, 0.0, %v1032
        %v1191 = vsel %vm881, 0.0, %v1034
        %v1192 = vsel %vm881, 0.0, %v1036
        %v1193 = vsel %vm882, 0.0, %v1038
        %v1194 = vsel %vm882, 0.0, %v1040
        %v1195 = vsel %vm883, 0.0, %v1042
        %v1196 = vsel %vm883, 0.0, %v1044
        %v1197 = vsel %vm884, 0.0, %v1046
        %v1198 = vsel %vm884, 0.0, %v1048
        %v1199 = vsel %vm885, 0.0, %v1050
        %v1200 = vsel %vm885, 0.0, %v1052
        %v1201 = vsel %vm886, 0.0, %v1054
        %v1202 = vsel %vm886, 0.0, %v1056
        %v1203 = vsel %vm887, 0.0, %v1058
        %v1204 = vsel %vm887, 0.0, %v1060
        %v1205 = vsel %vm888, 0.0, %v1062
        %v1206 = vsel %vm888, 0.0, %v1064
        %v1207 = vsel %vm889, 0.0, %v1066
        %v1208 = vsel %vm889, 0.0, %v1068
        %v1209 = vsel %vm890, 0.0, %v1070
        %v1210 = vsel %vm890, 0.0, %v1072
        %v1211 = vsel %vm891, 0.0, %v1074
        %v1212 = vsel %vm891, 0.0, %v1076
        %v1213 = vsel %vm892, 0.0, %v1078
        %v1214 = vsel %vm892, 0.0, %v1080
        %v1215 = vsel %vm893, 0.0, %v1082
        %v1216 = vsel %vm893, 0.0, %v1084
        %v1217 = vsel %vm894, 0.0, %v1086
        %v1218 = vsel %vm894, 0.0, %v1088
        %v1219 = vsel %vm895, 0.0, %v1090
        %v1220 = vsel %vm895, 0.0, %v1092
        %v1221 = vld [vmem:[#allocation4] sm:$0xff]
        %v1222 = vld [vmem:[#allocation4 + $0x8] sm:$0xff]
        %v1223 = vld [vmem:[#allocation4 + $0x10] sm:$0xff]
        %v1224 = vld [vmem:[#allocation4 + $0x18] sm:$0xff]
        %v1225 = vld [vmem:[#allocation4 + $0x20] sm:$0xff]
        %v1226 = vld [vmem:[#allocation4 + $0x28] sm:$0xff]
        %v1227 = vld [vmem:[#allocation4 + $0x30] sm:$0xff]
        %v1228 = vld [vmem:[#allocation4 + $0x38] sm:$0xff]
        %v1229 = vld [vmem:[#allocation4 + $0x40] sm:$0xff]
        %v1230 = vld [vmem:[#allocation4 + $0x48] sm:$0xff]
        %v1231 = vld [vmem:[#allocation4 + $0x50] sm:$0xff]
        %v1232 = vld [vmem:[#allocation4 + $0x58] sm:$0xff]
        %v1233 = vld [vmem:[#allocation4 + $0x60] sm:$0xff]
        %v1234 = vld [vmem:[#allocation4 + $0x68] sm:$0xff]
        %v1235 = vld [vmem:[#allocation4 + $0x70] sm:$0xff]
        %v1236 = vld [vmem:[#allocation4 + $0x78] sm:$0xff]
        %v1237 = vld [vmem:[#allocation4 + $0x80] sm:$0xff]
        %v1238 = vld [vmem:[#allocation4 + $0x88] sm:$0xff]
        %v1239 = vld [vmem:[#allocation4 + $0x90] sm:$0xff]
        %v1240 = vld [vmem:[#allocation4 + $0x98] sm:$0xff]
        %v1241 = vld [vmem:[#allocation4 + $0xa0] sm:$0xff]
        %v1242 = vld [vmem:[#allocation4 + $0xa8] sm:$0xff]
        %v1243 = vld [vmem:[#allocation4 + $0xb0] sm:$0xff]
        %v1244 = vld [vmem:[#allocation4 + $0xb8] sm:$0xff]
        %v1245 = vld [vmem:[#allocation4 + $0xc0] sm:$0xff]
        %v1246 = vld [vmem:[#allocation4 + $0xc8] sm:$0xff]
        %v1247 = vld [vmem:[#allocation4 + $0xd0] sm:$0xff]
        %v1248 = vld [vmem:[#allocation4 + $0xd8] sm:$0xff]
        %v1249 = vld [vmem:[#allocation4 + $0xe0] sm:$0xff]
        %v1250 = vld [vmem:[#allocation4 + $0xe8] sm:$0xff]
        %v1251 = vld [vmem:[#allocation4 + $0xf0] sm:$0xff]
        %v1252 = vld [vmem:[#allocation4 + $0xf8] sm:$0xff]
        %v1253 = vld [vmem:[#allocation4 + $0x100] sm:$0xff]
        %v1254 = vld [vmem:[#allocation4 + $0x108] sm:$0xff]
        %v1255 = vld [vmem:[#allocation4 + $0x110] sm:$0xff]
        %v1256 = vld [vmem:[#allocation4 + $0x118] sm:$0xff]
        %v1257 = vld [vmem:[#allocation4 + $0x120] sm:$0xff]
        %v1258 = vld [vmem:[#allocation4 + $0x128] sm:$0xff]
        %v1259 = vld [vmem:[#allocation4 + $0x130] sm:$0xff]
        %v1260 = vld [vmem:[#allocation4 + $0x138] sm:$0xff]
        %v1261 = vld [vmem:[#allocation4 + $0x140] sm:$0xff]
        %v1262 = vld [vmem:[#allocation4 + $0x148] sm:$0xff]
        %v1263 = vld [vmem:[#allocation4 + $0x150] sm:$0xff]
        %v1264 = vld [vmem:[#allocation4 + $0x158] sm:$0xff]
        %v1265 = vld [vmem:[#allocation4 + $0x160] sm:$0xff]
        %v1266 = vld [vmem:[#allocation4 + $0x168] sm:$0xff]
        %v1267 = vld [vmem:[#allocation4 + $0x170] sm:$0xff]
        %v1268 = vld [vmem:[#allocation4 + $0x178] sm:$0xff]
        %v1269 = vld [vmem:[#allocation4 + $0x180] sm:$0xff]
        %v1270 = vld [vmem:[#allocation4 + $0x188] sm:$0xff]
        %v1271 = vld [vmem:[#allocation4 + $0x190] sm:$0xff]
        %v1272 = vld [vmem:[#allocation4 + $0x198] sm:$0xff]
        %v1273 = vld [vmem:[#allocation4 + $0x1a0] sm:$0xff]
        %v1274 = vld [vmem:[#allocation4 + $0x1a8] sm:$0xff]
        %v1275 = vld [vmem:[#allocation4 + $0x1b0] sm:$0xff]
        %v1276 = vld [vmem:[#allocation4 + $0x1b8] sm:$0xff]
        %v1277 = vld [vmem:[#allocation4 + $0x1c0] sm:$0xff]
        %v1278 = vld [vmem:[#allocation4 + $0x1c8] sm:$0xff]
        %v1279 = vld [vmem:[#allocation4 + $0x1d0] sm:$0xff]
        %v1280 = vld [vmem:[#allocation4 + $0x1d8] sm:$0xff]
        %v1281 = vld [vmem:[#allocation4 + $0x1e0] sm:$0xff]
        %v1282 = vld [vmem:[#allocation4 + $0x1e8] sm:$0xff]
        %v1283 = vld [vmem:[#allocation4 + $0x1f0] sm:$0xff]
        %v1284 = vld [vmem:[#allocation4 + $0x1f8] sm:$0xff]
        %v1285 = vld [vmem:[%s241 + $0x210] sm:$0xff]
        %v1286 = vld [vmem:[%s241 + $0x218] sm:$0xff]
        %s1287 = scalar_lea.vmem [#allocation4], 512
        %v1288 = vld [vmem:[%s1287] sm:$0xff]
        %v1289 = vld [vmem:[%s1287 + $0x8] sm:$0xff]
        %v1290 = vld [vmem:[%s1287 + $0x10] sm:$0xff]
        %v1291 = vld [vmem:[%s1287 + $0x18] sm:$0xff]
        %v1292 = vld [vmem:[%s1287 + $0x20] sm:$0xff]
        %v1293 = vld [vmem:[%s1287 + $0x28] sm:$0xff]
        %v1294 = vld [vmem:[%s1287 + $0x30] sm:$0xff]
        %v1295 = vld [vmem:[%s1287 + $0x38] sm:$0xff]
        %v1296 = vld [vmem:[%s1287 + $0x40] sm:$0xff]
        %v1297 = vld [vmem:[%s1287 + $0x48] sm:$0xff]
        %v1298 = vld [vmem:[%s1287 + $0x50] sm:$0xff]
        %v1299 = vld [vmem:[%s1287 + $0x58] sm:$0xff]
        %v1300 = vld [vmem:[%s1287 + $0x60] sm:$0xff]
        %v1301 = vld [vmem:[%s1287 + $0x68] sm:$0xff]
        %v1302 = vld [vmem:[%s1287 + $0x70] sm:$0xff]
        %v1303 = vld [vmem:[%s1287 + $0x78] sm:$0xff]
        %v1304 = vld [vmem:[%s1287 + $0x80] sm:$0xff]
        %v1305 = vld [vmem:[%s1287 + $0x88] sm:$0xff]
        %v1306 = vld [vmem:[%s1287 + $0x90] sm:$0xff]
        %v1307 = vld [vmem:[%s1287 + $0x98] sm:$0xff]
        %v1308 = vld [vmem:[%s1287 + $0xa0] sm:$0xff]
        %v1309 = vld [vmem:[%s1287 + $0xa8] sm:$0xff]
        %v1310 = vld [vmem:[%s1287 + $0xb0] sm:$0xff]
        %v1311 = vld [vmem:[%s1287 + $0xb8] sm:$0xff]
        %v1312 = vld [vmem:[%s1287 + $0xc0] sm:$0xff]
        %v1313 = vld [vmem:[%s1287 + $0xc8] sm:$0xff]
        %v1314 = vld [vmem:[%s1287 + $0xd0] sm:$0xff]
        %v1315 = vld [vmem:[%s1287 + $0xd8] sm:$0xff]
        %v1316 = vld [vmem:[%s1287 + $0xe0] sm:$0xff]
        %v1317 = vld [vmem:[%s1287 + $0xe8] sm:$0xff]
        %v1318 = vld [vmem:[%s1287 + $0xf0] sm:$0xff]
        %v1319 = vld [vmem:[%s1287 + $0xf8] sm:$0xff]
        %v1320 = vld [vmem:[%s1287 + $0x100] sm:$0xff]
        %v1321 = vld [vmem:[%s1287 + $0x108] sm:$0xff]
        %v1322 = vld [vmem:[%s1287 + $0x110] sm:$0xff]
        %v1323 = vld [vmem:[%s1287 + $0x118] sm:$0xff]
        %v1324 = vld [vmem:[%s1287 + $0x120] sm:$0xff]
        %v1325 = vld [vmem:[%s1287 + $0x128] sm:$0xff]
        %v1326 = vld [vmem:[%s1287 + $0x130] sm:$0xff]
        %v1327 = vld [vmem:[%s1287 + $0x138] sm:$0xff]
        %v1328 = vld [vmem:[%s1287 + $0x140] sm:$0xff]
        %v1329 = vld [vmem:[%s1287 + $0x148] sm:$0xff]
        %v1330 = vld [vmem:[%s1287 + $0x150] sm:$0xff]
        %v1331 = vld [vmem:[%s1287 + $0x158] sm:$0xff]
        %v1332 = vld [vmem:[%s1287 + $0x160] sm:$0xff]
        %v1333 = vld [vmem:[%s1287 + $0x168] sm:$0xff]
        %v1334 = vld [vmem:[%s1287 + $0x170] sm:$0xff]
        %v1335 = vld [vmem:[%s1287 + $0x178] sm:$0xff]
        %v1336 = vld [vmem:[%s1287 + $0x180] sm:$0xff]
        %v1337 = vld [vmem:[%s1287 + $0x188] sm:$0xff]
        %v1338 = vld [vmem:[%s1287 + $0x190] sm:$0xff]
        %v1339 = vld [vmem:[%s1287 + $0x198] sm:$0xff]
        %v1340 = vld [vmem:[%s1287 + $0x1a0] sm:$0xff]
        %v1341 = vld [vmem:[%s1287 + $0x1a8] sm:$0xff]
        %v1342 = vld [vmem:[%s1287 + $0x1b0] sm:$0xff]
        %v1343 = vld [vmem:[%s1287 + $0x1b8] sm:$0xff]
        %v1344 = vld [vmem:[%s1287 + $0x1c0] sm:$0xff]
        %v1345 = vld [vmem:[%s1287 + $0x1c8] sm:$0xff]
        %v1346 = vld [vmem:[%s1287 + $0x1d0] sm:$0xff]
        %v1347 = vld [vmem:[%s1287 + $0x1d8] sm:$0xff]
        %v1348 = vld [vmem:[%s1287 + $0x1e0] sm:$0xff]
        %v1349 = vld [vmem:[%s1287 + $0x1e8] sm:$0xff]
        %v1350 = vld [vmem:[%s1287 + $0x1f0] sm:$0xff]
        %v1351 = vld [vmem:[%s1287 + $0x1f8] sm:$0xff]
        %1352 = vmatprep.subr.mxu0 %v1289
        %1353 = vmatpush1.msra.mxu0 %v1288
        %1354 = vmatprep.subr.mxu0 %v1291
        %1355 = vmatpush1.msra.mxu0 %v1290
        %1356 = vmatprep.subr.mxu0 %v1293
        %1357 = vmatpush1.msra.mxu0 %v1292
        %1358 = vmatprep.subr.mxu0 %v1295
        %1359 = vmatpush1.msra.mxu0 %v1294
        %1360 = vmatprep.subr.mxu0 %v1297
        %1361 = vmatpush1.msra.mxu0 %v1296
        %1362 = vmatprep.subr.mxu0 %v1299
        %1363 = vmatpush1.msra.mxu0 %v1298
        %1364 = vmatprep.subr.mxu0 %v1301
        %1365 = vmatpush1.msra.mxu0 %v1300
        %1366 = vmatprep.subr.mxu0 %v1303
        %1367 = vmatpush1.msra.mxu0 %v1302
        %1368 = vmatprep.subr.mxu0 %v1305
        %1369 = vmatpush1.msra.mxu0 %v1304
        %1370 = vmatprep.subr.mxu0 %v1307
        %1371 = vmatpush1.msra.mxu0 %v1306
        %1372 = vmatprep.subr.mxu0 %v1309
        %1373 = vmatpush1.msra.mxu0 %v1308
        %1374 = vmatprep.subr.mxu0 %v1311
        %1375 = vmatpush1.msra.mxu0 %v1310
        %1376 = vmatprep.subr.mxu0 %v1313
        %1377 = vmatpush1.msra.mxu0 %v1312
        %1378 = vmatprep.subr.mxu0 %v1315
        %1379 = vmatpush1.msra.mxu0 %v1314
        %1380 = vmatprep.subr.mxu0 %v1317
        %1381 = vmatpush1.msra.mxu0 %v1316
        %1382 = vmatprep.subr.mxu0 %v1319
        %1383 = vmatpush1.msra.mxu0 %v1318
        %1384 = vmatprep.subr.mxu0 %v1321
        %1385 = vmatpush1.msra.mxu0 %v1320
        %1386 = vmatprep.subr.mxu0 %v1323
        %1387 = vmatpush1.msra.mxu0 %v1322
        %1388 = vmatprep.subr.mxu0 %v1325
        %1389 = vmatpush1.msra.mxu0 %v1324
        %1390 = vmatprep.subr.mxu0 %v1327
        %1391 = vmatpush1.msra.mxu0 %v1326
        %1392 = vmatprep.subr.mxu0 %v1329
        %1393 = vmatpush1.msra.mxu0 %v1328
        %1394 = vmatprep.subr.mxu0 %v1331
        %1395 = vmatpush1.msra.mxu0 %v1330
        %1396 = vmatprep.subr.mxu0 %v1333
        %1397 = vmatpush1.msra.mxu0 %v1332
        %1398 = vmatprep.subr.mxu0 %v1335
        %1399 = vmatpush1.msra.mxu0 %v1334
        %1400 = vmatprep.subr.mxu0 %v1337
        %1401 = vmatpush1.msra.mxu0 %v1336
        %1402 = vmatprep.subr.mxu0 %v1339
        %1403 = vmatpush1.msra.mxu0 %v1338
        %1404 = vmatprep.subr.mxu0 %v1341
        %1405 = vmatpush1.msra.mxu0 %v1340
        %1406 = vmatprep.subr.mxu0 %v1343
        %1407 = vmatpush1.msra.mxu0 %v1342
        %1408 = vmatprep.subr.mxu0 %v1345
        %1409 = vmatpush1.msra.mxu0 %v1344
        %1410 = vmatprep.subr.mxu0 %v1347
        %1411 = vmatpush1.msra.mxu0 %v1346
        %1412 = vmatprep.subr.mxu0 %v1349
        %1413 = vmatpush1.msra.mxu0 %v1348
        %1414 = vmatprep.subr.mxu0 %v1351
        %1415 = vmatpush1.msra.mxu0 %v1350
        %1416 = vmatprep.mubr.f32.mxu0 %v769
        %1417 = vmatmul.mubr.f32.gmra.mrb[0].mxu0 %v768
        %v1418 = vpop.f32.mrb[0].mxu0
        %v1419 = vadd.f32 0.0, %v1418
        %v1420 = vpop.f32.mrb[0].mxu0
        %v1421 = vadd.f32 0.0, %v1420
        %1422 = vmatprep.mubr.f32.mxu0 %v771
        %1423 = vmatmul.mubr.f32.gmra.mrb[0].mxu0 %v770
        %v1424 = vpop.f32.mrb[0].mxu0
        %v1425 = vadd.f32 0.0, %v1424
        %v1426 = vpop.f32.mrb[0].mxu0
        %v1427 = vadd.f32 0.0, %v1426
        %1428 = vmatprep.mubr.f32.mxu0 %v773
        %1429 = vmatmul.mubr.f32.gmra.mrb[0].mxu0 %v772
        %v1430 = vpop.f32.mrb[0].mxu0
        %v1431 = vadd.f32 0.0, %v1430
        %v1432 = vpop.f32.mrb[0].mxu0
        %v1433 = vadd.f32 0.0, %v1432
        %1434 = vmatprep.mubr.f32.mxu0 %v775
        %1435 = vmatmul.mubr.f32.gmra.mrb[0].mxu0 %v774
        %v1436 = vpop.f32.mrb[0].mxu0
        %v1437 = vadd.f32 0.0, %v1436
        %v1438 = vpop.f32.mrb[0].mxu0
        %v1439 = vadd.f32 0.0, %v1438
        %1440 = vmatprep.mubr.f32.mxu0 %v777
        %1441 = vmatmul.mubr.f32.gmra.mrb[0].mxu0 %v776
        %v1442 = vpop.f32.mrb[0].mxu0
        %v1443 = vadd.f32 0.0, %v1442
        %v1444 = vpop.f32.mrb[0].mxu0
        %v1445 = vadd.f32 0.0, %v1444
        %1446 = vmatprep.mubr.f32.mxu0 %v779
        %1447 = vmatmul.mubr.f32.gmra.mrb[0].mxu0 %v778
        %v1448 = vpop.f32.mrb[0].mxu0
        %v1449 = vadd.f32 0.0, %v1448
        %v1450 = vpop.f32.mrb[0].mxu0
        %v1451 = vadd.f32 0.0, %v1450
        %1452 = vmatprep.mubr.f32.mxu0 %v781
        %1453 = vmatmul.mubr.f32.gmra.mrb[0].mxu0 %v780
        %v1454 = vpop.f32.mrb[0].mxu0
        %v1455 = vadd.f32 0.0, %v1454
        %v1456 = vpop.f32.mrb[0].mxu0
        %v1457 = vadd.f32 0.0, %v1456
        %1458 = vmatprep.mubr.f32.mxu0 %v783
        %1459 = vmatmul.mubr.f32.gmra.mrb[0].mxu0 %v782
        %v1460 = vpop.f32.mrb[0].mxu0
        %v1461 = vadd.f32 0.0, %v1460
        %v1462 = vpop.f32.mrb[0].mxu0
        %v1463 = vadd.f32 0.0, %v1462
        %1464 = vmatprep.mubr.f32.mxu0 %v785
        %1465 = vmatmul.mubr.f32.gmra.mrb[0].mxu0 %v784
        %v1466 = vpop.f32.mrb[0].mxu0
        %v1467 = vadd.f32 0.0, %v1466
        %v1468 = vpop.f32.mrb[0].mxu0
        %v1469 = vadd.f32 0.0, %v1468
        %1470 = vmatprep.mubr.f32.mxu0 %v787
        %1471 = vmatmul.mubr.f32.gmra.mrb[0].mxu0 %v786
        %v1472 = vpop.f32.mrb[0].mxu0
        %v1473 = vadd.f32 0.0, %v1472
        %v1474 = vpop.f32.mrb[0].mxu0
        %v1475 = vadd.f32 0.0, %v1474
        %1476 = vmatprep.mubr.f32.mxu0 %v789
        %1477 = vmatmul.mubr.f32.gmra.mrb[0].mxu0 %v788
        %v1478 = vpop.f32.mrb[0].mxu0
        %v1479 = vadd.f32 0.0, %v1478
        %v1480 = vpop.f32.mrb[0].mxu0
        %v1481 = vadd.f32 0.0, %v1480
        %1482 = vmatprep.mubr.f32.mxu0 %v791
        %1483 = vmatmul.mubr.f32.gmra.mrb[0].mxu0 %v790
        %v1484 = vpop.f32.mrb[0].mxu0
        %v1485 = vadd.f32 0.0, %v1484
        %v1486 = vpop.f32.mrb[0].mxu0
        %v1487 = vadd.f32 0.0, %v1486
        %1488 = vmatprep.mubr.f32.mxu0 %v793
        %1489 = vmatmul.mubr.f32.gmra.mrb[0].mxu0 %v792
        %v1490 = vpop.f32.mrb[0].mxu0
        %v1491 = vadd.f32 0.0, %v1490
        %v1492 = vpop.f32.mrb[0].mxu0
        %v1493 = vadd.f32 0.0, %v1492
        %1494 = vmatprep.mubr.f32.mxu0 %v795
        %1495 = vmatmul.mubr.f32.gmra.mrb[0].mxu0 %v794
        %v1496 = vpop.f32.mrb[0].mxu0
        %v1497 = vadd.f32 0.0, %v1496
        %v1498 = vpop.f32.mrb[0].mxu0
        %v1499 = vadd.f32 0.0, %v1498
        %1500 = vmatprep.mubr.f32.mxu0 %v797
        %1501 = vmatmul.mubr.f32.gmra.mrb[0].mxu0 %v796
        %v1502 = vpop.f32.mrb[0].mxu0
        %v1503 = vadd.f32 0.0, %v1502
        %v1504 = vpop.f32.mrb[0].mxu0
        %v1505 = vadd.f32 0.0, %v1504
        %1506 = vmatprep.mubr.f32.mxu0 %v799
        %1507 = vmatmul.mubr.f32.gmra.mrb[0].mxu0 %v798
        %v1508 = vpop.f32.mrb[0].mxu0
        %v1509 = vadd.f32 0.0, %v1508
        %v1510 = vpop.f32.mrb[0].mxu0
        %v1511 = vadd.f32 0.0, %v1510
        %1512 = vmatprep.mubr.f32.mxu0 %v801
        %1513 = vmatmul.mubr.f32.gmra.mrb[0].mxu0 %v800
        %v1514 = vpop.f32.mrb[0].mxu0
        %v1515 = vadd.f32 0.0, %v1514
        %v1516 = vpop.f32.mrb[0].mxu0
        %v1517 = vadd.f32 0.0, %v1516
        %1518 = vmatprep.mubr.f32.mxu0 %v803
        %1519 = vmatmul.mubr.f32.gmra.mrb[0].mxu0 %v802
        %v1520 = vpop.f32.mrb[0].mxu0
        %v1521 = vadd.f32 0.0, %v1520
        %v1522 = vpop.f32.mrb[0].mxu0
        %v1523 = vadd.f32 0.0, %v1522
        %1524 = vmatprep.mubr.f32.mxu0 %v805
        %1525 = vmatmul.mubr.f32.gmra.mrb[0].mxu0 %v804
        %v1526 = vpop.f32.mrb[0].mxu0
        %v1527 = vadd.f32 0.0, %v1526
        %v1528 = vpop.f32.mrb[0].mxu0
        %v1529 = vadd.f32 0.0, %v1528
        %1530 = vmatprep.mubr.f32.mxu0 %v807
        %1531 = vmatmul.mubr.f32.gmra.mrb[0].mxu0 %v806
        %v1532 = vpop.f32.mrb[0].mxu0
        %v1533 = vadd.f32 0.0, %v1532
        %v1534 = vpop.f32.mrb[0].mxu0
        %v1535 = vadd.f32 0.0, %v1534
        %1536 = vmatprep.mubr.f32.mxu0 %v809
        %1537 = vmatmul.mubr.f32.gmra.mrb[0].mxu0 %v808
        %v1538 = vpop.f32.mrb[0].mxu0
        %v1539 = vadd.f32 0.0, %v1538
        %v1540 = vpop.f32.mrb[0].mxu0
        %v1541 = vadd.f32 0.0, %v1540
        %1542 = vmatprep.mubr.f32.mxu0 %v811
        %1543 = vmatmul.mubr.f32.gmra.mrb[0].mxu0 %v810
        %v1544 = vpop.f32.mrb[0].mxu0
        %v1545 = vadd.f32 0.0, %v1544
        %v1546 = vpop.f32.mrb[0].mxu0
        %v1547 = vadd.f32 0.0, %v1546
        %1548 = vmatprep.mubr.f32.mxu0 %v813
        %1549 = vmatmul.mubr.f32.gmra.mrb[0].mxu0 %v812
        %v1550 = vpop.f32.mrb[0].mxu0
        %v1551 = vadd.f32 0.0, %v1550
        %v1552 = vpop.f32.mrb[0].mxu0
        %v1553 = vadd.f32 0.0, %v1552
        %1554 = vmatprep.mubr.f32.mxu0 %v815
        %1555 = vmatmul.mubr.f32.gmra.mrb[0].mxu0 %v814
        %v1556 = vpop.f32.mrb[0].mxu0
        %v1557 = vadd.f32 0.0, %v1556
        %v1558 = vpop.f32.mrb[0].mxu0
        %v1559 = vadd.f32 0.0, %v1558
        %1560 = vmatprep.mubr.f32.mxu0 %v817
        %1561 = vmatmul.mubr.f32.gmra.mrb[0].mxu0 %v816
        %v1562 = vpop.f32.mrb[0].mxu0
        %v1563 = vadd.f32 0.0, %v1562
        %v1564 = vpop.f32.mrb[0].mxu0
        %v1565 = vadd.f32 0.0, %v1564
        %1566 = vmatprep.mubr.f32.mxu0 %v819
        %1567 = vmatmul.mubr.f32.gmra.mrb[0].mxu0 %v818
        %v1568 = vpop.f32.mrb[0].mxu0
        %v1569 = vadd.f32 0.0, %v1568
        %v1570 = vpop.f32.mrb[0].mxu0
        %v1571 = vadd.f32 0.0, %v1570
        %1572 = vmatprep.mubr.f32.mxu0 %v821
        %1573 = vmatmul.mubr.f32.gmra.mrb[0].mxu0 %v820
        %v1574 = vpop.f32.mrb[0].mxu0
        %v1575 = vadd.f32 0.0, %v1574
        %v1576 = vpop.f32.mrb[0].mxu0
        %v1577 = vadd.f32 0.0, %v1576
        %1578 = vmatprep.mubr.f32.mxu0 %v823
        %1579 = vmatmul.mubr.f32.gmra.mrb[0].mxu0 %v822
        %v1580 = vpop.f32.mrb[0].mxu0
        %v1581 = vadd.f32 0.0, %v1580
        %v1582 = vpop.f32.mrb[0].mxu0
        %v1583 = vadd.f32 0.0, %v1582
        %1584 = vmatprep.mubr.f32.mxu0 %v825
        %1585 = vmatmul.mubr.f32.gmra.mrb[0].mxu0 %v824
        %v1586 = vpop.f32.mrb[0].mxu0
        %v1587 = vadd.f32 0.0, %v1586
        %v1588 = vpop.f32.mrb[0].mxu0
        %v1589 = vadd.f32 0.0, %v1588
        %1590 = vmatprep.mubr.f32.mxu0 %v827
        %1591 = vmatmul.mubr.f32.gmra.mrb[0].mxu0 %v826
        %v1592 = vpop.f32.mrb[0].mxu0
        %v1593 = vadd.f32 0.0, %v1592
        %v1594 = vpop.f32.mrb[0].mxu0
        %v1595 = vadd.f32 0.0, %v1594
        %1596 = vmatprep.mubr.f32.mxu0 %v829
        %1597 = vmatmul.mubr.f32.gmra.mrb[0].mxu0 %v828
        %v1598 = vpop.f32.mrb[0].mxu0
        %v1599 = vadd.f32 0.0, %v1598
        %v1600 = vpop.f32.mrb[0].mxu0
        %v1601 = vadd.f32 0.0, %v1600
        %1602 = vmatprep.mubr.f32.mxu0 %v1286
        %1603 = vmatmul.mubr.f32.gmra.mrb[0].mxu0 %v1285
        %v1604 = vpop.f32.mrb[0].mxu0
        %v1605 = vadd.f32 0.0, %v1604
        %v1606 = vpop.f32.mrb[0].mxu0
        %v1607 = vadd.f32 0.0, %v1606
        %1608 = vdwg.mxu0
        %1609 = vmatprep.subr.mxu0 %v1222
        %1610 = vmatpush1.msra.mxu0 %v1221
        %1611 = vmatprep.subr.mxu0 %v1224
        %1612 = vmatpush1.msra.mxu0 %v1223
        %1613 = vmatprep.subr.mxu0 %v1226
        %1614 = vmatpush1.msra.mxu0 %v1225
        %1615 = vmatprep.subr.mxu0 %v1228
        %1616 = vmatpush1.msra.mxu0 %v1227
        %1617 = vmatprep.subr.mxu0 %v1230
        %1618 = vmatpush1.msra.mxu0 %v1229
        %1619 = vmatprep.subr.mxu0 %v1232
        %1620 = vmatpush1.msra.mxu0 %v1231
        %1621 = vmatprep.subr.mxu0 %v1234
        %1622 = vmatpush1.msra.mxu0 %v1233
        %1623 = vmatprep.subr.mxu0 %v1236
        %1624 = vmatpush1.msra.mxu0 %v1235
        %1625 = vmatprep.subr.mxu0 %v1238
        %1626 = vmatpush1.msra.mxu0 %v1237
        %1627 = vmatprep.subr.mxu0 %v1240
        %1628 = vmatpush1.msra.mxu0 %v1239
        %1629 = vmatprep.subr.mxu0 %v1242
        %1630 = vmatpush1.msra.mxu0 %v1241
        %1631 = vmatprep.subr.mxu0 %v1244
        %1632 = vmatpush1.msra.mxu0 %v1243
        %1633 = vmatprep.subr.mxu0 %v1246
        %1634 = vmatpush1.msra.mxu0 %v1245
        %1635 = vmatprep.subr.mxu0 %v1248
        %1636 = vmatpush1.msra.mxu0 %v1247
        %1637 = vmatprep.subr.mxu0 %v1250
        %1638 = vmatpush1.msra.mxu0 %v1249
        %1639 = vmatprep.subr.mxu0 %v1252
        %1640 = vmatpush1.msra.mxu0 %v1251
        %1641 = vmatprep.subr.mxu0 %v1254
        %1642 = vmatpush1.msra.mxu0 %v1253
        %1643 = vmatprep.subr.mxu0 %v1256
        %1644 = vmatpush1.msra.mxu0 %v1255
        %1645 = vmatprep.subr.mxu0 %v1258
        %1646 = vmatpush1.msra.mxu0 %v1257
        %1647 = vmatprep.subr.mxu0 %v1260
        %1648 = vmatpush1.msra.mxu0 %v1259
        %1649 = vmatprep.subr.mxu0 %v1262
        %1650 = vmatpush1.msra.mxu0 %v1261
        %1651 = vmatprep.subr.mxu0 %v1264
        %1652 = vmatpush1.msra.mxu0 %v1263
        %1653 = vmatprep.subr.mxu0 %v1266
        %1654 = vmatpush1.msra.mxu0 %v1265
        %1655 = vmatprep.subr.mxu0 %v1268
        %1656 = vmatpush1.msra.mxu0 %v1267
        %1657 = vmatprep.subr.mxu0 %v1270
        %1658 = vmatpush1.msra.mxu0 %v1269
        %1659 = vmatprep.subr.mxu0 %v1272
        %1660 = vmatpush1.msra.mxu0 %v1271
        %1661 = vmatprep.subr.mxu0 %v1274
        %1662 = vmatpush1.msra.mxu0 %v1273
        %1663 = vmatprep.subr.mxu0 %v1276
        %1664 = vmatpush1.msra.mxu0 %v1275
        %1665 = vmatprep.subr.mxu0 %v1278
        %1666 = vmatpush1.msra.mxu0 %v1277
        %1667 = vmatprep.subr.mxu0 %v1280
        %1668 = vmatpush1.msra.mxu0 %v1279
        %1669 = vmatprep.subr.mxu0 %v1282
        %1670 = vmatpush1.msra.mxu0 %v1281
        %1671 = vmatprep.subr.mxu0 %v1284
        %1672 = vmatpush1.msra.mxu0 %v1283
        %1673 = vmatprep.mubr.f32.mxu0 %v1158
        %1674 = vmatmul.mubr.f32.gmra.mrb[0].mxu0 %v1157
        %v1675 = vpop.f32.mrb[0].mxu0
        %v1676 = vadd.f32 %v1419, %v1675
        %v1677 = vpop.f32.mrb[0].mxu0
        %v1678 = vadd.f32 %v1421, %v1677
        %1679 = vmatprep.mubr.f32.mxu0 %v1160
        %1680 = vmatmul.mubr.f32.gmra.mrb[0].mxu0 %v1159
        %v1681 = vpop.f32.mrb[0].mxu0
        %v1682 = vadd.f32 %v1425, %v1681
        %v1683 = vpop.f32.mrb[0].mxu0
        %v1684 = vadd.f32 %v1427, %v1683
        %1685 = vmatprep.mubr.f32.mxu0 %v1162
        %1686 = vmatmul.mubr.f32.gmra.mrb[0].mxu0 %v1161
        %v1687 = vpop.f32.mrb[0].mxu0
        %v1688 = vadd.f32 %v1431, %v1687
        %v1689 = vpop.f32.mrb[0].mxu0
        %v1690 = vadd.f32 %v1433, %v1689
        %1691 = vmatprep.mubr.f32.mxu0 %v1164
        %1692 = vmatmul.mubr.f32.gmra.mrb[0].mxu0 %v1163
        %v1693 = vpop.f32.mrb[0].mxu0
        %v1694 = vadd.f32 %v1437, %v1693
        %v1695 = vpop.f32.mrb[0].mxu0
        %v1696 = vadd.f32 %v1439, %v1695
        %1697 = vmatprep.mubr.f32.mxu0 %v1166
        %1698 = vmatmul.mubr.f32.gmra.mrb[0].mxu0 %v1165
        %v1699 = vpop.f32.mrb[0].mxu0
        %v1700 = vadd.f32 %v1443, %v1699
        %v1701 = vpop.f32.mrb[0].mxu0
        %v1702 = vadd.f32 %v1445, %v1701
        %1703 = vmatprep.mubr.f32.mxu0 %v1168
        %1704 = vmatmul.mubr.f32.gmra.mrb[0].mxu0 %v1167
        %v1705 = vpop.f32.mrb[0].mxu0
        %v1706 = vadd.f32 %v1449, %v1705
        %v1707 = vpop.f32.mrb[0].mxu0
        %v1708 = vadd.f32 %v1451, %v1707
        %1709 = vmatprep.mubr.f32.mxu0 %v1170
        %1710 = vmatmul.mubr.f32.gmra.mrb[0].mxu0 %v1169
        %v1711 = vpop.f32.mrb[0].mxu0
        %v1712 = vadd.f32 %v1455, %v1711
        %v1713 = vpop.f32.mrb[0].mxu0
        %v1714 = vadd.f32 %v1457, %v1713
        %1715 = vmatprep.mubr.f32.mxu0 %v1172
        %1716 = vmatmul.mubr.f32.gmra.mrb[0].mxu0 %v1171
        %v1717 = vpop.f32.mrb[0].mxu0
        %v1718 = vadd.f32 %v1461, %v1717
        %v1719 = vpop.f32.mrb[0].mxu0
        %v1720 = vadd.f32 %v1463, %v1719
        %1721 = vmatprep.mubr.f32.mxu0 %v1174
        %1722 = vmatmul.mubr.f32.gmra.mrb[0].mxu0 %v1173
        %v1723 = vpop.f32.mrb[0].mxu0
        %v1724 = vadd.f32 %v1467, %v1723
        %v1725 = vpop.f32.mrb[0].mxu0
        %v1726 = vadd.f32 %v1469, %v1725
        %1727 = vmatprep.mubr.f32.mxu0 %v1176
        %1728 = vmatmul.mubr.f32.gmra.mrb[0].mxu0 %v1175
        %v1729 = vpop.f32.mrb[0].mxu0
        %v1730 = vadd.f32 %v1473, %v1729
        %v1731 = vpop.f32.mrb[0].mxu0
        %v1732 = vadd.f32 %v1475, %v1731
        %1733 = vmatprep.mubr.f32.mxu0 %v1178
        %1734 = vmatmul.mubr.f32.gmra.mrb[0].mxu0 %v1177
        %v1735 = vpop.f32.mrb[0].mxu0
        %v1736 = vadd.f32 %v1479, %v1735
        %v1737 = vpop.f32.mrb[0].mxu0
        %v1738 = vadd.f32 %v1481, %v1737
        %1739 = vmatprep.mubr.f32.mxu0 %v1180
        %1740 = vmatmul.mubr.f32.gmra.mrb[0].mxu0 %v1179
        %v1741 = vpop.f32.mrb[0].mxu0
        %v1742 = vadd.f32 %v1485, %v1741
        %v1743 = vpop.f32.mrb[0].mxu0
        %v1744 = vadd.f32 %v1487, %v1743
        %1745 = vmatprep.mubr.f32.mxu0 %v1182
        %1746 = vmatmul.mubr.f32.gmra.mrb[0].mxu0 %v1181
        %v1747 = vpop.f32.mrb[0].mxu0
        %v1748 = vadd.f32 %v1491, %v1747
        %v1749 = vpop.f32.mrb[0].mxu0
        %v1750 = vadd.f32 %v1493, %v1749
        %1751 = vmatprep.mubr.f32.mxu0 %v1184
        %1752 = vmatmul.mubr.f32.gmra.mrb[0].mxu0 %v1183
        %v1753 = vpop.f32.mrb[0].mxu0
        %v1754 = vadd.f32 %v1497, %v1753
        %v1755 = vpop.f32.mrb[0].mxu0
        %v1756 = vadd.f32 %v1499, %v1755
        %1757 = vmatprep.mubr.f32.mxu0 %v1186
        %1758 = vmatmul.mubr.f32.gmra.mrb[0].mxu0 %v1185
        %v1759 = vpop.f32.mrb[0].mxu0
        %v1760 = vadd.f32 %v1503, %v1759
        %v1761 = vpop.f32.mrb[0].mxu0
        %v1762 = vadd.f32 %v1505, %v1761
        %1763 = vmatprep.mubr.f32.mxu0 %v1188
        %1764 = vmatmul.mubr.f32.gmra.mrb[0].mxu0 %v1187
        %v1765 = vpop.f32.mrb[0].mxu0
        %v1766 = vadd.f32 %v1509, %v1765
        %v1767 = vpop.f32.mrb[0].mxu0
        %v1768 = vadd.f32 %v1511, %v1767
        %1769 = vmatprep.mubr.f32.mxu0 %v1190
        %1770 = vmatmul.mubr.f32.gmra.mrb[0].mxu0 %v1189
        %v1771 = vpop.f32.mrb[0].mxu0
        %v1772 = vadd.f32 %v1515, %v1771
        %v1773 = vpop.f32.mrb[0].mxu0
        %v1774 = vadd.f32 %v1517, %v1773
        %1775 = vmatprep.mubr.f32.mxu0 %v1192
        %1776 = vmatmul.mubr.f32.gmra.mrb[0].mxu0 %v1191
        %v1777 = vpop.f32.mrb[0].mxu0
        %v1778 = vadd.f32 %v1521, %v1777
        %v1779 = vpop.f32.mrb[0].mxu0
        %v1780 = vadd.f32 %v1523, %v1779
        %1781 = vmatprep.mubr.f32.mxu0 %v1194
        %1782 = vmatmul.mubr.f32.gmra.mrb[0].mxu0 %v1193
        %v1783 = vpop.f32.mrb[0].mxu0
        %v1784 = vadd.f32 %v1527, %v1783
        %v1785 = vpop.f32.mrb[0].mxu0
        %v1786 = vadd.f32 %v1529, %v1785
        %1787 = vmatprep.mubr.f32.mxu0 %v1196
        %1788 = vmatmul.mubr.f32.gmra.mrb[0].mxu0 %v1195
        %v1789 = vpop.f32.mrb[0].mxu0
        %v1790 = vadd.f32 %v1533, %v1789
        %v1791 = vpop.f32.mrb[0].mxu0
        %v1792 = vadd.f32 %v1535, %v1791
        %1793 = vmatprep.mubr.f32.mxu0 %v1198
        %1794 = vmatmul.mubr.f32.gmra.mrb[0].mxu0 %v1197
        %v1795 = vpop.f32.mrb[0].mxu0
        %v1796 = vadd.f32 %v1539, %v1795
        %v1797 = vpop.f32.mrb[0].mxu0
        %v1798 = vadd.f32 %v1541, %v1797
        %1799 = vmatprep.mubr.f32.mxu0 %v1200
        %1800 = vmatmul.mubr.f32.gmra.mrb[0].mxu0 %v1199
        %v1801 = vpop.f32.mrb[0].mxu0
        %v1802 = vadd.f32 %v1545, %v1801
        %v1803 = vpop.f32.mrb[0].mxu0
        %v1804 = vadd.f32 %v1547, %v1803
        %1805 = vmatprep.mubr.f32.mxu0 %v1202
        %1806 = vmatmul.mubr.f32.gmra.mrb[0].mxu0 %v1201
        %v1807 = vpop.f32.mrb[0].mxu0
        %v1808 = vadd.f32 %v1551, %v1807
        %v1809 = vpop.f32.mrb[0].mxu0
        %v1810 = vadd.f32 %v1553, %v1809
        %1811 = vmatprep.mubr.f32.mxu0 %v1204
        %1812 = vmatmul.mubr.f32.gmra.mrb[0].mxu0 %v1203
        %v1813 = vpop.f32.mrb[0].mxu0
        %v1814 = vadd.f32 %v1557, %v1813
        %v1815 = vpop.f32.mrb[0].mxu0
        %v1816 = vadd.f32 %v1559, %v1815
        %1817 = vmatprep.mubr.f32.mxu0 %v1206
        %1818 = vmatmul.mubr.f32.gmra.mrb[0].mxu0 %v1205
        %v1819 = vpop.f32.mrb[0].mxu0
        %v1820 = vadd.f32 %v1563, %v1819
        %v1821 = vpop.f32.mrb[0].mxu0
        %v1822 = vadd.f32 %v1565, %v1821
        %1823 = vmatprep.mubr.f32.mxu0 %v1208
        %1824 = vmatmul.mubr.f32.gmra.mrb[0].mxu0 %v1207
        %v1825 = vpop.f32.mrb[0].mxu0
        %v1826 = vadd.f32 %v1569, %v1825
        %v1827 = vpop.f32.mrb[0].mxu0
        %v1828 = vadd.f32 %v1571, %v1827
        %1829 = vmatprep.mubr.f32.mxu0 %v1210
        %1830 = vmatmul.mubr.f32.gmra.mrb[0].mxu0 %v1209
        %v1831 = vpop.f32.mrb[0].mxu0
        %v1832 = vadd.f32 %v1575, %v1831
        %v1833 = vpop.f32.mrb[0].mxu0
        %v1834 = vadd.f32 %v1577, %v1833
        %1835 = vmatprep.mubr.f32.mxu0 %v1212
        %1836 = vmatmul.mubr.f32.gmra.mrb[0].mxu0 %v1211
        %v1837 = vpop.f32.mrb[0].mxu0
        %v1838 = vadd.f32 %v1581, %v1837
        %v1839 = vpop.f32.mrb[0].mxu0
        %v1840 = vadd.f32 %v1583, %v1839
        %1841 = vmatprep.mubr.f32.mxu0 %v1214
        %1842 = vmatmul.mubr.f32.gmra.mrb[0].mxu0 %v1213
        %v1843 = vpop.f32.mrb[0].mxu0
        %v1844 = vadd.f32 %v1587, %v1843
        %v1845 = vpop.f32.mrb[0].mxu0
        %v1846 = vadd.f32 %v1589, %v1845
        %1847 = vmatprep.mubr.f32.mxu0 %v1216
        %1848 = vmatmul.mubr.f32.gmra.mrb[0].mxu0 %v1215
        %v1849 = vpop.f32.mrb[0].mxu0
        %v1850 = vadd.f32 %v1593, %v1849
        %v1851 = vpop.f32.mrb[0].mxu0
        %v1852 = vadd.f32 %v1595, %v1851
        %1853 = vmatprep.mubr.f32.mxu0 %v1218
        %1854 = vmatmul.mubr.f32.gmra.mrb[0].mxu0 %v1217
        %v1855 = vpop.f32.mrb[0].mxu0
        %v1856 = vadd.f32 %v1599, %v1855
        %v1857 = vpop.f32.mrb[0].mxu0
        %v1858 = vadd.f32 %v1601, %v1857
        %1859 = vmatprep.mubr.f32.mxu0 %v1220
        %1860 = vmatmul.mubr.f32.gmra.mrb[0].mxu0 %v1219
        %v1861 = vpop.f32.mrb[0].mxu0
        %v1862 = vadd.f32 %v1605, %v1861
        %v1863 = vpop.f32.mrb[0].mxu0
        %v1864 = vadd.f32 %v1607, %v1863
        %1865 = vdwg.mxu0
        %v1866 = vld [vmem:[%s241 + $0x20] sm:$0xfe]
        %v1867 = vld [vmem:[%s241 + $0x28] sm:$0xfe]
        %v1868 = vld [vmem:[%s241 + $0x30] sm:$0xff]
        %v1869 = vld [vmem:[%s241 + $0x38] sm:$0xff]
        %v1870 = vld [vmem:[%s241 + $0x40] sm:$0xff]
        %v1871 = vld [vmem:[%s241 + $0x48] sm:$0xff]
        %v1872 = vld [vmem:[%s241 + $0x50] sm:$0xff]
        %v1873 = vld [vmem:[%s241 + $0x58] sm:$0xff]
        %v1874 = vld [vmem:[%s241 + $0x60] sm:$0xff]
        %v1875 = vld [vmem:[%s241 + $0x68] sm:$0xff]
        %v1876 = vld [vmem:[%s241 + $0x70] sm:$0xff]
        %v1877 = vld [vmem:[%s241 + $0x78] sm:$0xff]
        %v1878 = vld [vmem:[%s241 + $0x80] sm:$0xff]
        %v1879 = vld [vmem:[%s241 + $0x88] sm:$0xff]
        %v1880 = vld [vmem:[%s241 + $0x90] sm:$0xff]
        %v1881 = vld [vmem:[%s241 + $0x98] sm:$0xff]
        %v1882 = vld [vmem:[%s241 + $0xa0] sm:$0xff]
        %v1883 = vld [vmem:[%s241 + $0xa8] sm:$0xff]
        %v1884 = vld [vmem:[%s241 + $0xb0] sm:$0xff]
        %v1885 = vld [vmem:[%s241 + $0xb8] sm:$0xff]
        %v1886 = vld [vmem:[%s241 + $0xc0] sm:$0xff]
        %v1887 = vld [vmem:[%s241 + $0xc8] sm:$0xff]
        %v1888 = vld [vmem:[%s241 + $0xd0] sm:$0xff]
        %v1889 = vld [vmem:[%s241 + $0xd8] sm:$0xff]
        %v1890 = vld [vmem:[%s241 + $0xe0] sm:$0xff]
        %v1891 = vld [vmem:[%s241 + $0xe8] sm:$0xff]
        %v1892 = vld [vmem:[%s241 + $0xf0] sm:$0xff]
        %v1893 = vld [vmem:[%s241 + $0xf8] sm:$0xff]
        %v1894 = vld [vmem:[%s241 + $0x100] sm:$0xff]
        %v1895 = vld [vmem:[%s241 + $0x108] sm:$0xff]
        %v1896 = vld [vmem:[%s241 + $0x110] sm:$0xff]
        %v1897 = vld [vmem:[%s241 + $0x118] sm:$0xff]
        %v1898 = vld [vmem:[%s241 + $0x120] sm:$0xff]
        %v1899 = vld [vmem:[%s241 + $0x128] sm:$0xff]
        %v1900 = vld [vmem:[%s241 + $0x130] sm:$0xff]
        %v1901 = vld [vmem:[%s241 + $0x138] sm:$0xff]
        %v1902 = vld [vmem:[%s241 + $0x140] sm:$0xff]
        %v1903 = vld [vmem:[%s241 + $0x148] sm:$0xff]
        %v1904 = vld [vmem:[%s241 + $0x150] sm:$0xff]
        %v1905 = vld [vmem:[%s241 + $0x158] sm:$0xff]
        %v1906 = vld [vmem:[%s241 + $0x160] sm:$0xff]
        %v1907 = vld [vmem:[%s241 + $0x168] sm:$0xff]
        %v1908 = vld [vmem:[%s241 + $0x170] sm:$0xff]
        %v1909 = vld [vmem:[%s241 + $0x178] sm:$0xff]
        %v1910 = vld [vmem:[%s241 + $0x180] sm:$0xff]
        %v1911 = vld [vmem:[%s241 + $0x188] sm:$0xff]
        %v1912 = vld [vmem:[%s241 + $0x190] sm:$0xff]
        %v1913 = vld [vmem:[%s241 + $0x198] sm:$0xff]
        %v1914 = vld [vmem:[%s241 + $0x1a0] sm:$0xff]
        %v1915 = vld [vmem:[%s241 + $0x1a8] sm:$0xff]
        %v1916 = vld [vmem:[%s241 + $0x1b0] sm:$0xff]
        %v1917 = vld [vmem:[%s241 + $0x1b8] sm:$0xff]
        %v1918 = vld [vmem:[%s241 + $0x1c0] sm:$0xff]
        %v1919 = vld [vmem:[%s241 + $0x1c8] sm:$0xff]
        %v1920 = vld [vmem:[%s241 + $0x1d0] sm:$0xff]
        %v1921 = vld [vmem:[%s241 + $0x1d8] sm:$0xff]
        %v1922 = vld [vmem:[%s241 + $0x1e0] sm:$0xff]
        %v1923 = vld [vmem:[%s241 + $0x1e8] sm:$0xff]
        %v1924 = vld [vmem:[%s241 + $0x1f0] sm:$0xff]
        %v1925 = vld [vmem:[%s241 + $0x1f8] sm:$0xff]
        %v1926 = vld [vmem:[%s241 + $0x200] sm:$0xff]
        %v1927 = vld [vmem:[%s241 + $0x208] sm:$0xff]
        %v1928 = vld [vmem:[%s241 + $0x210] sm:$0xff]
        %v1929 = vld [vmem:[%s241 + $0x218] sm:$0xff]
        %v1930 = vld [vmem:[%s241 + $0x220] sm:$0x1]
        %v1931 = vld [vmem:[%s241 + $0x228] sm:$0x1]
        %v1932 = vsel %vm734, 1, 0
        %v1933 = vsel %vm735, 1, 0
        %v1934 = vsel %vm736, 1, 0
        %v1935 = vsel %vm737, 1, 0
        %v1936 = vsel %vm738, 1, 0
        %v1937 = vsel %vm739, 1, 0
        %v1938 = vsel %vm740, 1, 0
        %v1939 = vsel %vm741, 1, 0
        %v1940 = vsel %vm742, 1, 0
        %v1941 = vsel %vm743, 1, 0
        %v1942 = vsel %vm744, 1, 0
        %v1943 = vsel %vm745, 1, 0
        %v1944 = vsel %vm746, 1, 0
        %v1945 = vsel %vm747, 1, 0
        %v1946 = vsel %vm748, 1, 0
        %v1947 = vsel %vm749, 1, 0
        %v1948 = vsel %vm750, 1, 0
        %v1949 = vsel %vm751, 1, 0
        %v1950 = vsel %vm752, 1, 0
        %v1951 = vsel %vm753, 1, 0
        %v1952 = vsel %vm754, 1, 0
        %v1953 = vsel %vm755, 1, 0
        %v1954 = vsel %vm756, 1, 0
        %v1955 = vsel %vm757, 1, 0
        %v1956 = vsel %vm758, 1, 0
        %v1957 = vsel %vm759, 1, 0
        %v1958 = vsel %vm760, 1, 0
        %v1959 = vsel %vm761, 1, 0
        %v1960 = vsel %vm762, 1, 0
        %v1961 = vsel %vm763, 1, 0
        %v1962 = vsel %vm764, 1, 0
        %v1963 = vsel %vm765, 1, 0
        %vm1964 = vcmp.eq.s32.totalorder %v1932, 1
        %vm1965 = vcmp.eq.s32.totalorder %v1933, 1
        %vm1966 = vcmp.eq.s32.totalorder %v1934, 1
        %vm1967 = vcmp.eq.s32.totalorder %v1935, 1
        %vm1968 = vcmp.eq.s32.totalorder %v1936, 1
        %vm1969 = vcmp.eq.s32.totalorder %v1937, 1
        %vm1970 = vcmp.eq.s32.totalorder %v1938, 1
        %vm1971 = vcmp.eq.s32.totalorder %v1939, 1
        %vm1972 = vcmp.eq.s32.totalorder %v1940, 1
        %vm1973 = vcmp.eq.s32.totalorder %v1941, 1
        %vm1974 = vcmp.eq.s32.totalorder %v1942, 1
        %vm1975 = vcmp.eq.s32.totalorder %v1943, 1
        %vm1976 = vcmp.eq.s32.totalorder %v1944, 1
        %vm1977 = vcmp.eq.s32.totalorder %v1945, 1
        %vm1978 = vcmp.eq.s32.totalorder %v1946, 1
        %vm1979 = vcmp.eq.s32.totalorder %v1947, 1
        %vm1980 = vcmp.eq.s32.totalorder %v1948, 1
        %vm1981 = vcmp.eq.s32.totalorder %v1949, 1
        %vm1982 = vcmp.eq.s32.totalorder %v1950, 1
        %vm1983 = vcmp.eq.s32.totalorder %v1951, 1
        %vm1984 = vcmp.eq.s32.totalorder %v1952, 1
        %vm1985 = vcmp.eq.s32.totalorder %v1953, 1
        %vm1986 = vcmp.eq.s32.totalorder %v1954, 1
        %vm1987 = vcmp.eq.s32.totalorder %v1955, 1
        %vm1988 = vcmp.eq.s32.totalorder %v1956, 1
        %vm1989 = vcmp.eq.s32.totalorder %v1957, 1
        %vm1990 = vcmp.eq.s32.totalorder %v1958, 1
        %vm1991 = vcmp.eq.s32.totalorder %v1959, 1
        %vm1992 = vcmp.eq.s32.totalorder %v1960, 1
        %vm1993 = vcmp.eq.s32.totalorder %v1961, 1
        %vm1994 = vcmp.eq.s32.totalorder %v1962, 1
        %vm1995 = vcmp.eq.s32.totalorder %v1963, 1
        %vm2062 = vcmask 1046528
        %v2063 = vrot.slane %v1866, 1
        %v2064 = vrot.slane %v1868, 1
        %v2065 = vsel %vm2062, %v2063, %v2064
        %v2066 = vrot.slane %v1867, 1
        %v2067 = vrot.slane %v1869, 1
        %v2068 = vsel %vm2062, %v2066, %v2067
        %v2069 = vrot.slane %v1870, 1
        %v2070 = vsel %vm2062, %v2064, %v2069
        %v2071 = vrot.slane %v1871, 1
        %v2072 = vsel %vm2062, %v2067, %v2071
        %v2073 = vrot.slane %v1872, 1
        %v2074 = vsel %vm2062, %v2069, %v2073
        %v2075 = vrot.slane %v1873, 1
        %v2076 = vsel %vm2062, %v2071, %v2075
        %v2077 = vrot.slane %v1874, 1
        %v2078 = vsel %vm2062, %v2073, %v2077
        %v2079 = vrot.slane %v1875, 1
        %v2080 = vsel %vm2062, %v2075, %v2079
        %v2081 = vrot.slane %v1876, 1
        %v2082 = vsel %vm2062, %v2077, %v2081
        %v2083 = vrot.slane %v1877, 1
        %v2084 = vsel %vm2062, %v2079, %v2083
        %v2085 = vrot.slane %v1878, 1
        %v2086 = vsel %vm2062, %v2081, %v2085
        %v2087 = vrot.slane %v1879, 1
        %v2088 = vsel %vm2062, %v2083, %v2087
        %v2089 = vrot.slane %v1880, 1
        %v2090 = vsel %vm2062, %v2085, %v2089
        %v2091 = vrot.slane %v1881, 1
        %v2092 = vsel %vm2062, %v2087, %v2091
        %v2093 = vrot.slane %v1882, 1
        %v2094 = vsel %vm2062, %v2089, %v2093
        %v2095 = vrot.slane %v1883, 1
        %v2096 = vsel %vm2062, %v2091, %v2095
        %v2097 = vrot.slane %v1884, 1
        %v2098 = vsel %vm2062, %v2093, %v2097
        %v2099 = vrot.slane %v1885, 1
        %v2100 = vsel %vm2062, %v2095, %v2099
        %v2101 = vrot.slane %v1886, 1
        %v2102 = vsel %vm2062, %v2097, %v2101
        %v2103 = vrot.slane %v1887, 1
        %v2104 = vsel %vm2062, %v2099, %v2103
        %v2105 = vrot.slane %v1888, 1
        %v2106 = vsel %vm2062, %v2101, %v2105
        %v2107 = vrot.slane %v1889, 1
        %v2108 = vsel %vm2062, %v2103, %v2107
        %v2109 = vrot.slane %v1890, 1
        %v2110 = vsel %vm2062, %v2105, %v2109
        %v2111 = vrot.slane %v1891, 1
        %v2112 = vsel %vm2062, %v2107, %v2111
        %v2113 = vrot.slane %v1892, 1
        %v2114 = vsel %vm2062, %v2109, %v2113
        %v2115 = vrot.slane %v1893, 1
        %v2116 = vsel %vm2062, %v2111, %v2115
        %v2117 = vrot.slane %v1894, 1
        %v2118 = vsel %vm2062, %v2113, %v2117
        %v2119 = vrot.slane %v1895, 1
        %v2120 = vsel %vm2062, %v2115, %v2119
        %v2121 = vrot.slane %v1896, 1
        %v2122 = vsel %vm2062, %v2117, %v2121
        %v2123 = vrot.slane %v1897, 1
        %v2124 = vsel %vm2062, %v2119, %v2123
        %v2125 = vrot.slane %v1898, 1
        %v2126 = vsel %vm2062, %v2121, %v2125
        %v2127 = vrot.slane %v1899, 1
        %v2128 = vsel %vm2062, %v2123, %v2127
        %v2129 = vrot.slane %v1900, 1
        %v2130 = vsel %vm2062, %v2125, %v2129
        %v2131 = vrot.slane %v1901, 1
        %v2132 = vsel %vm2062, %v2127, %v2131
        %v2133 = vrot.slane %v1902, 1
        %v2134 = vsel %vm2062, %v2129, %v2133
        %v2135 = vrot.slane %v1903, 1
        %v2136 = vsel %vm2062, %v2131, %v2135
        %v2137 = vrot.slane %v1904, 1
        %v2138 = vsel %vm2062, %v2133, %v2137
        %v2139 = vrot.slane %v1905, 1
        %v2140 = vsel %vm2062, %v2135, %v2139
        %v2141 = vrot.slane %v1906, 1
        %v2142 = vsel %vm2062, %v2137, %v2141
        %v2143 = vrot.slane %v1907, 1
        %v2144 = vsel %vm2062, %v2139, %v2143
        %v2145 = vrot.slane %v1908, 1
        %v2146 = vsel %vm2062, %v2141, %v2145
        %v2147 = vrot.slane %v1909, 1
        %v2148 = vsel %vm2062, %v2143, %v2147
        %v2149 = vrot.slane %v1910, 1
        %v2150 = vsel %vm2062, %v2145, %v2149
        %v2151 = vrot.slane %v1911, 1
        %v2152 = vsel %vm2062, %v2147, %v2151
        %v2153 = vrot.slane %v1912, 1
        %v2154 = vsel %vm2062, %v2149, %v2153
        %v2155 = vrot.slane %v1913, 1
        %v2156 = vsel %vm2062, %v2151, %v2155
        %v2157 = vrot.slane %v1914, 1
        %v2158 = vsel %vm2062, %v2153, %v2157
        %v2159 = vrot.slane %v1915, 1
        %v2160 = vsel %vm2062, %v2155, %v2159
        %v2161 = vrot.slane %v1916, 1
        %v2162 = vsel %vm2062, %v2157, %v2161
        %v2163 = vrot.slane %v1917, 1
        %v2164 = vsel %vm2062, %v2159, %v2163
        %v2165 = vrot.slane %v1918, 1
        %v2166 = vsel %vm2062, %v2161, %v2165
        %v2167 = vrot.slane %v1919, 1
        %v2168 = vsel %vm2062, %v2163, %v2167
        %v2169 = vrot.slane %v1920, 1
        %v2170 = vsel %vm2062, %v2165, %v2169
        %v2171 = vrot.slane %v1921, 1
        %v2172 = vsel %vm2062, %v2167, %v2171
        %v2173 = vrot.slane %v1922, 1
        %v2174 = vsel %vm2062, %v2169, %v2173
        %v2175 = vrot.slane %v1923, 1
        %v2176 = vsel %vm2062, %v2171, %v2175
        %v2177 = vrot.slane %v1924, 1
        %v2178 = vsel %vm2062, %v2173, %v2177
        %v2179 = vrot.slane %v1925, 1
        %v2180 = vsel %vm2062, %v2175, %v2179
        %v2181 = vrot.slane %v1926, 1
        %v2182 = vsel %vm2062, %v2177, %v2181
        %v2183 = vrot.slane %v1927, 1
        %v2184 = vsel %vm2062, %v2179, %v2183
        %v2185 = vrot.slane %v1928, 1
        %v2186 = vsel %vm2062, %v2181, %v2185
        %v2187 = vrot.slane %v1929, 1
        %v2188 = vsel %vm2062, %v2183, %v2187
        %v2189 = vrot.slane %v1930, 1
        %v2190 = vsel %vm2062, %v2185, %v2189
        %v2191 = vrot.slane %v1931, 1
        %v2192 = vsel %vm2062, %v2187, %v2191
        %v2257 = vsel %vm1964, 0.0, %v2065
        %v2258 = vsel %vm1964, 0.0, %v2068
        %v2259 = vsel %vm1965, 0.0, %v2070
        %v2260 = vsel %vm1965, 0.0, %v2072
        %v2261 = vsel %vm1966, 0.0, %v2074
        %v2262 = vsel %vm1966, 0.0, %v2076
        %v2263 = vsel %vm1967, 0.0, %v2078
        %v2264 = vsel %vm1967, 0.0, %v2080
        %v2265 = vsel %vm1968, 0.0, %v2082
        %v2266 = vsel %vm1968, 0.0, %v2084
        %v2267 = vsel %vm1969, 0.0, %v2086
        %v2268 = vsel %vm1969, 0.0, %v2088
        %v2269 = vsel %vm1970, 0.0, %v2090
        %v2270 = vsel %vm1970, 0.0, %v2092
        %v2271 = vsel %vm1971, 0.0, %v2094
        %v2272 = vsel %vm1971, 0.0, %v2096
        %v2273 = vsel %vm1972, 0.0, %v2098
        %v2274 = vsel %vm1972, 0.0, %v2100
        %v2275 = vsel %vm1973, 0.0, %v2102
        %v2276 = vsel %vm1973, 0.0, %v2104
        %v2277 = vsel %vm1974, 0.0, %v2106
        %v2278 = vsel %vm1974, 0.0, %v2108
        %v2279 = vsel %vm1975, 0.0, %v2110
        %v2280 = vsel %vm1975, 0.0, %v2112
        %v2281 = vsel %vm1976, 0.0, %v2114
        %v2282 = vsel %vm1976, 0.0, %v2116
        %v2283 = vsel %vm1977, 0.0, %v2118
        %v2284 = vsel %vm1977, 0.0, %v2120
        %v2285 = vsel %vm1978, 0.0, %v2122
        %v2286 = vsel %vm1978, 0.0, %v2124
        %v2287 = vsel %vm1979, 0.0, %v2126
        %v2288 = vsel %vm1979, 0.0, %v2128
        %v2289 = vsel %vm1980, 0.0, %v2130
        %v2290 = vsel %vm1980, 0.0, %v2132
        %v2291 = vsel %vm1981, 0.0, %v2134
        %v2292 = vsel %vm1981, 0.0, %v2136
        %v2293 = vsel %vm1982, 0.0, %v2138
        %v2294 = vsel %vm1982, 0.0, %v2140
        %v2295 = vsel %vm1983, 0.0, %v2142
        %v2296 = vsel %vm1983, 0.0, %v2144
        %v2297 = vsel %vm1984, 0.0, %v2146
        %v2298 = vsel %vm1984, 0.0, %v2148
        %v2299 = vsel %vm1985, 0.0, %v2150
        %v2300 = vsel %vm1985, 0.0, %v2152
        %v2301 = vsel %vm1986, 0.0, %v2154
        %v2302 = vsel %vm1986, 0.0, %v2156
        %v2303 = vsel %vm1987, 0.0, %v2158
        %v2304 = vsel %vm1987, 0.0, %v2160
        %v2305 = vsel %vm1988, 0.0, %v2162
        %v2306 = vsel %vm1988, 0.0, %v2164
        %v2307 = vsel %vm1989, 0.0, %v2166
        %v2308 = vsel %vm1989, 0.0, %v2168
        %v2309 = vsel %vm1990, 0.0, %v2170
        %v2310 = vsel %vm1990, 0.0, %v2172
        %v2311 = vsel %vm1991, 0.0, %v2174
        %v2312 = vsel %vm1991, 0.0, %v2176
        %v2313 = vsel %vm1992, 0.0, %v2178
        %v2314 = vsel %vm1992, 0.0, %v2180
        %v2315 = vsel %vm1993, 0.0, %v2182
        %v2316 = vsel %vm1993, 0.0, %v2184
        %v2317 = vsel %vm1994, 0.0, %v2186
        %v2318 = vsel %vm1994, 0.0, %v2188
        %v2319 = vsel %vm1995, 0.0, %v2190
        %v2320 = vsel %vm1995, 0.0, %v2192
        %s2321 = scalar_lea.vmem [#allocation4], 1024
        %v2322 = vld [vmem:[%s2321] sm:$0xff]
        %v2323 = vld [vmem:[%s2321 + $0x8] sm:$0xff]
        %v2324 = vld [vmem:[%s2321 + $0x10] sm:$0xff]
        %v2325 = vld [vmem:[%s2321 + $0x18] sm:$0xff]
        %v2326 = vld [vmem:[%s2321 + $0x20] sm:$0xff]
        %v2327 = vld [vmem:[%s2321 + $0x28] sm:$0xff]
        %v2328 = vld [vmem:[%s2321 + $0x30] sm:$0xff]
        %v2329 = vld [vmem:[%s2321 + $0x38] sm:$0xff]
        %v2330 = vld [vmem:[%s2321 + $0x40] sm:$0xff]
        %v2331 = vld [vmem:[%s2321 + $0x48] sm:$0xff]
        %v2332 = vld [vmem:[%s2321 + $0x50] sm:$0xff]
        %v2333 = vld [vmem:[%s2321 + $0x58] sm:$0xff]
        %v2334 = vld [vmem:[%s2321 + $0x60] sm:$0xff]
        %v2335 = vld [vmem:[%s2321 + $0x68] sm:$0xff]
        %v2336 = vld [vmem:[%s2321 + $0x70] sm:$0xff]
        %v2337 = vld [vmem:[%s2321 + $0x78] sm:$0xff]
        %v2338 = vld [vmem:[%s2321 + $0x80] sm:$0xff]
        %v2339 = vld [vmem:[%s2321 + $0x88] sm:$0xff]
        %v2340 = vld [vmem:[%s2321 + $0x90] sm:$0xff]
        %v2341 = vld [vmem:[%s2321 + $0x98] sm:$0xff]
        %v2342 = vld [vmem:[%s2321 + $0xa0] sm:$0xff]
        %v2343 = vld [vmem:[%s2321 + $0xa8] sm:$0xff]
        %v2344 = vld [vmem:[%s2321 + $0xb0] sm:$0xff]
        %v2345 = vld [vmem:[%s2321 + $0xb8] sm:$0xff]
        %v2346 = vld [vmem:[%s2321 + $0xc0] sm:$0xff]
        %v2347 = vld [vmem:[%s2321 + $0xc8] sm:$0xff]
        %v2348 = vld [vmem:[%s2321 + $0xd0] sm:$0xff]
        %v2349 = vld [vmem:[%s2321 + $0xd8] sm:$0xff]
        %v2350 = vld [vmem:[%s2321 + $0xe0] sm:$0xff]
        %v2351 = vld [vmem:[%s2321 + $0xe8] sm:$0xff]
        %v2352 = vld [vmem:[%s2321 + $0xf0] sm:$0xff]
        %v2353 = vld [vmem:[%s2321 + $0xf8] sm:$0xff]
        %v2354 = vld [vmem:[%s2321 + $0x100] sm:$0xff]
        %v2355 = vld [vmem:[%s2321 + $0x108] sm:$0xff]
        %v2356 = vld [vmem:[%s2321 + $0x110] sm:$0xff]
        %v2357 = vld [vmem:[%s2321 + $0x118] sm:$0xff]
        %v2358 = vld [vmem:[%s2321 + $0x120] sm:$0xff]
        %v2359 = vld [vmem:[%s2321 + $0x128] sm:$0xff]
        %v2360 = vld [vmem:[%s2321 + $0x130] sm:$0xff]
        %v2361 = vld [vmem:[%s2321 + $0x138] sm:$0xff]
        %v2362 = vld [vmem:[%s2321 + $0x140] sm:$0xff]
        %v2363 = vld [vmem:[%s2321 + $0x148] sm:$0xff]
        %v2364 = vld [vmem:[%s2321 + $0x150] sm:$0xff]
        %v2365 = vld [vmem:[%s2321 + $0x158] sm:$0xff]
        %v2366 = vld [vmem:[%s2321 + $0x160] sm:$0xff]
        %v2367 = vld [vmem:[%s2321 + $0x168] sm:$0xff]
        %v2368 = vld [vmem:[%s2321 + $0x170] sm:$0xff]
        %v2369 = vld [vmem:[%s2321 + $0x178] sm:$0xff]
        %v2370 = vld [vmem:[%s2321 + $0x180] sm:$0xff]
        %v2371 = vld [vmem:[%s2321 + $0x188] sm:$0xff]
        %v2372 = vld [vmem:[%s2321 + $0x190] sm:$0xff]
        %v2373 = vld [vmem:[%s2321 + $0x198] sm:$0xff]
        %v2374 = vld [vmem:[%s2321 + $0x1a0] sm:$0xff]
        %v2375 = vld [vmem:[%s2321 + $0x1a8] sm:$0xff]
        %v2376 = vld [vmem:[%s2321 + $0x1b0] sm:$0xff]
        %v2377 = vld [vmem:[%s2321 + $0x1b8] sm:$0xff]
        %v2378 = vld [vmem:[%s2321 + $0x1c0] sm:$0xff]
        %v2379 = vld [vmem:[%s2321 + $0x1c8] sm:$0xff]
        %v2380 = vld [vmem:[%s2321 + $0x1d0] sm:$0xff]
        %v2381 = vld [vmem:[%s2321 + $0x1d8] sm:$0xff]
        %v2382 = vld [vmem:[%s2321 + $0x1e0] sm:$0xff]
        %v2383 = vld [vmem:[%s2321 + $0x1e8] sm:$0xff]
        %v2384 = vld [vmem:[%s2321 + $0x1f0] sm:$0xff]
        %v2385 = vld [vmem:[%s2321 + $0x1f8] sm:$0xff]
        %2386 = vmatprep.subr.mxu0 %v2323
        %2387 = vmatpush1.msra.mxu0 %v2322
        %2388 = vmatprep.subr.mxu0 %v2325
        %2389 = vmatpush1.msra.mxu0 %v2324
        %2390 = vmatprep.subr.mxu0 %v2327
        %2391 = vmatpush1.msra.mxu0 %v2326
        %2392 = vmatprep.subr.mxu0 %v2329
        %2393 = vmatpush1.msra.mxu0 %v2328
        %2394 = vmatprep.subr.mxu0 %v2331
        %2395 = vmatpush1.msra.mxu0 %v2330
        %2396 = vmatprep.subr.mxu0 %v2333
        %2397 = vmatpush1.msra.mxu0 %v2332
        %2398 = vmatprep.subr.mxu0 %v2335
        %2399 = vmatpush1.msra.mxu0 %v2334
        %2400 = vmatprep.subr.mxu0 %v2337
        %2401 = vmatpush1.msra.mxu0 %v2336
        %2402 = vmatprep.subr.mxu0 %v2339
        %2403 = vmatpush1.msra.mxu0 %v2338
        %2404 = vmatprep.subr.mxu0 %v2341
        %2405 = vmatpush1.msra.mxu0 %v2340
        %2406 = vmatprep.subr.mxu0 %v2343
        %2407 = vmatpush1.msra.mxu0 %v2342
        %2408 = vmatprep.subr.mxu0 %v2345
        %2409 = vmatpush1.msra.mxu0 %v2344
        %2410 = vmatprep.subr.mxu0 %v2347
        %2411 = vmatpush1.msra.mxu0 %v2346
        %2412 = vmatprep.subr.mxu0 %v2349
        %2413 = vmatpush1.msra.mxu0 %v2348
        %2414 = vmatprep.subr.mxu0 %v2351
        %2415 = vmatpush1.msra.mxu0 %v2350
        %2416 = vmatprep.subr.mxu0 %v2353
        %2417 = vmatpush1.msra.mxu0 %v2352
        %2418 = vmatprep.subr.mxu0 %v2355
        %2419 = vmatpush1.msra.mxu0 %v2354
        %2420 = vmatprep.subr.mxu0 %v2357
        %2421 = vmatpush1.msra.mxu0 %v2356
        %2422 = vmatprep.subr.mxu0 %v2359
        %2423 = vmatpush1.msra.mxu0 %v2358
        %2424 = vmatprep.subr.mxu0 %v2361
        %2425 = vmatpush1.msra.mxu0 %v2360
        %2426 = vmatprep.subr.mxu0 %v2363
        %2427 = vmatpush1.msra.mxu0 %v2362
        %2428 = vmatprep.subr.mxu0 %v2365
        %2429 = vmatpush1.msra.mxu0 %v2364
        %2430 = vmatprep.subr.mxu0 %v2367
        %2431 = vmatpush1.msra.mxu0 %v2366
        %2432 = vmatprep.subr.mxu0 %v2369
        %2433 = vmatpush1.msra.mxu0 %v2368
        %2434 = vmatprep.subr.mxu0 %v2371
        %2435 = vmatpush1.msra.mxu0 %v2370
        %2436 = vmatprep.subr.mxu0 %v2373
        %2437 = vmatpush1.msra.mxu0 %v2372
        %2438 = vmatprep.subr.mxu0 %v2375
        %2439 = vmatpush1.msra.mxu0 %v2374
        %2440 = vmatprep.subr.mxu0 %v2377
        %2441 = vmatpush1.msra.mxu0 %v2376
        %2442 = vmatprep.subr.mxu0 %v2379
        %2443 = vmatpush1.msra.mxu0 %v2378
        %2444 = vmatprep.subr.mxu0 %v2381
        %2445 = vmatpush1.msra.mxu0 %v2380
        %2446 = vmatprep.subr.mxu0 %v2383
        %2447 = vmatpush1.msra.mxu0 %v2382
        %2448 = vmatprep.subr.mxu0 %v2385
        %2449 = vmatpush1.msra.mxu0 %v2384
        %2450 = vmatprep.mubr.f32.mxu0 %v2258
        %2451 = vmatmul.mubr.f32.gmra.mrb[0].mxu0 %v2257
        %v2452 = vpop.f32.mrb[0].mxu0
        %v2453 = vadd.f32 0.0, %v2452
        %v2454 = vpop.f32.mrb[0].mxu0
        %v2455 = vadd.f32 0.0, %v2454
        %2456 = vmatprep.mubr.f32.mxu0 %v2260
        %2457 = vmatmul.mubr.f32.gmra.mrb[0].mxu0 %v2259
        %v2458 = vpop.f32.mrb[0].mxu0
        %v2459 = vadd.f32 0.0, %v2458
        %v2460 = vpop.f32.mrb[0].mxu0
        %v2461 = vadd.f32 0.0, %v2460
        %2462 = vmatprep.mubr.f32.mxu0 %v2262
        %2463 = vmatmul.mubr.f32.gmra.mrb[0].mxu0 %v2261
        %v2464 = vpop.f32.mrb[0].mxu0
        %v2465 = vadd.f32 0.0, %v2464
        %v2466 = vpop.f32.mrb[0].mxu0
        %v2467 = vadd.f32 0.0, %v2466
        %2468 = vmatprep.mubr.f32.mxu0 %v2264
        %2469 = vmatmul.mubr.f32.gmra.mrb[0].mxu0 %v2263
        %v2470 = vpop.f32.mrb[0].mxu0
        %v2471 = vadd.f32 0.0, %v2470
        %v2472 = vpop.f32.mrb[0].mxu0
        %v2473 = vadd.f32 0.0, %v2472
        %2474 = vmatprep.mubr.f32.mxu0 %v2266
        %2475 = vmatmul.mubr.f32.gmra.mrb[0].mxu0 %v2265
        %v2476 = vpop.f32.mrb[0].mxu0
        %v2477 = vadd.f32 0.0, %v2476
        %v2478 = vpop.f32.mrb[0].mxu0
        %v2479 = vadd.f32 0.0, %v2478
        %2480 = vmatprep.mubr.f32.mxu0 %v2268
        %2481 = vmatmul.mubr.f32.gmra.mrb[0].mxu0 %v2267
        %v2482 = vpop.f32.mrb[0].mxu0
        %v2483 = vadd.f32 0.0, %v2482
        %v2484 = vpop.f32.mrb[0].mxu0
        %v2485 = vadd.f32 0.0, %v2484
        %2486 = vmatprep.mubr.f32.mxu0 %v2270
        %2487 = vmatmul.mubr.f32.gmra.mrb[0].mxu0 %v2269
        %v2488 = vpop.f32.mrb[0].mxu0
        %v2489 = vadd.f32 0.0, %v2488
        %v2490 = vpop.f32.mrb[0].mxu0
        %v2491 = vadd.f32 0.0, %v2490
        %2492 = vmatprep.mubr.f32.mxu0 %v2272
        %2493 = vmatmul.mubr.f32.gmra.mrb[0].mxu0 %v2271
        %v2494 = vpop.f32.mrb[0].mxu0
        %v2495 = vadd.f32 0.0, %v2494
        %v2496 = vpop.f32.mrb[0].mxu0
        %v2497 = vadd.f32 0.0, %v2496
        %2498 = vmatprep.mubr.f32.mxu0 %v2274
        %2499 = vmatmul.mubr.f32.gmra.mrb[0].mxu0 %v2273
        %v2500 = vpop.f32.mrb[0].mxu0
        %v2501 = vadd.f32 0.0, %v2500
        %v2502 = vpop.f32.mrb[0].mxu0
        %v2503 = vadd.f32 0.0, %v2502
        %2504 = vmatprep.mubr.f32.mxu0 %v2276
        %2505 = vmatmul.mubr.f32.gmra.mrb[0].mxu0 %v2275
        %v2506 = vpop.f32.mrb[0].mxu0
        %v2507 = vadd.f32 0.0, %v2506
        %v2508 = vpop.f32.mrb[0].mxu0
        %v2509 = vadd.f32 0.0, %v2508
        %2510 = vmatprep.mubr.f32.mxu0 %v2278
        %2511 = vmatmul.mubr.f32.gmra.mrb[0].mxu0 %v2277
        %v2512 = vpop.f32.mrb[0].mxu0
        %v2513 = vadd.f32 0.0, %v2512
        %v2514 = vpop.f32.mrb[0].mxu0
        %v2515 = vadd.f32 0.0, %v2514
        %2516 = vmatprep.mubr.f32.mxu0 %v2280
        %2517 = vmatmul.mubr.f32.gmra.mrb[0].mxu0 %v2279
        %v2518 = vpop.f32.mrb[0].mxu0
        %v2519 = vadd.f32 0.0, %v2518
        %v2520 = vpop.f32.mrb[0].mxu0
        %v2521 = vadd.f32 0.0, %v2520
        %2522 = vmatprep.mubr.f32.mxu0 %v2282
        %2523 = vmatmul.mubr.f32.gmra.mrb[0].mxu0 %v2281
        %v2524 = vpop.f32.mrb[0].mxu0
        %v2525 = vadd.f32 0.0, %v2524
        %v2526 = vpop.f32.mrb[0].mxu0
        %v2527 = vadd.f32 0.0, %v2526
        %2528 = vmatprep.mubr.f32.mxu0 %v2284
        %2529 = vmatmul.mubr.f32.gmra.mrb[0].mxu0 %v2283
        %v2530 = vpop.f32.mrb[0].mxu0
        %v2531 = vadd.f32 0.0, %v2530
        %v2532 = vpop.f32.mrb[0].mxu0
        %v2533 = vadd.f32 0.0, %v2532
        %2534 = vmatprep.mubr.f32.mxu0 %v2286
        %2535 = vmatmul.mubr.f32.gmra.mrb[0].mxu0 %v2285
        %v2536 = vpop.f32.mrb[0].mxu0
        %v2537 = vadd.f32 0.0, %v2536
        %v2538 = vpop.f32.mrb[0].mxu0
        %v2539 = vadd.f32 0.0, %v2538
        %2540 = vmatprep.mubr.f32.mxu0 %v2288
        %2541 = vmatmul.mubr.f32.gmra.mrb[0].mxu0 %v2287
        %v2542 = vpop.f32.mrb[0].mxu0
        %v2543 = vadd.f32 0.0, %v2542
        %v2544 = vpop.f32.mrb[0].mxu0
        %v2545 = vadd.f32 0.0, %v2544
        %2546 = vmatprep.mubr.f32.mxu0 %v2290
        %2547 = vmatmul.mubr.f32.gmra.mrb[0].mxu0 %v2289
        %v2548 = vpop.f32.mrb[0].mxu0
        %v2549 = vadd.f32 0.0, %v2548
        %v2550 = vpop.f32.mrb[0].mxu0
        %v2551 = vadd.f32 0.0, %v2550
        %2552 = vmatprep.mubr.f32.mxu0 %v2292
        %2553 = vmatmul.mubr.f32.gmra.mrb[0].mxu0 %v2291
        %v2554 = vpop.f32.mrb[0].mxu0
        %v2555 = vadd.f32 0.0, %v2554
        %v2556 = vpop.f32.mrb[0].mxu0
        %v2557 = vadd.f32 0.0, %v2556
        %2558 = vmatprep.mubr.f32.mxu0 %v2294
        %2559 = vmatmul.mubr.f32.gmra.mrb[0].mxu0 %v2293
        %v2560 = vpop.f32.mrb[0].mxu0
        %v2561 = vadd.f32 0.0, %v2560
        %v2562 = vpop.f32.mrb[0].mxu0
        %v2563 = vadd.f32 0.0, %v2562
        %2564 = vmatprep.mubr.f32.mxu0 %v2296
        %2565 = vmatmul.mubr.f32.gmra.mrb[0].mxu0 %v2295
        %v2566 = vpop.f32.mrb[0].mxu0
        %v2567 = vadd.f32 0.0, %v2566
        %v2568 = vpop.f32.mrb[0].mxu0
        %v2569 = vadd.f32 0.0, %v2568
        %2570 = vmatprep.mubr.f32.mxu0 %v2298
        %2571 = vmatmul.mubr.f32.gmra.mrb[0].mxu0 %v2297
        %v2572 = vpop.f32.mrb[0].mxu0
        %v2573 = vadd.f32 0.0, %v2572
        %v2574 = vpop.f32.mrb[0].mxu0
        %v2575 = vadd.f32 0.0, %v2574
        %2576 = vmatprep.mubr.f32.mxu0 %v2300
        %2577 = vmatmul.mubr.f32.gmra.mrb[0].mxu0 %v2299
        %v2578 = vpop.f32.mrb[0].mxu0
        %v2579 = vadd.f32 0.0, %v2578
        %v2580 = vpop.f32.mrb[0].mxu0
        %v2581 = vadd.f32 0.0, %v2580
        %2582 = vmatprep.mubr.f32.mxu0 %v2302
        %2583 = vmatmul.mubr.f32.gmra.mrb[0].mxu0 %v2301
        %v2584 = vpop.f32.mrb[0].mxu0
        %v2585 = vadd.f32 0.0, %v2584
        %v2586 = vpop.f32.mrb[0].mxu0
        %v2587 = vadd.f32 0.0, %v2586
        %2588 = vmatprep.mubr.f32.mxu0 %v2304
        %2589 = vmatmul.mubr.f32.gmra.mrb[0].mxu0 %v2303
        %v2590 = vpop.f32.mrb[0].mxu0
        %v2591 = vadd.f32 0.0, %v2590
        %v2592 = vpop.f32.mrb[0].mxu0
        %v2593 = vadd.f32 0.0, %v2592
        %2594 = vmatprep.mubr.f32.mxu0 %v2306
        %2595 = vmatmul.mubr.f32.gmra.mrb[0].mxu0 %v2305
        %v2596 = vpop.f32.mrb[0].mxu0
        %v2597 = vadd.f32 0.0, %v2596
        %v2598 = vpop.f32.mrb[0].mxu0
        %v2599 = vadd.f32 0.0, %v2598
        %2600 = vmatprep.mubr.f32.mxu0 %v2308
        %2601 = vmatmul.mubr.f32.gmra.mrb[0].mxu0 %v2307
        %v2602 = vpop.f32.mrb[0].mxu0
        %v2603 = vadd.f32 0.0, %v2602
        %v2604 = vpop.f32.mrb[0].mxu0
        %v2605 = vadd.f32 0.0, %v2604
        %2606 = vmatprep.mubr.f32.mxu0 %v2310
        %2607 = vmatmul.mubr.f32.gmra.mrb[0].mxu0 %v2309
        %v2608 = vpop.f32.mrb[0].mxu0
        %v2609 = vadd.f32 0.0, %v2608
        %v2610 = vpop.f32.mrb[0].mxu0
        %v2611 = vadd.f32 0.0, %v2610
        %2612 = vmatprep.mubr.f32.mxu0 %v2312
        %2613 = vmatmul.mubr.f32.gmra.mrb[0].mxu0 %v2311
        %v2614 = vpop.f32.mrb[0].mxu0
        %v2615 = vadd.f32 0.0, %v2614
        %v2616 = vpop.f32.mrb[0].mxu0
        %v2617 = vadd.f32 0.0, %v2616
        %2618 = vmatprep.mubr.f32.mxu0 %v2314
        %2619 = vmatmul.mubr.f32.gmra.mrb[0].mxu0 %v2313
        %v2620 = vpop.f32.mrb[0].mxu0
        %v2621 = vadd.f32 0.0, %v2620
        %v2622 = vpop.f32.mrb[0].mxu0
        %v2623 = vadd.f32 0.0, %v2622
        %2624 = vmatprep.mubr.f32.mxu0 %v2316
        %2625 = vmatmul.mubr.f32.gmra.mrb[0].mxu0 %v2315
        %v2626 = vpop.f32.mrb[0].mxu0
        %v2627 = vadd.f32 0.0, %v2626
        %v2628 = vpop.f32.mrb[0].mxu0
        %v2629 = vadd.f32 0.0, %v2628
        %2630 = vmatprep.mubr.f32.mxu0 %v2318
        %2631 = vmatmul.mubr.f32.gmra.mrb[0].mxu0 %v2317
        %v2632 = vpop.f32.mrb[0].mxu0
        %v2633 = vadd.f32 0.0, %v2632
        %v2634 = vpop.f32.mrb[0].mxu0
        %v2635 = vadd.f32 0.0, %v2634
        %2636 = vmatprep.mubr.f32.mxu0 %v2320
        %2637 = vmatmul.mubr.f32.gmra.mrb[0].mxu0 %v2319
        %v2638 = vpop.f32.mrb[0].mxu0
        %v2639 = vadd.f32 0.0, %v2638
        %v2640 = vpop.f32.mrb[0].mxu0
        %v2641 = vadd.f32 0.0, %v2640
        %2642 = vdwg.mxu0
        %v2643 = vadd.f32 %v1676, %v2453
        %v2644 = vadd.f32 %v1678, %v2455
        %v2645 = vadd.f32 %v1682, %v2459
        %v2646 = vadd.f32 %v1684, %v2461
        %v2647 = vadd.f32 %v1688, %v2465
        %v2648 = vadd.f32 %v1690, %v2467
        %v2649 = vadd.f32 %v1694, %v2471
        %v2650 = vadd.f32 %v1696, %v2473
        %v2651 = vadd.f32 %v1700, %v2477
        %v2652 = vadd.f32 %v1702, %v2479
        %v2653 = vadd.f32 %v1706, %v2483
        %v2654 = vadd.f32 %v1708, %v2485
        %v2655 = vadd.f32 %v1712, %v2489
        %v2656 = vadd.f32 %v1714, %v2491
        %v2657 = vadd.f32 %v1718, %v2495
        %v2658 = vadd.f32 %v1720, %v2497
        %v2659 = vadd.f32 %v1724, %v2501
        %v2660 = vadd.f32 %v1726, %v2503
        %v2661 = vadd.f32 %v1730, %v2507
        %v2662 = vadd.f32 %v1732, %v2509
        %v2663 = vadd.f32 %v1736, %v2513
        %v2664 = vadd.f32 %v1738, %v2515
        %v2665 = vadd.f32 %v1742, %v2519
        %v2666 = vadd.f32 %v1744, %v2521
        %v2667 = vadd.f32 %v1748, %v2525
        %v2668 = vadd.f32 %v1750, %v2527
        %v2669 = vadd.f32 %v1754, %v2531
        %v2670 = vadd.f32 %v1756, %v2533
        %v2671 = vadd.f32 %v1760, %v2537
        %v2672 = vadd.f32 %v1762, %v2539
        %v2673 = vadd.f32 %v1766, %v2543
        %v2674 = vadd.f32 %v1768, %v2545
        %v2675 = vadd.f32 %v1772, %v2549
        %v2676 = vadd.f32 %v1774, %v2551
        %v2677 = vadd.f32 %v1778, %v2555
        %v2678 = vadd.f32 %v1780, %v2557
        %v2679 = vadd.f32 %v1784, %v2561
        %v2680 = vadd.f32 %v1786, %v2563
        %v2681 = vadd.f32 %v1790, %v2567
        %v2682 = vadd.f32 %v1792, %v2569
        %v2683 = vadd.f32 %v1796, %v2573
        %v2684 = vadd.f32 %v1798, %v2575
        %v2685 = vadd.f32 %v1802, %v2579
        %v2686 = vadd.f32 %v1804, %v2581
        %v2687 = vadd.f32 %v1808, %v2585
        %v2688 = vadd.f32 %v1810, %v2587
        %v2689 = vadd.f32 %v1814, %v2591
        %v2690 = vadd.f32 %v1816, %v2593
        %v2691 = vadd.f32 %v1820, %v2597
        %v2692 = vadd.f32 %v1822, %v2599
        %v2693 = vadd.f32 %v1826, %v2603
        %v2694 = vadd.f32 %v1828, %v2605
        %v2695 = vadd.f32 %v1832, %v2609
        %v2696 = vadd.f32 %v1834, %v2611
        %v2697 = vadd.f32 %v1838, %v2615
        %v2698 = vadd.f32 %v1840, %v2617
        %v2699 = vadd.f32 %v1844, %v2621
        %v2700 = vadd.f32 %v1846, %v2623
        %v2701 = vadd.f32 %v1850, %v2627
        %v2702 = vadd.f32 %v1852, %v2629
        %v2703 = vadd.f32 %v1856, %v2633
        %v2704 = vadd.f32 %v1858, %v2635
        %v2705 = vadd.f32 %v1862, %v2639
        %v2706 = vadd.f32 %v1864, %v2641
        %v2707 = vld [vmem:[%s241 + $0x30] sm:$0x80]
        %v2708 = vld [vmem:[%s241 + $0x38] sm:$0x80]
        %v2709 = vld [vmem:[%s241 + $0x40] sm:$0xff]
        %v2710 = vld [vmem:[%s241 + $0x48] sm:$0xff]
        %v2711 = vld [vmem:[%s241 + $0x50] sm:$0xff]
        %v2712 = vld [vmem:[%s241 + $0x58] sm:$0xff]
        %v2713 = vld [vmem:[%s241 + $0x60] sm:$0xff]
        %v2714 = vld [vmem:[%s241 + $0x68] sm:$0xff]
        %v2715 = vld [vmem:[%s241 + $0x70] sm:$0xff]
        %v2716 = vld [vmem:[%s241 + $0x78] sm:$0xff]
        %v2717 = vld [vmem:[%s241 + $0x80] sm:$0xff]
        %v2718 = vld [vmem:[%s241 + $0x88] sm:$0xff]
        %v2719 = vld [vmem:[%s241 + $0x90] sm:$0xff]
        %v2720 = vld [vmem:[%s241 + $0x98] sm:$0xff]
        %v2721 = vld [vmem:[%s241 + $0xa0] sm:$0xff]
        %v2722 = vld [vmem:[%s241 + $0xa8] sm:$0xff]
        %v2723 = vld [vmem:[%s241 + $0xb0] sm:$0xff]
        %v2724 = vld [vmem:[%s241 + $0xb8] sm:$0xff]
        %v2725 = vld [vmem:[%s241 + $0xc0] sm:$0xff]
        %v2726 = vld [vmem:[%s241 + $0xc8] sm:$0xff]
        %v2727 = vld [vmem:[%s241 + $0xd0] sm:$0xff]
        %v2728 = vld [vmem:[%s241 + $0xd8] sm:$0xff]
        %v2729 = vld [vmem:[%s241 + $0xe0] sm:$0xff]
        %v2730 = vld [vmem:[%s241 + $0xe8] sm:$0xff]
        %v2731 = vld [vmem:[%s241 + $0xf0] sm:$0xff]
        %v2732 = vld [vmem:[%s241 + $0xf8] sm:$0xff]
        %v2733 = vld [vmem:[%s241 + $0x100] sm:$0xff]
        %v2734 = vld [vmem:[%s241 + $0x108] sm:$0xff]
        %v2735 = vld [vmem:[%s241 + $0x110] sm:$0xff]
        %v2736 = vld [vmem:[%s241 + $0x118] sm:$0xff]
        %v2737 = vld [vmem:[%s241 + $0x120] sm:$0xff]
        %v2738 = vld [vmem:[%s241 + $0x128] sm:$0xff]
        %v2739 = vld [vmem:[%s241 + $0x130] sm:$0xff]
        %v2740 = vld [vmem:[%s241 + $0x138] sm:$0xff]
        %v2741 = vld [vmem:[%s241 + $0x140] sm:$0xff]
        %v2742 = vld [vmem:[%s241 + $0x148] sm:$0xff]
        %v2743 = vld [vmem:[%s241 + $0x150] sm:$0xff]
        %v2744 = vld [vmem:[%s241 + $0x158] sm:$0xff]
        %v2745 = vld [vmem:[%s241 + $0x160] sm:$0xff]
        %v2746 = vld [vmem:[%s241 + $0x168] sm:$0xff]
        %v2747 = vld [vmem:[%s241 + $0x170] sm:$0xff]
        %v2748 = vld [vmem:[%s241 + $0x178] sm:$0xff]
        %v2749 = vld [vmem:[%s241 + $0x180] sm:$0xff]
        %v2750 = vld [vmem:[%s241 + $0x188] sm:$0xff]
        %v2751 = vld [vmem:[%s241 + $0x190] sm:$0xff]
        %v2752 = vld [vmem:[%s241 + $0x198] sm:$0xff]
        %v2753 = vld [vmem:[%s241 + $0x1a0] sm:$0xff]
        %v2754 = vld [vmem:[%s241 + $0x1a8] sm:$0xff]
        %v2755 = vld [vmem:[%s241 + $0x1b0] sm:$0xff]
        %v2756 = vld [vmem:[%s241 + $0x1b8] sm:$0xff]
        %v2757 = vld [vmem:[%s241 + $0x1c0] sm:$0xff]
        %v2758 = vld [vmem:[%s241 + $0x1c8] sm:$0xff]
        %v2759 = vld [vmem:[%s241 + $0x1d0] sm:$0xff]
        %v2760 = vld [vmem:[%s241 + $0x1d8] sm:$0xff]
        %v2761 = vld [vmem:[%s241 + $0x1e0] sm:$0xff]
        %v2762 = vld [vmem:[%s241 + $0x1e8] sm:$0xff]
        %v2763 = vld [vmem:[%s241 + $0x1f0] sm:$0xff]
        %v2764 = vld [vmem:[%s241 + $0x1f8] sm:$0xff]
        %v2765 = vld [vmem:[%s241 + $0x200] sm:$0xff]
        %v2766 = vld [vmem:[%s241 + $0x208] sm:$0xff]
        %v2767 = vld [vmem:[%s241 + $0x210] sm:$0xff]
        %v2768 = vld [vmem:[%s241 + $0x218] sm:$0xff]
        %v2769 = vld [vmem:[%s241 + $0x220] sm:$0xff]
        %v2770 = vld [vmem:[%s241 + $0x228] sm:$0xff]
        %v2771 = vld [vmem:[%s241 + $0x230] sm:$0x7f]
        %v2772 = vld [vmem:[%s241 + $0x238] sm:$0x7f]
        %v2839 = vrot.slane %v2707, 7
        %v2840 = vrot.slane %v2709, 7
        %v2841 = vsel %vm962, %v2839, %v2840
        %v2842 = vrot.slane %v2708, 7
        %v2843 = vrot.slane %v2710, 7
        %v2844 = vsel %vm962, %v2842, %v2843
        %v2845 = vrot.slane %v2711, 7
        %v2846 = vsel %vm962, %v2840, %v2845
        %v2847 = vrot.slane %v2712, 7
        %v2848 = vsel %vm962, %v2843, %v2847
        %v2849 = vrot.slane %v2713, 7
        %v2850 = vsel %vm962, %v2845, %v2849
        %v2851 = vrot.slane %v2714, 7
        %v2852 = vsel %vm962, %v2847, %v2851
        %v2853 = vrot.slane %v2715, 7
        %v2854 = vsel %vm962, %v2849, %v2853
        %v2855 = vrot.slane %v2716, 7
        %v2856 = vsel %vm962, %v2851, %v2855
        %v2857 = vrot.slane %v2717, 7
        %v2858 = vsel %vm962, %v2853, %v2857
        %v2859 = vrot.slane %v2718, 7
        %v2860 = vsel %vm962, %v2855, %v2859
        %v2861 = vrot.slane %v2719, 7
        %v2862 = vsel %vm962, %v2857, %v2861
        %v2863 = vrot.slane %v2720, 7
        %v2864 = vsel %vm962, %v2859, %v2863
        %v2865 = vrot.slane %v2721, 7
        %v2866 = vsel %vm962, %v2861, %v2865
        %v2867 = vrot.slane %v2722, 7
        %v2868 = vsel %vm962, %v2863, %v2867
        %v2869 = vrot.slane %v2723, 7
        %v2870 = vsel %vm962, %v2865, %v2869
        %v2871 = vrot.slane %v2724, 7
        %v2872 = vsel %vm962, %v2867, %v2871
        %v2873 = vrot.slane %v2725, 7
        %v2874 = vsel %vm962, %v2869, %v2873
        %v2875 = vrot.slane %v2726, 7
        %v2876 = vsel %vm962, %v2871, %v2875
        %v2877 = vrot.slane %v2727, 7
        %v2878 = vsel %vm962, %v2873, %v2877
        %v2879 = vrot.slane %v2728, 7
        %v2880 = vsel %vm962, %v2875, %v2879
        %v2881 = vrot.slane %v2729, 7
        %v2882 = vsel %vm962, %v2877, %v2881
        %v2883 = vrot.slane %v2730, 7
        %v2884 = vsel %vm962, %v2879, %v2883
        %v2885 = vrot.slane %v2731, 7
        %v2886 = vsel %vm962, %v2881, %v2885
        %v2887 = vrot.slane %v2732, 7
        %v2888 = vsel %vm962, %v2883, %v2887
        %v2889 = vrot.slane %v2733, 7
        %v2890 = vsel %vm962, %v2885, %v2889
        %v2891 = vrot.slane %v2734, 7
        %v2892 = vsel %vm962, %v2887, %v2891
        %v2893 = vrot.slane %v2735, 7
        %v2894 = vsel %vm962, %v2889, %v2893
        %v2895 = vrot.slane %v2736, 7
        %v2896 = vsel %vm962, %v2891, %v2895
        %v2897 = vrot.slane %v2737, 7
        %v2898 = vsel %vm962, %v2893, %v2897
        %v2899 = vrot.slane %v2738, 7
        %v2900 = vsel %vm962, %v2895, %v2899
        %v2901 = vrot.slane %v2739, 7
        %v2902 = vsel %vm962, %v2897, %v2901
        %v2903 = vrot.slane %v2740, 7
        %v2904 = vsel %vm962, %v2899, %v2903
        %v2905 = vrot.slane %v2741, 7
        %v2906 = vsel %vm962, %v2901, %v2905
        %v2907 = vrot.slane %v2742, 7
        %v2908 = vsel %vm962, %v2903, %v2907
        %v2909 = vrot.slane %v2743, 7
        %v2910 = vsel %vm962, %v2905, %v2909
        %v2911 = vrot.slane %v2744, 7
        %v2912 = vsel %vm962, %v2907, %v2911
        %v2913 = vrot.slane %v2745, 7
        %v2914 = vsel %vm962, %v2909, %v2913
        %v2915 = vrot.slane %v2746, 7
        %v2916 = vsel %vm962, %v2911, %v2915
        %v2917 = vrot.slane %v2747, 7
        %v2918 = vsel %vm962, %v2913, %v2917
        %v2919 = vrot.slane %v2748, 7
        %v2920 = vsel %vm962, %v2915, %v2919
        %v2921 = vrot.slane %v2749, 7
        %v2922 = vsel %vm962, %v2917, %v2921
        %v2923 = vrot.slane %v2750, 7
        %v2924 = vsel %vm962, %v2919, %v2923
        %v2925 = vrot.slane %v2751, 7
        %v2926 = vsel %vm962, %v2921, %v2925
        %v2927 = vrot.slane %v2752, 7
        %v2928 = vsel %vm962, %v2923, %v2927
        %v2929 = vrot.slane %v2753, 7
        %v2930 = vsel %vm962, %v2925, %v2929
        %v2931 = vrot.slane %v2754, 7
        %v2932 = vsel %vm962, %v2927, %v2931
        %v2933 = vrot.slane %v2755, 7
        %v2934 = vsel %vm962, %v2929, %v2933
        %v2935 = vrot.slane %v2756, 7
        %v2936 = vsel %vm962, %v2931, %v2935
        %v2937 = vrot.slane %v2757, 7
        %v2938 = vsel %vm962, %v2933, %v2937
        %v2939 = vrot.slane %v2758, 7
        %v2940 = vsel %vm962, %v2935, %v2939
        %v2941 = vrot.slane %v2759, 7
        %v2942 = vsel %vm962, %v2937, %v2941
        %v2943 = vrot.slane %v2760, 7
        %v2944 = vsel %vm962, %v2939, %v2943
        %v2945 = vrot.slane %v2761, 7
        %v2946 = vsel %vm962, %v2941, %v2945
        %v2947 = vrot.slane %v2762, 7
        %v2948 = vsel %vm962, %v2943, %v2947
        %v2949 = vrot.slane %v2763, 7
        %v2950 = vsel %vm962, %v2945, %v2949
        %v2951 = vrot.slane %v2764, 7
        %v2952 = vsel %vm962, %v2947, %v2951
        %v2953 = vrot.slane %v2765, 7
        %v2954 = vsel %vm962, %v2949, %v2953
        %v2955 = vrot.slane %v2766, 7
        %v2956 = vsel %vm962, %v2951, %v2955
        %v2957 = vrot.slane %v2767, 7
        %v2958 = vsel %vm962, %v2953, %v2957
        %v2959 = vrot.slane %v2768, 7
        %v2960 = vsel %vm962, %v2955, %v2959
        %v2961 = vrot.slane %v2769, 7
        %v2962 = vsel %vm962, %v2957, %v2961
        %v2963 = vrot.slane %v2770, 7
        %v2964 = vsel %vm962, %v2959, %v2963
        %v2965 = vrot.slane %v2771, 7
        %v2966 = vsel %vm962, %v2961, %v2965
        %v2967 = vrot.slane %v2772, 7
        %v2968 = vsel %vm962, %v2963, %v2967
        %v3033 = vsel %vm864, 0.0, %v2841
        %v3034 = vsel %vm864, 0.0, %v2844
        %v3035 = vsel %vm865, 0.0, %v2846
        %v3036 = vsel %vm865, 0.0, %v2848
        %v3037 = vsel %vm866, 0.0, %v2850
        %v3038 = vsel %vm866, 0.0, %v2852
        %v3039 = vsel %vm867, 0.0, %v2854
        %v3040 = vsel %vm867, 0.0, %v2856
        %v3041 = vsel %vm868, 0.0, %v2858
        %v3042 = vsel %vm868, 0.0, %v2860
        %v3043 = vsel %vm869, 0.0, %v2862
        %v3044 = vsel %vm869, 0.0, %v2864
        %v3045 = vsel %vm870, 0.0, %v2866
        %v3046 = vsel %vm870, 0.0, %v2868
        %v3047 = vsel %vm871, 0.0, %v2870
        %v3048 = vsel %vm871, 0.0, %v2872
        %v3049 = vsel %vm872, 0.0, %v2874
        %v3050 = vsel %vm872, 0.0, %v2876
        %v3051 = vsel %vm873, 0.0, %v2878
        %v3052 = vsel %vm873, 0.0, %v2880
        %v3053 = vsel %vm874, 0.0, %v2882
        %v3054 = vsel %vm874, 0.0, %v2884
        %v3055 = vsel %vm875, 0.0, %v2886
        %v3056 = vsel %vm875, 0.0, %v2888
        %v3057 = vsel %vm876, 0.0, %v2890
        %v3058 = vsel %vm876, 0.0, %v2892
        %v3059 = vsel %vm877, 0.0, %v2894
        %v3060 = vsel %vm877, 0.0, %v2896
        %v3061 = vsel %vm878, 0.0, %v2898
        %v3062 = vsel %vm878, 0.0, %v2900
        %v3063 = vsel %vm879, 0.0, %v2902
        %v3064 = vsel %vm879, 0.0, %v2904
        %v3065 = vsel %vm880, 0.0, %v2906
        %v3066 = vsel %vm880, 0.0, %v2908
        %v3067 = vsel %vm881, 0.0, %v2910
        %v3068 = vsel %vm881, 0.0, %v2912
        %v3069 = vsel %vm882, 0.0, %v2914
        %v3070 = vsel %vm882, 0.0, %v2916
        %v3071 = vsel %vm883, 0.0, %v2918
        %v3072 = vsel %vm883, 0.0, %v2920
        %v3073 = vsel %vm884, 0.0, %v2922
        %v3074 = vsel %vm884, 0.0, %v2924
        %v3075 = vsel %vm885, 0.0, %v2926
        %v3076 = vsel %vm885, 0.0, %v2928
        %v3077 = vsel %vm886, 0.0, %v2930
        %v3078 = vsel %vm886, 0.0, %v2932
        %v3079 = vsel %vm887, 0.0, %v2934
        %v3080 = vsel %vm887, 0.0, %v2936
        %v3081 = vsel %vm888, 0.0, %v2938
        %v3082 = vsel %vm888, 0.0, %v2940
        %v3083 = vsel %vm889, 0.0, %v2942
        %v3084 = vsel %vm889, 0.0, %v2944
        %v3085 = vsel %vm890, 0.0, %v2946
        %v3086 = vsel %vm890, 0.0, %v2948
        %v3087 = vsel %vm891, 0.0, %v2950
        %v3088 = vsel %vm891, 0.0, %v2952
        %v3089 = vsel %vm892, 0.0, %v2954
        %v3090 = vsel %vm892, 0.0, %v2956
        %v3091 = vsel %vm893, 0.0, %v2958
        %v3092 = vsel %vm893, 0.0, %v2960
        %v3093 = vsel %vm894, 0.0, %v2962
        %v3094 = vsel %vm894, 0.0, %v2964
        %v3095 = vsel %vm895, 0.0, %v2966
        %v3096 = vsel %vm895, 0.0, %v2968
        %s3097 = scalar_lea.vmem [#allocation4], 1536
        %v3098 = vld [vmem:[%s3097] sm:$0xff]
        %v3099 = vld [vmem:[%s3097 + $0x8] sm:$0xff]
        %v3100 = vld [vmem:[%s3097 + $0x10] sm:$0xff]
        %v3101 = vld [vmem:[%s3097 + $0x18] sm:$0xff]
        %v3102 = vld [vmem:[%s3097 + $0x20] sm:$0xff]
        %v3103 = vld [vmem:[%s3097 + $0x28] sm:$0xff]
        %v3104 = vld [vmem:[%s3097 + $0x30] sm:$0xff]
        %v3105 = vld [vmem:[%s3097 + $0x38] sm:$0xff]
        %v3106 = vld [vmem:[%s3097 + $0x40] sm:$0xff]
        %v3107 = vld [vmem:[%s3097 + $0x48] sm:$0xff]
        %v3108 = vld [vmem:[%s3097 + $0x50] sm:$0xff]
        %v3109 = vld [vmem:[%s3097 + $0x58] sm:$0xff]
        %v3110 = vld [vmem:[%s3097 + $0x60] sm:$0xff]
        %v3111 = vld [vmem:[%s3097 + $0x68] sm:$0xff]
        %v3112 = vld [vmem:[%s3097 + $0x70] sm:$0xff]
        %v3113 = vld [vmem:[%s3097 + $0x78] sm:$0xff]
        %v3114 = vld [vmem:[%s3097 + $0x80] sm:$0xff]
        %v3115 = vld [vmem:[%s3097 + $0x88] sm:$0xff]
        %v3116 = vld [vmem:[%s3097 + $0x90] sm:$0xff]
        %v3117 = vld [vmem:[%s3097 + $0x98] sm:$0xff]
        %v3118 = vld [vmem:[%s3097 + $0xa0] sm:$0xff]
        %v3119 = vld [vmem:[%s3097 + $0xa8] sm:$0xff]
        %v3120 = vld [vmem:[%s3097 + $0xb0] sm:$0xff]
        %v3121 = vld [vmem:[%s3097 + $0xb8] sm:$0xff]
        %v3122 = vld [vmem:[%s3097 + $0xc0] sm:$0xff]
        %v3123 = vld [vmem:[%s3097 + $0xc8] sm:$0xff]
        %v3124 = vld [vmem:[%s3097 + $0xd0] sm:$0xff]
        %v3125 = vld [vmem:[%s3097 + $0xd8] sm:$0xff]
        %v3126 = vld [vmem:[%s3097 + $0xe0] sm:$0xff]
        %v3127 = vld [vmem:[%s3097 + $0xe8] sm:$0xff]
        %v3128 = vld [vmem:[%s3097 + $0xf0] sm:$0xff]
        %v3129 = vld [vmem:[%s3097 + $0xf8] sm:$0xff]
        %v3130 = vld [vmem:[%s3097 + $0x100] sm:$0xff]
        %v3131 = vld [vmem:[%s3097 + $0x108] sm:$0xff]
        %v3132 = vld [vmem:[%s3097 + $0x110] sm:$0xff]
        %v3133 = vld [vmem:[%s3097 + $0x118] sm:$0xff]
        %v3134 = vld [vmem:[%s3097 + $0x120] sm:$0xff]
        %v3135 = vld [vmem:[%s3097 + $0x128] sm:$0xff]
        %v3136 = vld [vmem:[%s3097 + $0x130] sm:$0xff]
        %v3137 = vld [vmem:[%s3097 + $0x138] sm:$0xff]
        %v3138 = vld [vmem:[%s3097 + $0x140] sm:$0xff]
        %v3139 = vld [vmem:[%s3097 + $0x148] sm:$0xff]
        %v3140 = vld [vmem:[%s3097 + $0x150] sm:$0xff]
        %v3141 = vld [vmem:[%s3097 + $0x158] sm:$0xff]
        %v3142 = vld [vmem:[%s3097 + $0x160] sm:$0xff]
        %v3143 = vld [vmem:[%s3097 + $0x168] sm:$0xff]
        %v3144 = vld [vmem:[%s3097 + $0x170] sm:$0xff]
        %v3145 = vld [vmem:[%s3097 + $0x178] sm:$0xff]
        %v3146 = vld [vmem:[%s3097 + $0x180] sm:$0xff]
        %v3147 = vld [vmem:[%s3097 + $0x188] sm:$0xff]
        %v3148 = vld [vmem:[%s3097 + $0x190] sm:$0xff]
        %v3149 = vld [vmem:[%s3097 + $0x198] sm:$0xff]
        %v3150 = vld [vmem:[%s3097 + $0x1a0] sm:$0xff]
        %v3151 = vld [vmem:[%s3097 + $0x1a8] sm:$0xff]
        %v3152 = vld [vmem:[%s3097 + $0x1b0] sm:$0xff]
        %v3153 = vld [vmem:[%s3097 + $0x1b8] sm:$0xff]
        %v3154 = vld [vmem:[%s3097 + $0x1c0] sm:$0xff]
        %v3155 = vld [vmem:[%s3097 + $0x1c8] sm:$0xff]
        %v3156 = vld [vmem:[%s3097 + $0x1d0] sm:$0xff]
        %v3157 = vld [vmem:[%s3097 + $0x1d8] sm:$0xff]
        %v3158 = vld [vmem:[%s3097 + $0x1e0] sm:$0xff]
        %v3159 = vld [vmem:[%s3097 + $0x1e8] sm:$0xff]
        %v3160 = vld [vmem:[%s3097 + $0x1f0] sm:$0xff]
        %v3161 = vld [vmem:[%s3097 + $0x1f8] sm:$0xff]
        %3162 = vmatprep.subr.mxu0 %v3099
        %3163 = vmatpush1.msra.mxu0 %v3098
        %3164 = vmatprep.subr.mxu0 %v3101
        %3165 = vmatpush1.msra.mxu0 %v3100
        %3166 = vmatprep.subr.mxu0 %v3103
        %3167 = vmatpush1.msra.mxu0 %v3102
        %3168 = vmatprep.subr.mxu0 %v3105
        %3169 = vmatpush1.msra.mxu0 %v3104
        %3170 = vmatprep.subr.mxu0 %v3107
        %3171 = vmatpush1.msra.mxu0 %v3106
        %3172 = vmatprep.subr.mxu0 %v3109
        %3173 = vmatpush1.msra.mxu0 %v3108
        %3174 = vmatprep.subr.mxu0 %v3111
        %3175 = vmatpush1.msra.mxu0 %v3110
        %3176 = vmatprep.subr.mxu0 %v3113
        %3177 = vmatpush1.msra.mxu0 %v3112
        %3178 = vmatprep.subr.mxu0 %v3115
        %3179 = vmatpush1.msra.mxu0 %v3114
        %3180 = vmatprep.subr.mxu0 %v3117
        %3181 = vmatpush1.msra.mxu0 %v3116
        %3182 = vmatprep.subr.mxu0 %v3119
        %3183 = vmatpush1.msra.mxu0 %v3118
        %3184 = vmatprep.subr.mxu0 %v3121
        %3185 = vmatpush1.msra.mxu0 %v3120
        %3186 = vmatprep.subr.mxu0 %v3123
        %3187 = vmatpush1.msra.mxu0 %v3122
        %3188 = vmatprep.subr.mxu0 %v3125
        %3189 = vmatpush1.msra.mxu0 %v3124
        %3190 = vmatprep.subr.mxu0 %v3127
        %3191 = vmatpush1.msra.mxu0 %v3126
        %3192 = vmatprep.subr.mxu0 %v3129
        %3193 = vmatpush1.msra.mxu0 %v3128
        %3194 = vmatprep.subr.mxu0 %v3131
        %3195 = vmatpush1.msra.mxu0 %v3130
        %3196 = vmatprep.subr.mxu0 %v3133
        %3197 = vmatpush1.msra.mxu0 %v3132
        %3198 = vmatprep.subr.mxu0 %v3135
        %3199 = vmatpush1.msra.mxu0 %v3134
        %3200 = vmatprep.subr.mxu0 %v3137
        %3201 = vmatpush1.msra.mxu0 %v3136
        %3202 = vmatprep.subr.mxu0 %v3139
        %3203 = vmatpush1.msra.mxu0 %v3138
        %3204 = vmatprep.subr.mxu0 %v3141
        %3205 = vmatpush1.msra.mxu0 %v3140
        %3206 = vmatprep.subr.mxu0 %v3143
        %3207 = vmatpush1.msra.mxu0 %v3142
        %3208 = vmatprep.subr.mxu0 %v3145
        %3209 = vmatpush1.msra.mxu0 %v3144
        %3210 = vmatprep.subr.mxu0 %v3147
        %3211 = vmatpush1.msra.mxu0 %v3146
        %3212 = vmatprep.subr.mxu0 %v3149
        %3213 = vmatpush1.msra.mxu0 %v3148
        %3214 = vmatprep.subr.mxu0 %v3151
        %3215 = vmatpush1.msra.mxu0 %v3150
        %3216 = vmatprep.subr.mxu0 %v3153
        %3217 = vmatpush1.msra.mxu0 %v3152
        %3218 = vmatprep.subr.mxu0 %v3155
        %3219 = vmatpush1.msra.mxu0 %v3154
        %3220 = vmatprep.subr.mxu0 %v3157
        %3221 = vmatpush1.msra.mxu0 %v3156
        %3222 = vmatprep.subr.mxu0 %v3159
        %3223 = vmatpush1.msra.mxu0 %v3158
        %3224 = vmatprep.subr.mxu0 %v3161
        %3225 = vmatpush1.msra.mxu0 %v3160
        %3226 = vmatprep.mubr.f32.mxu0 %v3034
        %3227 = vmatmul.mubr.f32.gmra.mrb[0].mxu0 %v3033
        %v3228 = vpop.f32.mrb[0].mxu0
        %v3229 = vadd.f32 0.0, %v3228
        %v3230 = vpop.f32.mrb[0].mxu0
        %v3231 = vadd.f32 0.0, %v3230
        %3232 = vmatprep.mubr.f32.mxu0 %v3036
        %3233 = vmatmul.mubr.f32.gmra.mrb[0].mxu0 %v3035
        %v3234 = vpop.f32.mrb[0].mxu0
        %v3235 = vadd.f32 0.0, %v3234
        %v3236 = vpop.f32.mrb[0].mxu0
        %v3237 = vadd.f32 0.0, %v3236
        %3238 = vmatprep.mubr.f32.mxu0 %v3038
        %3239 = vmatmul.mubr.f32.gmra.mrb[0].mxu0 %v3037
        %v3240 = vpop.f32.mrb[0].mxu0
        %v3241 = vadd.f32 0.0, %v3240
        %v3242 = vpop.f32.mrb[0].mxu0
        %v3243 = vadd.f32 0.0, %v3242
        %3244 = vmatprep.mubr.f32.mxu0 %v3040
        %3245 = vmatmul.mubr.f32.gmra.mrb[0].mxu0 %v3039
        %v3246 = vpop.f32.mrb[0].mxu0
        %v3247 = vadd.f32 0.0, %v3246
        %v3248 = vpop.f32.mrb[0].mxu0
        %v3249 = vadd.f32 0.0, %v3248
        %3250 = vmatprep.mubr.f32.mxu0 %v3042
        %3251 = vmatmul.mubr.f32.gmra.mrb[0].mxu0 %v3041
        %v3252 = vpop.f32.mrb[0].mxu0
        %v3253 = vadd.f32 0.0, %v3252
        %v3254 = vpop.f32.mrb[0].mxu0
        %v3255 = vadd.f32 0.0, %v3254
        %3256 = vmatprep.mubr.f32.mxu0 %v3044
        %3257 = vmatmul.mubr.f32.gmra.mrb[0].mxu0 %v3043
        %v3258 = vpop.f32.mrb[0].mxu0
        %v3259 = vadd.f32 0.0, %v3258
        %v3260 = vpop.f32.mrb[0].mxu0
        %v3261 = vadd.f32 0.0, %v3260
        %3262 = vmatprep.mubr.f32.mxu0 %v3046
        %3263 = vmatmul.mubr.f32.gmra.mrb[0].mxu0 %v3045
        %v3264 = vpop.f32.mrb[0].mxu0
        %v3265 = vadd.f32 0.0, %v3264
        %v3266 = vpop.f32.mrb[0].mxu0
        %v3267 = vadd.f32 0.0, %v3266
        %3268 = vmatprep.mubr.f32.mxu0 %v3048
        %3269 = vmatmul.mubr.f32.gmra.mrb[0].mxu0 %v3047
        %v3270 = vpop.f32.mrb[0].mxu0
        %v3271 = vadd.f32 0.0, %v3270
        %v3272 = vpop.f32.mrb[0].mxu0
        %v3273 = vadd.f32 0.0, %v3272
        %3274 = vmatprep.mubr.f32.mxu0 %v3050
        %3275 = vmatmul.mubr.f32.gmra.mrb[0].mxu0 %v3049
        %v3276 = vpop.f32.mrb[0].mxu0
        %v3277 = vadd.f32 0.0, %v3276
        %v3278 = vpop.f32.mrb[0].mxu0
        %v3279 = vadd.f32 0.0, %v3278
        %3280 = vmatprep.mubr.f32.mxu0 %v3052
        %3281 = vmatmul.mubr.f32.gmra.mrb[0].mxu0 %v3051
        %v3282 = vpop.f32.mrb[0].mxu0
        %v3283 = vadd.f32 0.0, %v3282
        %v3284 = vpop.f32.mrb[0].mxu0
        %v3285 = vadd.f32 0.0, %v3284
        %3286 = vmatprep.mubr.f32.mxu0 %v3054
        %3287 = vmatmul.mubr.f32.gmra.mrb[0].mxu0 %v3053
        %v3288 = vpop.f32.mrb[0].mxu0
        %v3289 = vadd.f32 0.0, %v3288
        %v3290 = vpop.f32.mrb[0].mxu0
        %v3291 = vadd.f32 0.0, %v3290
        %3292 = vmatprep.mubr.f32.mxu0 %v3056
        %3293 = vmatmul.mubr.f32.gmra.mrb[0].mxu0 %v3055
        %v3294 = vpop.f32.mrb[0].mxu0
        %v3295 = vadd.f32 0.0, %v3294
        %v3296 = vpop.f32.mrb[0].mxu0
        %v3297 = vadd.f32 0.0, %v3296
        %3298 = vmatprep.mubr.f32.mxu0 %v3058
        %3299 = vmatmul.mubr.f32.gmra.mrb[0].mxu0 %v3057
        %v3300 = vpop.f32.mrb[0].mxu0
        %v3301 = vadd.f32 0.0, %v3300
        %v3302 = vpop.f32.mrb[0].mxu0
        %v3303 = vadd.f32 0.0, %v3302
        %3304 = vmatprep.mubr.f32.mxu0 %v3060
        %3305 = vmatmul.mubr.f32.gmra.mrb[0].mxu0 %v3059
        %v3306 = vpop.f32.mrb[0].mxu0
        %v3307 = vadd.f32 0.0, %v3306
        %v3308 = vpop.f32.mrb[0].mxu0
        %v3309 = vadd.f32 0.0, %v3308
        %3310 = vmatprep.mubr.f32.mxu0 %v3062
        %3311 = vmatmul.mubr.f32.gmra.mrb[0].mxu0 %v3061
        %v3312 = vpop.f32.mrb[0].mxu0
        %v3313 = vadd.f32 0.0, %v3312
        %v3314 = vpop.f32.mrb[0].mxu0
        %v3315 = vadd.f32 0.0, %v3314
        %3316 = vmatprep.mubr.f32.mxu0 %v3064
        %3317 = vmatmul.mubr.f32.gmra.mrb[0].mxu0 %v3063
        %v3318 = vpop.f32.mrb[0].mxu0
        %v3319 = vadd.f32 0.0, %v3318
        %v3320 = vpop.f32.mrb[0].mxu0
        %v3321 = vadd.f32 0.0, %v3320
        %3322 = vmatprep.mubr.f32.mxu0 %v3066
        %3323 = vmatmul.mubr.f32.gmra.mrb[0].mxu0 %v3065
        %v3324 = vpop.f32.mrb[0].mxu0
        %v3325 = vadd.f32 0.0, %v3324
        %v3326 = vpop.f32.mrb[0].mxu0
        %v3327 = vadd.f32 0.0, %v3326
        %3328 = vmatprep.mubr.f32.mxu0 %v3068
        %3329 = vmatmul.mubr.f32.gmra.mrb[0].mxu0 %v3067
        %v3330 = vpop.f32.mrb[0].mxu0
        %v3331 = vadd.f32 0.0, %v3330
        %v3332 = vpop.f32.mrb[0].mxu0
        %v3333 = vadd.f32 0.0, %v3332
        %3334 = vmatprep.mubr.f32.mxu0 %v3070
        %3335 = vmatmul.mubr.f32.gmra.mrb[0].mxu0 %v3069
        %v3336 = vpop.f32.mrb[0].mxu0
        %v3337 = vadd.f32 0.0, %v3336
        %v3338 = vpop.f32.mrb[0].mxu0
        %v3339 = vadd.f32 0.0, %v3338
        %3340 = vmatprep.mubr.f32.mxu0 %v3072
        %3341 = vmatmul.mubr.f32.gmra.mrb[0].mxu0 %v3071
        %v3342 = vpop.f32.mrb[0].mxu0
        %v3343 = vadd.f32 0.0, %v3342
        %v3344 = vpop.f32.mrb[0].mxu0
        %v3345 = vadd.f32 0.0, %v3344
        %3346 = vmatprep.mubr.f32.mxu0 %v3074
        %3347 = vmatmul.mubr.f32.gmra.mrb[0].mxu0 %v3073
        %v3348 = vpop.f32.mrb[0].mxu0
        %v3349 = vadd.f32 0.0, %v3348
        %v3350 = vpop.f32.mrb[0].mxu0
        %v3351 = vadd.f32 0.0, %v3350
        %3352 = vmatprep.mubr.f32.mxu0 %v3076
        %3353 = vmatmul.mubr.f32.gmra.mrb[0].mxu0 %v3075
        %v3354 = vpop.f32.mrb[0].mxu0
        %v3355 = vadd.f32 0.0, %v3354
        %v3356 = vpop.f32.mrb[0].mxu0
        %v3357 = vadd.f32 0.0, %v3356
        %3358 = vmatprep.mubr.f32.mxu0 %v3078
        %3359 = vmatmul.mubr.f32.gmra.mrb[0].mxu0 %v3077
        %v3360 = vpop.f32.mrb[0].mxu0
        %v3361 = vadd.f32 0.0, %v3360
        %v3362 = vpop.f32.mrb[0].mxu0
        %v3363 = vadd.f32 0.0, %v3362
        %3364 = vmatprep.mubr.f32.mxu0 %v3080
        %3365 = vmatmul.mubr.f32.gmra.mrb[0].mxu0 %v3079
        %v3366 = vpop.f32.mrb[0].mxu0
        %v3367 = vadd.f32 0.0, %v3366
        %v3368 = vpop.f32.mrb[0].mxu0
        %v3369 = vadd.f32 0.0, %v3368
        %3370 = vmatprep.mubr.f32.mxu0 %v3082
        %3371 = vmatmul.mubr.f32.gmra.mrb[0].mxu0 %v3081
        %v3372 = vpop.f32.mrb[0].mxu0
        %v3373 = vadd.f32 0.0, %v3372
        %v3374 = vpop.f32.mrb[0].mxu0
        %v3375 = vadd.f32 0.0, %v3374
        %3376 = vmatprep.mubr.f32.mxu0 %v3084
        %3377 = vmatmul.mubr.f32.gmra.mrb[0].mxu0 %v3083
        %v3378 = vpop.f32.mrb[0].mxu0
        %v3379 = vadd.f32 0.0, %v3378
        %v3380 = vpop.f32.mrb[0].mxu0
        %v3381 = vadd.f32 0.0, %v3380
        %3382 = vmatprep.mubr.f32.mxu0 %v3086
        %3383 = vmatmul.mubr.f32.gmra.mrb[0].mxu0 %v3085
        %v3384 = vpop.f32.mrb[0].mxu0
        %v3385 = vadd.f32 0.0, %v3384
        %v3386 = vpop.f32.mrb[0].mxu0
        %v3387 = vadd.f32 0.0, %v3386
        %3388 = vmatprep.mubr.f32.mxu0 %v3088
        %3389 = vmatmul.mubr.f32.gmra.mrb[0].mxu0 %v3087
        %v3390 = vpop.f32.mrb[0].mxu0
        %v3391 = vadd.f32 0.0, %v3390
        %v3392 = vpop.f32.mrb[0].mxu0
        %v3393 = vadd.f32 0.0, %v3392
        %3394 = vmatprep.mubr.f32.mxu0 %v3090
        %3395 = vmatmul.mubr.f32.gmra.mrb[0].mxu0 %v3089
        %v3396 = vpop.f32.mrb[0].mxu0
        %v3397 = vadd.f32 0.0, %v3396
        %v3398 = vpop.f32.mrb[0].mxu0
        %v3399 = vadd.f32 0.0, %v3398
        %3400 = vmatprep.mubr.f32.mxu0 %v3092
        %3401 = vmatmul.mubr.f32.gmra.mrb[0].mxu0 %v3091
        %v3402 = vpop.f32.mrb[0].mxu0
        %v3403 = vadd.f32 0.0, %v3402
        %v3404 = vpop.f32.mrb[0].mxu0
        %v3405 = vadd.f32 0.0, %v3404
        %3406 = vmatprep.mubr.f32.mxu0 %v3094
        %3407 = vmatmul.mubr.f32.gmra.mrb[0].mxu0 %v3093
        %v3408 = vpop.f32.mrb[0].mxu0
        %v3409 = vadd.f32 0.0, %v3408
        %v3410 = vpop.f32.mrb[0].mxu0
        %v3411 = vadd.f32 0.0, %v3410
        %3412 = vmatprep.mubr.f32.mxu0 %v3096
        %3413 = vmatmul.mubr.f32.gmra.mrb[0].mxu0 %v3095
        %v3414 = vpop.f32.mrb[0].mxu0
        %v3415 = vadd.f32 0.0, %v3414
        %v3416 = vpop.f32.mrb[0].mxu0
        %v3417 = vadd.f32 0.0, %v3416
        %3418 = vdwg.mxu0
        %v3419 = vadd.f32 %v2643, %v3229
        %v3420 = vadd.f32 %v2644, %v3231
        %v3421 = vadd.f32 %v2645, %v3235
        %v3422 = vadd.f32 %v2646, %v3237
        %v3423 = vadd.f32 %v2647, %v3241
        %v3424 = vadd.f32 %v2648, %v3243
        %v3425 = vadd.f32 %v2649, %v3247
        %v3426 = vadd.f32 %v2650, %v3249
        %v3427 = vadd.f32 %v2651, %v3253
        %v3428 = vadd.f32 %v2652, %v3255
        %v3429 = vadd.f32 %v2653, %v3259
        %v3430 = vadd.f32 %v2654, %v3261
        %v3431 = vadd.f32 %v2655, %v3265
        %v3432 = vadd.f32 %v2656, %v3267
        %v3433 = vadd.f32 %v2657, %v3271
        %v3434 = vadd.f32 %v2658, %v3273
        %v3435 = vadd.f32 %v2659, %v3277
        %v3436 = vadd.f32 %v2660, %v3279
        %v3437 = vadd.f32 %v2661, %v3283
        %v3438 = vadd.f32 %v2662, %v3285
        %v3439 = vadd.f32 %v2663, %v3289
        %v3440 = vadd.f32 %v2664, %v3291
        %v3441 = vadd.f32 %v2665, %v3295
        %v3442 = vadd.f32 %v2666, %v3297
        %v3443 = vadd.f32 %v2667, %v3301
        %v3444 = vadd.f32 %v2668, %v3303
        %v3445 = vadd.f32 %v2669, %v3307
        %v3446 = vadd.f32 %v2670, %v3309
        %v3447 = vadd.f32 %v2671, %v3313
        %v3448 = vadd.f32 %v2672, %v3315
        %v3449 = vadd.f32 %v2673, %v3319
        %v3450 = vadd.f32 %v2674, %v3321
        %v3451 = vadd.f32 %v2675, %v3325
        %v3452 = vadd.f32 %v2676, %v3327
        %v3453 = vadd.f32 %v2677, %v3331
        %v3454 = vadd.f32 %v2678, %v3333
        %v3455 = vadd.f32 %v2679, %v3337
        %v3456 = vadd.f32 %v2680, %v3339
        %v3457 = vadd.f32 %v2681, %v3343
        %v3458 = vadd.f32 %v2682, %v3345
        %v3459 = vadd.f32 %v2683, %v3349
        %v3460 = vadd.f32 %v2684, %v3351
        %v3461 = vadd.f32 %v2685, %v3355
        %v3462 = vadd.f32 %v2686, %v3357
        %v3463 = vadd.f32 %v2687, %v3361
        %v3464 = vadd.f32 %v2688, %v3363
        %v3465 = vadd.f32 %v2689, %v3367
        %v3466 = vadd.f32 %v2690, %v3369
        %v3467 = vadd.f32 %v2691, %v3373
        %v3468 = vadd.f32 %v2692, %v3375
        %v3469 = vadd.f32 %v2693, %v3379
        %v3470 = vadd.f32 %v2694, %v3381
        %v3471 = vadd.f32 %v2695, %v3385
        %v3472 = vadd.f32 %v2696, %v3387
        %v3473 = vadd.f32 %v2697, %v3391
        %v3474 = vadd.f32 %v2698, %v3393
        %v3475 = vadd.f32 %v2699, %v3397
        %v3476 = vadd.f32 %v2700, %v3399
        %v3477 = vadd.f32 %v2701, %v3403
        %v3478 = vadd.f32 %v2702, %v3405
        %v3479 = vadd.f32 %v2703, %v3409
        %v3480 = vadd.f32 %v2704, %v3411
        %v3481 = vadd.f32 %v2705, %v3415
        %v3482 = vadd.f32 %v2706, %v3417
        %v3483 = vld [vmem:[%s241 + $0x230] sm:$0xff]
        %v3484 = vld [vmem:[%s241 + $0x238] sm:$0xff]
        %s3485 = scalar_lea.vmem [#allocation4], 2048
        %v3486 = vld [vmem:[%s3485] sm:$0xff]
        %v3487 = vld [vmem:[%s3485 + $0x8] sm:$0xff]
        %v3488 = vld [vmem:[%s3485 + $0x10] sm:$0xff]
        %v3489 = vld [vmem:[%s3485 + $0x18] sm:$0xff]
        %v3490 = vld [vmem:[%s3485 + $0x20] sm:$0xff]
        %v3491 = vld [vmem:[%s3485 + $0x28] sm:$0xff]
        %v3492 = vld [vmem:[%s3485 + $0x30] sm:$0xff]
        %v3493 = vld [vmem:[%s3485 + $0x38] sm:$0xff]
        %v3494 = vld [vmem:[%s3485 + $0x40] sm:$0xff]
        %v3495 = vld [vmem:[%s3485 + $0x48] sm:$0xff]
        %v3496 = vld [vmem:[%s3485 + $0x50] sm:$0xff]
        %v3497 = vld [vmem:[%s3485 + $0x58] sm:$0xff]
        %v3498 = vld [vmem:[%s3485 + $0x60] sm:$0xff]
        %v3499 = vld [vmem:[%s3485 + $0x68] sm:$0xff]
        %v3500 = vld [vmem:[%s3485 + $0x70] sm:$0xff]
        %v3501 = vld [vmem:[%s3485 + $0x78] sm:$0xff]
        %v3502 = vld [vmem:[%s3485 + $0x80] sm:$0xff]
        %v3503 = vld [vmem:[%s3485 + $0x88] sm:$0xff]
        %v3504 = vld [vmem:[%s3485 + $0x90] sm:$0xff]
        %v3505 = vld [vmem:[%s3485 + $0x98] sm:$0xff]
        %v3506 = vld [vmem:[%s3485 + $0xa0] sm:$0xff]
        %v3507 = vld [vmem:[%s3485 + $0xa8] sm:$0xff]
        %v3508 = vld [vmem:[%s3485 + $0xb0] sm:$0xff]
        %v3509 = vld [vmem:[%s3485 + $0xb8] sm:$0xff]
        %v3510 = vld [vmem:[%s3485 + $0xc0] sm:$0xff]
        %v3511 = vld [vmem:[%s3485 + $0xc8] sm:$0xff]
        %v3512 = vld [vmem:[%s3485 + $0xd0] sm:$0xff]
        %v3513 = vld [vmem:[%s3485 + $0xd8] sm:$0xff]
        %v3514 = vld [vmem:[%s3485 + $0xe0] sm:$0xff]
        %v3515 = vld [vmem:[%s3485 + $0xe8] sm:$0xff]
        %v3516 = vld [vmem:[%s3485 + $0xf0] sm:$0xff]
        %v3517 = vld [vmem:[%s3485 + $0xf8] sm:$0xff]
        %v3518 = vld [vmem:[%s3485 + $0x100] sm:$0xff]
        %v3519 = vld [vmem:[%s3485 + $0x108] sm:$0xff]
        %v3520 = vld [vmem:[%s3485 + $0x110] sm:$0xff]
        %v3521 = vld [vmem:[%s3485 + $0x118] sm:$0xff]
        %v3522 = vld [vmem:[%s3485 + $0x120] sm:$0xff]
        %v3523 = vld [vmem:[%s3485 + $0x128] sm:$0xff]
        %v3524 = vld [vmem:[%s3485 + $0x130] sm:$0xff]
        %v3525 = vld [vmem:[%s3485 + $0x138] sm:$0xff]
        %v3526 = vld [vmem:[%s3485 + $0x140] sm:$0xff]
        %v3527 = vld [vmem:[%s3485 + $0x148] sm:$0xff]
        %v3528 = vld [vmem:[%s3485 + $0x150] sm:$0xff]
        %v3529 = vld [vmem:[%s3485 + $0x158] sm:$0xff]
        %v3530 = vld [vmem:[%s3485 + $0x160] sm:$0xff]
        %v3531 = vld [vmem:[%s3485 + $0x168] sm:$0xff]
        %v3532 = vld [vmem:[%s3485 + $0x170] sm:$0xff]
        %v3533 = vld [vmem:[%s3485 + $0x178] sm:$0xff]
        %v3534 = vld [vmem:[%s3485 + $0x180] sm:$0xff]
        %v3535 = vld [vmem:[%s3485 + $0x188] sm:$0xff]
        %v3536 = vld [vmem:[%s3485 + $0x190] sm:$0xff]
        %v3537 = vld [vmem:[%s3485 + $0x198] sm:$0xff]
        %v3538 = vld [vmem:[%s3485 + $0x1a0] sm:$0xff]
        %v3539 = vld [vmem:[%s3485 + $0x1a8] sm:$0xff]
        %v3540 = vld [vmem:[%s3485 + $0x1b0] sm:$0xff]
        %v3541 = vld [vmem:[%s3485 + $0x1b8] sm:$0xff]
        %v3542 = vld [vmem:[%s3485 + $0x1c0] sm:$0xff]
        %v3543 = vld [vmem:[%s3485 + $0x1c8] sm:$0xff]
        %v3544 = vld [vmem:[%s3485 + $0x1d0] sm:$0xff]
        %v3545 = vld [vmem:[%s3485 + $0x1d8] sm:$0xff]
        %v3546 = vld [vmem:[%s3485 + $0x1e0] sm:$0xff]
        %v3547 = vld [vmem:[%s3485 + $0x1e8] sm:$0xff]
        %v3548 = vld [vmem:[%s3485 + $0x1f0] sm:$0xff]
        %v3549 = vld [vmem:[%s3485 + $0x1f8] sm:$0xff]
        %3550 = vmatprep.subr.mxu0 %v3487
        %3551 = vmatpush1.msra.mxu0 %v3486
        %3552 = vmatprep.subr.mxu0 %v3489
        %3553 = vmatpush1.msra.mxu0 %v3488
        %3554 = vmatprep.subr.mxu0 %v3491
        %3555 = vmatpush1.msra.mxu0 %v3490
        %3556 = vmatprep.subr.mxu0 %v3493
        %3557 = vmatpush1.msra.mxu0 %v3492
        %3558 = vmatprep.subr.mxu0 %v3495
        %3559 = vmatpush1.msra.mxu0 %v3494
        %3560 = vmatprep.subr.mxu0 %v3497
        %3561 = vmatpush1.msra.mxu0 %v3496
        %3562 = vmatprep.subr.mxu0 %v3499
        %3563 = vmatpush1.msra.mxu0 %v3498
        %3564 = vmatprep.subr.mxu0 %v3501
        %3565 = vmatpush1.msra.mxu0 %v3500
        %3566 = vmatprep.subr.mxu0 %v3503
        %3567 = vmatpush1.msra.mxu0 %v3502
        %3568 = vmatprep.subr.mxu0 %v3505
        %3569 = vmatpush1.msra.mxu0 %v3504
        %3570 = vmatprep.subr.mxu0 %v3507
        %3571 = vmatpush1.msra.mxu0 %v3506
        %3572 = vmatprep.subr.mxu0 %v3509
        %3573 = vmatpush1.msra.mxu0 %v3508
        %3574 = vmatprep.subr.mxu0 %v3511
        %3575 = vmatpush1.msra.mxu0 %v3510
        %3576 = vmatprep.subr.mxu0 %v3513
        %3577 = vmatpush1.msra.mxu0 %v3512
        %3578 = vmatprep.subr.mxu0 %v3515
        %3579 = vmatpush1.msra.mxu0 %v3514
        %3580 = vmatprep.subr.mxu0 %v3517
        %3581 = vmatpush1.msra.mxu0 %v3516
        %3582 = vmatprep.subr.mxu0 %v3519
        %3583 = vmatpush1.msra.mxu0 %v3518
        %3584 = vmatprep.subr.mxu0 %v3521
        %3585 = vmatpush1.msra.mxu0 %v3520
        %3586 = vmatprep.subr.mxu0 %v3523
        %3587 = vmatpush1.msra.mxu0 %v3522
        %3588 = vmatprep.subr.mxu0 %v3525
        %3589 = vmatpush1.msra.mxu0 %v3524
        %3590 = vmatprep.subr.mxu0 %v3527
        %3591 = vmatpush1.msra.mxu0 %v3526
        %3592 = vmatprep.subr.mxu0 %v3529
        %3593 = vmatpush1.msra.mxu0 %v3528
        %3594 = vmatprep.subr.mxu0 %v3531
        %3595 = vmatpush1.msra.mxu0 %v3530
        %3596 = vmatprep.subr.mxu0 %v3533
        %3597 = vmatpush1.msra.mxu0 %v3532
        %3598 = vmatprep.subr.mxu0 %v3535
        %3599 = vmatpush1.msra.mxu0 %v3534
        %3600 = vmatprep.subr.mxu0 %v3537
        %3601 = vmatpush1.msra.mxu0 %v3536
        %3602 = vmatprep.subr.mxu0 %v3539
        %3603 = vmatpush1.msra.mxu0 %v3538
        %3604 = vmatprep.subr.mxu0 %v3541
        %3605 = vmatpush1.msra.mxu0 %v3540
        %3606 = vmatprep.subr.mxu0 %v3543
        %3607 = vmatpush1.msra.mxu0 %v3542
        %3608 = vmatprep.subr.mxu0 %v3545
        %3609 = vmatpush1.msra.mxu0 %v3544
        %3610 = vmatprep.subr.mxu0 %v3547
        %3611 = vmatpush1.msra.mxu0 %v3546
        %3612 = vmatprep.subr.mxu0 %v3549
        %3613 = vmatpush1.msra.mxu0 %v3548
        %3614 = vmatprep.mubr.f32.mxu0 %v2710
        %3615 = vmatmul.mubr.f32.gmra.mrb[0].mxu0 %v2709
        %v3616 = vpop.f32.mrb[0].mxu0
        %v3617 = vadd.f32 0.0, %v3616
        %v3618 = vpop.f32.mrb[0].mxu0
        %v3619 = vadd.f32 0.0, %v3618
        %3620 = vmatprep.mubr.f32.mxu0 %v2712
        %3621 = vmatmul.mubr.f32.gmra.mrb[0].mxu0 %v2711
        %v3622 = vpop.f32.mrb[0].mxu0
        %v3623 = vadd.f32 0.0, %v3622
        %v3624 = vpop.f32.mrb[0].mxu0
        %v3625 = vadd.f32 0.0, %v3624
        %3626 = vmatprep.mubr.f32.mxu0 %v2714
        %3627 = vmatmul.mubr.f32.gmra.mrb[0].mxu0 %v2713
        %v3628 = vpop.f32.mrb[0].mxu0
        %v3629 = vadd.f32 0.0, %v3628
        %v3630 = vpop.f32.mrb[0].mxu0
        %v3631 = vadd.f32 0.0, %v3630
        %3632 = vmatprep.mubr.f32.mxu0 %v2716
        %3633 = vmatmul.mubr.f32.gmra.mrb[0].mxu0 %v2715
        %v3634 = vpop.f32.mrb[0].mxu0
        %v3635 = vadd.f32 0.0, %v3634
        %v3636 = vpop.f32.mrb[0].mxu0
        %v3637 = vadd.f32 0.0, %v3636
        %3638 = vmatprep.mubr.f32.mxu0 %v2718
        %3639 = vmatmul.mubr.f32.gmra.mrb[0].mxu0 %v2717
        %v3640 = vpop.f32.mrb[0].mxu0
        %v3641 = vadd.f32 0.0, %v3640
        %v3642 = vpop.f32.mrb[0].mxu0
        %v3643 = vadd.f32 0.0, %v3642
        %3644 = vmatprep.mubr.f32.mxu0 %v2720
        %3645 = vmatmul.mubr.f32.gmra.mrb[0].mxu0 %v2719
        %v3646 = vpop.f32.mrb[0].mxu0
        %v3647 = vadd.f32 0.0, %v3646
        %v3648 = vpop.f32.mrb[0].mxu0
        %v3649 = vadd.f32 0.0, %v3648
        %3650 = vmatprep.mubr.f32.mxu0 %v2722
        %3651 = vmatmul.mubr.f32.gmra.mrb[0].mxu0 %v2721
        %v3652 = vpop.f32.mrb[0].mxu0
        %v3653 = vadd.f32 0.0, %v3652
        %v3654 = vpop.f32.mrb[0].mxu0
        %v3655 = vadd.f32 0.0, %v3654
        %3656 = vmatprep.mubr.f32.mxu0 %v2724
        %3657 = vmatmul.mubr.f32.gmra.mrb[0].mxu0 %v2723
        %v3658 = vpop.f32.mrb[0].mxu0
        %v3659 = vadd.f32 0.0, %v3658
        %v3660 = vpop.f32.mrb[0].mxu0
        %v3661 = vadd.f32 0.0, %v3660
        %3662 = vmatprep.mubr.f32.mxu0 %v2726
        %3663 = vmatmul.mubr.f32.gmra.mrb[0].mxu0 %v2725
        %v3664 = vpop.f32.mrb[0].mxu0
        %v3665 = vadd.f32 0.0, %v3664
        %v3666 = vpop.f32.mrb[0].mxu0
        %v3667 = vadd.f32 0.0, %v3666
        %3668 = vmatprep.mubr.f32.mxu0 %v2728
        %3669 = vmatmul.mubr.f32.gmra.mrb[0].mxu0 %v2727
        %v3670 = vpop.f32.mrb[0].mxu0
        %v3671 = vadd.f32 0.0, %v3670
        %v3672 = vpop.f32.mrb[0].mxu0
        %v3673 = vadd.f32 0.0, %v3672
        %3674 = vmatprep.mubr.f32.mxu0 %v2730
        %3675 = vmatmul.mubr.f32.gmra.mrb[0].mxu0 %v2729
        %v3676 = vpop.f32.mrb[0].mxu0
        %v3677 = vadd.f32 0.0, %v3676
        %v3678 = vpop.f32.mrb[0].mxu0
        %v3679 = vadd.f32 0.0, %v3678
        %3680 = vmatprep.mubr.f32.mxu0 %v2732
        %3681 = vmatmul.mubr.f32.gmra.mrb[0].mxu0 %v2731
        %v3682 = vpop.f32.mrb[0].mxu0
        %v3683 = vadd.f32 0.0, %v3682
        %v3684 = vpop.f32.mrb[0].mxu0
        %v3685 = vadd.f32 0.0, %v3684
        %3686 = vmatprep.mubr.f32.mxu0 %v2734
        %3687 = vmatmul.mubr.f32.gmra.mrb[0].mxu0 %v2733
        %v3688 = vpop.f32.mrb[0].mxu0
        %v3689 = vadd.f32 0.0, %v3688
        %v3690 = vpop.f32.mrb[0].mxu0
        %v3691 = vadd.f32 0.0, %v3690
        %3692 = vmatprep.mubr.f32.mxu0 %v2736
        %3693 = vmatmul.mubr.f32.gmra.mrb[0].mxu0 %v2735
        %v3694 = vpop.f32.mrb[0].mxu0
        %v3695 = vadd.f32 0.0, %v3694
        %v3696 = vpop.f32.mrb[0].mxu0
        %v3697 = vadd.f32 0.0, %v3696
        %3698 = vmatprep.mubr.f32.mxu0 %v2738
        %3699 = vmatmul.mubr.f32.gmra.mrb[0].mxu0 %v2737
        %v3700 = vpop.f32.mrb[0].mxu0
        %v3701 = vadd.f32 0.0, %v3700
        %v3702 = vpop.f32.mrb[0].mxu0
        %v3703 = vadd.f32 0.0, %v3702
        %3704 = vmatprep.mubr.f32.mxu0 %v2740
        %3705 = vmatmul.mubr.f32.gmra.mrb[0].mxu0 %v2739
        %v3706 = vpop.f32.mrb[0].mxu0
        %v3707 = vadd.f32 0.0, %v3706
        %v3708 = vpop.f32.mrb[0].mxu0
        %v3709 = vadd.f32 0.0, %v3708
        %3710 = vmatprep.mubr.f32.mxu0 %v2742
        %3711 = vmatmul.mubr.f32.gmra.mrb[0].mxu0 %v2741
        %v3712 = vpop.f32.mrb[0].mxu0
        %v3713 = vadd.f32 0.0, %v3712
        %v3714 = vpop.f32.mrb[0].mxu0
        %v3715 = vadd.f32 0.0, %v3714
        %3716 = vmatprep.mubr.f32.mxu0 %v2744
        %3717 = vmatmul.mubr.f32.gmra.mrb[0].mxu0 %v2743
        %v3718 = vpop.f32.mrb[0].mxu0
        %v3719 = vadd.f32 0.0, %v3718
        %v3720 = vpop.f32.mrb[0].mxu0
        %v3721 = vadd.f32 0.0, %v3720
        %3722 = vmatprep.mubr.f32.mxu0 %v2746
        %3723 = vmatmul.mubr.f32.gmra.mrb[0].mxu0 %v2745
        %v3724 = vpop.f32.mrb[0].mxu0
        %v3725 = vadd.f32 0.0, %v3724
        %v3726 = vpop.f32.mrb[0].mxu0
        %v3727 = vadd.f32 0.0, %v3726
        %3728 = vmatprep.mubr.f32.mxu0 %v2748
        %3729 = vmatmul.mubr.f32.gmra.mrb[0].mxu0 %v2747
        %v3730 = vpop.f32.mrb[0].mxu0
        %v3731 = vadd.f32 0.0, %v3730
        %v3732 = vpop.f32.mrb[0].mxu0
        %v3733 = vadd.f32 0.0, %v3732
        %3734 = vmatprep.mubr.f32.mxu0 %v2750
        %3735 = vmatmul.mubr.f32.gmra.mrb[0].mxu0 %v2749
        %v3736 = vpop.f32.mrb[0].mxu0
        %v3737 = vadd.f32 0.0, %v3736
        %v3738 = vpop.f32.mrb[0].mxu0
        %v3739 = vadd.f32 0.0, %v3738
        %3740 = vmatprep.mubr.f32.mxu0 %v2752
        %3741 = vmatmul.mubr.f32.gmra.mrb[0].mxu0 %v2751
        %v3742 = vpop.f32.mrb[0].mxu0
        %v3743 = vadd.f32 0.0, %v3742
        %v3744 = vpop.f32.mrb[0].mxu0
        %v3745 = vadd.f32 0.0, %v3744
        %3746 = vmatprep.mubr.f32.mxu0 %v2754
        %3747 = vmatmul.mubr.f32.gmra.mrb[0].mxu0 %v2753
        %v3748 = vpop.f32.mrb[0].mxu0
        %v3749 = vadd.f32 0.0, %v3748
        %v3750 = vpop.f32.mrb[0].mxu0
        %v3751 = vadd.f32 0.0, %v3750
        %3752 = vmatprep.mubr.f32.mxu0 %v2756
        %3753 = vmatmul.mubr.f32.gmra.mrb[0].mxu0 %v2755
        %v3754 = vpop.f32.mrb[0].mxu0
        %v3755 = vadd.f32 0.0, %v3754
        %v3756 = vpop.f32.mrb[0].mxu0
        %v3757 = vadd.f32 0.0, %v3756
        %3758 = vmatprep.mubr.f32.mxu0 %v2758
        %3759 = vmatmul.mubr.f32.gmra.mrb[0].mxu0 %v2757
        %v3760 = vpop.f32.mrb[0].mxu0
        %v3761 = vadd.f32 0.0, %v3760
        %v3762 = vpop.f32.mrb[0].mxu0
        %v3763 = vadd.f32 0.0, %v3762
        %3764 = vmatprep.mubr.f32.mxu0 %v2760
        %3765 = vmatmul.mubr.f32.gmra.mrb[0].mxu0 %v2759
        %v3766 = vpop.f32.mrb[0].mxu0
        %v3767 = vadd.f32 0.0, %v3766
        %v3768 = vpop.f32.mrb[0].mxu0
        %v3769 = vadd.f32 0.0, %v3768
        %3770 = vmatprep.mubr.f32.mxu0 %v2762
        %3771 = vmatmul.mubr.f32.gmra.mrb[0].mxu0 %v2761
        %v3772 = vpop.f32.mrb[0].mxu0
        %v3773 = vadd.f32 0.0, %v3772
        %v3774 = vpop.f32.mrb[0].mxu0
        %v3775 = vadd.f32 0.0, %v3774
        %3776 = vmatprep.mubr.f32.mxu0 %v2764
        %3777 = vmatmul.mubr.f32.gmra.mrb[0].mxu0 %v2763
        %v3778 = vpop.f32.mrb[0].mxu0
        %v3779 = vadd.f32 0.0, %v3778
        %v3780 = vpop.f32.mrb[0].mxu0
        %v3781 = vadd.f32 0.0, %v3780
        %3782 = vmatprep.mubr.f32.mxu0 %v2766
        %3783 = vmatmul.mubr.f32.gmra.mrb[0].mxu0 %v2765
        %v3784 = vpop.f32.mrb[0].mxu0
        %v3785 = vadd.f32 0.0, %v3784
        %v3786 = vpop.f32.mrb[0].mxu0
        %v3787 = vadd.f32 0.0, %v3786
        %3788 = vmatprep.mubr.f32.mxu0 %v2768
        %3789 = vmatmul.mubr.f32.gmra.mrb[0].mxu0 %v2767
        %v3790 = vpop.f32.mrb[0].mxu0
        %v3791 = vadd.f32 0.0, %v3790
        %v3792 = vpop.f32.mrb[0].mxu0
        %v3793 = vadd.f32 0.0, %v3792
        %3794 = vmatprep.mubr.f32.mxu0 %v2770
        %3795 = vmatmul.mubr.f32.gmra.mrb[0].mxu0 %v2769
        %v3796 = vpop.f32.mrb[0].mxu0
        %v3797 = vadd.f32 0.0, %v3796
        %v3798 = vpop.f32.mrb[0].mxu0
        %v3799 = vadd.f32 0.0, %v3798
        %3800 = vmatprep.mubr.f32.mxu0 %v3484
        %3801 = vmatmul.mubr.f32.gmra.mrb[0].mxu0 %v3483
        %v3802 = vpop.f32.mrb[0].mxu0
        %v3803 = vadd.f32 0.0, %v3802
        %v3804 = vpop.f32.mrb[0].mxu0
        %v3805 = vadd.f32 0.0, %v3804
        %3806 = vdwg.mxu0
        %v3807 = vadd.f32 %v3419, %v3617
        %v3808 = vadd.f32 %v3420, %v3619
        %v3809 = vadd.f32 %v3421, %v3623
        %v3810 = vadd.f32 %v3422, %v3625
        %v3811 = vadd.f32 %v3423, %v3629
        %v3812 = vadd.f32 %v3424, %v3631
        %v3813 = vadd.f32 %v3425, %v3635
        %v3814 = vadd.f32 %v3426, %v3637
        %v3815 = vadd.f32 %v3427, %v3641
        %v3816 = vadd.f32 %v3428, %v3643
        %v3817 = vadd.f32 %v3429, %v3647
        %v3818 = vadd.f32 %v3430, %v3649
        %v3819 = vadd.f32 %v3431, %v3653
        %v3820 = vadd.f32 %v3432, %v3655
        %v3821 = vadd.f32 %v3433, %v3659
        %v3822 = vadd.f32 %v3434, %v3661
        %v3823 = vadd.f32 %v3435, %v3665
        %v3824 = vadd.f32 %v3436, %v3667
        %v3825 = vadd.f32 %v3437, %v3671
        %v3826 = vadd.f32 %v3438, %v3673
        %v3827 = vadd.f32 %v3439, %v3677
        %v3828 = vadd.f32 %v3440, %v3679
        %v3829 = vadd.f32 %v3441, %v3683
        %v3830 = vadd.f32 %v3442, %v3685
        %v3831 = vadd.f32 %v3443, %v3689
        %v3832 = vadd.f32 %v3444, %v3691
        %v3833 = vadd.f32 %v3445, %v3695
        %v3834 = vadd.f32 %v3446, %v3697
        %v3835 = vadd.f32 %v3447, %v3701
        %v3836 = vadd.f32 %v3448, %v3703
        %v3837 = vadd.f32 %v3449, %v3707
        %v3838 = vadd.f32 %v3450, %v3709
        %v3839 = vadd.f32 %v3451, %v3713
        %v3840 = vadd.f32 %v3452, %v3715
        %v3841 = vadd.f32 %v3453, %v3719
        %v3842 = vadd.f32 %v3454, %v3721
        %v3843 = vadd.f32 %v3455, %v3725
        %v3844 = vadd.f32 %v3456, %v3727
        %v3845 = vadd.f32 %v3457, %v3731
        %v3846 = vadd.f32 %v3458, %v3733
        %v3847 = vadd.f32 %v3459, %v3737
        %v3848 = vadd.f32 %v3460, %v3739
        %v3849 = vadd.f32 %v3461, %v3743
        %v3850 = vadd.f32 %v3462, %v3745
        %v3851 = vadd.f32 %v3463, %v3749
        %v3852 = vadd.f32 %v3464, %v3751
        %v3853 = vadd.f32 %v3465, %v3755
        %v3854 = vadd.f32 %v3466, %v3757
        %v3855 = vadd.f32 %v3467, %v3761
        %v3856 = vadd.f32 %v3468, %v3763
        %v3857 = vadd.f32 %v3469, %v3767
        %v3858 = vadd.f32 %v3470, %v3769
        %v3859 = vadd.f32 %v3471, %v3773
        %v3860 = vadd.f32 %v3472, %v3775
        %v3861 = vadd.f32 %v3473, %v3779
        %v3862 = vadd.f32 %v3474, %v3781
        %v3863 = vadd.f32 %v3475, %v3785
        %v3864 = vadd.f32 %v3476, %v3787
        %v3865 = vadd.f32 %v3477, %v3791
        %v3866 = vadd.f32 %v3478, %v3793
        %v3867 = vadd.f32 %v3479, %v3797
        %v3868 = vadd.f32 %v3480, %v3799
        %v3869 = vadd.f32 %v3481, %v3803
        %v3870 = vadd.f32 %v3482, %v3805
        %v3871 = vld [vmem:[%s241 + $0x40] sm:$0xfe]
        %v3872 = vld [vmem:[%s241 + $0x48] sm:$0xfe]
        %v3873 = vld [vmem:[%s241 + $0x50] sm:$0xff]
        %v3874 = vld [vmem:[%s241 + $0x58] sm:$0xff]
        %v3875 = vld [vmem:[%s241 + $0x60] sm:$0xff]
        %v3876 = vld [vmem:[%s241 + $0x68] sm:$0xff]
        %v3877 = vld [vmem:[%s241 + $0x70] sm:$0xff]
        %v3878 = vld [vmem:[%s241 + $0x78] sm:$0xff]
        %v3879 = vld [vmem:[%s241 + $0x80] sm:$0xff]
        %v3880 = vld [vmem:[%s241 + $0x88] sm:$0xff]
        %v3881 = vld [vmem:[%s241 + $0x90] sm:$0xff]
        %v3882 = vld [vmem:[%s241 + $0x98] sm:$0xff]
        %v3883 = vld [vmem:[%s241 + $0xa0] sm:$0xff]
        %v3884 = vld [vmem:[%s241 + $0xa8] sm:$0xff]
        %v3885 = vld [vmem:[%s241 + $0xb0] sm:$0xff]
        %v3886 = vld [vmem:[%s241 + $0xb8] sm:$0xff]
        %v3887 = vld [vmem:[%s241 + $0xc0] sm:$0xff]
        %v3888 = vld [vmem:[%s241 + $0xc8] sm:$0xff]
        %v3889 = vld [vmem:[%s241 + $0xd0] sm:$0xff]
        %v3890 = vld [vmem:[%s241 + $0xd8] sm:$0xff]
        %v3891 = vld [vmem:[%s241 + $0xe0] sm:$0xff]
        %v3892 = vld [vmem:[%s241 + $0xe8] sm:$0xff]
        %v3893 = vld [vmem:[%s241 + $0xf0] sm:$0xff]
        %v3894 = vld [vmem:[%s241 + $0xf8] sm:$0xff]
        %v3895 = vld [vmem:[%s241 + $0x100] sm:$0xff]
        %v3896 = vld [vmem:[%s241 + $0x108] sm:$0xff]
        %v3897 = vld [vmem:[%s241 + $0x110] sm:$0xff]
        %v3898 = vld [vmem:[%s241 + $0x118] sm:$0xff]
        %v3899 = vld [vmem:[%s241 + $0x120] sm:$0xff]
        %v3900 = vld [vmem:[%s241 + $0x128] sm:$0xff]
        %v3901 = vld [vmem:[%s241 + $0x130] sm:$0xff]
        %v3902 = vld [vmem:[%s241 + $0x138] sm:$0xff]
        %v3903 = vld [vmem:[%s241 + $0x140] sm:$0xff]
        %v3904 = vld [vmem:[%s241 + $0x148] sm:$0xff]
        %v3905 = vld [vmem:[%s241 + $0x150] sm:$0xff]
        %v3906 = vld [vmem:[%s241 + $0x158] sm:$0xff]
        %v3907 = vld [vmem:[%s241 + $0x160] sm:$0xff]
        %v3908 = vld [vmem:[%s241 + $0x168] sm:$0xff]
        %v3909 = vld [vmem:[%s241 + $0x170] sm:$0xff]
        %v3910 = vld [vmem:[%s241 + $0x178] sm:$0xff]
        %v3911 = vld [vmem:[%s241 + $0x180] sm:$0xff]
        %v3912 = vld [vmem:[%s241 + $0x188] sm:$0xff]
        %v3913 = vld [vmem:[%s241 + $0x190] sm:$0xff]
        %v3914 = vld [vmem:[%s241 + $0x198] sm:$0xff]
        %v3915 = vld [vmem:[%s241 + $0x1a0] sm:$0xff]
        %v3916 = vld [vmem:[%s241 + $0x1a8] sm:$0xff]
        %v3917 = vld [vmem:[%s241 + $0x1b0] sm:$0xff]
        %v3918 = vld [vmem:[%s241 + $0x1b8] sm:$0xff]
        %v3919 = vld [vmem:[%s241 + $0x1c0] sm:$0xff]
        %v3920 = vld [vmem:[%s241 + $0x1c8] sm:$0xff]
        %v3921 = vld [vmem:[%s241 + $0x1d0] sm:$0xff]
        %v3922 = vld [vmem:[%s241 + $0x1d8] sm:$0xff]
        %v3923 = vld [vmem:[%s241 + $0x1e0] sm:$0xff]
        %v3924 = vld [vmem:[%s241 + $0x1e8] sm:$0xff]
        %v3925 = vld [vmem:[%s241 + $0x1f0] sm:$0xff]
        %v3926 = vld [vmem:[%s241 + $0x1f8] sm:$0xff]
        %v3927 = vld [vmem:[%s241 + $0x200] sm:$0xff]
        %v3928 = vld [vmem:[%s241 + $0x208] sm:$0xff]
        %v3929 = vld [vmem:[%s241 + $0x210] sm:$0xff]
        %v3930 = vld [vmem:[%s241 + $0x218] sm:$0xff]
        %v3931 = vld [vmem:[%s241 + $0x220] sm:$0xff]
        %v3932 = vld [vmem:[%s241 + $0x228] sm:$0xff]
        %v3933 = vld [vmem:[%s241 + $0x230] sm:$0xff]
        %v3934 = vld [vmem:[%s241 + $0x238] sm:$0xff]
        %v3935 = vld [vmem:[%s241 + $0x240] sm:$0x1]
        %v3936 = vld [vmem:[%s241 + $0x248] sm:$0x1]
        %v4003 = vrot.slane %v3871, 1
        %v4004 = vrot.slane %v3873, 1
        %v4005 = vsel %vm2062, %v4003, %v4004
        %v4006 = vrot.slane %v3872, 1
        %v4007 = vrot.slane %v3874, 1
        %v4008 = vsel %vm2062, %v4006, %v4007
        %v4009 = vrot.slane %v3875, 1
        %v4010 = vsel %vm2062, %v4004, %v4009
        %v4011 = vrot.slane %v3876, 1
        %v4012 = vsel %vm2062, %v4007, %v4011
        %v4013 = vrot.slane %v3877, 1
        %v4014 = vsel %vm2062, %v4009, %v4013
        %v4015 = vrot.slane %v3878, 1
        %v4016 = vsel %vm2062, %v4011, %v4015
        %v4017 = vrot.slane %v3879, 1
        %v4018 = vsel %vm2062, %v4013, %v4017
        %v4019 = vrot.slane %v3880, 1
        %v4020 = vsel %vm2062, %v4015, %v4019
        %v4021 = vrot.slane %v3881, 1
        %v4022 = vsel %vm2062, %v4017, %v4021
        %v4023 = vrot.slane %v3882, 1
        %v4024 = vsel %vm2062, %v4019, %v4023
        %v4025 = vrot.slane %v3883, 1
        %v4026 = vsel %vm2062, %v4021, %v4025
        %v4027 = vrot.slane %v3884, 1
        %v4028 = vsel %vm2062, %v4023, %v4027
        %v4029 = vrot.slane %v3885, 1
        %v4030 = vsel %vm2062, %v4025, %v4029
        %v4031 = vrot.slane %v3886, 1
        %v4032 = vsel %vm2062, %v4027, %v4031
        %v4033 = vrot.slane %v3887, 1
        %v4034 = vsel %vm2062, %v4029, %v4033
        %v4035 = vrot.slane %v3888, 1
        %v4036 = vsel %vm2062, %v4031, %v4035
        %v4037 = vrot.slane %v3889, 1
        %v4038 = vsel %vm2062, %v4033, %v4037
        %v4039 = vrot.slane %v3890, 1
        %v4040 = vsel %vm2062, %v4035, %v4039
        %v4041 = vrot.slane %v3891, 1
        %v4042 = vsel %vm2062, %v4037, %v4041
        %v4043 = vrot.slane %v3892, 1
        %v4044 = vsel %vm2062, %v4039, %v4043
        %v4045 = vrot.slane %v3893, 1
        %v4046 = vsel %vm2062, %v4041, %v4045
        %v4047 = vrot.slane %v3894, 1
        %v4048 = vsel %vm2062, %v4043, %v4047
        %v4049 = vrot.slane %v3895, 1
        %v4050 = vsel %vm2062, %v4045, %v4049
        %v4051 = vrot.slane %v3896, 1
        %v4052 = vsel %vm2062, %v4047, %v4051
        %v4053 = vrot.slane %v3897, 1
        %v4054 = vsel %vm2062, %v4049, %v4053
        %v4055 = vrot.slane %v3898, 1
        %v4056 = vsel %vm2062, %v4051, %v4055
        %v4057 = vrot.slane %v3899, 1
        %v4058 = vsel %vm2062, %v4053, %v4057
        %v4059 = vrot.slane %v3900, 1
        %v4060 = vsel %vm2062, %v4055, %v4059
        %v4061 = vrot.slane %v3901, 1
        %v4062 = vsel %vm2062, %v4057, %v4061
        %v4063 = vrot.slane %v3902, 1
        %v4064 = vsel %vm2062, %v4059, %v4063
        %v4065 = vrot.slane %v3903, 1
        %v4066 = vsel %vm2062, %v4061, %v4065
        %v4067 = vrot.slane %v3904, 1
        %v4068 = vsel %vm2062, %v4063, %v4067
        %v4069 = vrot.slane %v3905, 1
        %v4070 = vsel %vm2062, %v4065, %v4069
        %v4071 = vrot.slane %v3906, 1
        %v4072 = vsel %vm2062, %v4067, %v4071
        %v4073 = vrot.slane %v3907, 1
        %v4074 = vsel %vm2062, %v4069, %v4073
        %v4075 = vrot.slane %v3908, 1
        %v4076 = vsel %vm2062, %v4071, %v4075
        %v4077 = vrot.slane %v3909, 1
        %v4078 = vsel %vm2062, %v4073, %v4077
        %v4079 = vrot.slane %v3910, 1
        %v4080 = vsel %vm2062, %v4075, %v4079
        %v4081 = vrot.slane %v3911, 1
        %v4082 = vsel %vm2062, %v4077, %v4081
        %v4083 = vrot.slane %v3912, 1
        %v4084 = vsel %vm2062, %v4079, %v4083
        %v4085 = vrot.slane %v3913, 1
        %v4086 = vsel %vm2062, %v4081, %v4085
        %v4087 = vrot.slane %v3914, 1
        %v4088 = vsel %vm2062, %v4083, %v4087
        %v4089 = vrot.slane %v3915, 1
        %v4090 = vsel %vm2062, %v4085, %v4089
        %v4091 = vrot.slane %v3916, 1
        %v4092 = vsel %vm2062, %v4087, %v4091
        %v4093 = vrot.slane %v3917, 1
        %v4094 = vsel %vm2062, %v4089, %v4093
        %v4095 = vrot.slane %v3918, 1
        %v4096 = vsel %vm2062, %v4091, %v4095
        %v4097 = vrot.slane %v3919, 1
        %v4098 = vsel %vm2062, %v4093, %v4097
        %v4099 = vrot.slane %v3920, 1
        %v4100 = vsel %vm2062, %v4095, %v4099
        %v4101 = vrot.slane %v3921, 1
        %v4102 = vsel %vm2062, %v4097, %v4101
        %v4103 = vrot.slane %v3922, 1
        %v4104 = vsel %vm2062, %v4099, %v4103
        %v4105 = vrot.slane %v3923, 1
        %v4106 = vsel %vm2062, %v4101, %v4105
        %v4107 = vrot.slane %v3924, 1
        %v4108 = vsel %vm2062, %v4103, %v4107
        %v4109 = vrot.slane %v3925, 1
        %v4110 = vsel %vm2062, %v4105, %v4109
        %v4111 = vrot.slane %v3926, 1
        %v4112 = vsel %vm2062, %v4107, %v4111
        %v4113 = vrot.slane %v3927, 1
        %v4114 = vsel %vm2062, %v4109, %v4113
        %v4115 = vrot.slane %v3928, 1
        %v4116 = vsel %vm2062, %v4111, %v4115
        %v4117 = vrot.slane %v3929, 1
        %v4118 = vsel %vm2062, %v4113, %v4117
        %v4119 = vrot.slane %v3930, 1
        %v4120 = vsel %vm2062, %v4115, %v4119
        %v4121 = vrot.slane %v3931, 1
        %v4122 = vsel %vm2062, %v4117, %v4121
        %v4123 = vrot.slane %v3932, 1
        %v4124 = vsel %vm2062, %v4119, %v4123
        %v4125 = vrot.slane %v3933, 1
        %v4126 = vsel %vm2062, %v4121, %v4125
        %v4127 = vrot.slane %v3934, 1
        %v4128 = vsel %vm2062, %v4123, %v4127
        %v4129 = vrot.slane %v3935, 1
        %v4130 = vsel %vm2062, %v4125, %v4129
        %v4131 = vrot.slane %v3936, 1
        %v4132 = vsel %vm2062, %v4127, %v4131
        %v4197 = vsel %vm1964, 0.0, %v4005
        %v4198 = vsel %vm1964, 0.0, %v4008
        %v4199 = vsel %vm1965, 0.0, %v4010
        %v4200 = vsel %vm1965, 0.0, %v4012
        %v4201 = vsel %vm1966, 0.0, %v4014
        %v4202 = vsel %vm1966, 0.0, %v4016
        %v4203 = vsel %vm1967, 0.0, %v4018
        %v4204 = vsel %vm1967, 0.0, %v4020
        %v4205 = vsel %vm1968, 0.0, %v4022
        %v4206 = vsel %vm1968, 0.0, %v4024
        %v4207 = vsel %vm1969, 0.0, %v4026
        %v4208 = vsel %vm1969, 0.0, %v4028
        %v4209 = vsel %vm1970, 0.0, %v4030
        %v4210 = vsel %vm1970, 0.0, %v4032
        %v4211 = vsel %vm1971, 0.0, %v4034
        %v4212 = vsel %vm1971, 0.0, %v4036
        %v4213 = vsel %vm1972, 0.0, %v4038
        %v4214 = vsel %vm1972, 0.0, %v4040
        %v4215 = vsel %vm1973, 0.0, %v4042
        %v4216 = vsel %vm1973, 0.0, %v4044
        %v4217 = vsel %vm1974, 0.0, %v4046
        %v4218 = vsel %vm1974, 0.0, %v4048
        %v4219 = vsel %vm1975, 0.0, %v4050
        %v4220 = vsel %vm1975, 0.0, %v4052
        %v4221 = vsel %vm1976, 0.0, %v4054
        %v4222 = vsel %vm1976, 0.0, %v4056
        %v4223 = vsel %vm1977, 0.0, %v4058
        %v4224 = vsel %vm1977, 0.0, %v4060
        %v4225 = vsel %vm1978, 0.0, %v4062
        %v4226 = vsel %vm1978, 0.0, %v4064
        %v4227 = vsel %vm1979, 0.0, %v4066
        %v4228 = vsel %vm1979, 0.0, %v4068
        %v4229 = vsel %vm1980, 0.0, %v4070
        %v4230 = vsel %vm1980, 0.0, %v4072
        %v4231 = vsel %vm1981, 0.0, %v4074
        %v4232 = vsel %vm1981, 0.0, %v4076
        %v4233 = vsel %vm1982, 0.0, %v4078
        %v4234 = vsel %vm1982, 0.0, %v4080
        %v4235 = vsel %vm1983, 0.0, %v4082
        %v4236 = vsel %vm1983, 0.0, %v4084
        %v4237 = vsel %vm1984, 0.0, %v4086
        %v4238 = vsel %vm1984, 0.0, %v4088
        %v4239 = vsel %vm1985, 0.0, %v4090
        %v4240 = vsel %vm1985, 0.0, %v4092
        %v4241 = vsel %vm1986, 0.0, %v4094
        %v4242 = vsel %vm1986, 0.0, %v4096
        %v4243 = vsel %vm1987, 0.0, %v4098
        %v4244 = vsel %vm1987, 0.0, %v4100
        %v4245 = vsel %vm1988, 0.0, %v4102
        %v4246 = vsel %vm1988, 0.0, %v4104
        %v4247 = vsel %vm1989, 0.0, %v4106
        %v4248 = vsel %vm1989, 0.0, %v4108
        %v4249 = vsel %vm1990, 0.0, %v4110
        %v4250 = vsel %vm1990, 0.0, %v4112
        %v4251 = vsel %vm1991, 0.0, %v4114
        %v4252 = vsel %vm1991, 0.0, %v4116
        %v4253 = vsel %vm1992, 0.0, %v4118
        %v4254 = vsel %vm1992, 0.0, %v4120
        %v4255 = vsel %vm1993, 0.0, %v4122
        %v4256 = vsel %vm1993, 0.0, %v4124
        %v4257 = vsel %vm1994, 0.0, %v4126
        %v4258 = vsel %vm1994, 0.0, %v4128
        %v4259 = vsel %vm1995, 0.0, %v4130
        %v4260 = vsel %vm1995, 0.0, %v4132
        %s4261 = scalar_lea.vmem [#allocation4], 2560
        %v4262 = vld [vmem:[%s4261] sm:$0xff]
        %v4263 = vld [vmem:[%s4261 + $0x8] sm:$0xff]
        %v4264 = vld [vmem:[%s4261 + $0x10] sm:$0xff]
        %v4265 = vld [vmem:[%s4261 + $0x18] sm:$0xff]
        %v4266 = vld [vmem:[%s4261 + $0x20] sm:$0xff]
        %v4267 = vld [vmem:[%s4261 + $0x28] sm:$0xff]
        %v4268 = vld [vmem:[%s4261 + $0x30] sm:$0xff]
        %v4269 = vld [vmem:[%s4261 + $0x38] sm:$0xff]
        %v4270 = vld [vmem:[%s4261 + $0x40] sm:$0xff]
        %v4271 = vld [vmem:[%s4261 + $0x48] sm:$0xff]
        %v4272 = vld [vmem:[%s4261 + $0x50] sm:$0xff]
        %v4273 = vld [vmem:[%s4261 + $0x58] sm:$0xff]
        %v4274 = vld [vmem:[%s4261 + $0x60] sm:$0xff]
        %v4275 = vld [vmem:[%s4261 + $0x68] sm:$0xff]
        %v4276 = vld [vmem:[%s4261 + $0x70] sm:$0xff]
        %v4277 = vld [vmem:[%s4261 + $0x78] sm:$0xff]
        %v4278 = vld [vmem:[%s4261 + $0x80] sm:$0xff]
        %v4279 = vld [vmem:[%s4261 + $0x88] sm:$0xff]
        %v4280 = vld [vmem:[%s4261 + $0x90] sm:$0xff]
        %v4281 = vld [vmem:[%s4261 + $0x98] sm:$0xff]
        %v4282 = vld [vmem:[%s4261 + $0xa0] sm:$0xff]
        %v4283 = vld [vmem:[%s4261 + $0xa8] sm:$0xff]
        %v4284 = vld [vmem:[%s4261 + $0xb0] sm:$0xff]
        %v4285 = vld [vmem:[%s4261 + $0xb8] sm:$0xff]
        %v4286 = vld [vmem:[%s4261 + $0xc0] sm:$0xff]
        %v4287 = vld [vmem:[%s4261 + $0xc8] sm:$0xff]
        %v4288 = vld [vmem:[%s4261 + $0xd0] sm:$0xff]
        %v4289 = vld [vmem:[%s4261 + $0xd8] sm:$0xff]
        %v4290 = vld [vmem:[%s4261 + $0xe0] sm:$0xff]
        %v4291 = vld [vmem:[%s4261 + $0xe8] sm:$0xff]
        %v4292 = vld [vmem:[%s4261 + $0xf0] sm:$0xff]
        %v4293 = vld [vmem:[%s4261 + $0xf8] sm:$0xff]
        %v4294 = vld [vmem:[%s4261 + $0x100] sm:$0xff]
        %v4295 = vld [vmem:[%s4261 + $0x108] sm:$0xff]
        %v4296 = vld [vmem:[%s4261 + $0x110] sm:$0xff]
        %v4297 = vld [vmem:[%s4261 + $0x118] sm:$0xff]
        %v4298 = vld [vmem:[%s4261 + $0x120] sm:$0xff]
        %v4299 = vld [vmem:[%s4261 + $0x128] sm:$0xff]
        %v4300 = vld [vmem:[%s4261 + $0x130] sm:$0xff]
        %v4301 = vld [vmem:[%s4261 + $0x138] sm:$0xff]
        %v4302 = vld [vmem:[%s4261 + $0x140] sm:$0xff]
        %v4303 = vld [vmem:[%s4261 + $0x148] sm:$0xff]
        %v4304 = vld [vmem:[%s4261 + $0x150] sm:$0xff]
        %v4305 = vld [vmem:[%s4261 + $0x158] sm:$0xff]
        %v4306 = vld [vmem:[%s4261 + $0x160] sm:$0xff]
        %v4307 = vld [vmem:[%s4261 + $0x168] sm:$0xff]
        %v4308 = vld [vmem:[%s4261 + $0x170] sm:$0xff]
        %v4309 = vld [vmem:[%s4261 + $0x178] sm:$0xff]
        %v4310 = vld [vmem:[%s4261 + $0x180] sm:$0xff]
        %v4311 = vld [vmem:[%s4261 + $0x188] sm:$0xff]
        %v4312 = vld [vmem:[%s4261 + $0x190] sm:$0xff]
        %v4313 = vld [vmem:[%s4261 + $0x198] sm:$0xff]
        %v4314 = vld [vmem:[%s4261 + $0x1a0] sm:$0xff]
        %v4315 = vld [vmem:[%s4261 + $0x1a8] sm:$0xff]
        %v4316 = vld [vmem:[%s4261 + $0x1b0] sm:$0xff]
        %v4317 = vld [vmem:[%s4261 + $0x1b8] sm:$0xff]
        %v4318 = vld [vmem:[%s4261 + $0x1c0] sm:$0xff]
        %v4319 = vld [vmem:[%s4261 + $0x1c8] sm:$0xff]
        %v4320 = vld [vmem:[%s4261 + $0x1d0] sm:$0xff]
        %v4321 = vld [vmem:[%s4261 + $0x1d8] sm:$0xff]
        %v4322 = vld [vmem:[%s4261 + $0x1e0] sm:$0xff]
        %v4323 = vld [vmem:[%s4261 + $0x1e8] sm:$0xff]
        %v4324 = vld [vmem:[%s4261 + $0x1f0] sm:$0xff]
        %v4325 = vld [vmem:[%s4261 + $0x1f8] sm:$0xff]
        %4326 = vmatprep.subr.mxu0 %v4263
        %4327 = vmatpush1.msra.mxu0 %v4262
        %4328 = vmatprep.subr.mxu0 %v4265
        %4329 = vmatpush1.msra.mxu0 %v4264
        %4330 = vmatprep.subr.mxu0 %v4267
        %4331 = vmatpush1.msra.mxu0 %v4266
        %4332 = vmatprep.subr.mxu0 %v4269
        %4333 = vmatpush1.msra.mxu0 %v4268
        %4334 = vmatprep.subr.mxu0 %v4271
        %4335 = vmatpush1.msra.mxu0 %v4270
        %4336 = vmatprep.subr.mxu0 %v4273
        %4337 = vmatpush1.msra.mxu0 %v4272
        %4338 = vmatprep.subr.mxu0 %v4275
        %4339 = vmatpush1.msra.mxu0 %v4274
        %4340 = vmatprep.subr.mxu0 %v4277
        %4341 = vmatpush1.msra.mxu0 %v4276
        %4342 = vmatprep.subr.mxu0 %v4279
        %4343 = vmatpush1.msra.mxu0 %v4278
        %4344 = vmatprep.subr.mxu0 %v4281
        %4345 = vmatpush1.msra.mxu0 %v4280
        %4346 = vmatprep.subr.mxu0 %v4283
        %4347 = vmatpush1.msra.mxu0 %v4282
        %4348 = vmatprep.subr.mxu0 %v4285
        %4349 = vmatpush1.msra.mxu0 %v4284
        %4350 = vmatprep.subr.mxu0 %v4287
        %4351 = vmatpush1.msra.mxu0 %v4286
        %4352 = vmatprep.subr.mxu0 %v4289
        %4353 = vmatpush1.msra.mxu0 %v4288
        %4354 = vmatprep.subr.mxu0 %v4291
        %4355 = vmatpush1.msra.mxu0 %v4290
        %4356 = vmatprep.subr.mxu0 %v4293
        %4357 = vmatpush1.msra.mxu0 %v4292
        %4358 = vmatprep.subr.mxu0 %v4295
        %4359 = vmatpush1.msra.mxu0 %v4294
        %4360 = vmatprep.subr.mxu0 %v4297
        %4361 = vmatpush1.msra.mxu0 %v4296
        %4362 = vmatprep.subr.mxu0 %v4299
        %4363 = vmatpush1.msra.mxu0 %v4298
        %4364 = vmatprep.subr.mxu0 %v4301
        %4365 = vmatpush1.msra.mxu0 %v4300
        %4366 = vmatprep.subr.mxu0 %v4303
        %4367 = vmatpush1.msra.mxu0 %v4302
        %4368 = vmatprep.subr.mxu0 %v4305
        %4369 = vmatpush1.msra.mxu0 %v4304
        %4370 = vmatprep.subr.mxu0 %v4307
        %4371 = vmatpush1.msra.mxu0 %v4306
        %4372 = vmatprep.subr.mxu0 %v4309
        %4373 = vmatpush1.msra.mxu0 %v4308
        %4374 = vmatprep.subr.mxu0 %v4311
        %4375 = vmatpush1.msra.mxu0 %v4310
        %4376 = vmatprep.subr.mxu0 %v4313
        %4377 = vmatpush1.msra.mxu0 %v4312
        %4378 = vmatprep.subr.mxu0 %v4315
        %4379 = vmatpush1.msra.mxu0 %v4314
        %4380 = vmatprep.subr.mxu0 %v4317
        %4381 = vmatpush1.msra.mxu0 %v4316
        %4382 = vmatprep.subr.mxu0 %v4319
        %4383 = vmatpush1.msra.mxu0 %v4318
        %4384 = vmatprep.subr.mxu0 %v4321
        %4385 = vmatpush1.msra.mxu0 %v4320
        %4386 = vmatprep.subr.mxu0 %v4323
        %4387 = vmatpush1.msra.mxu0 %v4322
        %4388 = vmatprep.subr.mxu0 %v4325
        %4389 = vmatpush1.msra.mxu0 %v4324
        %4390 = vmatprep.mubr.f32.mxu0 %v4198
        %4391 = vmatmul.mubr.f32.gmra.mrb[0].mxu0 %v4197
        %v4392 = vpop.f32.mrb[0].mxu0
        %v4393 = vadd.f32 0.0, %v4392
        %v4394 = vpop.f32.mrb[0].mxu0
        %v4395 = vadd.f32 0.0, %v4394
        %4396 = vmatprep.mubr.f32.mxu0 %v4200
        %4397 = vmatmul.mubr.f32.gmra.mrb[0].mxu0 %v4199
        %v4398 = vpop.f32.mrb[0].mxu0
        %v4399 = vadd.f32 0.0, %v4398
        %v4400 = vpop.f32.mrb[0].mxu0
        %v4401 = vadd.f32 0.0, %v4400
        %4402 = vmatprep.mubr.f32.mxu0 %v4202
        %4403 = vmatmul.mubr.f32.gmra.mrb[0].mxu0 %v4201
        %v4404 = vpop.f32.mrb[0].mxu0
        %v4405 = vadd.f32 0.0, %v4404
        %v4406 = vpop.f32.mrb[0].mxu0
        %v4407 = vadd.f32 0.0, %v4406
        %4408 = vmatprep.mubr.f32.mxu0 %v4204
        %4409 = vmatmul.mubr.f32.gmra.mrb[0].mxu0 %v4203
        %v4410 = vpop.f32.mrb[0].mxu0
        %v4411 = vadd.f32 0.0, %v4410
        %v4412 = vpop.f32.mrb[0].mxu0
        %v4413 = vadd.f32 0.0, %v4412
        %4414 = vmatprep.mubr.f32.mxu0 %v4206
        %4415 = vmatmul.mubr.f32.gmra.mrb[0].mxu0 %v4205
        %v4416 = vpop.f32.mrb[0].mxu0
        %v4417 = vadd.f32 0.0, %v4416
        %v4418 = vpop.f32.mrb[0].mxu0
        %v4419 = vadd.f32 0.0, %v4418
        %4420 = vmatprep.mubr.f32.mxu0 %v4208
        %4421 = vmatmul.mubr.f32.gmra.mrb[0].mxu0 %v4207
        %v4422 = vpop.f32.mrb[0].mxu0
        %v4423 = vadd.f32 0.0, %v4422
        %v4424 = vpop.f32.mrb[0].mxu0
        %v4425 = vadd.f32 0.0, %v4424
        %4426 = vmatprep.mubr.f32.mxu0 %v4210
        %4427 = vmatmul.mubr.f32.gmra.mrb[0].mxu0 %v4209
        %v4428 = vpop.f32.mrb[0].mxu0
        %v4429 = vadd.f32 0.0, %v4428
        %v4430 = vpop.f32.mrb[0].mxu0
        %v4431 = vadd.f32 0.0, %v4430
        %4432 = vmatprep.mubr.f32.mxu0 %v4212
        %4433 = vmatmul.mubr.f32.gmra.mrb[0].mxu0 %v4211
        %v4434 = vpop.f32.mrb[0].mxu0
        %v4435 = vadd.f32 0.0, %v4434
        %v4436 = vpop.f32.mrb[0].mxu0
        %v4437 = vadd.f32 0.0, %v4436
        %4438 = vmatprep.mubr.f32.mxu0 %v4214
        %4439 = vmatmul.mubr.f32.gmra.mrb[0].mxu0 %v4213
        %v4440 = vpop.f32.mrb[0].mxu0
        %v4441 = vadd.f32 0.0, %v4440
        %v4442 = vpop.f32.mrb[0].mxu0
        %v4443 = vadd.f32 0.0, %v4442
        %4444 = vmatprep.mubr.f32.mxu0 %v4216
        %4445 = vmatmul.mubr.f32.gmra.mrb[0].mxu0 %v4215
        %v4446 = vpop.f32.mrb[0].mxu0
        %v4447 = vadd.f32 0.0, %v4446
        %v4448 = vpop.f32.mrb[0].mxu0
        %v4449 = vadd.f32 0.0, %v4448
        %4450 = vmatprep.mubr.f32.mxu0 %v4218
        %4451 = vmatmul.mubr.f32.gmra.mrb[0].mxu0 %v4217
        %v4452 = vpop.f32.mrb[0].mxu0
        %v4453 = vadd.f32 0.0, %v4452
        %v4454 = vpop.f32.mrb[0].mxu0
        %v4455 = vadd.f32 0.0, %v4454
        %4456 = vmatprep.mubr.f32.mxu0 %v4220
        %4457 = vmatmul.mubr.f32.gmra.mrb[0].mxu0 %v4219
        %v4458 = vpop.f32.mrb[0].mxu0
        %v4459 = vadd.f32 0.0, %v4458
        %v4460 = vpop.f32.mrb[0].mxu0
        %v4461 = vadd.f32 0.0, %v4460
        %4462 = vmatprep.mubr.f32.mxu0 %v4222
        %4463 = vmatmul.mubr.f32.gmra.mrb[0].mxu0 %v4221
        %v4464 = vpop.f32.mrb[0].mxu0
        %v4465 = vadd.f32 0.0, %v4464
        %v4466 = vpop.f32.mrb[0].mxu0
        %v4467 = vadd.f32 0.0, %v4466
        %4468 = vmatprep.mubr.f32.mxu0 %v4224
        %4469 = vmatmul.mubr.f32.gmra.mrb[0].mxu0 %v4223
        %v4470 = vpop.f32.mrb[0].mxu0
        %v4471 = vadd.f32 0.0, %v4470
        %v4472 = vpop.f32.mrb[0].mxu0
        %v4473 = vadd.f32 0.0, %v4472
        %4474 = vmatprep.mubr.f32.mxu0 %v4226
        %4475 = vmatmul.mubr.f32.gmra.mrb[0].mxu0 %v4225
        %v4476 = vpop.f32.mrb[0].mxu0
        %v4477 = vadd.f32 0.0, %v4476
        %v4478 = vpop.f32.mrb[0].mxu0
        %v4479 = vadd.f32 0.0, %v4478
        %4480 = vmatprep.mubr.f32.mxu0 %v4228
        %4481 = vmatmul.mubr.f32.gmra.mrb[0].mxu0 %v4227
        %v4482 = vpop.f32.mrb[0].mxu0
        %v4483 = vadd.f32 0.0, %v4482
        %v4484 = vpop.f32.mrb[0].mxu0
        %v4485 = vadd.f32 0.0, %v4484
        %4486 = vmatprep.mubr.f32.mxu0 %v4230
        %4487 = vmatmul.mubr.f32.gmra.mrb[0].mxu0 %v4229
        %v4488 = vpop.f32.mrb[0].mxu0
        %v4489 = vadd.f32 0.0, %v4488
        %v4490 = vpop.f32.mrb[0].mxu0
        %v4491 = vadd.f32 0.0, %v4490
        %4492 = vmatprep.mubr.f32.mxu0 %v4232
        %4493 = vmatmul.mubr.f32.gmra.mrb[0].mxu0 %v4231
        %v4494 = vpop.f32.mrb[0].mxu0
        %v4495 = vadd.f32 0.0, %v4494
        %v4496 = vpop.f32.mrb[0].mxu0
        %v4497 = vadd.f32 0.0, %v4496
        %4498 = vmatprep.mubr.f32.mxu0 %v4234
        %4499 = vmatmul.mubr.f32.gmra.mrb[0].mxu0 %v4233
        %v4500 = vpop.f32.mrb[0].mxu0
        %v4501 = vadd.f32 0.0, %v4500
        %v4502 = vpop.f32.mrb[0].mxu0
        %v4503 = vadd.f32 0.0, %v4502
        %4504 = vmatprep.mubr.f32.mxu0 %v4236
        %4505 = vmatmul.mubr.f32.gmra.mrb[0].mxu0 %v4235
        %v4506 = vpop.f32.mrb[0].mxu0
        %v4507 = vadd.f32 0.0, %v4506
        %v4508 = vpop.f32.mrb[0].mxu0
        %v4509 = vadd.f32 0.0, %v4508
        %4510 = vmatprep.mubr.f32.mxu0 %v4238
        %4511 = vmatmul.mubr.f32.gmra.mrb[0].mxu0 %v4237
        %v4512 = vpop.f32.mrb[0].mxu0
        %v4513 = vadd.f32 0.0, %v4512
        %v4514 = vpop.f32.mrb[0].mxu0
        %v4515 = vadd.f32 0.0, %v4514
        %4516 = vmatprep.mubr.f32.mxu0 %v4240
        %4517 = vmatmul.mubr.f32.gmra.mrb[0].mxu0 %v4239
        %v4518 = vpop.f32.mrb[0].mxu0
        %v4519 = vadd.f32 0.0, %v4518
        %v4520 = vpop.f32.mrb[0].mxu0
        %v4521 = vadd.f32 0.0, %v4520
        %4522 = vmatprep.mubr.f32.mxu0 %v4242
        %4523 = vmatmul.mubr.f32.gmra.mrb[0].mxu0 %v4241
        %v4524 = vpop.f32.mrb[0].mxu0
        %v4525 = vadd.f32 0.0, %v4524
        %v4526 = vpop.f32.mrb[0].mxu0
        %v4527 = vadd.f32 0.0, %v4526
        %4528 = vmatprep.mubr.f32.mxu0 %v4244
        %4529 = vmatmul.mubr.f32.gmra.mrb[0].mxu0 %v4243
        %v4530 = vpop.f32.mrb[0].mxu0
        %v4531 = vadd.f32 0.0, %v4530
        %v4532 = vpop.f32.mrb[0].mxu0
        %v4533 = vadd.f32 0.0, %v4532
        %4534 = vmatprep.mubr.f32.mxu0 %v4246
        %4535 = vmatmul.mubr.f32.gmra.mrb[0].mxu0 %v4245
        %v4536 = vpop.f32.mrb[0].mxu0
        %v4537 = vadd.f32 0.0, %v4536
        %v4538 = vpop.f32.mrb[0].mxu0
        %v4539 = vadd.f32 0.0, %v4538
        %4540 = vmatprep.mubr.f32.mxu0 %v4248
        %4541 = vmatmul.mubr.f32.gmra.mrb[0].mxu0 %v4247
        %v4542 = vpop.f32.mrb[0].mxu0
        %v4543 = vadd.f32 0.0, %v4542
        %v4544 = vpop.f32.mrb[0].mxu0
        %v4545 = vadd.f32 0.0, %v4544
        %4546 = vmatprep.mubr.f32.mxu0 %v4250
        %4547 = vmatmul.mubr.f32.gmra.mrb[0].mxu0 %v4249
        %v4548 = vpop.f32.mrb[0].mxu0
        %v4549 = vadd.f32 0.0, %v4548
        %v4550 = vpop.f32.mrb[0].mxu0
        %v4551 = vadd.f32 0.0, %v4550
        %4552 = vmatprep.mubr.f32.mxu0 %v4252
        %4553 = vmatmul.mubr.f32.gmra.mrb[0].mxu0 %v4251
        %v4554 = vpop.f32.mrb[0].mxu0
        %v4555 = vadd.f32 0.0, %v4554
        %v4556 = vpop.f32.mrb[0].mxu0
        %v4557 = vadd.f32 0.0, %v4556
        %4558 = vmatprep.mubr.f32.mxu0 %v4254
        %4559 = vmatmul.mubr.f32.gmra.mrb[0].mxu0 %v4253
        %v4560 = vpop.f32.mrb[0].mxu0
        %v4561 = vadd.f32 0.0, %v4560
        %v4562 = vpop.f32.mrb[0].mxu0
        %v4563 = vadd.f32 0.0, %v4562
        %4564 = vmatprep.mubr.f32.mxu0 %v4256
        %4565 = vmatmul.mubr.f32.gmra.mrb[0].mxu0 %v4255
        %v4566 = vpop.f32.mrb[0].mxu0
        %v4567 = vadd.f32 0.0, %v4566
        %v4568 = vpop.f32.mrb[0].mxu0
        %v4569 = vadd.f32 0.0, %v4568
        %4570 = vmatprep.mubr.f32.mxu0 %v4258
        %4571 = vmatmul.mubr.f32.gmra.mrb[0].mxu0 %v4257
        %v4572 = vpop.f32.mrb[0].mxu0
        %v4573 = vadd.f32 0.0, %v4572
        %v4574 = vpop.f32.mrb[0].mxu0
        %v4575 = vadd.f32 0.0, %v4574
        %4576 = vmatprep.mubr.f32.mxu0 %v4260
        %4577 = vmatmul.mubr.f32.gmra.mrb[0].mxu0 %v4259
        %v4578 = vpop.f32.mrb[0].mxu0
        %v4579 = vadd.f32 0.0, %v4578
        %v4580 = vpop.f32.mrb[0].mxu0
        %v4581 = vadd.f32 0.0, %v4580
        %4582 = vdwg.mxu0
        %v4583 = vadd.f32 %v3807, %v4393
        %v4584 = vadd.f32 %v3808, %v4395
        %v4585 = vadd.f32 %v3809, %v4399
        %v4586 = vadd.f32 %v3810, %v4401
        %v4587 = vadd.f32 %v3811, %v4405
        %v4588 = vadd.f32 %v3812, %v4407
        %v4589 = vadd.f32 %v3813, %v4411
        %v4590 = vadd.f32 %v3814, %v4413
        %v4591 = vadd.f32 %v3815, %v4417
        %v4592 = vadd.f32 %v3816, %v4419
        %v4593 = vadd.f32 %v3817, %v4423
        %v4594 = vadd.f32 %v3818, %v4425
        %v4595 = vadd.f32 %v3819, %v4429
        %v4596 = vadd.f32 %v3820, %v4431
        %v4597 = vadd.f32 %v3821, %v4435
        %v4598 = vadd.f32 %v3822, %v4437
        %v4599 = vadd.f32 %v3823, %v4441
        %v4600 = vadd.f32 %v3824, %v4443
        %v4601 = vadd.f32 %v3825, %v4447
        %v4602 = vadd.f32 %v3826, %v4449
        %v4603 = vadd.f32 %v3827, %v4453
        %v4604 = vadd.f32 %v3828, %v4455
        %v4605 = vadd.f32 %v3829, %v4459
        %v4606 = vadd.f32 %v3830, %v4461
        %v4607 = vadd.f32 %v3831, %v4465
        %v4608 = vadd.f32 %v3832, %v4467
        %v4609 = vadd.f32 %v3833, %v4471
        %v4610 = vadd.f32 %v3834, %v4473
        %v4611 = vadd.f32 %v3835, %v4477
        %v4612 = vadd.f32 %v3836, %v4479
        %v4613 = vadd.f32 %v3837, %v4483
        %v4614 = vadd.f32 %v3838, %v4485
        %v4615 = vadd.f32 %v3839, %v4489
        %v4616 = vadd.f32 %v3840, %v4491
        %v4617 = vadd.f32 %v3841, %v4495
        %v4618 = vadd.f32 %v3842, %v4497
        %v4619 = vadd.f32 %v3843, %v4501
        %v4620 = vadd.f32 %v3844, %v4503
        %v4621 = vadd.f32 %v3845, %v4507
        %v4622 = vadd.f32 %v3846, %v4509
        %v4623 = vadd.f32 %v3847, %v4513
        %v4624 = vadd.f32 %v3848, %v4515
        %v4625 = vadd.f32 %v3849, %v4519
        %v4626 = vadd.f32 %v3850, %v4521
        %v4627 = vadd.f32 %v3851, %v4525
        %v4628 = vadd.f32 %v3852, %v4527
        %v4629 = vadd.f32 %v3853, %v4531
        %v4630 = vadd.f32 %v3854, %v4533
        %v4631 = vadd.f32 %v3855, %v4537
        %v4632 = vadd.f32 %v3856, %v4539
        %v4633 = vadd.f32 %v3857, %v4543
        %v4634 = vadd.f32 %v3858, %v4545
        %v4635 = vadd.f32 %v3859, %v4549
        %v4636 = vadd.f32 %v3860, %v4551
        %v4637 = vadd.f32 %v3861, %v4555
        %v4638 = vadd.f32 %v3862, %v4557
        %v4639 = vadd.f32 %v3863, %v4561
        %v4640 = vadd.f32 %v3864, %v4563
        %v4641 = vadd.f32 %v3865, %v4567
        %v4642 = vadd.f32 %v3866, %v4569
        %v4643 = vadd.f32 %v3867, %v4573
        %v4644 = vadd.f32 %v3868, %v4575
        %v4645 = vadd.f32 %v3869, %v4579
        %v4646 = vadd.f32 %v3870, %v4581
        %v4647 = vld [vmem:[%s241 + $0x50] sm:$0x80]
        %v4648 = vld [vmem:[%s241 + $0x58] sm:$0x80]
        %v4649 = vld [vmem:[%s241 + $0x60] sm:$0xff]
        %v4650 = vld [vmem:[%s241 + $0x68] sm:$0xff]
        %v4651 = vld [vmem:[%s241 + $0x70] sm:$0xff]
        %v4652 = vld [vmem:[%s241 + $0x78] sm:$0xff]
        %v4653 = vld [vmem:[%s241 + $0x80] sm:$0xff]
        %v4654 = vld [vmem:[%s241 + $0x88] sm:$0xff]
        %v4655 = vld [vmem:[%s241 + $0x90] sm:$0xff]
        %v4656 = vld [vmem:[%s241 + $0x98] sm:$0xff]
        %v4657 = vld [vmem:[%s241 + $0xa0] sm:$0xff]
        %v4658 = vld [vmem:[%s241 + $0xa8] sm:$0xff]
        %v4659 = vld [vmem:[%s241 + $0xb0] sm:$0xff]
        %v4660 = vld [vmem:[%s241 + $0xb8] sm:$0xff]
        %v4661 = vld [vmem:[%s241 + $0xc0] sm:$0xff]
        %v4662 = vld [vmem:[%s241 + $0xc8] sm:$0xff]
        %v4663 = vld [vmem:[%s241 + $0xd0] sm:$0xff]
        %v4664 = vld [vmem:[%s241 + $0xd8] sm:$0xff]
        %v4665 = vld [vmem:[%s241 + $0xe0] sm:$0xff]
        %v4666 = vld [vmem:[%s241 + $0xe8] sm:$0xff]
        %v4667 = vld [vmem:[%s241 + $0xf0] sm:$0xff]
        %v4668 = vld [vmem:[%s241 + $0xf8] sm:$0xff]
        %v4669 = vld [vmem:[%s241 + $0x100] sm:$0xff]
        %v4670 = vld [vmem:[%s241 + $0x108] sm:$0xff]
        %v4671 = vld [vmem:[%s241 + $0x110] sm:$0xff]
        %v4672 = vld [vmem:[%s241 + $0x118] sm:$0xff]
        %v4673 = vld [vmem:[%s241 + $0x120] sm:$0xff]
        %v4674 = vld [vmem:[%s241 + $0x128] sm:$0xff]
        %v4675 = vld [vmem:[%s241 + $0x130] sm:$0xff]
        %v4676 = vld [vmem:[%s241 + $0x138] sm:$0xff]
        %v4677 = vld [vmem:[%s241 + $0x140] sm:$0xff]
        %v4678 = vld [vmem:[%s241 + $0x148] sm:$0xff]
        %v4679 = vld [vmem:[%s241 + $0x150] sm:$0xff]
        %v4680 = vld [vmem:[%s241 + $0x158] sm:$0xff]
        %v4681 = vld [vmem:[%s241 + $0x160] sm:$0xff]
        %v4682 = vld [vmem:[%s241 + $0x168] sm:$0xff]
        %v4683 = vld [vmem:[%s241 + $0x170] sm:$0xff]
        %v4684 = vld [vmem:[%s241 + $0x178] sm:$0xff]
        %v4685 = vld [vmem:[%s241 + $0x180] sm:$0xff]
        %v4686 = vld [vmem:[%s241 + $0x188] sm:$0xff]
        %v4687 = vld [vmem:[%s241 + $0x190] sm:$0xff]
        %v4688 = vld [vmem:[%s241 + $0x198] sm:$0xff]
        %v4689 = vld [vmem:[%s241 + $0x1a0] sm:$0xff]
        %v4690 = vld [vmem:[%s241 + $0x1a8] sm:$0xff]
        %v4691 = vld [vmem:[%s241 + $0x1b0] sm:$0xff]
        %v4692 = vld [vmem:[%s241 + $0x1b8] sm:$0xff]
        %v4693 = vld [vmem:[%s241 + $0x1c0] sm:$0xff]
        %v4694 = vld [vmem:[%s241 + $0x1c8] sm:$0xff]
        %v4695 = vld [vmem:[%s241 + $0x1d0] sm:$0xff]
        %v4696 = vld [vmem:[%s241 + $0x1d8] sm:$0xff]
        %v4697 = vld [vmem:[%s241 + $0x1e0] sm:$0xff]
        %v4698 = vld [vmem:[%s241 + $0x1e8] sm:$0xff]
        %v4699 = vld [vmem:[%s241 + $0x1f0] sm:$0xff]
        %v4700 = vld [vmem:[%s241 + $0x1f8] sm:$0xff]
        %v4701 = vld [vmem:[%s241 + $0x200] sm:$0xff]
        %v4702 = vld [vmem:[%s241 + $0x208] sm:$0xff]
        %v4703 = vld [vmem:[%s241 + $0x210] sm:$0xff]
        %v4704 = vld [vmem:[%s241 + $0x218] sm:$0xff]
        %v4705 = vld [vmem:[%s241 + $0x220] sm:$0xff]
        %v4706 = vld [vmem:[%s241 + $0x228] sm:$0xff]
        %v4707 = vld [vmem:[%s241 + $0x230] sm:$0xff]
        %v4708 = vld [vmem:[%s241 + $0x238] sm:$0xff]
        %v4709 = vld [vmem:[%s241 + $0x240] sm:$0xff]
        %v4710 = vld [vmem:[%s241 + $0x248] sm:$0xff]
        %v4711 = vld [vmem:[%s241 + $0x250] sm:$0x7f]
        %v4712 = vld [vmem:[%s241 + $0x258] sm:$0x7f]
        %v4779 = vrot.slane %v4647, 7
        %v4780 = vrot.slane %v4649, 7
        %v4781 = vsel %vm962, %v4779, %v4780
        %v4782 = vrot.slane %v4648, 7
        %v4783 = vrot.slane %v4650, 7
        %v4784 = vsel %vm962, %v4782, %v4783
        %v4785 = vrot.slane %v4651, 7
        %v4786 = vsel %vm962, %v4780, %v4785
        %v4787 = vrot.slane %v4652, 7
        %v4788 = vsel %vm962, %v4783, %v4787
        %v4789 = vrot.slane %v4653, 7
        %v4790 = vsel %vm962, %v4785, %v4789
        %v4791 = vrot.slane %v4654, 7
        %v4792 = vsel %vm962, %v4787, %v4791
        %v4793 = vrot.slane %v4655, 7
        %v4794 = vsel %vm962, %v4789, %v4793
        %v4795 = vrot.slane %v4656, 7
        %v4796 = vsel %vm962, %v4791, %v4795
        %v4797 = vrot.slane %v4657, 7
        %v4798 = vsel %vm962, %v4793, %v4797
        %v4799 = vrot.slane %v4658, 7
        %v4800 = vsel %vm962, %v4795, %v4799
        %v4801 = vrot.slane %v4659, 7
        %v4802 = vsel %vm962, %v4797, %v4801
        %v4803 = vrot.slane %v4660, 7
        %v4804 = vsel %vm962, %v4799, %v4803
        %v4805 = vrot.slane %v4661, 7
        %v4806 = vsel %vm962, %v4801, %v4805
        %v4807 = vrot.slane %v4662, 7
        %v4808 = vsel %vm962, %v4803, %v4807
        %v4809 = vrot.slane %v4663, 7
        %v4810 = vsel %vm962, %v4805, %v4809
        %v4811 = vrot.slane %v4664, 7
        %v4812 = vsel %vm962, %v4807, %v4811
        %v4813 = vrot.slane %v4665, 7
        %v4814 = vsel %vm962, %v4809, %v4813
        %v4815 = vrot.slane %v4666, 7
        %v4816 = vsel %vm962, %v4811, %v4815
        %v4817 = vrot.slane %v4667, 7
        %v4818 = vsel %vm962, %v4813, %v4817
        %v4819 = vrot.slane %v4668, 7
        %v4820 = vsel %vm962, %v4815, %v4819
        %v4821 = vrot.slane %v4669, 7
        %v4822 = vsel %vm962, %v4817, %v4821
        %v4823 = vrot.slane %v4670, 7
        %v4824 = vsel %vm962, %v4819, %v4823
        %v4825 = vrot.slane %v4671, 7
        %v4826 = vsel %vm962, %v4821, %v4825
        %v4827 = vrot.slane %v4672, 7
        %v4828 = vsel %vm962, %v4823, %v4827
        %v4829 = vrot.slane %v4673, 7
        %v4830 = vsel %vm962, %v4825, %v4829
        %v4831 = vrot.slane %v4674, 7
        %v4832 = vsel %vm962, %v4827, %v4831
        %v4833 = vrot.slane %v4675, 7
        %v4834 = vsel %vm962, %v4829, %v4833
        %v4835 = vrot.slane %v4676, 7
        %v4836 = vsel %vm962, %v4831, %v4835
        %v4837 = vrot.slane %v4677, 7
        %v4838 = vsel %vm962, %v4833, %v4837
        %v4839 = vrot.slane %v4678, 7
        %v4840 = vsel %vm962, %v4835, %v4839
        %v4841 = vrot.slane %v4679, 7
        %v4842 = vsel %vm962, %v4837, %v4841
        %v4843 = vrot.slane %v4680, 7
        %v4844 = vsel %vm962, %v4839, %v4843
        %v4845 = vrot.slane %v4681, 7
        %v4846 = vsel %vm962, %v4841, %v4845
        %v4847 = vrot.slane %v4682, 7
        %v4848 = vsel %vm962, %v4843, %v4847
        %v4849 = vrot.slane %v4683, 7
        %v4850 = vsel %vm962, %v4845, %v4849
        %v4851 = vrot.slane %v4684, 7
        %v4852 = vsel %vm962, %v4847, %v4851
        %v4853 = vrot.slane %v4685, 7
        %v4854 = vsel %vm962, %v4849, %v4853
        %v4855 = vrot.slane %v4686, 7
        %v4856 = vsel %vm962, %v4851, %v4855
        %v4857 = vrot.slane %v4687, 7
        %v4858 = vsel %vm962, %v4853, %v4857
        %v4859 = vrot.slane %v4688, 7
        %v4860 = vsel %vm962, %v4855, %v4859
        %v4861 = vrot.slane %v4689, 7
        %v4862 = vsel %vm962, %v4857, %v4861
        %v4863 = vrot.slane %v4690, 7
        %v4864 = vsel %vm962, %v4859, %v4863
        %v4865 = vrot.slane %v4691, 7
        %v4866 = vsel %vm962, %v4861, %v4865
        %v4867 = vrot.slane %v4692, 7
        %v4868 = vsel %vm962, %v4863, %v4867
        %v4869 = vrot.slane %v4693, 7
        %v4870 = vsel %vm962, %v4865, %v4869
        %v4871 = vrot.slane %v4694, 7
        %v4872 = vsel %vm962, %v4867, %v4871
        %v4873 = vrot.slane %v4695, 7
        %v4874 = vsel %vm962, %v4869, %v4873
        %v4875 = vrot.slane %v4696, 7
        %v4876 = vsel %vm962, %v4871, %v4875
        %v4877 = vrot.slane %v4697, 7
        %v4878 = vsel %vm962, %v4873, %v4877
        %v4879 = vrot.slane %v4698, 7
        %v4880 = vsel %vm962, %v4875, %v4879
        %v4881 = vrot.slane %v4699, 7
        %v4882 = vsel %vm962, %v4877, %v4881
        %v4883 = vrot.slane %v4700, 7
        %v4884 = vsel %vm962, %v4879, %v4883
        %v4885 = vrot.slane %v4701, 7
        %v4886 = vsel %vm962, %v4881, %v4885
        %v4887 = vrot.slane %v4702, 7
        %v4888 = vsel %vm962, %v4883, %v4887
        %v4889 = vrot.slane %v4703, 7
        %v4890 = vsel %vm962, %v4885, %v4889
        %v4891 = vrot.slane %v4704, 7
        %v4892 = vsel %vm962, %v4887, %v4891
        %v4893 = vrot.slane %v4705, 7
        %v4894 = vsel %vm962, %v4889, %v4893
        %v4895 = vrot.slane %v4706, 7
        %v4896 = vsel %vm962, %v4891, %v4895
        %v4897 = vrot.slane %v4707, 7
        %v4898 = vsel %vm962, %v4893, %v4897
        %v4899 = vrot.slane %v4708, 7
        %v4900 = vsel %vm962, %v4895, %v4899
        %v4901 = vrot.slane %v4709, 7
        %v4902 = vsel %vm962, %v4897, %v4901
        %v4903 = vrot.slane %v4710, 7
        %v4904 = vsel %vm962, %v4899, %v4903
        %v4905 = vrot.slane %v4711, 7
        %v4906 = vsel %vm962, %v4901, %v4905
        %v4907 = vrot.slane %v4712, 7
        %v4908 = vsel %vm962, %v4903, %v4907
        %v4973 = vsel %vm864, 0.0, %v4781
        %v4974 = vsel %vm864, 0.0, %v4784
        %v4975 = vsel %vm865, 0.0, %v4786
        %v4976 = vsel %vm865, 0.0, %v4788
        %v4977 = vsel %vm866, 0.0, %v4790
        %v4978 = vsel %vm866, 0.0, %v4792
        %v4979 = vsel %vm867, 0.0, %v4794
        %v4980 = vsel %vm867, 0.0, %v4796
        %v4981 = vsel %vm868, 0.0, %v4798
        %v4982 = vsel %vm868, 0.0, %v4800
        %v4983 = vsel %vm869, 0.0, %v4802
        %v4984 = vsel %vm869, 0.0, %v4804
        %v4985 = vsel %vm870, 0.0, %v4806
        %v4986 = vsel %vm870, 0.0, %v4808
        %v4987 = vsel %vm871, 0.0, %v4810
        %v4988 = vsel %vm871, 0.0, %v4812
        %v4989 = vsel %vm872, 0.0, %v4814
        %v4990 = vsel %vm872, 0.0, %v4816
        %v4991 = vsel %vm873, 0.0, %v4818
        %v4992 = vsel %vm873, 0.0, %v4820
        %v4993 = vsel %vm874, 0.0, %v4822
        %v4994 = vsel %vm874, 0.0, %v4824
        %v4995 = vsel %vm875, 0.0, %v4826
        %v4996 = vsel %vm875, 0.0, %v4828
        %v4997 = vsel %vm876, 0.0, %v4830
        %v4998 = vsel %vm876, 0.0, %v4832
        %v4999 = vsel %vm877, 0.0, %v4834
        %v5000 = vsel %vm877, 0.0, %v4836
        %v5001 = vsel %vm878, 0.0, %v4838
        %v5002 = vsel %vm878, 0.0, %v4840
        %v5003 = vsel %vm879, 0.0, %v4842
        %v5004 = vsel %vm879, 0.0, %v4844
        %v5005 = vsel %vm880, 0.0, %v4846
        %v5006 = vsel %vm880, 0.0, %v4848
        %v5007 = vsel %vm881, 0.0, %v4850
        %v5008 = vsel %vm881, 0.0, %v4852
        %v5009 = vsel %vm882, 0.0, %v4854
        %v5010 = vsel %vm882, 0.0, %v4856
        %v5011 = vsel %vm883, 0.0, %v4858
        %v5012 = vsel %vm883, 0.0, %v4860
        %v5013 = vsel %vm884, 0.0, %v4862
        %v5014 = vsel %vm884, 0.0, %v4864
        %v5015 = vsel %vm885, 0.0, %v4866
        %v5016 = vsel %vm885, 0.0, %v4868
        %v5017 = vsel %vm886, 0.0, %v4870
        %v5018 = vsel %vm886, 0.0, %v4872
        %v5019 = vsel %vm887, 0.0, %v4874
        %v5020 = vsel %vm887, 0.0, %v4876
        %v5021 = vsel %vm888, 0.0, %v4878
        %v5022 = vsel %vm888, 0.0, %v4880
        %v5023 = vsel %vm889, 0.0, %v4882
        %v5024 = vsel %vm889, 0.0, %v4884
        %v5025 = vsel %vm890, 0.0, %v4886
        %v5026 = vsel %vm890, 0.0, %v4888
        %v5027 = vsel %vm891, 0.0, %v4890
        %v5028 = vsel %vm891, 0.0, %v4892
        %v5029 = vsel %vm892, 0.0, %v4894
        %v5030 = vsel %vm892, 0.0, %v4896
        %v5031 = vsel %vm893, 0.0, %v4898
        %v5032 = vsel %vm893, 0.0, %v4900
        %v5033 = vsel %vm894, 0.0, %v4902
        %v5034 = vsel %vm894, 0.0, %v4904
        %v5035 = vsel %vm895, 0.0, %v4906
        %v5036 = vsel %vm895, 0.0, %v4908
        %s5037 = scalar_lea.vmem [#allocation4], 3072
        %v5038 = vld [vmem:[%s5037] sm:$0xff]
        %v5039 = vld [vmem:[%s5037 + $0x8] sm:$0xff]
        %v5040 = vld [vmem:[%s5037 + $0x10] sm:$0xff]
        %v5041 = vld [vmem:[%s5037 + $0x18] sm:$0xff]
        %v5042 = vld [vmem:[%s5037 + $0x20] sm:$0xff]
        %v5043 = vld [vmem:[%s5037 + $0x28] sm:$0xff]
        %v5044 = vld [vmem:[%s5037 + $0x30] sm:$0xff]
        %v5045 = vld [vmem:[%s5037 + $0x38] sm:$0xff]
        %v5046 = vld [vmem:[%s5037 + $0x40] sm:$0xff]
        %v5047 = vld [vmem:[%s5037 + $0x48] sm:$0xff]
        %v5048 = vld [vmem:[%s5037 + $0x50] sm:$0xff]
        %v5049 = vld [vmem:[%s5037 + $0x58] sm:$0xff]
        %v5050 = vld [vmem:[%s5037 + $0x60] sm:$0xff]
        %v5051 = vld [vmem:[%s5037 + $0x68] sm:$0xff]
        %v5052 = vld [vmem:[%s5037 + $0x70] sm:$0xff]
        %v5053 = vld [vmem:[%s5037 + $0x78] sm:$0xff]
        %v5054 = vld [vmem:[%s5037 + $0x80] sm:$0xff]
        %v5055 = vld [vmem:[%s5037 + $0x88] sm:$0xff]
        %v5056 = vld [vmem:[%s5037 + $0x90] sm:$0xff]
        %v5057 = vld [vmem:[%s5037 + $0x98] sm:$0xff]
        %v5058 = vld [vmem:[%s5037 + $0xa0] sm:$0xff]
        %v5059 = vld [vmem:[%s5037 + $0xa8] sm:$0xff]
        %v5060 = vld [vmem:[%s5037 + $0xb0] sm:$0xff]
        %v5061 = vld [vmem:[%s5037 + $0xb8] sm:$0xff]
        %v5062 = vld [vmem:[%s5037 + $0xc0] sm:$0xff]
        %v5063 = vld [vmem:[%s5037 + $0xc8] sm:$0xff]
        %v5064 = vld [vmem:[%s5037 + $0xd0] sm:$0xff]
        %v5065 = vld [vmem:[%s5037 + $0xd8] sm:$0xff]
        %v5066 = vld [vmem:[%s5037 + $0xe0] sm:$0xff]
        %v5067 = vld [vmem:[%s5037 + $0xe8] sm:$0xff]
        %v5068 = vld [vmem:[%s5037 + $0xf0] sm:$0xff]
        %v5069 = vld [vmem:[%s5037 + $0xf8] sm:$0xff]
        %v5070 = vld [vmem:[%s5037 + $0x100] sm:$0xff]
        %v5071 = vld [vmem:[%s5037 + $0x108] sm:$0xff]
        %v5072 = vld [vmem:[%s5037 + $0x110] sm:$0xff]
        %v5073 = vld [vmem:[%s5037 + $0x118] sm:$0xff]
        %v5074 = vld [vmem:[%s5037 + $0x120] sm:$0xff]
        %v5075 = vld [vmem:[%s5037 + $0x128] sm:$0xff]
        %v5076 = vld [vmem:[%s5037 + $0x130] sm:$0xff]
        %v5077 = vld [vmem:[%s5037 + $0x138] sm:$0xff]
        %v5078 = vld [vmem:[%s5037 + $0x140] sm:$0xff]
        %v5079 = vld [vmem:[%s5037 + $0x148] sm:$0xff]
        %v5080 = vld [vmem:[%s5037 + $0x150] sm:$0xff]
        %v5081 = vld [vmem:[%s5037 + $0x158] sm:$0xff]
        %v5082 = vld [vmem:[%s5037 + $0x160] sm:$0xff]
        %v5083 = vld [vmem:[%s5037 + $0x168] sm:$0xff]
        %v5084 = vld [vmem:[%s5037 + $0x170] sm:$0xff]
        %v5085 = vld [vmem:[%s5037 + $0x178] sm:$0xff]
        %v5086 = vld [vmem:[%s5037 + $0x180] sm:$0xff]
        %v5087 = vld [vmem:[%s5037 + $0x188] sm:$0xff]
        %v5088 = vld [vmem:[%s5037 + $0x190] sm:$0xff]
        %v5089 = vld [vmem:[%s5037 + $0x198] sm:$0xff]
        %v5090 = vld [vmem:[%s5037 + $0x1a0] sm:$0xff]
        %v5091 = vld [vmem:[%s5037 + $0x1a8] sm:$0xff]
        %v5092 = vld [vmem:[%s5037 + $0x1b0] sm:$0xff]
        %v5093 = vld [vmem:[%s5037 + $0x1b8] sm:$0xff]
        %v5094 = vld [vmem:[%s5037 + $0x1c0] sm:$0xff]
        %v5095 = vld [vmem:[%s5037 + $0x1c8] sm:$0xff]
        %v5096 = vld [vmem:[%s5037 + $0x1d0] sm:$0xff]
        %v5097 = vld [vmem:[%s5037 + $0x1d8] sm:$0xff]
        %v5098 = vld [vmem:[%s5037 + $0x1e0] sm:$0xff]
        %v5099 = vld [vmem:[%s5037 + $0x1e8] sm:$0xff]
        %v5100 = vld [vmem:[%s5037 + $0x1f0] sm:$0xff]
        %v5101 = vld [vmem:[%s5037 + $0x1f8] sm:$0xff]
        %5102 = vmatprep.subr.mxu0 %v5039
        %5103 = vmatpush1.msra.mxu0 %v5038
        %5104 = vmatprep.subr.mxu0 %v5041
        %5105 = vmatpush1.msra.mxu0 %v5040
        %5106 = vmatprep.subr.mxu0 %v5043
        %5107 = vmatpush1.msra.mxu0 %v5042
        %5108 = vmatprep.subr.mxu0 %v5045
        %5109 = vmatpush1.msra.mxu0 %v5044
        %5110 = vmatprep.subr.mxu0 %v5047
        %5111 = vmatpush1.msra.mxu0 %v5046
        %5112 = vmatprep.subr.mxu0 %v5049
        %5113 = vmatpush1.msra.mxu0 %v5048
        %5114 = vmatprep.subr.mxu0 %v5051
        %5115 = vmatpush1.msra.mxu0 %v5050
        %5116 = vmatprep.subr.mxu0 %v5053
        %5117 = vmatpush1.msra.mxu0 %v5052
        %5118 = vmatprep.subr.mxu0 %v5055
        %5119 = vmatpush1.msra.mxu0 %v5054
        %5120 = vmatprep.subr.mxu0 %v5057
        %5121 = vmatpush1.msra.mxu0 %v5056
        %5122 = vmatprep.subr.mxu0 %v5059
        %5123 = vmatpush1.msra.mxu0 %v5058
        %5124 = vmatprep.subr.mxu0 %v5061
        %5125 = vmatpush1.msra.mxu0 %v5060
        %5126 = vmatprep.subr.mxu0 %v5063
        %5127 = vmatpush1.msra.mxu0 %v5062
        %5128 = vmatprep.subr.mxu0 %v5065
        %5129 = vmatpush1.msra.mxu0 %v5064
        %5130 = vmatprep.subr.mxu0 %v5067
        %5131 = vmatpush1.msra.mxu0 %v5066
        %5132 = vmatprep.subr.mxu0 %v5069
        %5133 = vmatpush1.msra.mxu0 %v5068
        %5134 = vmatprep.subr.mxu0 %v5071
        %5135 = vmatpush1.msra.mxu0 %v5070
        %5136 = vmatprep.subr.mxu0 %v5073
        %5137 = vmatpush1.msra.mxu0 %v5072
        %5138 = vmatprep.subr.mxu0 %v5075
        %5139 = vmatpush1.msra.mxu0 %v5074
        %5140 = vmatprep.subr.mxu0 %v5077
        %5141 = vmatpush1.msra.mxu0 %v5076
        %5142 = vmatprep.subr.mxu0 %v5079
        %5143 = vmatpush1.msra.mxu0 %v5078
        %5144 = vmatprep.subr.mxu0 %v5081
        %5145 = vmatpush1.msra.mxu0 %v5080
        %5146 = vmatprep.subr.mxu0 %v5083
        %5147 = vmatpush1.msra.mxu0 %v5082
        %5148 = vmatprep.subr.mxu0 %v5085
        %5149 = vmatpush1.msra.mxu0 %v5084
        %5150 = vmatprep.subr.mxu0 %v5087
        %5151 = vmatpush1.msra.mxu0 %v5086
        %5152 = vmatprep.subr.mxu0 %v5089
        %5153 = vmatpush1.msra.mxu0 %v5088
        %5154 = vmatprep.subr.mxu0 %v5091
        %5155 = vmatpush1.msra.mxu0 %v5090
        %5156 = vmatprep.subr.mxu0 %v5093
        %5157 = vmatpush1.msra.mxu0 %v5092
        %5158 = vmatprep.subr.mxu0 %v5095
        %5159 = vmatpush1.msra.mxu0 %v5094
        %5160 = vmatprep.subr.mxu0 %v5097
        %5161 = vmatpush1.msra.mxu0 %v5096
        %5162 = vmatprep.subr.mxu0 %v5099
        %5163 = vmatpush1.msra.mxu0 %v5098
        %5164 = vmatprep.subr.mxu0 %v5101
        %5165 = vmatpush1.msra.mxu0 %v5100
        %5166 = vmatprep.mubr.f32.mxu0 %v4974
        %5167 = vmatmul.mubr.f32.gmra.mrb[0].mxu0 %v4973
        %v5168 = vpop.f32.mrb[0].mxu0
        %v5169 = vadd.f32 0.0, %v5168
        %v5170 = vpop.f32.mrb[0].mxu0
        %v5171 = vadd.f32 0.0, %v5170
        %5172 = vmatprep.mubr.f32.mxu0 %v4976
        %5173 = vmatmul.mubr.f32.gmra.mrb[0].mxu0 %v4975
        %v5174 = vpop.f32.mrb[0].mxu0
        %v5175 = vadd.f32 0.0, %v5174
        %v5176 = vpop.f32.mrb[0].mxu0
        %v5177 = vadd.f32 0.0, %v5176
        %5178 = vmatprep.mubr.f32.mxu0 %v4978
        %5179 = vmatmul.mubr.f32.gmra.mrb[0].mxu0 %v4977
        %v5180 = vpop.f32.mrb[0].mxu0
        %v5181 = vadd.f32 0.0, %v5180
        %v5182 = vpop.f32.mrb[0].mxu0
        %v5183 = vadd.f32 0.0, %v5182
        %5184 = vmatprep.mubr.f32.mxu0 %v4980
        %5185 = vmatmul.mubr.f32.gmra.mrb[0].mxu0 %v4979
        %v5186 = vpop.f32.mrb[0].mxu0
        %v5187 = vadd.f32 0.0, %v5186
        %v5188 = vpop.f32.mrb[0].mxu0
        %v5189 = vadd.f32 0.0, %v5188
        %5190 = vmatprep.mubr.f32.mxu0 %v4982
        %5191 = vmatmul.mubr.f32.gmra.mrb[0].mxu0 %v4981
        %v5192 = vpop.f32.mrb[0].mxu0
        %v5193 = vadd.f32 0.0, %v5192
        %v5194 = vpop.f32.mrb[0].mxu0
        %v5195 = vadd.f32 0.0, %v5194
        %5196 = vmatprep.mubr.f32.mxu0 %v4984
        %5197 = vmatmul.mubr.f32.gmra.mrb[0].mxu0 %v4983
        %v5198 = vpop.f32.mrb[0].mxu0
        %v5199 = vadd.f32 0.0, %v5198
        %v5200 = vpop.f32.mrb[0].mxu0
        %v5201 = vadd.f32 0.0, %v5200
        %5202 = vmatprep.mubr.f32.mxu0 %v4986
        %5203 = vmatmul.mubr.f32.gmra.mrb[0].mxu0 %v4985
        %v5204 = vpop.f32.mrb[0].mxu0
        %v5205 = vadd.f32 0.0, %v5204
        %v5206 = vpop.f32.mrb[0].mxu0
        %v5207 = vadd.f32 0.0, %v5206
        %5208 = vmatprep.mubr.f32.mxu0 %v4988
        %5209 = vmatmul.mubr.f32.gmra.mrb[0].mxu0 %v4987
        %v5210 = vpop.f32.mrb[0].mxu0
        %v5211 = vadd.f32 0.0, %v5210
        %v5212 = vpop.f32.mrb[0].mxu0
        %v5213 = vadd.f32 0.0, %v5212
        %5214 = vmatprep.mubr.f32.mxu0 %v4990
        %5215 = vmatmul.mubr.f32.gmra.mrb[0].mxu0 %v4989
        %v5216 = vpop.f32.mrb[0].mxu0
        %v5217 = vadd.f32 0.0, %v5216
        %v5218 = vpop.f32.mrb[0].mxu0
        %v5219 = vadd.f32 0.0, %v5218
        %5220 = vmatprep.mubr.f32.mxu0 %v4992
        %5221 = vmatmul.mubr.f32.gmra.mrb[0].mxu0 %v4991
        %v5222 = vpop.f32.mrb[0].mxu0
        %v5223 = vadd.f32 0.0, %v5222
        %v5224 = vpop.f32.mrb[0].mxu0
        %v5225 = vadd.f32 0.0, %v5224
        %5226 = vmatprep.mubr.f32.mxu0 %v4994
        %5227 = vmatmul.mubr.f32.gmra.mrb[0].mxu0 %v4993
        %v5228 = vpop.f32.mrb[0].mxu0
        %v5229 = vadd.f32 0.0, %v5228
        %v5230 = vpop.f32.mrb[0].mxu0
        %v5231 = vadd.f32 0.0, %v5230
        %5232 = vmatprep.mubr.f32.mxu0 %v4996
        %5233 = vmatmul.mubr.f32.gmra.mrb[0].mxu0 %v4995
        %v5234 = vpop.f32.mrb[0].mxu0
        %v5235 = vadd.f32 0.0, %v5234
        %v5236 = vpop.f32.mrb[0].mxu0
        %v5237 = vadd.f32 0.0, %v5236
        %5238 = vmatprep.mubr.f32.mxu0 %v4998
        %5239 = vmatmul.mubr.f32.gmra.mrb[0].mxu0 %v4997
        %v5240 = vpop.f32.mrb[0].mxu0
        %v5241 = vadd.f32 0.0, %v5240
        %v5242 = vpop.f32.mrb[0].mxu0
        %v5243 = vadd.f32 0.0, %v5242
        %5244 = vmatprep.mubr.f32.mxu0 %v5000
        %5245 = vmatmul.mubr.f32.gmra.mrb[0].mxu0 %v4999
        %v5246 = vpop.f32.mrb[0].mxu0
        %v5247 = vadd.f32 0.0, %v5246
        %v5248 = vpop.f32.mrb[0].mxu0
        %v5249 = vadd.f32 0.0, %v5248
        %5250 = vmatprep.mubr.f32.mxu0 %v5002
        %5251 = vmatmul.mubr.f32.gmra.mrb[0].mxu0 %v5001
        %v5252 = vpop.f32.mrb[0].mxu0
        %v5253 = vadd.f32 0.0, %v5252
        %v5254 = vpop.f32.mrb[0].mxu0
        %v5255 = vadd.f32 0.0, %v5254
        %5256 = vmatprep.mubr.f32.mxu0 %v5004
        %5257 = vmatmul.mubr.f32.gmra.mrb[0].mxu0 %v5003
        %v5258 = vpop.f32.mrb[0].mxu0
        %v5259 = vadd.f32 0.0, %v5258
        %v5260 = vpop.f32.mrb[0].mxu0
        %v5261 = vadd.f32 0.0, %v5260
        %5262 = vmatprep.mubr.f32.mxu0 %v5006
        %5263 = vmatmul.mubr.f32.gmra.mrb[0].mxu0 %v5005
        %v5264 = vpop.f32.mrb[0].mxu0
        %v5265 = vadd.f32 0.0, %v5264
        %v5266 = vpop.f32.mrb[0].mxu0
        %v5267 = vadd.f32 0.0, %v5266
        %5268 = vmatprep.mubr.f32.mxu0 %v5008
        %5269 = vmatmul.mubr.f32.gmra.mrb[0].mxu0 %v5007
        %v5270 = vpop.f32.mrb[0].mxu0
        %v5271 = vadd.f32 0.0, %v5270
        %v5272 = vpop.f32.mrb[0].mxu0
        %v5273 = vadd.f32 0.0, %v5272
        %5274 = vmatprep.mubr.f32.mxu0 %v5010
        %5275 = vmatmul.mubr.f32.gmra.mrb[0].mxu0 %v5009
        %v5276 = vpop.f32.mrb[0].mxu0
        %v5277 = vadd.f32 0.0, %v5276
        %v5278 = vpop.f32.mrb[0].mxu0
        %v5279 = vadd.f32 0.0, %v5278
        %5280 = vmatprep.mubr.f32.mxu0 %v5012
        %5281 = vmatmul.mubr.f32.gmra.mrb[0].mxu0 %v5011
        %v5282 = vpop.f32.mrb[0].mxu0
        %v5283 = vadd.f32 0.0, %v5282
        %v5284 = vpop.f32.mrb[0].mxu0
        %v5285 = vadd.f32 0.0, %v5284
        %5286 = vmatprep.mubr.f32.mxu0 %v5014
        %5287 = vmatmul.mubr.f32.gmra.mrb[0].mxu0 %v5013
        %v5288 = vpop.f32.mrb[0].mxu0
        %v5289 = vadd.f32 0.0, %v5288
        %v5290 = vpop.f32.mrb[0].mxu0
        %v5291 = vadd.f32 0.0, %v5290
        %5292 = vmatprep.mubr.f32.mxu0 %v5016
        %5293 = vmatmul.mubr.f32.gmra.mrb[0].mxu0 %v5015
        %v5294 = vpop.f32.mrb[0].mxu0
        %v5295 = vadd.f32 0.0, %v5294
        %v5296 = vpop.f32.mrb[0].mxu0
        %v5297 = vadd.f32 0.0, %v5296
        %5298 = vmatprep.mubr.f32.mxu0 %v5018
        %5299 = vmatmul.mubr.f32.gmra.mrb[0].mxu0 %v5017
        %v5300 = vpop.f32.mrb[0].mxu0
        %v5301 = vadd.f32 0.0, %v5300
        %v5302 = vpop.f32.mrb[0].mxu0
        %v5303 = vadd.f32 0.0, %v5302
        %5304 = vmatprep.mubr.f32.mxu0 %v5020
        %5305 = vmatmul.mubr.f32.gmra.mrb[0].mxu0 %v5019
        %v5306 = vpop.f32.mrb[0].mxu0
        %v5307 = vadd.f32 0.0, %v5306
        %v5308 = vpop.f32.mrb[0].mxu0
        %v5309 = vadd.f32 0.0, %v5308
        %5310 = vmatprep.mubr.f32.mxu0 %v5022
        %5311 = vmatmul.mubr.f32.gmra.mrb[0].mxu0 %v5021
        %v5312 = vpop.f32.mrb[0].mxu0
        %v5313 = vadd.f32 0.0, %v5312
        %v5314 = vpop.f32.mrb[0].mxu0
        %v5315 = vadd.f32 0.0, %v5314
        %5316 = vmatprep.mubr.f32.mxu0 %v5024
        %5317 = vmatmul.mubr.f32.gmra.mrb[0].mxu0 %v5023
        %v5318 = vpop.f32.mrb[0].mxu0
        %v5319 = vadd.f32 0.0, %v5318
        %v5320 = vpop.f32.mrb[0].mxu0
        %v5321 = vadd.f32 0.0, %v5320
        %5322 = vmatprep.mubr.f32.mxu0 %v5026
        %5323 = vmatmul.mubr.f32.gmra.mrb[0].mxu0 %v5025
        %v5324 = vpop.f32.mrb[0].mxu0
        %v5325 = vadd.f32 0.0, %v5324
        %v5326 = vpop.f32.mrb[0].mxu0
        %v5327 = vadd.f32 0.0, %v5326
        %5328 = vmatprep.mubr.f32.mxu0 %v5028
        %5329 = vmatmul.mubr.f32.gmra.mrb[0].mxu0 %v5027
        %v5330 = vpop.f32.mrb[0].mxu0
        %v5331 = vadd.f32 0.0, %v5330
        %v5332 = vpop.f32.mrb[0].mxu0
        %v5333 = vadd.f32 0.0, %v5332
        %5334 = vmatprep.mubr.f32.mxu0 %v5030
        %5335 = vmatmul.mubr.f32.gmra.mrb[0].mxu0 %v5029
        %v5336 = vpop.f32.mrb[0].mxu0
        %v5337 = vadd.f32 0.0, %v5336
        %v5338 = vpop.f32.mrb[0].mxu0
        %v5339 = vadd.f32 0.0, %v5338
        %5340 = vmatprep.mubr.f32.mxu0 %v5032
        %5341 = vmatmul.mubr.f32.gmra.mrb[0].mxu0 %v5031
        %v5342 = vpop.f32.mrb[0].mxu0
        %v5343 = vadd.f32 0.0, %v5342
        %v5344 = vpop.f32.mrb[0].mxu0
        %v5345 = vadd.f32 0.0, %v5344
        %5346 = vmatprep.mubr.f32.mxu0 %v5034
        %5347 = vmatmul.mubr.f32.gmra.mrb[0].mxu0 %v5033
        %v5348 = vpop.f32.mrb[0].mxu0
        %v5349 = vadd.f32 0.0, %v5348
        %v5350 = vpop.f32.mrb[0].mxu0
        %v5351 = vadd.f32 0.0, %v5350
        %5352 = vmatprep.mubr.f32.mxu0 %v5036
        %5353 = vmatmul.mubr.f32.gmra.mrb[0].mxu0 %v5035
        %v5354 = vpop.f32.mrb[0].mxu0
        %v5355 = vadd.f32 0.0, %v5354
        %v5356 = vpop.f32.mrb[0].mxu0
        %v5357 = vadd.f32 0.0, %v5356
        %5358 = vdwg.mxu0
        %v5359 = vadd.f32 %v4583, %v5169
        %v5360 = vadd.f32 %v4584, %v5171
        %v5361 = vadd.f32 %v4585, %v5175
        %v5362 = vadd.f32 %v4586, %v5177
        %v5363 = vadd.f32 %v4587, %v5181
        %v5364 = vadd.f32 %v4588, %v5183
        %v5365 = vadd.f32 %v4589, %v5187
        %v5366 = vadd.f32 %v4590, %v5189
        %v5367 = vadd.f32 %v4591, %v5193
        %v5368 = vadd.f32 %v4592, %v5195
        %v5369 = vadd.f32 %v4593, %v5199
        %v5370 = vadd.f32 %v4594, %v5201
        %v5371 = vadd.f32 %v4595, %v5205
        %v5372 = vadd.f32 %v4596, %v5207
        %v5373 = vadd.f32 %v4597, %v5211
        %v5374 = vadd.f32 %v4598, %v5213
        %v5375 = vadd.f32 %v4599, %v5217
        %v5376 = vadd.f32 %v4600, %v5219
        %v5377 = vadd.f32 %v4601, %v5223
        %v5378 = vadd.f32 %v4602, %v5225
        %v5379 = vadd.f32 %v4603, %v5229
        %v5380 = vadd.f32 %v4604, %v5231
        %v5381 = vadd.f32 %v4605, %v5235
        %v5382 = vadd.f32 %v4606, %v5237
        %v5383 = vadd.f32 %v4607, %v5241
        %v5384 = vadd.f32 %v4608, %v5243
        %v5385 = vadd.f32 %v4609, %v5247
        %v5386 = vadd.f32 %v4610, %v5249
        %v5387 = vadd.f32 %v4611, %v5253
        %v5388 = vadd.f32 %v4612, %v5255
        %v5389 = vadd.f32 %v4613, %v5259
        %v5390 = vadd.f32 %v4614, %v5261
        %v5391 = vadd.f32 %v4615, %v5265
        %v5392 = vadd.f32 %v4616, %v5267
        %v5393 = vadd.f32 %v4617, %v5271
        %v5394 = vadd.f32 %v4618, %v5273
        %v5395 = vadd.f32 %v4619, %v5277
        %v5396 = vadd.f32 %v4620, %v5279
        %v5397 = vadd.f32 %v4621, %v5283
        %v5398 = vadd.f32 %v4622, %v5285
        %v5399 = vadd.f32 %v4623, %v5289
        %v5400 = vadd.f32 %v4624, %v5291
        %v5401 = vadd.f32 %v4625, %v5295
        %v5402 = vadd.f32 %v4626, %v5297
        %v5403 = vadd.f32 %v4627, %v5301
        %v5404 = vadd.f32 %v4628, %v5303
        %v5405 = vadd.f32 %v4629, %v5307
        %v5406 = vadd.f32 %v4630, %v5309
        %v5407 = vadd.f32 %v4631, %v5313
        %v5408 = vadd.f32 %v4632, %v5315
        %v5409 = vadd.f32 %v4633, %v5319
        %v5410 = vadd.f32 %v4634, %v5321
        %v5411 = vadd.f32 %v4635, %v5325
        %v5412 = vadd.f32 %v4636, %v5327
        %v5413 = vadd.f32 %v4637, %v5331
        %v5414 = vadd.f32 %v4638, %v5333
        %v5415 = vadd.f32 %v4639, %v5337
        %v5416 = vadd.f32 %v4640, %v5339
        %v5417 = vadd.f32 %v4641, %v5343
        %v5418 = vadd.f32 %v4642, %v5345
        %v5419 = vadd.f32 %v4643, %v5349
        %v5420 = vadd.f32 %v4644, %v5351
        %v5421 = vadd.f32 %v4645, %v5355
        %v5422 = vadd.f32 %v4646, %v5357
        %v5423 = vld [vmem:[%s241 + $0x250] sm:$0xff]
        %v5424 = vld [vmem:[%s241 + $0x258] sm:$0xff]
        %s5425 = scalar_lea.vmem [#allocation4], 3584
        %v5426 = vld [vmem:[%s5425] sm:$0xff]
        %v5427 = vld [vmem:[%s5425 + $0x8] sm:$0xff]
        %v5428 = vld [vmem:[%s5425 + $0x10] sm:$0xff]
        %v5429 = vld [vmem:[%s5425 + $0x18] sm:$0xff]
        %v5430 = vld [vmem:[%s5425 + $0x20] sm:$0xff]
        %v5431 = vld [vmem:[%s5425 + $0x28] sm:$0xff]
        %v5432 = vld [vmem:[%s5425 + $0x30] sm:$0xff]
        %v5433 = vld [vmem:[%s5425 + $0x38] sm:$0xff]
        %v5434 = vld [vmem:[%s5425 + $0x40] sm:$0xff]
        %v5435 = vld [vmem:[%s5425 + $0x48] sm:$0xff]
        %v5436 = vld [vmem:[%s5425 + $0x50] sm:$0xff]
        %v5437 = vld [vmem:[%s5425 + $0x58] sm:$0xff]
        %v5438 = vld [vmem:[%s5425 + $0x60] sm:$0xff]
        %v5439 = vld [vmem:[%s5425 + $0x68] sm:$0xff]
        %v5440 = vld [vmem:[%s5425 + $0x70] sm:$0xff]
        %v5441 = vld [vmem:[%s5425 + $0x78] sm:$0xff]
        %v5442 = vld [vmem:[%s5425 + $0x80] sm:$0xff]
        %v5443 = vld [vmem:[%s5425 + $0x88] sm:$0xff]
        %v5444 = vld [vmem:[%s5425 + $0x90] sm:$0xff]
        %v5445 = vld [vmem:[%s5425 + $0x98] sm:$0xff]
        %v5446 = vld [vmem:[%s5425 + $0xa0] sm:$0xff]
        %v5447 = vld [vmem:[%s5425 + $0xa8] sm:$0xff]
        %v5448 = vld [vmem:[%s5425 + $0xb0] sm:$0xff]
        %v5449 = vld [vmem:[%s5425 + $0xb8] sm:$0xff]
        %v5450 = vld [vmem:[%s5425 + $0xc0] sm:$0xff]
        %v5451 = vld [vmem:[%s5425 + $0xc8] sm:$0xff]
        %v5452 = vld [vmem:[%s5425 + $0xd0] sm:$0xff]
        %v5453 = vld [vmem:[%s5425 + $0xd8] sm:$0xff]
        %v5454 = vld [vmem:[%s5425 + $0xe0] sm:$0xff]
        %v5455 = vld [vmem:[%s5425 + $0xe8] sm:$0xff]
        %v5456 = vld [vmem:[%s5425 + $0xf0] sm:$0xff]
        %v5457 = vld [vmem:[%s5425 + $0xf8] sm:$0xff]
        %v5458 = vld [vmem:[%s5425 + $0x100] sm:$0xff]
        %v5459 = vld [vmem:[%s5425 + $0x108] sm:$0xff]
        %v5460 = vld [vmem:[%s5425 + $0x110] sm:$0xff]
        %v5461 = vld [vmem:[%s5425 + $0x118] sm:$0xff]
        %v5462 = vld [vmem:[%s5425 + $0x120] sm:$0xff]
        %v5463 = vld [vmem:[%s5425 + $0x128] sm:$0xff]
        %v5464 = vld [vmem:[%s5425 + $0x130] sm:$0xff]
        %v5465 = vld [vmem:[%s5425 + $0x138] sm:$0xff]
        %v5466 = vld [vmem:[%s5425 + $0x140] sm:$0xff]
        %v5467 = vld [vmem:[%s5425 + $0x148] sm:$0xff]
        %v5468 = vld [vmem:[%s5425 + $0x150] sm:$0xff]
        %v5469 = vld [vmem:[%s5425 + $0x158] sm:$0xff]
        %v5470 = vld [vmem:[%s5425 + $0x160] sm:$0xff]
        %v5471 = vld [vmem:[%s5425 + $0x168] sm:$0xff]
        %v5472 = vld [vmem:[%s5425 + $0x170] sm:$0xff]
        %v5473 = vld [vmem:[%s5425 + $0x178] sm:$0xff]
        %v5474 = vld [vmem:[%s5425 + $0x180] sm:$0xff]
        %v5475 = vld [vmem:[%s5425 + $0x188] sm:$0xff]
        %v5476 = vld [vmem:[%s5425 + $0x190] sm:$0xff]
        %v5477 = vld [vmem:[%s5425 + $0x198] sm:$0xff]
        %v5478 = vld [vmem:[%s5425 + $0x1a0] sm:$0xff]
        %v5479 = vld [vmem:[%s5425 + $0x1a8] sm:$0xff]
        %v5480 = vld [vmem:[%s5425 + $0x1b0] sm:$0xff]
        %v5481 = vld [vmem:[%s5425 + $0x1b8] sm:$0xff]
        %v5482 = vld [vmem:[%s5425 + $0x1c0] sm:$0xff]
        %v5483 = vld [vmem:[%s5425 + $0x1c8] sm:$0xff]
        %v5484 = vld [vmem:[%s5425 + $0x1d0] sm:$0xff]
        %v5485 = vld [vmem:[%s5425 + $0x1d8] sm:$0xff]
        %v5486 = vld [vmem:[%s5425 + $0x1e0] sm:$0xff]
        %v5487 = vld [vmem:[%s5425 + $0x1e8] sm:$0xff]
        %v5488 = vld [vmem:[%s5425 + $0x1f0] sm:$0xff]
        %v5489 = vld [vmem:[%s5425 + $0x1f8] sm:$0xff]
        %5490 = vmatprep.subr.mxu0 %v5427
        %5491 = vmatpush1.msra.mxu0 %v5426
        %5492 = vmatprep.subr.mxu0 %v5429
        %5493 = vmatpush1.msra.mxu0 %v5428
        %5494 = vmatprep.subr.mxu0 %v5431
        %5495 = vmatpush1.msra.mxu0 %v5430
        %5496 = vmatprep.subr.mxu0 %v5433
        %5497 = vmatpush1.msra.mxu0 %v5432
        %5498 = vmatprep.subr.mxu0 %v5435
        %5499 = vmatpush1.msra.mxu0 %v5434
        %5500 = vmatprep.subr.mxu0 %v5437
        %5501 = vmatpush1.msra.mxu0 %v5436
        %5502 = vmatprep.subr.mxu0 %v5439
        %5503 = vmatpush1.msra.mxu0 %v5438
        %5504 = vmatprep.subr.mxu0 %v5441
        %5505 = vmatpush1.msra.mxu0 %v5440
        %5506 = vmatprep.subr.mxu0 %v5443
        %5507 = vmatpush1.msra.mxu0 %v5442
        %5508 = vmatprep.subr.mxu0 %v5445
        %5509 = vmatpush1.msra.mxu0 %v5444
        %5510 = vmatprep.subr.mxu0 %v5447
        %5511 = vmatpush1.msra.mxu0 %v5446
        %5512 = vmatprep.subr.mxu0 %v5449
        %5513 = vmatpush1.msra.mxu0 %v5448
        %5514 = vmatprep.subr.mxu0 %v5451
        %5515 = vmatpush1.msra.mxu0 %v5450
        %5516 = vmatprep.subr.mxu0 %v5453
        %5517 = vmatpush1.msra.mxu0 %v5452
        %5518 = vmatprep.subr.mxu0 %v5455
        %5519 = vmatpush1.msra.mxu0 %v5454
        %5520 = vmatprep.subr.mxu0 %v5457
        %5521 = vmatpush1.msra.mxu0 %v5456
        %5522 = vmatprep.subr.mxu0 %v5459
        %5523 = vmatpush1.msra.mxu0 %v5458
        %5524 = vmatprep.subr.mxu0 %v5461
        %5525 = vmatpush1.msra.mxu0 %v5460
        %5526 = vmatprep.subr.mxu0 %v5463
        %5527 = vmatpush1.msra.mxu0 %v5462
        %5528 = vmatprep.subr.mxu0 %v5465
        %5529 = vmatpush1.msra.mxu0 %v5464
        %5530 = vmatprep.subr.mxu0 %v5467
        %5531 = vmatpush1.msra.mxu0 %v5466
        %5532 = vmatprep.subr.mxu0 %v5469
        %5533 = vmatpush1.msra.mxu0 %v5468
        %5534 = vmatprep.subr.mxu0 %v5471
        %5535 = vmatpush1.msra.mxu0 %v5470
        %5536 = vmatprep.subr.mxu0 %v5473
        %5537 = vmatpush1.msra.mxu0 %v5472
        %5538 = vmatprep.subr.mxu0 %v5475
        %5539 = vmatpush1.msra.mxu0 %v5474
        %5540 = vmatprep.subr.mxu0 %v5477
        %5541 = vmatpush1.msra.mxu0 %v5476
        %5542 = vmatprep.subr.mxu0 %v5479
        %5543 = vmatpush1.msra.mxu0 %v5478
        %5544 = vmatprep.subr.mxu0 %v5481
        %5545 = vmatpush1.msra.mxu0 %v5480
        %5546 = vmatprep.subr.mxu0 %v5483
        %5547 = vmatpush1.msra.mxu0 %v5482
        %5548 = vmatprep.subr.mxu0 %v5485
        %5549 = vmatpush1.msra.mxu0 %v5484
        %5550 = vmatprep.subr.mxu0 %v5487
        %5551 = vmatpush1.msra.mxu0 %v5486
        %5552 = vmatprep.subr.mxu0 %v5489
        %5553 = vmatpush1.msra.mxu0 %v5488
        %5554 = vmatprep.mubr.f32.mxu0 %v4650
        %5555 = vmatmul.mubr.f32.gmra.mrb[0].mxu0 %v4649
        %v5556 = vpop.f32.mrb[0].mxu0
        %v5557 = vadd.f32 0.0, %v5556
        %v5558 = vpop.f32.mrb[0].mxu0
        %v5559 = vadd.f32 0.0, %v5558
        %5560 = vmatprep.mubr.f32.mxu0 %v4652
        %5561 = vmatmul.mubr.f32.gmra.mrb[0].mxu0 %v4651
        %v5562 = vpop.f32.mrb[0].mxu0
        %v5563 = vadd.f32 0.0, %v5562
        %v5564 = vpop.f32.mrb[0].mxu0
        %v5565 = vadd.f32 0.0, %v5564
        %5566 = vmatprep.mubr.f32.mxu0 %v4654
        %5567 = vmatmul.mubr.f32.gmra.mrb[0].mxu0 %v4653
        %v5568 = vpop.f32.mrb[0].mxu0
        %v5569 = vadd.f32 0.0, %v5568
        %v5570 = vpop.f32.mrb[0].mxu0
        %v5571 = vadd.f32 0.0, %v5570
        %5572 = vmatprep.mubr.f32.mxu0 %v4656
        %5573 = vmatmul.mubr.f32.gmra.mrb[0].mxu0 %v4655
        %v5574 = vpop.f32.mrb[0].mxu0
        %v5575 = vadd.f32 0.0, %v5574
        %v5576 = vpop.f32.mrb[0].mxu0
        %v5577 = vadd.f32 0.0, %v5576
        %5578 = vmatprep.mubr.f32.mxu0 %v4658
        %5579 = vmatmul.mubr.f32.gmra.mrb[0].mxu0 %v4657
        %v5580 = vpop.f32.mrb[0].mxu0
        %v5581 = vadd.f32 0.0, %v5580
        %v5582 = vpop.f32.mrb[0].mxu0
        %v5583 = vadd.f32 0.0, %v5582
        %5584 = vmatprep.mubr.f32.mxu0 %v4660
        %5585 = vmatmul.mubr.f32.gmra.mrb[0].mxu0 %v4659
        %v5586 = vpop.f32.mrb[0].mxu0
        %v5587 = vadd.f32 0.0, %v5586
        %v5588 = vpop.f32.mrb[0].mxu0
        %v5589 = vadd.f32 0.0, %v5588
        %5590 = vmatprep.mubr.f32.mxu0 %v4662
        %5591 = vmatmul.mubr.f32.gmra.mrb[0].mxu0 %v4661
        %v5592 = vpop.f32.mrb[0].mxu0
        %v5593 = vadd.f32 0.0, %v5592
        %v5594 = vpop.f32.mrb[0].mxu0
        %v5595 = vadd.f32 0.0, %v5594
        %5596 = vmatprep.mubr.f32.mxu0 %v4664
        %5597 = vmatmul.mubr.f32.gmra.mrb[0].mxu0 %v4663
        %v5598 = vpop.f32.mrb[0].mxu0
        %v5599 = vadd.f32 0.0, %v5598
        %v5600 = vpop.f32.mrb[0].mxu0
        %v5601 = vadd.f32 0.0, %v5600
        %5602 = vmatprep.mubr.f32.mxu0 %v4666
        %5603 = vmatmul.mubr.f32.gmra.mrb[0].mxu0 %v4665
        %v5604 = vpop.f32.mrb[0].mxu0
        %v5605 = vadd.f32 0.0, %v5604
        %v5606 = vpop.f32.mrb[0].mxu0
        %v5607 = vadd.f32 0.0, %v5606
        %5608 = vmatprep.mubr.f32.mxu0 %v4668
        %5609 = vmatmul.mubr.f32.gmra.mrb[0].mxu0 %v4667
        %v5610 = vpop.f32.mrb[0].mxu0
        %v5611 = vadd.f32 0.0, %v5610
        %v5612 = vpop.f32.mrb[0].mxu0
        %v5613 = vadd.f32 0.0, %v5612
        %5614 = vmatprep.mubr.f32.mxu0 %v4670
        %5615 = vmatmul.mubr.f32.gmra.mrb[0].mxu0 %v4669
        %v5616 = vpop.f32.mrb[0].mxu0
        %v5617 = vadd.f32 0.0, %v5616
        %v5618 = vpop.f32.mrb[0].mxu0
        %v5619 = vadd.f32 0.0, %v5618
        %5620 = vmatprep.mubr.f32.mxu0 %v4672
        %5621 = vmatmul.mubr.f32.gmra.mrb[0].mxu0 %v4671
        %v5622 = vpop.f32.mrb[0].mxu0
        %v5623 = vadd.f32 0.0, %v5622
        %v5624 = vpop.f32.mrb[0].mxu0
        %v5625 = vadd.f32 0.0, %v5624
        %5626 = vmatprep.mubr.f32.mxu0 %v4674
        %5627 = vmatmul.mubr.f32.gmra.mrb[0].mxu0 %v4673
        %v5628 = vpop.f32.mrb[0].mxu0
        %v5629 = vadd.f32 0.0, %v5628
        %v5630 = vpop.f32.mrb[0].mxu0
        %v5631 = vadd.f32 0.0, %v5630
        %5632 = vmatprep.mubr.f32.mxu0 %v4676
        %5633 = vmatmul.mubr.f32.gmra.mrb[0].mxu0 %v4675
        %v5634 = vpop.f32.mrb[0].mxu0
        %v5635 = vadd.f32 0.0, %v5634
        %v5636 = vpop.f32.mrb[0].mxu0
        %v5637 = vadd.f32 0.0, %v5636
        %5638 = vmatprep.mubr.f32.mxu0 %v4678
        %5639 = vmatmul.mubr.f32.gmra.mrb[0].mxu0 %v4677
        %v5640 = vpop.f32.mrb[0].mxu0
        %v5641 = vadd.f32 0.0, %v5640
        %v5642 = vpop.f32.mrb[0].mxu0
        %v5643 = vadd.f32 0.0, %v5642
        %5644 = vmatprep.mubr.f32.mxu0 %v4680
        %5645 = vmatmul.mubr.f32.gmra.mrb[0].mxu0 %v4679
        %v5646 = vpop.f32.mrb[0].mxu0
        %v5647 = vadd.f32 0.0, %v5646
        %v5648 = vpop.f32.mrb[0].mxu0
        %v5649 = vadd.f32 0.0, %v5648
        %5650 = vmatprep.mubr.f32.mxu0 %v4682
        %5651 = vmatmul.mubr.f32.gmra.mrb[0].mxu0 %v4681
        %v5652 = vpop.f32.mrb[0].mxu0
        %v5653 = vadd.f32 0.0, %v5652
        %v5654 = vpop.f32.mrb[0].mxu0
        %v5655 = vadd.f32 0.0, %v5654
        %5656 = vmatprep.mubr.f32.mxu0 %v4684
        %5657 = vmatmul.mubr.f32.gmra.mrb[0].mxu0 %v4683
        %v5658 = vpop.f32.mrb[0].mxu0
        %v5659 = vadd.f32 0.0, %v5658
        %v5660 = vpop.f32.mrb[0].mxu0
        %v5661 = vadd.f32 0.0, %v5660
        %5662 = vmatprep.mubr.f32.mxu0 %v4686
        %5663 = vmatmul.mubr.f32.gmra.mrb[0].mxu0 %v4685
        %v5664 = vpop.f32.mrb[0].mxu0
        %v5665 = vadd.f32 0.0, %v5664
        %v5666 = vpop.f32.mrb[0].mxu0
        %v5667 = vadd.f32 0.0, %v5666
        %5668 = vmatprep.mubr.f32.mxu0 %v4688
        %5669 = vmatmul.mubr.f32.gmra.mrb[0].mxu0 %v4687
        %v5670 = vpop.f32.mrb[0].mxu0
        %v5671 = vadd.f32 0.0, %v5670
        %v5672 = vpop.f32.mrb[0].mxu0
        %v5673 = vadd.f32 0.0, %v5672
        %5674 = vmatprep.mubr.f32.mxu0 %v4690
        %5675 = vmatmul.mubr.f32.gmra.mrb[0].mxu0 %v4689
        %v5676 = vpop.f32.mrb[0].mxu0
        %v5677 = vadd.f32 0.0, %v5676
        %v5678 = vpop.f32.mrb[0].mxu0
        %v5679 = vadd.f32 0.0, %v5678
        %5680 = vmatprep.mubr.f32.mxu0 %v4692
        %5681 = vmatmul.mubr.f32.gmra.mrb[0].mxu0 %v4691
        %v5682 = vpop.f32.mrb[0].mxu0
        %v5683 = vadd.f32 0.0, %v5682
        %v5684 = vpop.f32.mrb[0].mxu0
        %v5685 = vadd.f32 0.0, %v5684
        %5686 = vmatprep.mubr.f32.mxu0 %v4694
        %5687 = vmatmul.mubr.f32.gmra.mrb[0].mxu0 %v4693
        %v5688 = vpop.f32.mrb[0].mxu0
        %v5689 = vadd.f32 0.0, %v5688
        %v5690 = vpop.f32.mrb[0].mxu0
        %v5691 = vadd.f32 0.0, %v5690
        %5692 = vmatprep.mubr.f32.mxu0 %v4696
        %5693 = vmatmul.mubr.f32.gmra.mrb[0].mxu0 %v4695
        %v5694 = vpop.f32.mrb[0].mxu0
        %v5695 = vadd.f32 0.0, %v5694
        %v5696 = vpop.f32.mrb[0].mxu0
        %v5697 = vadd.f32 0.0, %v5696
        %5698 = vmatprep.mubr.f32.mxu0 %v4698
        %5699 = vmatmul.mubr.f32.gmra.mrb[0].mxu0 %v4697
        %v5700 = vpop.f32.mrb[0].mxu0
        %v5701 = vadd.f32 0.0, %v5700
        %v5702 = vpop.f32.mrb[0].mxu0
        %v5703 = vadd.f32 0.0, %v5702
        %5704 = vmatprep.mubr.f32.mxu0 %v4700
        %5705 = vmatmul.mubr.f32.gmra.mrb[0].mxu0 %v4699
        %v5706 = vpop.f32.mrb[0].mxu0
        %v5707 = vadd.f32 0.0, %v5706
        %v5708 = vpop.f32.mrb[0].mxu0
        %v5709 = vadd.f32 0.0, %v5708
        %5710 = vmatprep.mubr.f32.mxu0 %v4702
        %5711 = vmatmul.mubr.f32.gmra.mrb[0].mxu0 %v4701
        %v5712 = vpop.f32.mrb[0].mxu0
        %v5713 = vadd.f32 0.0, %v5712
        %v5714 = vpop.f32.mrb[0].mxu0
        %v5715 = vadd.f32 0.0, %v5714
        %5716 = vmatprep.mubr.f32.mxu0 %v4704
        %5717 = vmatmul.mubr.f32.gmra.mrb[0].mxu0 %v4703
        %v5718 = vpop.f32.mrb[0].mxu0
        %v5719 = vadd.f32 0.0, %v5718
        %v5720 = vpop.f32.mrb[0].mxu0
        %v5721 = vadd.f32 0.0, %v5720
        %5722 = vmatprep.mubr.f32.mxu0 %v4706
        %5723 = vmatmul.mubr.f32.gmra.mrb[0].mxu0 %v4705
        %v5724 = vpop.f32.mrb[0].mxu0
        %v5725 = vadd.f32 0.0, %v5724
        %v5726 = vpop.f32.mrb[0].mxu0
        %v5727 = vadd.f32 0.0, %v5726
        %5728 = vmatprep.mubr.f32.mxu0 %v4708
        %5729 = vmatmul.mubr.f32.gmra.mrb[0].mxu0 %v4707
        %v5730 = vpop.f32.mrb[0].mxu0
        %v5731 = vadd.f32 0.0, %v5730
        %v5732 = vpop.f32.mrb[0].mxu0
        %v5733 = vadd.f32 0.0, %v5732
        %5734 = vmatprep.mubr.f32.mxu0 %v4710
        %5735 = vmatmul.mubr.f32.gmra.mrb[0].mxu0 %v4709
        %v5736 = vpop.f32.mrb[0].mxu0
        %v5737 = vadd.f32 0.0, %v5736
        %v5738 = vpop.f32.mrb[0].mxu0
        %v5739 = vadd.f32 0.0, %v5738
        %5740 = vmatprep.mubr.f32.mxu0 %v5424
        %5741 = vmatmul.mubr.f32.gmra.mrb[0].mxu0 %v5423
        %v5742 = vpop.f32.mrb[0].mxu0
        %v5743 = vadd.f32 0.0, %v5742
        %v5744 = vpop.f32.mrb[0].mxu0
        %v5745 = vadd.f32 0.0, %v5744
        %5746 = vdwg.mxu0
        %v5747 = vadd.f32 %v5359, %v5557
        %v5748 = vadd.f32 %v5360, %v5559
        %v5749 = vadd.f32 %v5361, %v5563
        %v5750 = vadd.f32 %v5362, %v5565
        %v5751 = vadd.f32 %v5363, %v5569
        %v5752 = vadd.f32 %v5364, %v5571
        %v5753 = vadd.f32 %v5365, %v5575
        %v5754 = vadd.f32 %v5366, %v5577
        %v5755 = vadd.f32 %v5367, %v5581
        %v5756 = vadd.f32 %v5368, %v5583
        %v5757 = vadd.f32 %v5369, %v5587
        %v5758 = vadd.f32 %v5370, %v5589
        %v5759 = vadd.f32 %v5371, %v5593
        %v5760 = vadd.f32 %v5372, %v5595
        %v5761 = vadd.f32 %v5373, %v5599
        %v5762 = vadd.f32 %v5374, %v5601
        %v5763 = vadd.f32 %v5375, %v5605
        %v5764 = vadd.f32 %v5376, %v5607
        %v5765 = vadd.f32 %v5377, %v5611
        %v5766 = vadd.f32 %v5378, %v5613
        %v5767 = vadd.f32 %v5379, %v5617
        %v5768 = vadd.f32 %v5380, %v5619
        %v5769 = vadd.f32 %v5381, %v5623
        %v5770 = vadd.f32 %v5382, %v5625
        %v5771 = vadd.f32 %v5383, %v5629
        %v5772 = vadd.f32 %v5384, %v5631
        %v5773 = vadd.f32 %v5385, %v5635
        %v5774 = vadd.f32 %v5386, %v5637
        %v5775 = vadd.f32 %v5387, %v5641
        %v5776 = vadd.f32 %v5388, %v5643
        %v5777 = vadd.f32 %v5389, %v5647
        %v5778 = vadd.f32 %v5390, %v5649
        %v5779 = vadd.f32 %v5391, %v5653
        %v5780 = vadd.f32 %v5392, %v5655
        %v5781 = vadd.f32 %v5393, %v5659
        %v5782 = vadd.f32 %v5394, %v5661
        %v5783 = vadd.f32 %v5395, %v5665
        %v5784 = vadd.f32 %v5396, %v5667
        %v5785 = vadd.f32 %v5397, %v5671
        %v5786 = vadd.f32 %v5398, %v5673
        %v5787 = vadd.f32 %v5399, %v5677
        %v5788 = vadd.f32 %v5400, %v5679
        %v5789 = vadd.f32 %v5401, %v5683
        %v5790 = vadd.f32 %v5402, %v5685
        %v5791 = vadd.f32 %v5403, %v5689
        %v5792 = vadd.f32 %v5404, %v5691
        %v5793 = vadd.f32 %v5405, %v5695
        %v5794 = vadd.f32 %v5406, %v5697
        %v5795 = vadd.f32 %v5407, %v5701
        %v5796 = vadd.f32 %v5408, %v5703
        %v5797 = vadd.f32 %v5409, %v5707
        %v5798 = vadd.f32 %v5410, %v5709
        %v5799 = vadd.f32 %v5411, %v5713
        %v5800 = vadd.f32 %v5412, %v5715
        %v5801 = vadd.f32 %v5413, %v5719
        %v5802 = vadd.f32 %v5414, %v5721
        %v5803 = vadd.f32 %v5415, %v5725
        %v5804 = vadd.f32 %v5416, %v5727
        %v5805 = vadd.f32 %v5417, %v5731
        %v5806 = vadd.f32 %v5418, %v5733
        %v5807 = vadd.f32 %v5419, %v5737
        %v5808 = vadd.f32 %v5420, %v5739
        %v5809 = vadd.f32 %v5421, %v5743
        %v5810 = vadd.f32 %v5422, %v5745
        %v5811 = vld [vmem:[%s241 + $0x60] sm:$0xfe]
        %v5812 = vld [vmem:[%s241 + $0x68] sm:$0xfe]
        %v5813 = vld [vmem:[%s241 + $0x70] sm:$0xff]
        %v5814 = vld [vmem:[%s241 + $0x78] sm:$0xff]
        %v5815 = vld [vmem:[%s241 + $0x80] sm:$0xff]
        %v5816 = vld [vmem:[%s241 + $0x88] sm:$0xff]
        %v5817 = vld [vmem:[%s241 + $0x90] sm:$0xff]
        %v5818 = vld [vmem:[%s241 + $0x98] sm:$0xff]
        %v5819 = vld [vmem:[%s241 + $0xa0] sm:$0xff]
        %v5820 = vld [vmem:[%s241 + $0xa8] sm:$0xff]
        %v5821 = vld [vmem:[%s241 + $0xb0] sm:$0xff]
        %v5822 = vld [vmem:[%s241 + $0xb8] sm:$0xff]
        %v5823 = vld [vmem:[%s241 + $0xc0] sm:$0xff]
        %v5824 = vld [vmem:[%s241 + $0xc8] sm:$0xff]
        %v5825 = vld [vmem:[%s241 + $0xd0] sm:$0xff]
        %v5826 = vld [vmem:[%s241 + $0xd8] sm:$0xff]
        %v5827 = vld [vmem:[%s241 + $0xe0] sm:$0xff]
        %v5828 = vld [vmem:[%s241 + $0xe8] sm:$0xff]
        %v5829 = vld [vmem:[%s241 + $0xf0] sm:$0xff]
        %v5830 = vld [vmem:[%s241 + $0xf8] sm:$0xff]
        %v5831 = vld [vmem:[%s241 + $0x100] sm:$0xff]
        %v5832 = vld [vmem:[%s241 + $0x108] sm:$0xff]
        %v5833 = vld [vmem:[%s241 + $0x110] sm:$0xff]
        %v5834 = vld [vmem:[%s241 + $0x118] sm:$0xff]
        %v5835 = vld [vmem:[%s241 + $0x120] sm:$0xff]
        %v5836 = vld [vmem:[%s241 + $0x128] sm:$0xff]
        %v5837 = vld [vmem:[%s241 + $0x130] sm:$0xff]
        %v5838 = vld [vmem:[%s241 + $0x138] sm:$0xff]
        %v5839 = vld [vmem:[%s241 + $0x140] sm:$0xff]
        %v5840 = vld [vmem:[%s241 + $0x148] sm:$0xff]
        %v5841 = vld [vmem:[%s241 + $0x150] sm:$0xff]
        %v5842 = vld [vmem:[%s241 + $0x158] sm:$0xff]
        %v5843 = vld [vmem:[%s241 + $0x160] sm:$0xff]
        %v5844 = vld [vmem:[%s241 + $0x168] sm:$0xff]
        %v5845 = vld [vmem:[%s241 + $0x170] sm:$0xff]
        %v5846 = vld [vmem:[%s241 + $0x178] sm:$0xff]
        %v5847 = vld [vmem:[%s241 + $0x180] sm:$0xff]
        %v5848 = vld [vmem:[%s241 + $0x188] sm:$0xff]
        %v5849 = vld [vmem:[%s241 + $0x190] sm:$0xff]
        %v5850 = vld [vmem:[%s241 + $0x198] sm:$0xff]
        %v5851 = vld [vmem:[%s241 + $0x1a0] sm:$0xff]
        %v5852 = vld [vmem:[%s241 + $0x1a8] sm:$0xff]
        %v5853 = vld [vmem:[%s241 + $0x1b0] sm:$0xff]
        %v5854 = vld [vmem:[%s241 + $0x1b8] sm:$0xff]
        %v5855 = vld [vmem:[%s241 + $0x1c0] sm:$0xff]
        %v5856 = vld [vmem:[%s241 + $0x1c8] sm:$0xff]
        %v5857 = vld [vmem:[%s241 + $0x1d0] sm:$0xff]
        %v5858 = vld [vmem:[%s241 + $0x1d8] sm:$0xff]
        %v5859 = vld [vmem:[%s241 + $0x1e0] sm:$0xff]
        %v5860 = vld [vmem:[%s241 + $0x1e8] sm:$0xff]
        %v5861 = vld [vmem:[%s241 + $0x1f0] sm:$0xff]
        %v5862 = vld [vmem:[%s241 + $0x1f8] sm:$0xff]
        %v5863 = vld [vmem:[%s241 + $0x200] sm:$0xff]
        %v5864 = vld [vmem:[%s241 + $0x208] sm:$0xff]
        %v5865 = vld [vmem:[%s241 + $0x210] sm:$0xff]
        %v5866 = vld [vmem:[%s241 + $0x218] sm:$0xff]
        %v5867 = vld [vmem:[%s241 + $0x220] sm:$0xff]
        %v5868 = vld [vmem:[%s241 + $0x228] sm:$0xff]
        %v5869 = vld [vmem:[%s241 + $0x230] sm:$0xff]
        %v5870 = vld [vmem:[%s241 + $0x238] sm:$0xff]
        %v5871 = vld [vmem:[%s241 + $0x240] sm:$0xff]
        %v5872 = vld [vmem:[%s241 + $0x248] sm:$0xff]
        %v5873 = vld [vmem:[%s241 + $0x250] sm:$0xff]
        %v5874 = vld [vmem:[%s241 + $0x258] sm:$0xff]
        %v5875 = vld [vmem:[%s241 + $0x260] sm:$0x1]
        %v5876 = vld [vmem:[%s241 + $0x268] sm:$0x1]
        %v5943 = vrot.slane %v5811, 1
        %v5944 = vrot.slane %v5813, 1
        %v5945 = vsel %vm2062, %v5943, %v5944
        %v5946 = vrot.slane %v5812, 1
        %v5947 = vrot.slane %v5814, 1
        %v5948 = vsel %vm2062, %v5946, %v5947
        %v5949 = vrot.slane %v5815, 1
        %v5950 = vsel %vm2062, %v5944, %v5949
        %v5951 = vrot.slane %v5816, 1
        %v5952 = vsel %vm2062, %v5947, %v5951
        %v5953 = vrot.slane %v5817, 1
        %v5954 = vsel %vm2062, %v5949, %v5953
        %v5955 = vrot.slane %v5818, 1
        %v5956 = vsel %vm2062, %v5951, %v5955
        %v5957 = vrot.slane %v5819, 1
        %v5958 = vsel %vm2062, %v5953, %v5957
        %v5959 = vrot.slane %v5820, 1
        %v5960 = vsel %vm2062, %v5955, %v5959
        %v5961 = vrot.slane %v5821, 1
        %v5962 = vsel %vm2062, %v5957, %v5961
        %v5963 = vrot.slane %v5822, 1
        %v5964 = vsel %vm2062, %v5959, %v5963
        %v5965 = vrot.slane %v5823, 1
        %v5966 = vsel %vm2062, %v5961, %v5965
        %v5967 = vrot.slane %v5824, 1
        %v5968 = vsel %vm2062, %v5963, %v5967
        %v5969 = vrot.slane %v5825, 1
        %v5970 = vsel %vm2062, %v5965, %v5969
        %v5971 = vrot.slane %v5826, 1
        %v5972 = vsel %vm2062, %v5967, %v5971
        %v5973 = vrot.slane %v5827, 1
        %v5974 = vsel %vm2062, %v5969, %v5973
        %v5975 = vrot.slane %v5828, 1
        %v5976 = vsel %vm2062, %v5971, %v5975
        %v5977 = vrot.slane %v5829, 1
        %v5978 = vsel %vm2062, %v5973, %v5977
        %v5979 = vrot.slane %v5830, 1
        %v5980 = vsel %vm2062, %v5975, %v5979
        %v5981 = vrot.slane %v5831, 1
        %v5982 = vsel %vm2062, %v5977, %v5981
        %v5983 = vrot.slane %v5832, 1
        %v5984 = vsel %vm2062, %v5979, %v5983
        %v5985 = vrot.slane %v5833, 1
        %v5986 = vsel %vm2062, %v5981, %v5985
        %v5987 = vrot.slane %v5834, 1
        %v5988 = vsel %vm2062, %v5983, %v5987
        %v5989 = vrot.slane %v5835, 1
        %v5990 = vsel %vm2062, %v5985, %v5989
        %v5991 = vrot.slane %v5836, 1
        %v5992 = vsel %vm2062, %v5987, %v5991
        %v5993 = vrot.slane %v5837, 1
        %v5994 = vsel %vm2062, %v5989, %v5993
        %v5995 = vrot.slane %v5838, 1
        %v5996 = vsel %vm2062, %v5991, %v5995
        %v5997 = vrot.slane %v5839, 1
        %v5998 = vsel %vm2062, %v5993, %v5997
        %v5999 = vrot.slane %v5840, 1
        %v6000 = vsel %vm2062, %v5995, %v5999
        %v6001 = vrot.slane %v5841, 1
        %v6002 = vsel %vm2062, %v5997, %v6001
        %v6003 = vrot.slane %v5842, 1
        %v6004 = vsel %vm2062, %v5999, %v6003
        %v6005 = vrot.slane %v5843, 1
        %v6006 = vsel %vm2062, %v6001, %v6005
        %v6007 = vrot.slane %v5844, 1
        %v6008 = vsel %vm2062, %v6003, %v6007
        %v6009 = vrot.slane %v5845, 1
        %v6010 = vsel %vm2062, %v6005, %v6009
        %v6011 = vrot.slane %v5846, 1
        %v6012 = vsel %vm2062, %v6007, %v6011
        %v6013 = vrot.slane %v5847, 1
        %v6014 = vsel %vm2062, %v6009, %v6013
        %v6015 = vrot.slane %v5848, 1
        %v6016 = vsel %vm2062, %v6011, %v6015
        %v6017 = vrot.slane %v5849, 1
        %v6018 = vsel %vm2062, %v6013, %v6017
        %v6019 = vrot.slane %v5850, 1
        %v6020 = vsel %vm2062, %v6015, %v6019
        %v6021 = vrot.slane %v5851, 1
        %v6022 = vsel %vm2062, %v6017, %v6021
        %v6023 = vrot.slane %v5852, 1
        %v6024 = vsel %vm2062, %v6019, %v6023
        %v6025 = vrot.slane %v5853, 1
        %v6026 = vsel %vm2062, %v6021, %v6025
        %v6027 = vrot.slane %v5854, 1
        %v6028 = vsel %vm2062, %v6023, %v6027
        %v6029 = vrot.slane %v5855, 1
        %v6030 = vsel %vm2062, %v6025, %v6029
        %v6031 = vrot.slane %v5856, 1
        %v6032 = vsel %vm2062, %v6027, %v6031
        %v6033 = vrot.slane %v5857, 1
        %v6034 = vsel %vm2062, %v6029, %v6033
        %v6035 = vrot.slane %v5858, 1
        %v6036 = vsel %vm2062, %v6031, %v6035
        %v6037 = vrot.slane %v5859, 1
        %v6038 = vsel %vm2062, %v6033, %v6037
        %v6039 = vrot.slane %v5860, 1
        %v6040 = vsel %vm2062, %v6035, %v6039
        %v6041 = vrot.slane %v5861, 1
        %v6042 = vsel %vm2062, %v6037, %v6041
        %v6043 = vrot.slane %v5862, 1
        %v6044 = vsel %vm2062, %v6039, %v6043
        %v6045 = vrot.slane %v5863, 1
        %v6046 = vsel %vm2062, %v6041, %v6045
        %v6047 = vrot.slane %v5864, 1
        %v6048 = vsel %vm2062, %v6043, %v6047
        %v6049 = vrot.slane %v5865, 1
        %v6050 = vsel %vm2062, %v6045, %v6049
        %v6051 = vrot.slane %v5866, 1
        %v6052 = vsel %vm2062, %v6047, %v6051
        %v6053 = vrot.slane %v5867, 1
        %v6054 = vsel %vm2062, %v6049, %v6053
        %v6055 = vrot.slane %v5868, 1
        %v6056 = vsel %vm2062, %v6051, %v6055
        %v6057 = vrot.slane %v5869, 1
        %v6058 = vsel %vm2062, %v6053, %v6057
        %v6059 = vrot.slane %v5870, 1
        %v6060 = vsel %vm2062, %v6055, %v6059
        %v6061 = vrot.slane %v5871, 1
        %v6062 = vsel %vm2062, %v6057, %v6061
        %v6063 = vrot.slane %v5872, 1
        %v6064 = vsel %vm2062, %v6059, %v6063
        %v6065 = vrot.slane %v5873, 1
        %v6066 = vsel %vm2062, %v6061, %v6065
        %v6067 = vrot.slane %v5874, 1
        %v6068 = vsel %vm2062, %v6063, %v6067
        %v6069 = vrot.slane %v5875, 1
        %v6070 = vsel %vm2062, %v6065, %v6069
        %v6071 = vrot.slane %v5876, 1
        %v6072 = vsel %vm2062, %v6067, %v6071
        %v6137 = vsel %vm1964, 0.0, %v5945
        %v6138 = vsel %vm1964, 0.0, %v5948
        %v6139 = vsel %vm1965, 0.0, %v5950
        %v6140 = vsel %vm1965, 0.0, %v5952
        %v6141 = vsel %vm1966, 0.0, %v5954
        %v6142 = vsel %vm1966, 0.0, %v5956
        %v6143 = vsel %vm1967, 0.0, %v5958
        %v6144 = vsel %vm1967, 0.0, %v5960
        %v6145 = vsel %vm1968, 0.0, %v5962
        %v6146 = vsel %vm1968, 0.0, %v5964
        %v6147 = vsel %vm1969, 0.0, %v5966
        %v6148 = vsel %vm1969, 0.0, %v5968
        %v6149 = vsel %vm1970, 0.0, %v5970
        %v6150 = vsel %vm1970, 0.0, %v5972
        %v6151 = vsel %vm1971, 0.0, %v5974
        %v6152 = vsel %vm1971, 0.0, %v5976
        %v6153 = vsel %vm1972, 0.0, %v5978
        %v6154 = vsel %vm1972, 0.0, %v5980
        %v6155 = vsel %vm1973, 0.0, %v5982
        %v6156 = vsel %vm1973, 0.0, %v5984
        %v6157 = vsel %vm1974, 0.0, %v5986
        %v6158 = vsel %vm1974, 0.0, %v5988
        %v6159 = vsel %vm1975, 0.0, %v5990
        %v6160 = vsel %vm1975, 0.0, %v5992
        %v6161 = vsel %vm1976, 0.0, %v5994
        %v6162 = vsel %vm1976, 0.0, %v5996
        %v6163 = vsel %vm1977, 0.0, %v5998
        %v6164 = vsel %vm1977, 0.0, %v6000
        %v6165 = vsel %vm1978, 0.0, %v6002
        %v6166 = vsel %vm1978, 0.0, %v6004
        %v6167 = vsel %vm1979, 0.0, %v6006
        %v6168 = vsel %vm1979, 0.0, %v6008
        %v6169 = vsel %vm1980, 0.0, %v6010
        %v6170 = vsel %vm1980, 0.0, %v6012
        %v6171 = vsel %vm1981, 0.0, %v6014
        %v6172 = vsel %vm1981, 0.0, %v6016
        %v6173 = vsel %vm1982, 0.0, %v6018
        %v6174 = vsel %vm1982, 0.0, %v6020
        %v6175 = vsel %vm1983, 0.0, %v6022
        %v6176 = vsel %vm1983, 0.0, %v6024
        %v6177 = vsel %vm1984, 0.0, %v6026
        %v6178 = vsel %vm1984, 0.0, %v6028
        %v6179 = vsel %vm1985, 0.0, %v6030
        %v6180 = vsel %vm1985, 0.0, %v6032
        %v6181 = vsel %vm1986, 0.0, %v6034
        %v6182 = vsel %vm1986, 0.0, %v6036
        %v6183 = vsel %vm1987, 0.0, %v6038
        %v6184 = vsel %vm1987, 0.0, %v6040
        %v6185 = vsel %vm1988, 0.0, %v6042
        %v6186 = vsel %vm1988, 0.0, %v6044
        %v6187 = vsel %vm1989, 0.0, %v6046
        %v6188 = vsel %vm1989, 0.0, %v6048
        %v6189 = vsel %vm1990, 0.0, %v6050
        %v6190 = vsel %vm1990, 0.0, %v6052
        %v6191 = vsel %vm1991, 0.0, %v6054
        %v6192 = vsel %vm1991, 0.0, %v6056
        %v6193 = vsel %vm1992, 0.0, %v6058
        %v6194 = vsel %vm1992, 0.0, %v6060
        %v6195 = vsel %vm1993, 0.0, %v6062
        %v6196 = vsel %vm1993, 0.0, %v6064
        %v6197 = vsel %vm1994, 0.0, %v6066
        %v6198 = vsel %vm1994, 0.0, %v6068
        %v6199 = vsel %vm1995, 0.0, %v6070
        %v6200 = vsel %vm1995, 0.0, %v6072
        %s6201 = scalar_lea.vmem [#allocation4], 4096
        %v6202 = vld [vmem:[%s6201] sm:$0xff]
        %v6203 = vld [vmem:[%s6201 + $0x8] sm:$0xff]
        %v6204 = vld [vmem:[%s6201 + $0x10] sm:$0xff]
        %v6205 = vld [vmem:[%s6201 + $0x18] sm:$0xff]
        %v6206 = vld [vmem:[%s6201 + $0x20] sm:$0xff]
        %v6207 = vld [vmem:[%s6201 + $0x28] sm:$0xff]
        %v6208 = vld [vmem:[%s6201 + $0x30] sm:$0xff]
        %v6209 = vld [vmem:[%s6201 + $0x38] sm:$0xff]
        %v6210 = vld [vmem:[%s6201 + $0x40] sm:$0xff]
        %v6211 = vld [vmem:[%s6201 + $0x48] sm:$0xff]
        %v6212 = vld [vmem:[%s6201 + $0x50] sm:$0xff]
        %v6213 = vld [vmem:[%s6201 + $0x58] sm:$0xff]
        %v6214 = vld [vmem:[%s6201 + $0x60] sm:$0xff]
        %v6215 = vld [vmem:[%s6201 + $0x68] sm:$0xff]
        %v6216 = vld [vmem:[%s6201 + $0x70] sm:$0xff]
        %v6217 = vld [vmem:[%s6201 + $0x78] sm:$0xff]
        %v6218 = vld [vmem:[%s6201 + $0x80] sm:$0xff]
        %v6219 = vld [vmem:[%s6201 + $0x88] sm:$0xff]
        %v6220 = vld [vmem:[%s6201 + $0x90] sm:$0xff]
        %v6221 = vld [vmem:[%s6201 + $0x98] sm:$0xff]
        %v6222 = vld [vmem:[%s6201 + $0xa0] sm:$0xff]
        %v6223 = vld [vmem:[%s6201 + $0xa8] sm:$0xff]
        %v6224 = vld [vmem:[%s6201 + $0xb0] sm:$0xff]
        %v6225 = vld [vmem:[%s6201 + $0xb8] sm:$0xff]
        %v6226 = vld [vmem:[%s6201 + $0xc0] sm:$0xff]
        %v6227 = vld [vmem:[%s6201 + $0xc8] sm:$0xff]
        %v6228 = vld [vmem:[%s6201 + $0xd0] sm:$0xff]
        %v6229 = vld [vmem:[%s6201 + $0xd8] sm:$0xff]
        %v6230 = vld [vmem:[%s6201 + $0xe0] sm:$0xff]
        %v6231 = vld [vmem:[%s6201 + $0xe8] sm:$0xff]
        %v6232 = vld [vmem:[%s6201 + $0xf0] sm:$0xff]
        %v6233 = vld [vmem:[%s6201 + $0xf8] sm:$0xff]
        %v6234 = vld [vmem:[%s6201 + $0x100] sm:$0xff]
        %v6235 = vld [vmem:[%s6201 + $0x108] sm:$0xff]
        %v6236 = vld [vmem:[%s6201 + $0x110] sm:$0xff]
        %v6237 = vld [vmem:[%s6201 + $0x118] sm:$0xff]
        %v6238 = vld [vmem:[%s6201 + $0x120] sm:$0xff]
        %v6239 = vld [vmem:[%s6201 + $0x128] sm:$0xff]
        %v6240 = vld [vmem:[%s6201 + $0x130] sm:$0xff]
        %v6241 = vld [vmem:[%s6201 + $0x138] sm:$0xff]
        %v6242 = vld [vmem:[%s6201 + $0x140] sm:$0xff]
        %v6243 = vld [vmem:[%s6201 + $0x148] sm:$0xff]
        %v6244 = vld [vmem:[%s6201 + $0x150] sm:$0xff]
        %v6245 = vld [vmem:[%s6201 + $0x158] sm:$0xff]
        %v6246 = vld [vmem:[%s6201 + $0x160] sm:$0xff]
        %v6247 = vld [vmem:[%s6201 + $0x168] sm:$0xff]
        %v6248 = vld [vmem:[%s6201 + $0x170] sm:$0xff]
        %v6249 = vld [vmem:[%s6201 + $0x178] sm:$0xff]
        %v6250 = vld [vmem:[%s6201 + $0x180] sm:$0xff]
        %v6251 = vld [vmem:[%s6201 + $0x188] sm:$0xff]
        %v6252 = vld [vmem:[%s6201 + $0x190] sm:$0xff]
        %v6253 = vld [vmem:[%s6201 + $0x198] sm:$0xff]
        %v6254 = vld [vmem:[%s6201 + $0x1a0] sm:$0xff]
        %v6255 = vld [vmem:[%s6201 + $0x1a8] sm:$0xff]
        %v6256 = vld [vmem:[%s6201 + $0x1b0] sm:$0xff]
        %v6257 = vld [vmem:[%s6201 + $0x1b8] sm:$0xff]
        %v6258 = vld [vmem:[%s6201 + $0x1c0] sm:$0xff]
        %v6259 = vld [vmem:[%s6201 + $0x1c8] sm:$0xff]
        %v6260 = vld [vmem:[%s6201 + $0x1d0] sm:$0xff]
        %v6261 = vld [vmem:[%s6201 + $0x1d8] sm:$0xff]
        %v6262 = vld [vmem:[%s6201 + $0x1e0] sm:$0xff]
        %v6263 = vld [vmem:[%s6201 + $0x1e8] sm:$0xff]
        %v6264 = vld [vmem:[%s6201 + $0x1f0] sm:$0xff]
        %v6265 = vld [vmem:[%s6201 + $0x1f8] sm:$0xff]
        %6266 = vmatprep.subr.mxu0 %v6203
        %6267 = vmatpush1.msra.mxu0 %v6202
        %6268 = vmatprep.subr.mxu0 %v6205
        %6269 = vmatpush1.msra.mxu0 %v6204
        %6270 = vmatprep.subr.mxu0 %v6207
        %6271 = vmatpush1.msra.mxu0 %v6206
        %6272 = vmatprep.subr.mxu0 %v6209
        %6273 = vmatpush1.msra.mxu0 %v6208
        %6274 = vmatprep.subr.mxu0 %v6211
        %6275 = vmatpush1.msra.mxu0 %v6210
        %6276 = vmatprep.subr.mxu0 %v6213
        %6277 = vmatpush1.msra.mxu0 %v6212
        %6278 = vmatprep.subr.mxu0 %v6215
        %6279 = vmatpush1.msra.mxu0 %v6214
        %6280 = vmatprep.subr.mxu0 %v6217
        %6281 = vmatpush1.msra.mxu0 %v6216
        %6282 = vmatprep.subr.mxu0 %v6219
        %6283 = vmatpush1.msra.mxu0 %v6218
        %6284 = vmatprep.subr.mxu0 %v6221
        %6285 = vmatpush1.msra.mxu0 %v6220
        %6286 = vmatprep.subr.mxu0 %v6223
        %6287 = vmatpush1.msra.mxu0 %v6222
        %6288 = vmatprep.subr.mxu0 %v6225
        %6289 = vmatpush1.msra.mxu0 %v6224
        %6290 = vmatprep.subr.mxu0 %v6227
        %6291 = vmatpush1.msra.mxu0 %v6226
        %6292 = vmatprep.subr.mxu0 %v6229
        %6293 = vmatpush1.msra.mxu0 %v6228
        %6294 = vmatprep.subr.mxu0 %v6231
        %6295 = vmatpush1.msra.mxu0 %v6230
        %6296 = vmatprep.subr.mxu0 %v6233
        %6297 = vmatpush1.msra.mxu0 %v6232
        %6298 = vmatprep.subr.mxu0 %v6235
        %6299 = vmatpush1.msra.mxu0 %v6234
        %6300 = vmatprep.subr.mxu0 %v6237
        %6301 = vmatpush1.msra.mxu0 %v6236
        %6302 = vmatprep.subr.mxu0 %v6239
        %6303 = vmatpush1.msra.mxu0 %v6238
        %6304 = vmatprep.subr.mxu0 %v6241
        %6305 = vmatpush1.msra.mxu0 %v6240
        %6306 = vmatprep.subr.mxu0 %v6243
        %6307 = vmatpush1.msra.mxu0 %v6242
        %6308 = vmatprep.subr.mxu0 %v6245
        %6309 = vmatpush1.msra.mxu0 %v6244
        %6310 = vmatprep.subr.mxu0 %v6247
        %6311 = vmatpush1.msra.mxu0 %v6246
        %6312 = vmatprep.subr.mxu0 %v6249
        %6313 = vmatpush1.msra.mxu0 %v6248
        %6314 = vmatprep.subr.mxu0 %v6251
        %6315 = vmatpush1.msra.mxu0 %v6250
        %6316 = vmatprep.subr.mxu0 %v6253
        %6317 = vmatpush1.msra.mxu0 %v6252
        %6318 = vmatprep.subr.mxu0 %v6255
        %6319 = vmatpush1.msra.mxu0 %v6254
        %6320 = vmatprep.subr.mxu0 %v6257
        %6321 = vmatpush1.msra.mxu0 %v6256
        %6322 = vmatprep.subr.mxu0 %v6259
        %6323 = vmatpush1.msra.mxu0 %v6258
        %6324 = vmatprep.subr.mxu0 %v6261
        %6325 = vmatpush1.msra.mxu0 %v6260
        %6326 = vmatprep.subr.mxu0 %v6263
        %6327 = vmatpush1.msra.mxu0 %v6262
        %6328 = vmatprep.subr.mxu0 %v6265
        %6329 = vmatpush1.msra.mxu0 %v6264
        %6330 = vmatprep.mubr.f32.mxu0 %v6138
        %6331 = vmatmul.mubr.f32.gmra.mrb[0].mxu0 %v6137
        %v6332 = vpop.f32.mrb[0].mxu0
        %v6333 = vadd.f32 0.0, %v6332
        %v6334 = vpop.f32.mrb[0].mxu0
        %v6335 = vadd.f32 0.0, %v6334
        %6336 = vmatprep.mubr.f32.mxu0 %v6140
        %6337 = vmatmul.mubr.f32.gmra.mrb[0].mxu0 %v6139
        %v6338 = vpop.f32.mrb[0].mxu0
        %v6339 = vadd.f32 0.0, %v6338
        %v6340 = vpop.f32.mrb[0].mxu0
        %v6341 = vadd.f32 0.0, %v6340
        %6342 = vmatprep.mubr.f32.mxu0 %v6142
        %6343 = vmatmul.mubr.f32.gmra.mrb[0].mxu0 %v6141
        %v6344 = vpop.f32.mrb[0].mxu0
        %v6345 = vadd.f32 0.0, %v6344
        %v6346 = vpop.f32.mrb[0].mxu0
        %v6347 = vadd.f32 0.0, %v6346
        %6348 = vmatprep.mubr.f32.mxu0 %v6144
        %6349 = vmatmul.mubr.f32.gmra.mrb[0].mxu0 %v6143
        %v6350 = vpop.f32.mrb[0].mxu0
        %v6351 = vadd.f32 0.0, %v6350
        %v6352 = vpop.f32.mrb[0].mxu0
        %v6353 = vadd.f32 0.0, %v6352
        %6354 = vmatprep.mubr.f32.mxu0 %v6146
        %6355 = vmatmul.mubr.f32.gmra.mrb[0].mxu0 %v6145
        %v6356 = vpop.f32.mrb[0].mxu0
        %v6357 = vadd.f32 0.0, %v6356
        %v6358 = vpop.f32.mrb[0].mxu0
        %v6359 = vadd.f32 0.0, %v6358
        %6360 = vmatprep.mubr.f32.mxu0 %v6148
        %6361 = vmatmul.mubr.f32.gmra.mrb[0].mxu0 %v6147
        %v6362 = vpop.f32.mrb[0].mxu0
        %v6363 = vadd.f32 0.0, %v6362
        %v6364 = vpop.f32.mrb[0].mxu0
        %v6365 = vadd.f32 0.0, %v6364
        %6366 = vmatprep.mubr.f32.mxu0 %v6150
        %6367 = vmatmul.mubr.f32.gmra.mrb[0].mxu0 %v6149
        %v6368 = vpop.f32.mrb[0].mxu0
        %v6369 = vadd.f32 0.0, %v6368
        %v6370 = vpop.f32.mrb[0].mxu0
        %v6371 = vadd.f32 0.0, %v6370
        %6372 = vmatprep.mubr.f32.mxu0 %v6152
        %6373 = vmatmul.mubr.f32.gmra.mrb[0].mxu0 %v6151
        %v6374 = vpop.f32.mrb[0].mxu0
        %v6375 = vadd.f32 0.0, %v6374
        %v6376 = vpop.f32.mrb[0].mxu0
        %v6377 = vadd.f32 0.0, %v6376
        %6378 = vmatprep.mubr.f32.mxu0 %v6154
        %6379 = vmatmul.mubr.f32.gmra.mrb[0].mxu0 %v6153
        %v6380 = vpop.f32.mrb[0].mxu0
        %v6381 = vadd.f32 0.0, %v6380
        %v6382 = vpop.f32.mrb[0].mxu0
        %v6383 = vadd.f32 0.0, %v6382
        %6384 = vmatprep.mubr.f32.mxu0 %v6156
        %6385 = vmatmul.mubr.f32.gmra.mrb[0].mxu0 %v6155
        %v6386 = vpop.f32.mrb[0].mxu0
        %v6387 = vadd.f32 0.0, %v6386
        %v6388 = vpop.f32.mrb[0].mxu0
        %v6389 = vadd.f32 0.0, %v6388
        %6390 = vmatprep.mubr.f32.mxu0 %v6158
        %6391 = vmatmul.mubr.f32.gmra.mrb[0].mxu0 %v6157
        %v6392 = vpop.f32.mrb[0].mxu0
        %v6393 = vadd.f32 0.0, %v6392
        %v6394 = vpop.f32.mrb[0].mxu0
        %v6395 = vadd.f32 0.0, %v6394
        %6396 = vmatprep.mubr.f32.mxu0 %v6160
        %6397 = vmatmul.mubr.f32.gmra.mrb[0].mxu0 %v6159
        %v6398 = vpop.f32.mrb[0].mxu0
        %v6399 = vadd.f32 0.0, %v6398
        %v6400 = vpop.f32.mrb[0].mxu0
        %v6401 = vadd.f32 0.0, %v6400
        %6402 = vmatprep.mubr.f32.mxu0 %v6162
        %6403 = vmatmul.mubr.f32.gmra.mrb[0].mxu0 %v6161
        %v6404 = vpop.f32.mrb[0].mxu0
        %v6405 = vadd.f32 0.0, %v6404
        %v6406 = vpop.f32.mrb[0].mxu0
        %v6407 = vadd.f32 0.0, %v6406
        %6408 = vmatprep.mubr.f32.mxu0 %v6164
        %6409 = vmatmul.mubr.f32.gmra.mrb[0].mxu0 %v6163
        %v6410 = vpop.f32.mrb[0].mxu0
        %v6411 = vadd.f32 0.0, %v6410
        %v6412 = vpop.f32.mrb[0].mxu0
        %v6413 = vadd.f32 0.0, %v6412
        %6414 = vmatprep.mubr.f32.mxu0 %v6166
        %6415 = vmatmul.mubr.f32.gmra.mrb[0].mxu0 %v6165
        %v6416 = vpop.f32.mrb[0].mxu0
        %v6417 = vadd.f32 0.0, %v6416
        %v6418 = vpop.f32.mrb[0].mxu0
        %v6419 = vadd.f32 0.0, %v6418
        %6420 = vmatprep.mubr.f32.mxu0 %v6168
        %6421 = vmatmul.mubr.f32.gmra.mrb[0].mxu0 %v6167
        %v6422 = vpop.f32.mrb[0].mxu0
        %v6423 = vadd.f32 0.0, %v6422
        %v6424 = vpop.f32.mrb[0].mxu0
        %v6425 = vadd.f32 0.0, %v6424
        %6426 = vmatprep.mubr.f32.mxu0 %v6170
        %6427 = vmatmul.mubr.f32.gmra.mrb[0].mxu0 %v6169
        %v6428 = vpop.f32.mrb[0].mxu0
        %v6429 = vadd.f32 0.0, %v6428
        %v6430 = vpop.f32.mrb[0].mxu0
        %v6431 = vadd.f32 0.0, %v6430
        %6432 = vmatprep.mubr.f32.mxu0 %v6172
        %6433 = vmatmul.mubr.f32.gmra.mrb[0].mxu0 %v6171
        %v6434 = vpop.f32.mrb[0].mxu0
        %v6435 = vadd.f32 0.0, %v6434
        %v6436 = vpop.f32.mrb[0].mxu0
        %v6437 = vadd.f32 0.0, %v6436
        %6438 = vmatprep.mubr.f32.mxu0 %v6174
        %6439 = vmatmul.mubr.f32.gmra.mrb[0].mxu0 %v6173
        %v6440 = vpop.f32.mrb[0].mxu0
        %v6441 = vadd.f32 0.0, %v6440
        %v6442 = vpop.f32.mrb[0].mxu0
        %v6443 = vadd.f32 0.0, %v6442
        %6444 = vmatprep.mubr.f32.mxu0 %v6176
        %6445 = vmatmul.mubr.f32.gmra.mrb[0].mxu0 %v6175
        %v6446 = vpop.f32.mrb[0].mxu0
        %v6447 = vadd.f32 0.0, %v6446
        %v6448 = vpop.f32.mrb[0].mxu0
        %v6449 = vadd.f32 0.0, %v6448
        %6450 = vmatprep.mubr.f32.mxu0 %v6178
        %6451 = vmatmul.mubr.f32.gmra.mrb[0].mxu0 %v6177
        %v6452 = vpop.f32.mrb[0].mxu0
        %v6453 = vadd.f32 0.0, %v6452
        %v6454 = vpop.f32.mrb[0].mxu0
        %v6455 = vadd.f32 0.0, %v6454
        %6456 = vmatprep.mubr.f32.mxu0 %v6180
        %6457 = vmatmul.mubr.f32.gmra.mrb[0].mxu0 %v6179
        %v6458 = vpop.f32.mrb[0].mxu0
        %v6459 = vadd.f32 0.0, %v6458
        %v6460 = vpop.f32.mrb[0].mxu0
        %v6461 = vadd.f32 0.0, %v6460
        %6462 = vmatprep.mubr.f32.mxu0 %v6182
        %6463 = vmatmul.mubr.f32.gmra.mrb[0].mxu0 %v6181
        %v6464 = vpop.f32.mrb[0].mxu0
        %v6465 = vadd.f32 0.0, %v6464
        %v6466 = vpop.f32.mrb[0].mxu0
        %v6467 = vadd.f32 0.0, %v6466
        %6468 = vmatprep.mubr.f32.mxu0 %v6184
        %6469 = vmatmul.mubr.f32.gmra.mrb[0].mxu0 %v6183
        %v6470 = vpop.f32.mrb[0].mxu0
        %v6471 = vadd.f32 0.0, %v6470
        %v6472 = vpop.f32.mrb[0].mxu0
        %v6473 = vadd.f32 0.0, %v6472
        %6474 = vmatprep.mubr.f32.mxu0 %v6186
        %6475 = vmatmul.mubr.f32.gmra.mrb[0].mxu0 %v6185
        %v6476 = vpop.f32.mrb[0].mxu0
        %v6477 = vadd.f32 0.0, %v6476
        %v6478 = vpop.f32.mrb[0].mxu0
        %v6479 = vadd.f32 0.0, %v6478
        %6480 = vmatprep.mubr.f32.mxu0 %v6188
        %6481 = vmatmul.mubr.f32.gmra.mrb[0].mxu0 %v6187
        %v6482 = vpop.f32.mrb[0].mxu0
        %v6483 = vadd.f32 0.0, %v6482
        %v6484 = vpop.f32.mrb[0].mxu0
        %v6485 = vadd.f32 0.0, %v6484
        %6486 = vmatprep.mubr.f32.mxu0 %v6190
        %6487 = vmatmul.mubr.f32.gmra.mrb[0].mxu0 %v6189
        %v6488 = vpop.f32.mrb[0].mxu0
        %v6489 = vadd.f32 0.0, %v6488
        %v6490 = vpop.f32.mrb[0].mxu0
        %v6491 = vadd.f32 0.0, %v6490
        %6492 = vmatprep.mubr.f32.mxu0 %v6192
        %6493 = vmatmul.mubr.f32.gmra.mrb[0].mxu0 %v6191
        %v6494 = vpop.f32.mrb[0].mxu0
        %v6495 = vadd.f32 0.0, %v6494
        %v6496 = vpop.f32.mrb[0].mxu0
        %v6497 = vadd.f32 0.0, %v6496
        %6498 = vmatprep.mubr.f32.mxu0 %v6194
        %6499 = vmatmul.mubr.f32.gmra.mrb[0].mxu0 %v6193
        %v6500 = vpop.f32.mrb[0].mxu0
        %v6501 = vadd.f32 0.0, %v6500
        %v6502 = vpop.f32.mrb[0].mxu0
        %v6503 = vadd.f32 0.0, %v6502
        %6504 = vmatprep.mubr.f32.mxu0 %v6196
        %6505 = vmatmul.mubr.f32.gmra.mrb[0].mxu0 %v6195
        %v6506 = vpop.f32.mrb[0].mxu0
        %v6507 = vadd.f32 0.0, %v6506
        %v6508 = vpop.f32.mrb[0].mxu0
        %v6509 = vadd.f32 0.0, %v6508
        %6510 = vmatprep.mubr.f32.mxu0 %v6198
        %6511 = vmatmul.mubr.f32.gmra.mrb[0].mxu0 %v6197
        %v6512 = vpop.f32.mrb[0].mxu0
        %v6513 = vadd.f32 0.0, %v6512
        %v6514 = vpop.f32.mrb[0].mxu0
        %v6515 = vadd.f32 0.0, %v6514
        %6516 = vmatprep.mubr.f32.mxu0 %v6200
        %6517 = vmatmul.mubr.f32.gmra.mrb[0].mxu0 %v6199
        %v6518 = vpop.f32.mrb[0].mxu0
        %v6519 = vadd.f32 0.0, %v6518
        %v6520 = vpop.f32.mrb[0].mxu0
        %v6521 = vadd.f32 0.0, %v6520
        %6522 = vdwg.mxu0
        %v6523 = vadd.f32 %v5747, %v6333
        %v6524 = vadd.f32 %v5748, %v6335
        %v6525 = vadd.f32 %v5749, %v6339
        %v6526 = vadd.f32 %v5750, %v6341
        %v6527 = vadd.f32 %v5751, %v6345
        %v6528 = vadd.f32 %v5752, %v6347
        %v6529 = vadd.f32 %v5753, %v6351
        %v6530 = vadd.f32 %v5754, %v6353
        %v6531 = vadd.f32 %v5755, %v6357
        %v6532 = vadd.f32 %v5756, %v6359
        %v6533 = vadd.f32 %v5757, %v6363
        %v6534 = vadd.f32 %v5758, %v6365
        %v6535 = vadd.f32 %v5759, %v6369
        %v6536 = vadd.f32 %v5760, %v6371
        %v6537 = vadd.f32 %v5761, %v6375
        %v6538 = vadd.f32 %v5762, %v6377
        %v6539 = vadd.f32 %v5763, %v6381
        %v6540 = vadd.f32 %v5764, %v6383
        %v6541 = vadd.f32 %v5765, %v6387
        %v6542 = vadd.f32 %v5766, %v6389
        %v6543 = vadd.f32 %v5767, %v6393
        %v6544 = vadd.f32 %v5768, %v6395
        %v6545 = vadd.f32 %v5769, %v6399
        %v6546 = vadd.f32 %v5770, %v6401
        %v6547 = vadd.f32 %v5771, %v6405
        %v6548 = vadd.f32 %v5772, %v6407
        %v6549 = vadd.f32 %v5773, %v6411
        %v6550 = vadd.f32 %v5774, %v6413
        %v6551 = vadd.f32 %v5775, %v6417
        %v6552 = vadd.f32 %v5776, %v6419
        %v6553 = vadd.f32 %v5777, %v6423
        %v6554 = vadd.f32 %v5778, %v6425
        %v6555 = vadd.f32 %v5779, %v6429
        %v6556 = vadd.f32 %v5780, %v6431
        %v6557 = vadd.f32 %v5781, %v6435
        %v6558 = vadd.f32 %v5782, %v6437
        %v6559 = vadd.f32 %v5783, %v6441
        %v6560 = vadd.f32 %v5784, %v6443
        %v6561 = vadd.f32 %v5785, %v6447
        %v6562 = vadd.f32 %v5786, %v6449
        %v6563 = vadd.f32 %v5787, %v6453
        %v6564 = vadd.f32 %v5788, %v6455
        %v6565 = vadd.f32 %v5789, %v6459
        %v6566 = vadd.f32 %v5790, %v6461
        %v6567 = vadd.f32 %v5791, %v6465
        %v6568 = vadd.f32 %v5792, %v6467
        %v6569 = vadd.f32 %v5793, %v6471
        %v6570 = vadd.f32 %v5794, %v6473
        %v6571 = vadd.f32 %v5795, %v6477
        %v6572 = vadd.f32 %v5796, %v6479
        %v6573 = vadd.f32 %v5797, %v6483
        %v6574 = vadd.f32 %v5798, %v6485
        %v6575 = vadd.f32 %v5799, %v6489
        %v6576 = vadd.f32 %v5800, %v6491
        %v6577 = vadd.f32 %v5801, %v6495
        %v6578 = vadd.f32 %v5802, %v6497
        %v6579 = vadd.f32 %v5803, %v6501
        %v6580 = vadd.f32 %v5804, %v6503
        %v6581 = vadd.f32 %v5805, %v6507
        %v6582 = vadd.f32 %v5806, %v6509
        %v6583 = vadd.f32 %v5807, %v6513
        %v6584 = vadd.f32 %v5808, %v6515
        %v6585 = vadd.f32 %v5809, %v6519
        %v6586 = vadd.f32 %v5810, %v6521
        %v6587 = vld [vmem:[#allocation6] sm:$0x3]
        %v6589 = vlaneseq
        %v6590 = vshrl.u32 %v6589, 7
        %v6591 = vsub.s32 0, %v6590
        %v6592 = vrot.slane %v6587, %v6591
        %v6593 = vlaneseq
        %v6594 = vshrl.u32 %v6593, 7
        %v6595 = vsub.s32 1, %v6594
        %v6596 = vrot.slane %v6587, %v6595
        %v6599 = vadd.f32 %v6523, %v6592
        %v6600 = vadd.f32 %v6524, %v6596
        %v6601 = vadd.f32 %v6525, %v6592
        %v6602 = vadd.f32 %v6526, %v6596
        %v6603 = vadd.f32 %v6527, %v6592
        %v6604 = vadd.f32 %v6528, %v6596
        %v6605 = vadd.f32 %v6529, %v6592
        %v6606 = vadd.f32 %v6530, %v6596
        %v6607 = vadd.f32 %v6531, %v6592
        %v6608 = vadd.f32 %v6532, %v6596
        %v6609 = vadd.f32 %v6533, %v6592
        %v6610 = vadd.f32 %v6534, %v6596
        %v6611 = vadd.f32 %v6535, %v6592
        %v6612 = vadd.f32 %v6536, %v6596
        %v6613 = vadd.f32 %v6537, %v6592
        %v6614 = vadd.f32 %v6538, %v6596
        %v6615 = vadd.f32 %v6539, %v6592
        %v6616 = vadd.f32 %v6540, %v6596
        %v6617 = vadd.f32 %v6541, %v6592
        %v6618 = vadd.f32 %v6542, %v6596
        %v6619 = vadd.f32 %v6543, %v6592
        %v6620 = vadd.f32 %v6544, %v6596
        %v6621 = vadd.f32 %v6545, %v6592
        %v6622 = vadd.f32 %v6546, %v6596
        %v6623 = vadd.f32 %v6547, %v6592
        %v6624 = vadd.f32 %v6548, %v6596
        %v6625 = vadd.f32 %v6549, %v6592
        %v6626 = vadd.f32 %v6550, %v6596
        %v6627 = vadd.f32 %v6551, %v6592
        %v6628 = vadd.f32 %v6552, %v6596
        %v6629 = vadd.f32 %v6553, %v6592
        %v6630 = vadd.f32 %v6554, %v6596
        %v6631 = vadd.f32 %v6555, %v6592
        %v6632 = vadd.f32 %v6556, %v6596
        %v6633 = vadd.f32 %v6557, %v6592
        %v6634 = vadd.f32 %v6558, %v6596
        %v6635 = vadd.f32 %v6559, %v6592
        %v6636 = vadd.f32 %v6560, %v6596
        %v6637 = vadd.f32 %v6561, %v6592
        %v6638 = vadd.f32 %v6562, %v6596
        %v6639 = vadd.f32 %v6563, %v6592
        %v6640 = vadd.f32 %v6564, %v6596
        %v6641 = vadd.f32 %v6565, %v6592
        %v6642 = vadd.f32 %v6566, %v6596
        %v6643 = vadd.f32 %v6567, %v6592
        %v6644 = vadd.f32 %v6568, %v6596
        %v6645 = vadd.f32 %v6569, %v6592
        %v6646 = vadd.f32 %v6570, %v6596
        %v6647 = vadd.f32 %v6571, %v6592
        %v6648 = vadd.f32 %v6572, %v6596
        %v6649 = vadd.f32 %v6573, %v6592
        %v6650 = vadd.f32 %v6574, %v6596
        %v6651 = vadd.f32 %v6575, %v6592
        %v6652 = vadd.f32 %v6576, %v6596
        %v6653 = vadd.f32 %v6577, %v6592
        %v6654 = vadd.f32 %v6578, %v6596
        %v6655 = vadd.f32 %v6579, %v6592
        %v6656 = vadd.f32 %v6580, %v6596
        %v6657 = vadd.f32 %v6581, %v6592
        %v6658 = vadd.f32 %v6582, %v6596
        %v6659 = vadd.f32 %v6583, %v6592
        %v6660 = vadd.f32 %v6584, %v6596
        %v6661 = vadd.f32 %v6585, %v6592
        %v6662 = vadd.f32 %v6586, %v6596
        %v6663 = vmax.f32 %v6599, 0.0
        %v6664 = vmax.f32 %v6600, 0.0
        %v6665 = vmax.f32 %v6601, 0.0
        %v6666 = vmax.f32 %v6602, 0.0
        %v6667 = vmax.f32 %v6603, 0.0
        %v6668 = vmax.f32 %v6604, 0.0
        %v6669 = vmax.f32 %v6605, 0.0
        %v6670 = vmax.f32 %v6606, 0.0
        %v6671 = vmax.f32 %v6607, 0.0
        %v6672 = vmax.f32 %v6608, 0.0
        %v6673 = vmax.f32 %v6609, 0.0
        %v6674 = vmax.f32 %v6610, 0.0
        %v6675 = vmax.f32 %v6611, 0.0
        %v6676 = vmax.f32 %v6612, 0.0
        %v6677 = vmax.f32 %v6613, 0.0
        %v6678 = vmax.f32 %v6614, 0.0
        %v6679 = vmax.f32 %v6615, 0.0
        %v6680 = vmax.f32 %v6616, 0.0
        %v6681 = vmax.f32 %v6617, 0.0
        %v6682 = vmax.f32 %v6618, 0.0
        %v6683 = vmax.f32 %v6619, 0.0
        %v6684 = vmax.f32 %v6620, 0.0
        %v6685 = vmax.f32 %v6621, 0.0
        %v6686 = vmax.f32 %v6622, 0.0
        %v6687 = vmax.f32 %v6623, 0.0
        %v6688 = vmax.f32 %v6624, 0.0
        %v6689 = vmax.f32 %v6625, 0.0
        %v6690 = vmax.f32 %v6626, 0.0
        %v6691 = vmax.f32 %v6627, 0.0
        %v6692 = vmax.f32 %v6628, 0.0
        %v6693 = vmax.f32 %v6629, 0.0
        %v6694 = vmax.f32 %v6630, 0.0
        %v6695 = vmax.f32 %v6631, 0.0
        %v6696 = vmax.f32 %v6632, 0.0
        %v6697 = vmax.f32 %v6633, 0.0
        %v6698 = vmax.f32 %v6634, 0.0
        %v6699 = vmax.f32 %v6635, 0.0
        %v6700 = vmax.f32 %v6636, 0.0
        %v6701 = vmax.f32 %v6637, 0.0
        %v6702 = vmax.f32 %v6638, 0.0
        %v6703 = vmax.f32 %v6639, 0.0
        %v6704 = vmax.f32 %v6640, 0.0
        %v6705 = vmax.f32 %v6641, 0.0
        %v6706 = vmax.f32 %v6642, 0.0
        %v6707 = vmax.f32 %v6643, 0.0
        %v6708 = vmax.f32 %v6644, 0.0
        %v6709 = vmax.f32 %v6645, 0.0
        %v6710 = vmax.f32 %v6646, 0.0
        %v6711 = vmax.f32 %v6647, 0.0
        %v6712 = vmax.f32 %v6648, 0.0
        %v6713 = vmax.f32 %v6649, 0.0
        %v6714 = vmax.f32 %v6650, 0.0
        %v6715 = vmax.f32 %v6651, 0.0
        %v6716 = vmax.f32 %v6652, 0.0
        %v6717 = vmax.f32 %v6653, 0.0
        %v6718 = vmax.f32 %v6654, 0.0
        %v6719 = vmax.f32 %v6655, 0.0
        %v6720 = vmax.f32 %v6656, 0.0
        %v6721 = vmax.f32 %v6657, 0.0
        %v6722 = vmax.f32 %v6658, 0.0
        %v6723 = vmax.f32 %v6659, 0.0
        %v6724 = vmax.f32 %v6660, 0.0
        %v6725 = vmax.f32 %v6661, 0.0
        %v6726 = vmax.f32 %v6662, 0.0
        %v6727 = vld [vmem:[%s3] sm:$0xff]
        %v6728 = vld [vmem:[%s3 + $0x8] sm:$0xff]
        %v6729 = vld [vmem:[%s3 + $0x10] sm:$0xff]
        %v6730 = vld [vmem:[%s3 + $0x18] sm:$0xff]
        %v6731 = vld [vmem:[%s3 + $0x20] sm:$0xff]
        %v6732 = vld [vmem:[%s3 + $0x28] sm:$0xff]
        %v6733 = vld [vmem:[%s3 + $0x30] sm:$0xff]
        %v6734 = vld [vmem:[%s3 + $0x38] sm:$0xff]
        %v6735 = vld [vmem:[%s3 + $0x40] sm:$0xff]
        %v6736 = vld [vmem:[%s3 + $0x48] sm:$0xff]
        %v6737 = vld [vmem:[%s3 + $0x50] sm:$0xff]
        %v6738 = vld [vmem:[%s3 + $0x58] sm:$0xff]
        %v6739 = vld [vmem:[%s3 + $0x60] sm:$0xff]
        %v6740 = vld [vmem:[%s3 + $0x68] sm:$0xff]
        %v6741 = vld [vmem:[%s3 + $0x70] sm:$0xff]
        %v6742 = vld [vmem:[%s3 + $0x78] sm:$0xff]
        %v6743 = vld [vmem:[%s3 + $0x80] sm:$0xff]
        %v6744 = vld [vmem:[%s3 + $0x88] sm:$0xff]
        %v6745 = vld [vmem:[%s3 + $0x90] sm:$0xff]
        %v6746 = vld [vmem:[%s3 + $0x98] sm:$0xff]
        %v6747 = vld [vmem:[%s3 + $0xa0] sm:$0xff]
        %v6748 = vld [vmem:[%s3 + $0xa8] sm:$0xff]
        %v6749 = vld [vmem:[%s3 + $0xb0] sm:$0xff]
        %v6750 = vld [vmem:[%s3 + $0xb8] sm:$0xff]
        %v6751 = vld [vmem:[%s3 + $0xc0] sm:$0xff]
        %v6752 = vld [vmem:[%s3 + $0xc8] sm:$0xff]
        %v6753 = vld [vmem:[%s3 + $0xd0] sm:$0xff]
        %v6754 = vld [vmem:[%s3 + $0xd8] sm:$0xff]
        %v6755 = vld [vmem:[%s3 + $0xe0] sm:$0xff]
        %v6756 = vld [vmem:[%s3 + $0xe8] sm:$0xff]
        %v6757 = vld [vmem:[%s3 + $0xf0] sm:$0xff]
        %v6758 = vld [vmem:[%s3 + $0xf8] sm:$0xff]
        %v6759 = vld [vmem:[#allocation7] sm:$0x1]
        %v6761 = vlaneseq
        %v6762 = vshrl.u32 %v6761, 7
        %v6763 = vsub.s32 0, %v6762
        %v6764 = vrot.slane %v6759, %v6763
        %6766 = vmatprep.subr.mxu0 0.0
        %6767 = vmatpush1.msra.mxu0 %v6727
        %6768 = vmatprep.subr.mxu0 0.0
        %6769 = vmatpush1.msra.mxu0 %v6728
        %6770 = vmatprep.subr.mxu0 0.0
        %6771 = vmatpush1.msra.mxu0 %v6729
        %6772 = vmatprep.subr.mxu0 0.0
        %6773 = vmatpush1.msra.mxu0 %v6730
        %6774 = vmatprep.subr.mxu0 0.0
        %6775 = vmatpush1.msra.mxu0 %v6731
        %6776 = vmatprep.subr.mxu0 0.0
        %6777 = vmatpush1.msra.mxu0 %v6732
        %6778 = vmatprep.subr.mxu0 0.0
        %6779 = vmatpush1.msra.mxu0 %v6733
        %6780 = vmatprep.subr.mxu0 0.0
        %6781 = vmatpush1.msra.mxu0 %v6734
        %6782 = vmatprep.subr.mxu0 0.0
        %6783 = vmatpush1.msra.mxu0 %v6735
        %6784 = vmatprep.subr.mxu0 0.0
        %6785 = vmatpush1.msra.mxu0 %v6736
        %6786 = vmatprep.subr.mxu0 0.0
        %6787 = vmatpush1.msra.mxu0 %v6737
        %6788 = vmatprep.subr.mxu0 0.0
        %6789 = vmatpush1.msra.mxu0 %v6738
        %6790 = vmatprep.subr.mxu0 0.0
        %6791 = vmatpush1.msra.mxu0 %v6739
        %6792 = vmatprep.subr.mxu0 0.0
        %6793 = vmatpush1.msra.mxu0 %v6740
        %6794 = vmatprep.subr.mxu0 0.0
        %6795 = vmatpush1.msra.mxu0 %v6741
        %6796 = vmatprep.subr.mxu0 0.0
        %6797 = vmatpush1.msra.mxu0 %v6742
        %6798 = vmatprep.subr.mxu0 0.0
        %6799 = vmatpush1.msra.mxu0 %v6743
        %6800 = vmatprep.subr.mxu0 0.0
        %6801 = vmatpush1.msra.mxu0 %v6744
        %6802 = vmatprep.subr.mxu0 0.0
        %6803 = vmatpush1.msra.mxu0 %v6745
        %6804 = vmatprep.subr.mxu0 0.0
        %6805 = vmatpush1.msra.mxu0 %v6746
        %6806 = vmatprep.subr.mxu0 0.0
        %6807 = vmatpush1.msra.mxu0 %v6747
        %6808 = vmatprep.subr.mxu0 0.0
        %6809 = vmatpush1.msra.mxu0 %v6748
        %6810 = vmatprep.subr.mxu0 0.0
        %6811 = vmatpush1.msra.mxu0 %v6749
        %6812 = vmatprep.subr.mxu0 0.0
        %6813 = vmatpush1.msra.mxu0 %v6750
        %6814 = vmatprep.subr.mxu0 0.0
        %6815 = vmatpush1.msra.mxu0 %v6751
        %6816 = vmatprep.subr.mxu0 0.0
        %6817 = vmatpush1.msra.mxu0 %v6752
        %6818 = vmatprep.subr.mxu0 0.0
        %6819 = vmatpush1.msra.mxu0 %v6753
        %6820 = vmatprep.subr.mxu0 0.0
        %6821 = vmatpush1.msra.mxu0 %v6754
        %6822 = vmatprep.subr.mxu0 0.0
        %6823 = vmatpush1.msra.mxu0 %v6755
        %6824 = vmatprep.subr.mxu0 0.0
        %6825 = vmatpush1.msra.mxu0 %v6756
        %6826 = vmatprep.subr.mxu0 0.0
        %6827 = vmatpush1.msra.mxu0 %v6757
        %6828 = vmatprep.subr.mxu0 0.0
        %6829 = vmatpush1.msra.mxu0 %v6758
        %6830 = vmatprep.mubr.f32.mxu0 %v6664
        %6831 = vmatmul.mubr.f32.gmra.mrb[0].mxu0 %v6663
        %v6832 = vpop.f32.mrb[0].mxu0
        %v6833 = vadd.f32 %v6764, %v6832
        %v6834 = vpop.f32.mrb[0].mxu0
        %6835 = vmatprep.mubr.f32.mxu0 %v6666
        %6836 = vmatmul.mubr.f32.gmra.mrb[0].mxu0 %v6665
        %v6837 = vpop.f32.mrb[0].mxu0
        %v6838 = vadd.f32 %v6764, %v6837
        %v6839 = vpop.f32.mrb[0].mxu0
        %6840 = vmatprep.mubr.f32.mxu0 %v6668
        %6841 = vmatmul.mubr.f32.gmra.mrb[0].mxu0 %v6667
        %v6842 = vpop.f32.mrb[0].mxu0
        %v6843 = vadd.f32 %v6764, %v6842
        %v6844 = vpop.f32.mrb[0].mxu0
        %6845 = vmatprep.mubr.f32.mxu0 %v6670
        %6846 = vmatmul.mubr.f32.gmra.mrb[0].mxu0 %v6669
        %v6847 = vpop.f32.mrb[0].mxu0
        %v6848 = vadd.f32 %v6764, %v6847
        %v6849 = vpop.f32.mrb[0].mxu0
        %6850 = vmatprep.mubr.f32.mxu0 %v6672
        %6851 = vmatmul.mubr.f32.gmra.mrb[0].mxu0 %v6671
        %v6852 = vpop.f32.mrb[0].mxu0
        %v6853 = vadd.f32 %v6764, %v6852
        %v6854 = vpop.f32.mrb[0].mxu0
        %6855 = vmatprep.mubr.f32.mxu0 %v6674
        %6856 = vmatmul.mubr.f32.gmra.mrb[0].mxu0 %v6673
        %v6857 = vpop.f32.mrb[0].mxu0
        %v6858 = vadd.f32 %v6764, %v6857
        %v6859 = vpop.f32.mrb[0].mxu0
        %6860 = vmatprep.mubr.f32.mxu0 %v6676
        %6861 = vmatmul.mubr.f32.gmra.mrb[0].mxu0 %v6675
        %v6862 = vpop.f32.mrb[0].mxu0
        %v6863 = vadd.f32 %v6764, %v6862
        %v6864 = vpop.f32.mrb[0].mxu0
        %6865 = vmatprep.mubr.f32.mxu0 %v6678
        %6866 = vmatmul.mubr.f32.gmra.mrb[0].mxu0 %v6677
        %v6867 = vpop.f32.mrb[0].mxu0
        %v6868 = vadd.f32 %v6764, %v6867
        %v6869 = vpop.f32.mrb[0].mxu0
        %6870 = vmatprep.mubr.f32.mxu0 %v6680
        %6871 = vmatmul.mubr.f32.gmra.mrb[0].mxu0 %v6679
        %v6872 = vpop.f32.mrb[0].mxu0
        %v6873 = vadd.f32 %v6764, %v6872
        %v6874 = vpop.f32.mrb[0].mxu0
        %6875 = vmatprep.mubr.f32.mxu0 %v6682
        %6876 = vmatmul.mubr.f32.gmra.mrb[0].mxu0 %v6681
        %v6877 = vpop.f32.mrb[0].mxu0
        %v6878 = vadd.f32 %v6764, %v6877
        %v6879 = vpop.f32.mrb[0].mxu0
        %6880 = vmatprep.mubr.f32.mxu0 %v6684
        %6881 = vmatmul.mubr.f32.gmra.mrb[0].mxu0 %v6683
        %v6882 = vpop.f32.mrb[0].mxu0
        %v6883 = vadd.f32 %v6764, %v6882
        %v6884 = vpop.f32.mrb[0].mxu0
        %6885 = vmatprep.mubr.f32.mxu0 %v6686
        %6886 = vmatmul.mubr.f32.gmra.mrb[0].mxu0 %v6685
        %v6887 = vpop.f32.mrb[0].mxu0
        %v6888 = vadd.f32 %v6764, %v6887
        %v6889 = vpop.f32.mrb[0].mxu0
        %6890 = vmatprep.mubr.f32.mxu0 %v6688
        %6891 = vmatmul.mubr.f32.gmra.mrb[0].mxu0 %v6687
        %v6892 = vpop.f32.mrb[0].mxu0
        %v6893 = vadd.f32 %v6764, %v6892
        %v6894 = vpop.f32.mrb[0].mxu0
        %6895 = vmatprep.mubr.f32.mxu0 %v6690
        %6896 = vmatmul.mubr.f32.gmra.mrb[0].mxu0 %v6689
        %v6897 = vpop.f32.mrb[0].mxu0
        %v6898 = vadd.f32 %v6764, %v6897
        %v6899 = vpop.f32.mrb[0].mxu0
        %6900 = vmatprep.mubr.f32.mxu0 %v6692
        %6901 = vmatmul.mubr.f32.gmra.mrb[0].mxu0 %v6691
        %v6902 = vpop.f32.mrb[0].mxu0
        %v6903 = vadd.f32 %v6764, %v6902
        %v6904 = vpop.f32.mrb[0].mxu0
        %6905 = vmatprep.mubr.f32.mxu0 %v6694
        %6906 = vmatmul.mubr.f32.gmra.mrb[0].mxu0 %v6693
        %v6907 = vpop.f32.mrb[0].mxu0
        %v6908 = vadd.f32 %v6764, %v6907
        %v6909 = vpop.f32.mrb[0].mxu0
        %6910 = vmatprep.mubr.f32.mxu0 %v6696
        %6911 = vmatmul.mubr.f32.gmra.mrb[0].mxu0 %v6695
        %v6912 = vpop.f32.mrb[0].mxu0
        %v6913 = vadd.f32 %v6764, %v6912
        %v6914 = vpop.f32.mrb[0].mxu0
        %6915 = vmatprep.mubr.f32.mxu0 %v6698
        %6916 = vmatmul.mubr.f32.gmra.mrb[0].mxu0 %v6697
        %v6917 = vpop.f32.mrb[0].mxu0
        %v6918 = vadd.f32 %v6764, %v6917
        %v6919 = vpop.f32.mrb[0].mxu0
        %6920 = vmatprep.mubr.f32.mxu0 %v6700
        %6921 = vmatmul.mubr.f32.gmra.mrb[0].mxu0 %v6699
        %v6922 = vpop.f32.mrb[0].mxu0
        %v6923 = vadd.f32 %v6764, %v6922
        %v6924 = vpop.f32.mrb[0].mxu0
        %6925 = vmatprep.mubr.f32.mxu0 %v6702
        %6926 = vmatmul.mubr.f32.gmra.mrb[0].mxu0 %v6701
        %v6927 = vpop.f32.mrb[0].mxu0
        %v6928 = vadd.f32 %v6764, %v6927
        %v6929 = vpop.f32.mrb[0].mxu0
        %6930 = vmatprep.mubr.f32.mxu0 %v6704
        %6931 = vmatmul.mubr.f32.gmra.mrb[0].mxu0 %v6703
        %v6932 = vpop.f32.mrb[0].mxu0
        %v6933 = vadd.f32 %v6764, %v6932
        %v6934 = vpop.f32.mrb[0].mxu0
        %6935 = vmatprep.mubr.f32.mxu0 %v6706
        %6936 = vmatmul.mubr.f32.gmra.mrb[0].mxu0 %v6705
        %v6937 = vpop.f32.mrb[0].mxu0
        %v6938 = vadd.f32 %v6764, %v6937
        %v6939 = vpop.f32.mrb[0].mxu0
        %6940 = vmatprep.mubr.f32.mxu0 %v6708
        %6941 = vmatmul.mubr.f32.gmra.mrb[0].mxu0 %v6707
        %v6942 = vpop.f32.mrb[0].mxu0
        %v6943 = vadd.f32 %v6764, %v6942
        %v6944 = vpop.f32.mrb[0].mxu0
        %6945 = vmatprep.mubr.f32.mxu0 %v6710
        %6946 = vmatmul.mubr.f32.gmra.mrb[0].mxu0 %v6709
        %v6947 = vpop.f32.mrb[0].mxu0
        %v6948 = vadd.f32 %v6764, %v6947
        %v6949 = vpop.f32.mrb[0].mxu0
        %6950 = vmatprep.mubr.f32.mxu0 %v6712
        %6951 = vmatmul.mubr.f32.gmra.mrb[0].mxu0 %v6711
        %v6952 = vpop.f32.mrb[0].mxu0
        %v6953 = vadd.f32 %v6764, %v6952
        %v6954 = vpop.f32.mrb[0].mxu0
        %6955 = vmatprep.mubr.f32.mxu0 %v6714
        %6956 = vmatmul.mubr.f32.gmra.mrb[0].mxu0 %v6713
        %v6957 = vpop.f32.mrb[0].mxu0
        %v6958 = vadd.f32 %v6764, %v6957
        %v6959 = vpop.f32.mrb[0].mxu0
        %6960 = vmatprep.mubr.f32.mxu0 %v6716
        %6961 = vmatmul.mubr.f32.gmra.mrb[0].mxu0 %v6715
        %v6962 = vpop.f32.mrb[0].mxu0
        %v6963 = vadd.f32 %v6764, %v6962
        %v6964 = vpop.f32.mrb[0].mxu0
        %6965 = vmatprep.mubr.f32.mxu0 %v6718
        %6966 = vmatmul.mubr.f32.gmra.mrb[0].mxu0 %v6717
        %v6967 = vpop.f32.mrb[0].mxu0
        %v6968 = vadd.f32 %v6764, %v6967
        %v6969 = vpop.f32.mrb[0].mxu0
        %6970 = vmatprep.mubr.f32.mxu0 %v6720
        %6971 = vmatmul.mubr.f32.gmra.mrb[0].mxu0 %v6719
        %v6972 = vpop.f32.mrb[0].mxu0
        %v6973 = vadd.f32 %v6764, %v6972
        %v6974 = vpop.f32.mrb[0].mxu0
        %6975 = vmatprep.mubr.f32.mxu0 %v6722
        %6976 = vmatmul.mubr.f32.gmra.mrb[0].mxu0 %v6721
        %v6977 = vpop.f32.mrb[0].mxu0
        %v6978 = vadd.f32 %v6764, %v6977
        %v6979 = vpop.f32.mrb[0].mxu0
        %6980 = vmatprep.mubr.f32.mxu0 %v6724
        %6981 = vmatmul.mubr.f32.gmra.mrb[0].mxu0 %v6723
        %v6982 = vpop.f32.mrb[0].mxu0
        %v6983 = vadd.f32 %v6764, %v6982
        %v6984 = vpop.f32.mrb[0].mxu0
        %6985 = vmatprep.mubr.f32.mxu0 %v6726
        %6986 = vmatmul.mubr.f32.gmra.mrb[0].mxu0 %v6725
        %v6987 = vpop.f32.mrb[0].mxu0
        %v6988 = vadd.f32 %v6764, %v6987
        %v6989 = vpop.f32.mrb[0].mxu0
        %6990 = vdwg.mxu0
        %v6991 = vsub.f32 0.0, %v6833
        %v6992 = vsub.f32 0.0, %v6838
        %v6993 = vsub.f32 0.0, %v6843
        %v6994 = vsub.f32 0.0, %v6848
        %v6995 = vsub.f32 0.0, %v6853
        %v6996 = vsub.f32 0.0, %v6858
        %v6997 = vsub.f32 0.0, %v6863
        %v6998 = vsub.f32 0.0, %v6868
        %v6999 = vsub.f32 0.0, %v6873
        %v7000 = vsub.f32 0.0, %v6878
        %v7001 = vsub.f32 0.0, %v6883
        %v7002 = vsub.f32 0.0, %v6888
        %v7003 = vsub.f32 0.0, %v6893
        %v7004 = vsub.f32 0.0, %v6898
        %v7005 = vsub.f32 0.0, %v6903
        %v7006 = vsub.f32 0.0, %v6908
        %v7007 = vsub.f32 0.0, %v6913
        %v7008 = vsub.f32 0.0, %v6918
        %v7009 = vsub.f32 0.0, %v6923
        %v7010 = vsub.f32 0.0, %v6928
        %v7011 = vsub.f32 0.0, %v6933
        %v7012 = vsub.f32 0.0, %v6938
        %v7013 = vsub.f32 0.0, %v6943
        %v7014 = vsub.f32 0.0, %v6948
        %v7015 = vsub.f32 0.0, %v6953
        %v7016 = vsub.f32 0.0, %v6958
        %v7017 = vsub.f32 0.0, %v6963
        %v7018 = vsub.f32 0.0, %v6968
        %v7019 = vsub.f32 0.0, %v6973
        %v7020 = vsub.f32 0.0, %v6978
        %v7021 = vsub.f32 0.0, %v6983
        %v7022 = vsub.f32 0.0, %v6988
        %v7023 = vmul.f32 %v6991, 1.442695
        %v7024 = vpow.pop %v7023
        %v7025 = vmul.f32 %v6992, 1.442695
        %v7026 = vpow.pop %v7025
        %v7027 = vmul.f32 %v6993, 1.442695
        %v7028 = vpow.pop %v7027
        %v7029 = vmul.f32 %v6994, 1.442695
        %v7030 = vpow.pop %v7029
        %v7031 = vmul.f32 %v6995, 1.442695
        %v7032 = vpow.pop %v7031
        %v7033 = vmul.f32 %v6996, 1.442695
        %v7034 = vpow.pop %v7033
        %v7035 = vmul.f32 %v6997, 1.442695
        %v7036 = vpow.pop %v7035
        %v7037 = vmul.f32 %v6998, 1.442695
        %v7038 = vpow.pop %v7037
        %v7039 = vmul.f32 %v6999, 1.442695
        %v7040 = vpow.pop %v7039
        %v7041 = vmul.f32 %v7000, 1.442695
        %v7042 = vpow.pop %v7041
        %v7043 = vmul.f32 %v7001, 1.442695
        %v7044 = vpow.pop %v7043
        %v7045 = vmul.f32 %v7002, 1.442695
        %v7046 = vpow.pop %v7045
        %v7047 = vmul.f32 %v7003, 1.442695
        %v7048 = vpow.pop %v7047
        %v7049 = vmul.f32 %v7004, 1.442695
        %v7050 = vpow.pop %v7049
        %v7051 = vmul.f32 %v7005, 1.442695
        %v7052 = vpow.pop %v7051
        %v7053 = vmul.f32 %v7006, 1.442695
        %v7054 = vpow.pop %v7053
        %v7055 = vmul.f32 %v7007, 1.442695
        %v7056 = vpow.pop %v7055
        %v7057 = vmul.f32 %v7008, 1.442695
        %v7058 = vpow.pop %v7057
        %v7059 = vmul.f32 %v7009, 1.442695
        %v7060 = vpow.pop %v7059
        %v7061 = vmul.f32 %v7010, 1.442695
        %v7062 = vpow.pop %v7061
        %v7063 = vmul.f32 %v7011, 1.442695
        %v7064 = vpow.pop %v7063
        %v7065 = vmul.f32 %v7012, 1.442695
        %v7066 = vpow.pop %v7065
        %v7067 = vmul.f32 %v7013, 1.442695
        %v7068 = vpow.pop %v7067
        %v7069 = vmul.f32 %v7014, 1.442695
        %v7070 = vpow.pop %v7069
        %v7071 = vmul.f32 %v7015, 1.442695
        %v7072 = vpow.pop %v7071
        %v7073 = vmul.f32 %v7016, 1.442695
        %v7074 = vpow.pop %v7073
        %v7075 = vmul.f32 %v7017, 1.442695
        %v7076 = vpow.pop %v7075
        %v7077 = vmul.f32 %v7018, 1.442695
        %v7078 = vpow.pop %v7077
        %v7079 = vmul.f32 %v7019, 1.442695
        %v7080 = vpow.pop %v7079
        %v7081 = vmul.f32 %v7020, 1.442695
        %v7082 = vpow.pop %v7081
        %v7083 = vmul.f32 %v7021, 1.442695
        %v7084 = vpow.pop %v7083
        %v7085 = vmul.f32 %v7022, 1.442695
        %v7086 = vpow.pop %v7085
        %v7087 = vadd.f32 %v7024, 1.0
        %v7088 = vadd.f32 %v7026, 1.0
        %v7089 = vadd.f32 %v7028, 1.0
        %v7090 = vadd.f32 %v7030, 1.0
        %v7091 = vadd.f32 %v7032, 1.0
        %v7092 = vadd.f32 %v7034, 1.0
        %v7093 = vadd.f32 %v7036, 1.0
        %v7094 = vadd.f32 %v7038, 1.0
        %v7095 = vadd.f32 %v7040, 1.0
        %v7096 = vadd.f32 %v7042, 1.0
        %v7097 = vadd.f32 %v7044, 1.0
        %v7098 = vadd.f32 %v7046, 1.0
        %v7099 = vadd.f32 %v7048, 1.0
        %v7100 = vadd.f32 %v7050, 1.0
        %v7101 = vadd.f32 %v7052, 1.0
        %v7102 = vadd.f32 %v7054, 1.0
        %v7103 = vadd.f32 %v7056, 1.0
        %v7104 = vadd.f32 %v7058, 1.0
        %v7105 = vadd.f32 %v7060, 1.0
        %v7106 = vadd.f32 %v7062, 1.0
        %v7107 = vadd.f32 %v7064, 1.0
        %v7108 = vadd.f32 %v7066, 1.0
        %v7109 = vadd.f32 %v7068, 1.0
        %v7110 = vadd.f32 %v7070, 1.0
        %v7111 = vadd.f32 %v7072, 1.0
        %v7112 = vadd.f32 %v7074, 1.0
        %v7113 = vadd.f32 %v7076, 1.0
        %v7114 = vadd.f32 %v7078, 1.0
        %v7115 = vadd.f32 %v7080, 1.0
        %v7116 = vadd.f32 %v7082, 1.0
        %v7117 = vadd.f32 %v7084, 1.0
        %v7118 = vadd.f32 %v7086, 1.0
        %v7119 = vrcp.pop %v7087
        %v7120 = vmul.f32 1.0, %v7119
        %v7121 = vrcp.pop %v7088
        %v7122 = vmul.f32 1.0, %v7121
        %v7123 = vrcp.pop %v7089
        %v7124 = vmul.f32 1.0, %v7123
        %v7125 = vrcp.pop %v7090
        %v7126 = vmul.f32 1.0, %v7125
        %v7127 = vrcp.pop %v7091
        %v7128 = vmul.f32 1.0, %v7127
        %v7129 = vrcp.pop %v7092
        %v7130 = vmul.f32 1.0, %v7129
        %v7131 = vrcp.pop %v7093
        %v7132 = vmul.f32 1.0, %v7131
        %v7133 = vrcp.pop %v7094
        %v7134 = vmul.f32 1.0, %v7133
        %v7135 = vrcp.pop %v7095
        %v7136 = vmul.f32 1.0, %v7135
        %v7137 = vrcp.pop %v7096
        %v7138 = vmul.f32 1.0, %v7137
        %v7139 = vrcp.pop %v7097
        %v7140 = vmul.f32 1.0, %v7139
        %v7141 = vrcp.pop %v7098
        %v7142 = vmul.f32 1.0, %v7141
        %v7143 = vrcp.pop %v7099
        %v7144 = vmul.f32 1.0, %v7143
        %v7145 = vrcp.pop %v7100
        %v7146 = vmul.f32 1.0, %v7145
        %v7147 = vrcp.pop %v7101
        %v7148 = vmul.f32 1.0, %v7147
        %v7149 = vrcp.pop %v7102
        %v7150 = vmul.f32 1.0, %v7149
        %v7151 = vrcp.pop %v7103
        %v7152 = vmul.f32 1.0, %v7151
        %v7153 = vrcp.pop %v7104
        %v7154 = vmul.f32 1.0, %v7153
        %v7155 = vrcp.pop %v7105
        %v7156 = vmul.f32 1.0, %v7155
        %v7157 = vrcp.pop %v7106
        %v7158 = vmul.f32 1.0, %v7157
        %v7159 = vrcp.pop %v7107
        %v7160 = vmul.f32 1.0, %v7159
        %v7161 = vrcp.pop %v7108
        %v7162 = vmul.f32 1.0, %v7161
        %v7163 = vrcp.pop %v7109
        %v7164 = vmul.f32 1.0, %v7163
        %v7165 = vrcp.pop %v7110
        %v7166 = vmul.f32 1.0, %v7165
        %v7167 = vrcp.pop %v7111
        %v7168 = vmul.f32 1.0, %v7167
        %v7169 = vrcp.pop %v7112
        %v7170 = vmul.f32 1.0, %v7169
        %v7171 = vrcp.pop %v7113
        %v7172 = vmul.f32 1.0, %v7171
        %v7173 = vrcp.pop %v7114
        %v7174 = vmul.f32 1.0, %v7173
        %v7175 = vrcp.pop %v7115
        %v7176 = vmul.f32 1.0, %v7175
        %v7177 = vrcp.pop %v7116
        %v7178 = vmul.f32 1.0, %v7177
        %v7179 = vrcp.pop %v7117
        %v7180 = vmul.f32 1.0, %v7179
        %v7181 = vrcp.pop %v7118
        %v7182 = vmul.f32 1.0, %v7181
        %v7183 = vlaneseq
        %v7184 = vand.u32 %v7183, 127
        %vm7185 = vcmp.eq.s32.totalorder %v7184, 5
        %v7186 = vsub.f32 %v7120, 0.5
        %v7187 = vsub.f32 %v7122, 0.5
        %v7188 = vsub.f32 %v7124, 0.5
        %v7189 = vsub.f32 %v7126, 0.5
        %v7190 = vsub.f32 %v7128, 0.5
        %v7191 = vsub.f32 %v7130, 0.5
        %v7192 = vsub.f32 %v7132, 0.5
        %v7193 = vsub.f32 %v7134, 0.5
        %v7194 = vsub.f32 %v7136, 0.5
        %v7195 = vsub.f32 %v7138, 0.5
        %v7196 = vsub.f32 %v7140, 0.5
        %v7197 = vsub.f32 %v7142, 0.5
        %v7198 = vsub.f32 %v7144, 0.5
        %v7199 = vsub.f32 %v7146, 0.5
        %v7200 = vsub.f32 %v7148, 0.5
        %v7201 = vsub.f32 %v7150, 0.5
        %v7202 = vsub.f32 %v7152, 0.5
        %v7203 = vsub.f32 %v7154, 0.5
        %v7204 = vsub.f32 %v7156, 0.5
        %v7205 = vsub.f32 %v7158, 0.5
        %v7206 = vsub.f32 %v7160, 0.5
        %v7207 = vsub.f32 %v7162, 0.5
        %v7208 = vsub.f32 %v7164, 0.5
        %v7209 = vsub.f32 %v7166, 0.5
        %v7210 = vsub.f32 %v7168, 0.5
        %v7211 = vsub.f32 %v7170, 0.5
        %v7212 = vsub.f32 %v7172, 0.5
        %v7213 = vsub.f32 %v7174, 0.5
        %v7214 = vsub.f32 %v7176, 0.5
        %v7215 = vsub.f32 %v7178, 0.5
        %v7216 = vsub.f32 %v7180, 0.5
        %v7217 = vsub.f32 %v7182, 0.5
        %v7218 = vmul.f32 %v7186, 3.1415927
        %v7219 = vmul.f32 %v7187, 3.1415927
        %v7220 = vmul.f32 %v7188, 3.1415927
        %v7221 = vmul.f32 %v7189, 3.1415927
        %v7222 = vmul.f32 %v7190, 3.1415927
        %v7223 = vmul.f32 %v7191, 3.1415927
        %v7224 = vmul.f32 %v7192, 3.1415927
        %v7225 = vmul.f32 %v7193, 3.1415927
        %v7226 = vmul.f32 %v7194, 3.1415927
        %v7227 = vmul.f32 %v7195, 3.1415927
        %v7228 = vmul.f32 %v7196, 3.1415927
        %v7229 = vmul.f32 %v7197, 3.1415927
        %v7230 = vmul.f32 %v7198, 3.1415927
        %v7231 = vmul.f32 %v7199, 3.1415927
        %v7232 = vmul.f32 %v7200, 3.1415927
        %v7233 = vmul.f32 %v7201, 3.1415927
        %v7234 = vmul.f32 %v7202, 3.1415927
        %v7235 = vmul.f32 %v7203, 3.1415927
        %v7236 = vmul.f32 %v7204, 3.1415927
        %v7237 = vmul.f32 %v7205, 3.1415927
        %v7238 = vmul.f32 %v7206, 3.1415927
        %v7239 = vmul.f32 %v7207, 3.1415927
        %v7240 = vmul.f32 %v7208, 3.1415927
        %v7241 = vmul.f32 %v7209, 3.1415927
        %v7242 = vmul.f32 %v7210, 3.1415927
        %v7243 = vmul.f32 %v7211, 3.1415927
        %v7244 = vmul.f32 %v7212, 3.1415927
        %v7245 = vmul.f32 %v7213, 3.1415927
        %v7246 = vmul.f32 %v7214, 3.1415927
        %v7247 = vmul.f32 %v7215, 3.1415927
        %v7248 = vmul.f32 %v7216, 3.1415927
        %v7249 = vmul.f32 %v7217, 3.1415927
        %v7250 = vsel %vm7185, %v7218, %v7120
        %v7251 = vsel %vm7185, %v7219, %v7122
        %v7252 = vsel %vm7185, %v7220, %v7124
        %v7253 = vsel %vm7185, %v7221, %v7126
        %v7254 = vsel %vm7185, %v7222, %v7128
        %v7255 = vsel %vm7185, %v7223, %v7130
        %v7256 = vsel %vm7185, %v7224, %v7132
        %v7257 = vsel %vm7185, %v7225, %v7134
        %v7258 = vsel %vm7185, %v7226, %v7136
        %v7259 = vsel %vm7185, %v7227, %v7138
        %v7260 = vsel %vm7185, %v7228, %v7140
        %v7261 = vsel %vm7185, %v7229, %v7142
        %v7262 = vsel %vm7185, %v7230, %v7144
        %v7263 = vsel %vm7185, %v7231, %v7146
        %v7264 = vsel %vm7185, %v7232, %v7148
        %v7265 = vsel %vm7185, %v7233, %v7150
        %v7266 = vsel %vm7185, %v7234, %v7152
        %v7267 = vsel %vm7185, %v7235, %v7154
        %v7268 = vsel %vm7185, %v7236, %v7156
        %v7269 = vsel %vm7185, %v7237, %v7158
        %v7270 = vsel %vm7185, %v7238, %v7160
        %v7271 = vsel %vm7185, %v7239, %v7162
        %v7272 = vsel %vm7185, %v7240, %v7164
        %v7273 = vsel %vm7185, %v7241, %v7166
        %v7274 = vsel %vm7185, %v7242, %v7168
        %v7275 = vsel %vm7185, %v7243, %v7170
        %v7276 = vsel %vm7185, %v7244, %v7172
        %v7277 = vsel %vm7185, %v7245, %v7174
        %v7278 = vsel %vm7185, %v7246, %v7176
        %v7279 = vsel %vm7185, %v7247, %v7178
        %v7280 = vsel %vm7185, %v7248, %v7180
        %v7281 = vsel %vm7185, %v7249, %v7182
        %vm7282 = vcmask 48128
        %7283 = vst.msk [vmem:[%s284] sm:$0xff] %vm7282, %v7250
        %7284 = vst.msk [vmem:[%s284 + $0x8] sm:$0xff] %vm7282, %v7251
        %7285 = vst.msk [vmem:[%s284 + $0x10] sm:$0xff] %vm7282, %v7252
        %7286 = vst.msk [vmem:[%s284 + $0x18] sm:$0xff] %vm7282, %v7253
        %7287 = vst.msk [vmem:[%s284 + $0x20] sm:$0xff] %vm7282, %v7254
        %7288 = vst.msk [vmem:[%s284 + $0x28] sm:$0xff] %vm7282, %v7255
        %7289 = vst.msk [vmem:[%s284 + $0x30] sm:$0xff] %vm7282, %v7256
        %7290 = vst.msk [vmem:[%s284 + $0x38] sm:$0xff] %vm7282, %v7257
        %7291 = vst.msk [vmem:[%s284 + $0x40] sm:$0xff] %vm7282, %v7258
        %7292 = vst.msk [vmem:[%s284 + $0x48] sm:$0xff] %vm7282, %v7259
        %7293 = vst.msk [vmem:[%s284 + $0x50] sm:$0xff] %vm7282, %v7260
        %7294 = vst.msk [vmem:[%s284 + $0x58] sm:$0xff] %vm7282, %v7261
        %7295 = vst.msk [vmem:[%s284 + $0x60] sm:$0xff] %vm7282, %v7262
        %7296 = vst.msk [vmem:[%s284 + $0x68] sm:$0xff] %vm7282, %v7263
        %7297 = vst.msk [vmem:[%s284 + $0x70] sm:$0xff] %vm7282, %v7264
        %7298 = vst.msk [vmem:[%s284 + $0x78] sm:$0xff] %vm7282, %v7265
        %7299 = vst.msk [vmem:[%s284 + $0x80] sm:$0xff] %vm7282, %v7266
        %7300 = vst.msk [vmem:[%s284 + $0x88] sm:$0xff] %vm7282, %v7267
        %7301 = vst.msk [vmem:[%s284 + $0x90] sm:$0xff] %vm7282, %v7268
        %7302 = vst.msk [vmem:[%s284 + $0x98] sm:$0xff] %vm7282, %v7269
        %7303 = vst.msk [vmem:[%s284 + $0xa0] sm:$0xff] %vm7282, %v7270
        %7304 = vst.msk [vmem:[%s284 + $0xa8] sm:$0xff] %vm7282, %v7271
        %7305 = vst.msk [vmem:[%s284 + $0xb0] sm:$0xff] %vm7282, %v7272
        %7306 = vst.msk [vmem:[%s284 + $0xb8] sm:$0xff] %vm7282, %v7273
        %7307 = vst.msk [vmem:[%s284 + $0xc0] sm:$0xff] %vm7282, %v7274
        %7308 = vst.msk [vmem:[%s284 + $0xc8] sm:$0xff] %vm7282, %v7275
        %7309 = vst.msk [vmem:[%s284 + $0xd0] sm:$0xff] %vm7282, %v7276
        %7310 = vst.msk [vmem:[%s284 + $0xd8] sm:$0xff] %vm7282, %v7277
        %7311 = vst.msk [vmem:[%s284 + $0xe0] sm:$0xff] %vm7282, %v7278
        %7312 = vst.msk [vmem:[%s284 + $0xe8] sm:$0xff] %vm7282, %v7279
        %7313 = vst.msk [vmem:[%s284 + $0xf0] sm:$0xff] %vm7282, %v7280
        %7314 = vst.msk [vmem:[%s284 + $0xf8] sm:$0xff] %vm7282, %v7281
        %p7315 = scmp.lt.s32.totalorder %s21, 1
        %s7316 = scalar_select %p7315, %s21, 1
        %s7317 = smul.addr %s7316, 32
        %s7318 = smul.addr %s7317, 8
        %s7319 = scalar_lea.vmem %s5, %s7318
        // Predicated region
        $region57: #{tpu_custom_call.1} parent=39 // pred_check
          %p7320 = pneg %p149
        $region58: #{tpu_custom_call.1} parent=39 // pred_check_branch
          %7322 = sbr.rel (%p7320) target = $region60
        $region59: #{tpu_custom_call.1} parent=39 // pred_region
          _
        $region60: #{tpu_custom_call.1} parent=39 // pred_fallthru
          _
      $region40: #{tpu_custom_call.1} parent=5 // pred_fallthru
        _
      %p7323 = scmp.le.s32.totalorder 2, %s16
      // Predicated region
      $region61: #{tpu_custom_call.1} parent=5 // pred_check
        %p7324 = pneg %p7323
      $region62: #{tpu_custom_call.1} parent=5 // pred_check_branch
        %7326 = sbr.rel (%p7324) target = $region64
      $region63: #{tpu_custom_call.1} parent=5 // pred_region
        %s7327 = ssub.s32 %s16, 2
        // Predicated region
        $region65: #{tpu_custom_call.1} parent=63 // pred_check
          %p7328 = pneg %p155
        $region66: #{tpu_custom_call.1} parent=63 // pred_check_branch
          %7330 = sbr.rel (%p7328) target = $region68
        $region67: #{tpu_custom_call.1} parent=63 // pred_region
          %p7331 = scmp.lt.s32.totalorder %s22, 1
          %s7332 = scalar_select %p7331, %s22, 1
          %s7333 = smul.addr %s7332, 32
          %s7334 = smul.addr %s7333, 8
          %s7335 = scalar_lea.vmem %s5, %s7334
        $region68: #{tpu_custom_call.1} parent=63 // pred_fallthru
          _
      $region64: #{tpu_custom_call.1} parent=5 // pred_fallthru
        _
    $region6: #{tpu_custom_call.1} parent=1 // loop_footer
      %s20 = sadd.s32 1, %s16
    $region7: #{tpu_custom_call.1} parent=1 // loop_footer_branch
      %15 = sbr.rel target = $region3
    $region8: #{tpu_custom_call.1} parent=1 // loop_exit
      _
    %7336 = vsyncpa [#allocation3], 1
    %s7337 = scalar_lea.sflag [#allocation3], 1
    %7338 = vsyncpa %s7337, 1
    %7339 = vsyncpa [#allocation5], 1
    %7340 = vsyncpa [#allocation8], 1

</llo_original>
